<compile_context>
chip_gen: v7x
topology: tpu7x:2x2x1
jax: 0.10.0
libtpu: 0.0.40
codegen_flags: <defaults>
</compile_context>

<pallas_src>
import functools

import numpy as np

import jax
import jax.numpy as jnp
from jax.experimental import pallas as pl
from jax.experimental.pallas import tpu as pltpu

LEAKY_SLOPE = 0.01  # torch.nn.LeakyReLU default negative_slope


# ------------------------------ Model config ------------------------------ #

class Config:
    feature_depth = 8
    prototype_belief_depth = 4
    prototype_affinity_depth = 4
    pointnet_feature_depth = 16
    # (kernel_size, layer_count, final_depth) per stage
    pointnet_layers = [(3, 3, 8), (3, 3, 8)]


# ------------------------------- Parameters ------------------------------- #

def make_stage_params(key, in_depth, out_depth, layer_config, cfg):
    """Mirror Pointnet._create_stage: list of conv dicts (w, b, K, act)."""
    kernel_size, layer_count, final_depth = layer_config
    specs = [(in_depth, cfg.pointnet_feature_depth, kernel_size, True)]
    for _ in range(layer_count - 2):
        specs.append((cfg.pointnet_feature_depth, cfg.pointnet_feature_depth,
                      kernel_size, True))
    specs.append((cfg.pointnet_feature_depth, final_depth, 1, True))
    specs.append((final_depth, out_depth, 1, False))   # no trailing activation

    params = []
    for cin, cout, kk, act in specs:
        key, wk, bk = jax.random.split(key, 3)
        scale = (1.0 / (cin * kk * kk)) ** 0.5
        w = jax.random.normal(wk, (cout, cin, kk, kk), jnp.float32) * scale
        b = jax.random.normal(bk, (cout,), jnp.float32) * 0.01
        params.append(dict(w=w, b=b, K=kk, act=act))
    return key, params


def make_pointnet_params(key, cfg):
    belief_params, affinity_params = [], []
    for i, layer_config in enumerate(cfg.pointnet_layers):
        in_depth = (cfg.feature_depth if i == 0 else
                    cfg.feature_depth + cfg.prototype_belief_depth
                    + cfg.prototype_affinity_depth)
        key, bp = make_stage_params(key, in_depth, cfg.prototype_belief_depth,
                                    layer_config, cfg)
        key, ap = make_stage_params(key, in_depth, cfg.prototype_affinity_depth,
                                    layer_config, cfg)
        belief_params.append(bp)
        affinity_params.append(ap)
    return belief_params, affinity_params


# --------------------------- Build-time packing ---------------------------- #

def _im2col_weight(w, col_of, kd):
    """(Cout, Cin, K, K) torch-layout conv weight -> (Cout, kd) matmul weight.

    Column for input-channel c of tap t = col_of(t, c); unused columns are 0.
    """
    w = np.asarray(w, np.float32)
    cout, cin, k, _ = w.shape
    out = np.zeros((cout, kd), np.float32)
    for ky in range(k):
        for kx in range(k):
            t = ky * k + kx
            for c in range(cin):
                out[:, col_of(t, c)] = w[:, c, ky, kx]
    return out


def pack_pointnet_params(cfg, belief_params, affinity_params):
    """Pack every conv into one bf16 weight slab + one f32 bias slab.

    Stage 0's belief/affinity heads are fused layer-by-layer (stacked or
    block-diagonal weights -> one matmul per layer serves both heads).
    Later-stage first-conv weight columns are permuted so the in-kernel
    channel order is [x, belief, affinity] (sublane aligned concat).
    """
    Cx = cfg.feature_depth
    Bd = cfg.prototype_belief_depth
    Ad = cfg.prototype_affinity_depth
    F = cfg.pointnet_feature_depth
    K = cfg.pointnet_layers[0][0]
    KK = K * K
    num_stages = len(belief_params)
    n_mid = len(belief_params[0]) - 3          # number of F->F KxK convs per head

    entries = []                               # (W2d, bias, act)

    def add(W, b, act):
        entries.append((W, np.asarray(b, np.float32), bool(act)))

    # ---------------- stage 0: both heads fused ----------------
    bp, ap = belief_params[0], affinity_params[0]
    # First KxK conv (Cx -> F per head): shared x-im2col, stacked Cout rows.
    add(np.concatenate(
            [_im2col_weight(bp[0]["w"], lambda t, c: t * Cx + c, KK * Cx),
             _im2col_weight(ap[0]["w"], lambda t, c: t * Cx + c, KK * Cx)], 0),
        np.concatenate([np.asarray(bp[0]["b"]), np.asarray(ap[0]["b"])]), True)
    # Middle KxK convs (F -> F per head): block-diagonal per 2F-row tap chunk.
    for li in range(1, 1 + n_mid):
        add(np.concatenate(
                [_im2col_weight(bp[li]["w"], lambda t, c: t * 2 * F + c, KK * 2 * F),
                 _im2col_weight(ap[li]["w"], lambda t, c: t * 2 * F + F + c, KK * 2 * F)], 0),
            np.concatenate([np.asarray(bp[li]["b"]), np.asarray(ap[li]["b"])]), True)
    # 1x1 conv (F -> final per head): block-diagonal over [hb(F); ha(F)] rows.
    li = 1 + n_mid
    fd = bp[li]["w"].shape[0]
    add(np.concatenate(
            [_im2col_weight(bp[li]["w"], lambda t, c: c, 2 * F),
             _im2col_weight(ap[li]["w"], lambda t, c: F + c, 2 * F)], 0),
        np.concatenate([np.asarray(bp[li]["b"]), np.asarray(ap[li]["b"])]), True)
    # 1x1 conv (final -> out per head), no activation.
    li = 2 + n_mid
    add(np.concatenate(
            [_im2col_weight(bp[li]["w"], lambda t, c: c, 2 * fd),
             _im2col_weight(ap[li]["w"], lambda t, c: fd + c, 2 * fd)], 0),
        np.concatenate([np.asarray(bp[li]["b"]), np.asarray(ap[li]["b"])]), False)

    # ---------------- later stages (heads serial: affinity needs new belief) --
    Cin_s = Cx + Bd + Ad
    # torch concat order is [belief, affinity, x]; kernel per-tap order is
    # [x, belief, affinity] -> permute the cin columns accordingly.
    def kernel_pos(c):
        return Cx + c if c < Bd + Ad else c - (Bd + Ad)

    for s in range(1, num_stages):
        for head in (belief_params[s], affinity_params[s]):
            add(_im2col_weight(head[0]["w"],
                               lambda t, c: t * Cin_s + kernel_pos(c), KK * Cin_s),
                head[0]["b"], True)
            for li in range(1, 1 + n_mid):
                add(_im2col_weight(head[li]["w"], lambda t, c: t * F + c, KK * F),
                    head[li]["b"], True)
            li = 1 + n_mid
            fd_h = head[li]["w"].shape[0]
            add(_im2col_weight(head[li]["w"], lambda t, c: c, F),
                head[li]["b"], True)
            add(_im2col_weight(head[li + 1]["w"], lambda t, c: c, fd_h),
                head[li + 1]["b"], False)

    # ---------------- slabs ----------------
    n = len(entries)
    max_cout = max(W.shape[0] for W, _, _ in entries)
    max_kd = max(W.shape[1] for W, _, _ in entries)
    row_stride = ((max_cout + 15) // 16) * 16          # bf16 sublane-tile aligned
    w_slab = np.zeros((n * row_stride, max_kd), np.float32)
    b_slab = np.zeros((row_stride, n), np.float32)
    meta = []
    for i, (W, b, act) in enumerate(entries):
        cout, kd = W.shape
        w_slab[i * row_stride:i * row_stride + cout, :kd] = W
        b_slab[:cout, i] = b
        meta.append((int(cout), int(kd), bool(act)))
    return (jnp.asarray(w_slab, dtype=jnp.bfloat16),
            jnp.asarray(b_slab, dtype=jnp.float32),
            tuple(meta), n_mid, row_stride)


def build_taps(N, H, W, K):
    """Per-tap lane shift + boundary mask for the flat (C, N*H*W) layout."""
    M = N * H * W
    HW = H * W
    pad = K // 2
    lane = np.arange(M)
    hh = (lane % HW) // W
    ww = lane % W
    shifts, masks = [], []
    for ky in range(K):
        for kx in range(K):
            dy, dx = ky - pad, kx - pad
            # shifted[i] = h[i + dy*W + dx]; wrap-around is masked away, which
            # also handles image-edge and cross-batch boundaries.
            shifts.append(int((-(dy * W + dx)) % M))
            valid = ((hh + dy >= 0) & (hh + dy < H) &
                     (ww + dx >= 0) & (ww + dx < W))
            masks.append(valid.astype(np.float32))
    return tuple(shifts), np.stack(masks, axis=0)      # (K*K,), (K*K, M)


# ----------------------------- Fused Pallas kernel ------------------------- #

def _pointnet_kernel(x_ref, w_ref, b_ref, m_ref, out_ref, patches, cache, *,
                     meta, shifts, K, Cx, F, Bd, Ad, n_mid, num_stages,
                     row_stride):
    """Whole Pointnet forward; activations live in VMEM as (C, N*H*W)."""
    KK = K * K
    center = KK // 2
    Cs = Cx + Bd + Ad              # later-stage input channel count

    # One matmul (bf16 MXU operands, f32 accumulate) + bias + optional LeakyReLU.
    def mm(idx, rhs):
        cout, kd, act = meta[idx]
        r0 = idx * row_stride
        w = w_ref[r0:r0 + cout, 0:kd]                          # bf16 (cout, kd)
        y = jnp.dot(w, rhs.astype(jnp.bfloat16),
                    preferred_element_type=jnp.float32)        # (cout, M) f32
        y = y + b_ref[0:cout, idx:idx + 1]
        if act:
            y = jnp.where(y >= 0.0, y, LEAKY_SLOPE * y)
        return y

    def mm_from(idx, src_ref):
        kd = meta[idx][1]
        return mm(idx, src_ref[0:kd, :])

    # im2col: store the KK shifted+masked copies of h (cin, M) into dst as a
    # tap-major (KK*cin, M) matrix; every chunk start is 8-row aligned.
    def im2col(h, cin, dst):
        for t in range(KK):
            sh = shifts[t]
            piece = pltpu.roll(h, sh, axis=1) if sh else h
            if t != center:
                piece = piece * m_ref[t:t + 1, :]
            dst[t * cin:(t + 1) * cin, :] = piece

    x = x_ref[...]                                             # (Cx, M) f32
    idx = 0

    # ---------------- stage 0: belief & affinity heads fused ----------------
    im2col(x, Cx, patches)                                     # shared x patches
    h = mm_from(idx, patches); idx += 1                        # (2F, M)
    for _ in range(n_mid):
        im2col(h, 2 * F, patches)
        h = mm_from(idx, patches); idx += 1                    # (2F, M)
    h = mm(idx, h); idx += 1                                   # (2*final, M)
    ba = mm(idx, h); idx += 1                                  # (Bd+Ad, M) [belief; affinity]
    out_ref[0:Bd + Ad, :] = ba

    # ---------------- later stages ----------------
    for st in range(1, num_stages):
        # Belief head. Per-tap channel order [x(Cx), belief(Bd), affinity(Ad)];
        # the im2col stays cached for the affinity head.
        im2col(jnp.concatenate([x, ba], axis=0), Cs, cache)
        hb = mm_from(idx, cache); idx += 1                     # (F, M)
        for _ in range(n_mid):
            im2col(hb, F, patches)
            hb = mm_from(idx, patches); idx += 1
        hb = mm(idx, hb); idx += 1                             # (final, M)
        nb = mm(idx, hb); idx += 1                             # (Bd, M) new belief

        # Affinity head: identical input except belief -> new belief, so only
        # the Bd belief rows of each cached tap chunk are recomputed.
        for t in range(KK):
            sh = shifts[t]
            piece = pltpu.roll(nb, sh, axis=1) if sh else nb
            if t != center:
                piece = piece * m_ref[t:t + 1, :]
            cache[t * Cs + Cx:t * Cs + Cx + Bd, :] = piece
        ha = mm_from(idx, cache); idx += 1
        for _ in range(n_mid):
            im2col(ha, F, patches)
            ha = mm_from(idx, patches); idx += 1
        ha = mm(idx, ha); idx += 1
        na = mm(idx, ha); idx += 1                             # (Ad, M) new affinity

        ba = jnp.concatenate([nb, na], axis=0)                 # (Bd+Ad, M)
        out_ref[(Bd + Ad) * st:(Bd + Ad) * (st + 1), :] = ba


# ------------------------------ Forward builder ---------------------------- #

def make_pointnet_forward(cfg, belief_params, affinity_params, N, H, W):
    """Returns a jitted forward(fpn_nchw) -> (beliefs, affinities) NCHW lists."""
    K = cfg.pointnet_layers[0][0]
    assert all(lc[0] == K for lc in cfg.pointnet_layers), "single kernel size assumed"
    assert K % 2 == 1
    M = N * H * W
    assert M % 128 == 0, "flattened spatial size must be lane-aligned"

    Cx = cfg.feature_depth
    Bd = cfg.prototype_belief_depth
    Ad = cfg.prototype_affinity_depth
    F = cfg.pointnet_feature_depth
    num_stages = len(cfg.pointnet_layers)

    w_slab, b_slab, meta, n_mid, row_stride = pack_pointnet_params(
        cfg, belief_params, affinity_params)
    shifts, masks_np = build_taps(N, H, W, K)
    masks = jnp.asarray(masks_np)                              # (K*K, M) f32

    patches_rows = K * K * max(Cx, F, 2 * F)
    cache_rows = K * K * (Cx + Bd + Ad)

    kern = functools.partial(
        _pointnet_kernel, meta=meta, shifts=shifts, K=K, Cx=Cx, F=F, Bd=Bd,
        Ad=Ad, n_mid=n_mid, num_stages=num_stages, row_stride=row_stride)

    # Single fused pallas_call, no grid: 4 input operands + 1 stacked
    # lane-dense output + 2 VMEM scratch buffers; total footprint < 2 MiB.
    fused = pl.pallas_call(
        kern,
        out_shape=jax.ShapeDtypeStruct(((Bd + Ad) * num_stages, M), jnp.float32),
        scratch_shapes=[pltpu.VMEM((patches_rows, M), jnp.float32),
                        pltpu.VMEM((cache_rows, M), jnp.float32)],
    )

    @jax.jit
    def forward(fpn_nchw):
        # NCHW -> (C, N*H*W): channels on sublanes, flat spatial on lanes.
        x_flat = jnp.transpose(fpn_nchw, (1, 0, 2, 3)).reshape(Cx, M)
        out = fused(x_flat, w_slab, b_slab, masks)             # (8*S, M)

        def to_nchw(rows):
            c = rows.shape[0]
            return jnp.transpose(rows.reshape(c, N, H, W), (1, 0, 2, 3))

        beliefs, affinities = [], []
        for st in range(num_stages):
            blk = out[(Bd + Ad) * st:(Bd + Ad) * (st + 1)]
            beliefs.append(to_nchw(blk[0:Bd]))
            affinities.append(to_nchw(blk[Bd:Bd + Ad]))
        return beliefs, affinities

    return forward


# --------------------------- Pure-JAX references --------------------------- #

def _leaky(x):
    return jnp.where(x >= 0, x, LEAKY_SLOPE * x)


def _stage_ref(x, params, bf16):
    for p in params:
        pad = p["K"] // 2
        w, xin = p["w"], x
        if bf16:
            w, xin = w.astype(jnp.bfloat16), x.astype(jnp.bfloat16)
        x = jax.lax.conv_general_dilated(
            xin, w, window_strides=(1, 1),
            padding=[(pad, pad), (pad, pad)],
            dimension_numbers=("NCHW", "OIHW", "NCHW"),
            preferred_element_type=jnp.float32,
            precision=(jax.lax.Precision.DEFAULT if bf16
                       else jax.lax.Precision.HIGHEST),
        ) + p["b"].reshape(1, -1, 1, 1)
        if p["act"]:
            x = _leaky(x)
    return x


def pointnet_reference(fpn, belief_params, affinity_params, bf16=False):
    beliefs, affinities = [], []
    belief = _stage_ref(fpn, belief_params[0], bf16)
    affinity = _stage_ref(fpn, affinity_params[0], bf16)
    beliefs.append(belief)
    affinities.append(affinity)
    for bp, ap in zip(belief_params[1:], affinity_params[1:]):
        belief = _stage_ref(jnp.concatenate([belief, affinity, fpn], 1), bp, bf16)
        affinity = _stage_ref(jnp.concatenate([belief, affinity, fpn], 1), ap, bf16)
        beliefs.append(belief)
        affinities.append(affinity)
    return beliefs, affinities


# ---------------------------------- Main ----------------------------------- #

if __name__ == "__main__":
    cfg = Config()
    key = jax.random.PRNGKey(0)
    key, xk = jax.random.split(key)

    N, H, W = 2, 16, 16
    fpn_output = jax.random.normal(xk, (N, cfg.feature_depth, H, W), jnp.float32)

    belief_params, affinity_params = make_pointnet_params(key, cfg)
    forward = make_pointnet_forward(cfg, belief_params, affinity_params, N, H, W)

    beliefs, affinities = forward(fpn_output)
    jax.block_until_ready((beliefs, affinities))

    assert len(beliefs) == len(cfg.pointnet_layers)
    assert len(affinities) == len(cfg.pointnet_layers)
    for b in beliefs:
        assert b.shape == (N, cfg.prototype_belief_depth, H, W)
    for a in affinities:
        assert a.shape == (N, cfg.prototype_affinity_depth, H, W)

    got_all = list(beliefs) + list(affinities)

    # Strict check against a reference with the SAME MXU operand precision
    # (bf16 inputs/weights, f32 accumulate) -> validates all kernel structure.
    rb16, ra16 = pointnet_reference(fpn_output, belief_params, affinity_params,
                                    bf16=True)
    for got, want in zip(got_all, list(rb16) + list(ra16)):
        np.testing.assert_allclose(np.asarray(got), np.asarray(want),
                                   atol=2e-2, rtol=2e-2)

    # Sanity check against the original full-f32 semantics; the looser budget
    # covers bf16 MXU operand quantization over the 4-conv-deep stages.
    rb, ra = pointnet_reference(fpn_output, belief_params, affinity_params,
                                bf16=False)
    for got, want in zip(got_all, list(rb) + list(ra)):
        np.testing.assert_allclose(np.asarray(got), np.asarray(want),
                                   atol=1e-1, rtol=1e-1)

    print("KERNEL_OK")
</pallas_src>

<mosaic_0001>
module attributes {stable_mosaic.version = 11 : i64} {
  func.func @_pointnet_kernel(%arg0: memref<8x512xf32, #tpu.memory_space<vmem>>, %arg1: memref<384x288xbf16, #tpu.memory_space<vmem>>, %arg2: memref<32x12xf32, #tpu.memory_space<vmem>>, %arg3: memref<9x512xf32, #tpu.memory_space<vmem>>, %arg4: memref<16x512xf32, #tpu.memory_space<vmem>>, %arg5: memref<288x512xf32, #tpu.memory_space<vmem>>, %arg6: memref<144x512xf32, #tpu.memory_space<vmem>>) attributes {dimension_semantics = [], scalar_prefetch = 0 : i64, scratch_operands = 2 : i64, tpu.core_type = #tpu.core_type<tc>} {
    %c0 = arith.constant 0 : index
    %c0_0 = arith.constant 0 : index
    %0 = vector.load %arg0[%c0, %c0_0] : memref<8x512xf32, #tpu.memory_space<vmem>>, vector<8x512xf32>
    %c17_i32 = arith.constant 17 : i32
    %1 = tpu.dynamic_rotate %0 by %c17_i32 dim 1 : vector<8x512xf32>, i32 -> vector<8x512xf32>
    %c0_1 = arith.constant 0 : index
    %c0_2 = arith.constant 0 : index
    %2 = vector.load %arg3[%c0_1, %c0_2] : memref<9x512xf32, #tpu.memory_space<vmem>>, vector<1x512xf32>
    %3 = vector.broadcast %2 : vector<1x512xf32> to vector<8x512xf32>
    %4 = arith.mulf %1, %3 : vector<8x512xf32>
    %c0_3 = arith.constant 0 : index
    %c0_4 = arith.constant 0 : index
    %5 = vector.load %arg5[%c0_3, %c0_4] : memref<288x512xf32, #tpu.memory_space<vmem>>, vector<8x512xf32>
    tpu.vector_store %arg5[%c0_3, %c0_4], %4 {strides = array<i32>} : memref<288x512xf32, #tpu.memory_space<vmem>>, vector<8x512xf32>,
    %c16_i32 = arith.constant 16 : i32
    %6 = tpu.dynamic_rotate %0 by %c16_i32 dim 1 : vector<8x512xf32>, i32 -> vector<8x512xf32>
    %c1 = arith.constant 1 : index
    %c0_5 = arith.constant 0 : index
    %7 = vector.load %arg3[%c1, %c0_5] : memref<9x512xf32, #tpu.memory_space<vmem>>, vector<1x512xf32>
    %8 = vector.broadcast %7 : vector<1x512xf32> to vector<8x512xf32>
    %9 = arith.mulf %6, %8 : vector<8x512xf32>
    %c8 = arith.constant 8 : index
    %c0_6 = arith.constant 0 : index
    %10 = vector.load %arg5[%c8, %c0_6] : memref<288x512xf32, #tpu.memory_space<vmem>>, vector<8x512xf32>
    tpu.vector_store %arg5[%c8, %c0_6], %9 {strides = array<i32>} : memref<288x512xf32, #tpu.memory_space<vmem>>, vector<8x512xf32>,
    %c15_i32 = arith.constant 15 : i32
    %11 = tpu.dynamic_rotate %0 by %c15_i32 dim 1 : vector<8x512xf32>, i32 -> vector<8x512xf32>
    %c2 = arith.constant 2 : index
    %c0_7 = arith.constant 0 : index
    %12 = vector.load %arg3[%c2, %c0_7] : memref<9x512xf32, #tpu.memory_space<vmem>>, vector<1x512xf32>
    %13 = vector.broadcast %12 : vector<1x512xf32> to vector<8x512xf32>
    %14 = arith.mulf %11, %13 : vector<8x512xf32>
    %c16 = arith.constant 16 : index
    %c0_8 = arith.constant 0 : index
    %15 = vector.load %arg5[%c16, %c0_8] : memref<288x512xf32, #tpu.memory_space<vmem>>, vector<8x512xf32>
    tpu.vector_store %arg5[%c16, %c0_8], %14 {strides = array<i32>} : memref<288x512xf32, #tpu.memory_space<vmem>>, vector<8x512xf32>,
    %c1_i32 = arith.constant 1 : i32
    %16 = tpu.dynamic_rotate %0 by %c1_i32 dim 1 : vector<8x512xf32>, i32 -> vector<8x512xf32>
    %c3 = arith.constant 3 : index
    %c0_9 = arith.constant 0 : index
    %17 = vector.load %arg3[%c3, %c0_9] : memref<9x512xf32, #tpu.memory_space<vmem>>, vector<1x512xf32>
    %18 = vector.broadcast %17 : vector<1x512xf32> to vector<8x512xf32>
    %19 = arith.mulf %16, %18 : vector<8x512xf32>
    %c24 = arith.constant 24 : index
    %c0_10 = arith.constant 0 : index
    %20 = vector.load %arg5[%c24, %c0_10] : memref<288x512xf32, #tpu.memory_space<vmem>>, vector<8x512xf32>
    tpu.vector_store %arg5[%c24, %c0_10], %19 {strides = array<i32>} : memref<288x512xf32, #tpu.memory_space<vmem>>, vector<8x512xf32>,
    %c32 = arith.constant 32 : index
    %c0_11 = arith.constant 0 : index
    %21 = vector.load %arg5[%c32, %c0_11] : memref<288x512xf32, #tpu.memory_space<vmem>>, vector<8x512xf32>
    tpu.vector_store %arg5[%c32, %c0_11], %0 {strides = array<i32>} : memref<288x512xf32, #tpu.memory_space<vmem>>, vector<8x512xf32>,
    %c511_i32 = arith.constant 511 : i32
    %22 = tpu.dynamic_rotate %0 by %c511_i32 dim 1 : vector<8x512xf32>, i32 -> vector<8x512xf32>
    %c5 = arith.constant 5 : index
    %c0_12 = arith.constant 0 : index
    %23 = vector.load %arg3[%c5, %c0_12] : memref<9x512xf32, #tpu.memory_space<vmem>>, vector<1x512xf32>
    %24 = vector.broadcast %23 : vector<1x512xf32> to vector<8x512xf32>
    %25 = arith.mulf %22, %24 : vector<8x512xf32>
    %c40 = arith.constant 40 : index
    %c0_13 = arith.constant 0 : index
    %26 = vector.load %arg5[%c40, %c0_13] : memref<288x512xf32, #tpu.memory_space<vmem>>, vector<8x512xf32>
    tpu.vector_store %arg5[%c40, %c0_13], %25 {strides = array<i32>} : memref<288x512xf32, #tpu.memory_space<vmem>>, vector<8x512xf32>,
    %c497_i32 = arith.constant 497 : i32
    %27 = tpu.dynamic_rotate %0 by %c497_i32 dim 1 : vector<8x512xf32>, i32 -> vector<8x512xf32>
    %c6 = arith.constant 6 : index
    %c0_14 = arith.constant 0 : index
    %28 = vector.load %arg3[%c6, %c0_14] : memref<9x512xf32, #tpu.memory_space<vmem>>, vector<1x512xf32>
    %29 = vector.broadcast %28 : vector<1x512xf32> to vector<8x512xf32>
    %30 = arith.mulf %27, %29 : vector<8x512xf32>
    %c48 = arith.constant 48 : index
    %c0_15 = arith.constant 0 : index
    %31 = vector.load %arg5[%c48, %c0_15] : memref<288x512xf32, #tpu.memory_space<vmem>>, vector<8x512xf32>
    tpu.vector_store %arg5[%c48, %c0_15], %30 {strides = array<i32>} : memref<288x512xf32, #tpu.memory_space<vmem>>, vector<8x512xf32>,
    %c496_i32 = arith.constant 496 : i32
    %32 = tpu.dynamic_rotate %0 by %c496_i32 dim 1 : vector<8x512xf32>, i32 -> vector<8x512xf32>
    %c7 = arith.constant 7 : index
    %c0_16 = arith.constant 0 : index
    %33 = vector.load %arg3[%c7, %c0_16] : memref<9x512xf32, #tpu.memory_space<vmem>>, vector<1x512xf32>
    %34 = vector.broadcast %33 : vector<1x512xf32> to vector<8x512xf32>
    %35 = arith.mulf %32, %34 : vector<8x512xf32>
    %c56 = arith.constant 56 : index
    %c0_17 = arith.constant 0 : index
    %36 = vector.load %arg5[%c56, %c0_17] : memref<288x512xf32, #tpu.memory_space<vmem>>, vector<8x512xf32>
    tpu.vector_store %arg5[%c56, %c0_17], %35 {strides = array<i32>} : memref<288x512xf32, #tpu.memory_space<vmem>>, vector<8x512xf32>,
    %c495_i32 = arith.constant 495 : i32
    %37 = tpu.dynamic_rotate %0 by %c495_i32 dim 1 : vector<8x512xf32>, i32 -> vector<8x512xf32>
    %c8_18 = arith.constant 8 : index
    %c0_19 = arith.constant 0 : index
    %38 = vector.load %arg3[%c8_18, %c0_19] : memref<9x512xf32, #tpu.memory_space<vmem>>, vector<1x512xf32>
    %39 = vector.broadcast %38 : vector<1x512xf32> to vector<8x512xf32>
    %40 = arith.mulf %37, %39 : vector<8x512xf32>
    %c64 = arith.constant 64 : index
    %c0_20 = arith.constant 0 : index
    %41 = vector.load %arg5[%c64, %c0_20] : memref<288x512xf32, #tpu.memory_space<vmem>>, vector<8x512xf32>
    tpu.vector_store %arg5[%c64, %c0_20], %40 {strides = array<i32>} : memref<288x512xf32, #tpu.memory_space<vmem>>, vector<8x512xf32>,
    %c0_21 = arith.constant 0 : index
    %c0_22 = arith.constant 0 : index
    %42 = vector.load %arg5[%c0_21, %c0_22] : memref<288x512xf32, #tpu.memory_space<vmem>>, vector<72x512xf32>
    %c0_23 = arith.constant 0 : index
    %c0_24 = arith.constant 0 : index
    %43 = vector.load %arg1[%c0_23, %c0_24] : memref<384x288xbf16, #tpu.memory_space<vmem>>, vector<32x72xbf16>
    %44 = arith.truncf %42 : vector<72x512xf32> to vector<72x512xbf16>
    %cst = arith.constant dense<0.000000e+00> : vector<32x512xf32>
    %45 = tpu.matmul %43, %44, %cst {dimension_numbers = #tpu.dot_dimension_numbers<[1], [0], [0], [1], [0, 0, 1, 1], [], []>} : vector<32x72xbf16>, vector<72x512xbf16>, vector<32x512xf32> -> vector<32x512xf32>
    %c0_25 = arith.constant 0 : index
    %c0_26 = arith.constant 0 : index
    %46 = vector.load %arg2[%c0_25, %c0_26] : memref<32x12xf32, #tpu.memory_space<vmem>>, vector<32x1xf32>
    %47 = vector.broadcast %46 : vector<32x1xf32> to vector<32x512xf32>
    %48 = arith.addf %45, %47 : vector<32x512xf32>
    %cst_27 = arith.constant 0.000000e+00 : f32
    %49 = vector.broadcast %cst_27 : f32 to vector<32x512xf32>
    %50 = arith.cmpf oge, %48, %49 : vector<32x512xf32>
    %cst_28 = arith.constant 0.00999999977 : f32
    %51 = vector.broadcast %cst_28 : f32 to vector<32x512xf32>
    %52 = arith.mulf %51, %48 : vector<32x512xf32>
    %53 = arith.select %50, %48, %52 : vector<32x512xi1>, vector<32x512xf32>
    %c17_i32_29 = arith.constant 17 : i32
    %54 = tpu.dynamic_rotate %53 by %c17_i32_29 dim 1 : vector<32x512xf32>, i32 -> vector<32x512xf32>
    %c0_30 = arith.constant 0 : index
    %c0_31 = arith.constant 0 : index
    %55 = vector.load %arg3[%c0_30, %c0_31] : memref<9x512xf32, #tpu.memory_space<vmem>>, vector<1x512xf32>
    %56 = vector.broadcast %55 : vector<1x512xf32> to vector<32x512xf32>
    %57 = arith.mulf %54, %56 : vector<32x512xf32>
    %c0_32 = arith.constant 0 : index
    %c0_33 = arith.constant 0 : index
    %58 = vector.load %arg5[%c0_32, %c0_33] : memref<288x512xf32, #tpu.memory_space<vmem>>, vector<32x512xf32>
    tpu.vector_store %arg5[%c0_32, %c0_33], %57 {strides = array<i32>} : memref<288x512xf32, #tpu.memory_space<vmem>>, vector<32x512xf32>,
    %c16_i32_34 = arith.constant 16 : i32
    %59 = tpu.dynamic_rotate %53 by %c16_i32_34 dim 1 : vector<32x512xf32>, i32 -> vector<32x512xf32>
    %c1_35 = arith.constant 1 : index
    %c0_36 = arith.constant 0 : index
    %60 = vector.load %arg3[%c1_35, %c0_36] : memref<9x512xf32, #tpu.memory_space<vmem>>, vector<1x512xf32>
    %61 = vector.broadcast %60 : vector<1x512xf32> to vector<32x512xf32>
    %62 = arith.mulf %59, %61 : vector<32x512xf32>
    %c32_37 = arith.constant 32 : index
    %c0_38 = arith.constant 0 : index
    %63 = vector.load %arg5[%c32_37, %c0_38] : memref<288x512xf32, #tpu.memory_space<vmem>>, vector<32x512xf32>
    tpu.vector_store %arg5[%c32_37, %c0_38], %62 {strides = array<i32>} : memref<288x512xf32, #tpu.memory_space<vmem>>, vector<32x512xf32>,
    %c15_i32_39 = arith.constant 15 : i32
    %64 = tpu.dynamic_rotate %53 by %c15_i32_39 dim 1 : vector<32x512xf32>, i32 -> vector<32x512xf32>
    %c2_40 = arith.constant 2 : index
    %c0_41 = arith.constant 0 : index
    %65 = vector.load %arg3[%c2_40, %c0_41] : memref<9x512xf32, #tpu.memory_space<vmem>>, vector<1x512xf32>
    %66 = vector.broadcast %65 : vector<1x512xf32> to vector<32x512xf32>
    %67 = arith.mulf %64, %66 : vector<32x512xf32>
    %c64_42 = arith.constant 64 : index
    %c0_43 = arith.constant 0 : index
    %68 = vector.load %arg5[%c64_42, %c0_43] : memref<288x512xf32, #tpu.memory_space<vmem>>, vector<32x512xf32>
    tpu.vector_store %arg5[%c64_42, %c0_43], %67 {strides = array<i32>} : memref<288x512xf32, #tpu.memory_space<vmem>>, vector<32x512xf32>,
    %c1_i32_44 = arith.constant 1 : i32
    %69 = tpu.dynamic_rotate %53 by %c1_i32_44 dim 1 : vector<32x512xf32>, i32 -> vector<32x512xf32>
    %c3_45 = arith.constant 3 : index
    %c0_46 = arith.constant 0 : index
    %70 = vector.load %arg3[%c3_45, %c0_46] : memref<9x512xf32, #tpu.memory_space<vmem>>, vector<1x512xf32>
    %71 = vector.broadcast %70 : vector<1x512xf32> to vector<32x512xf32>
    %72 = arith.mulf %69, %71 : vector<32x512xf32>
    %c96 = arith.constant 96 : index
    %c0_47 = arith.constant 0 : index
    %73 = vector.load %arg5[%c96, %c0_47] : memref<288x512xf32, #tpu.memory_space<vmem>>, vector<32x512xf32>
    tpu.vector_store %arg5[%c96, %c0_47], %72 {strides = array<i32>} : memref<288x512xf32, #tpu.memory_space<vmem>>, vector<32x512xf32>,
    %c128 = arith.constant 128 : index
    %c0_48 = arith.constant 0 : index
    %74 = vector.load %arg5[%c128, %c0_48] : memref<288x512xf32, #tpu.memory_space<vmem>>, vector<32x512xf32>
    tpu.vector_store %arg5[%c128, %c0_48], %53 {strides = array<i32>} : memref<288x512xf32, #tpu.memory_space<vmem>>, vector<32x512xf32>,
    %c511_i32_49 = arith.constant 511 : i32
    %75 = tpu.dynamic_rotate %53 by %c511_i32_49 dim 1 : vector<32x512xf32>, i32 -> vector<32x512xf32>
    %c5_50 = arith.constant 5 : index
    %c0_51 = arith.constant 0 : index
    %76 = vector.load %arg3[%c5_50, %c0_51] : memref<9x512xf32, #tpu.memory_space<vmem>>, vector<1x512xf32>
    %77 = vector.broadcast %76 : vector<1x512xf32> to vector<32x512xf32>
    %78 = arith.mulf %75, %77 : vector<32x512xf32>
    %c160 = arith.constant 160 : index
    %c0_52 = arith.constant 0 : index
    %79 = vector.load %arg5[%c160, %c0_52] : memref<288x512xf32, #tpu.memory_space<vmem>>, vector<32x512xf32>
    tpu.vector_store %arg5[%c160, %c0_52], %78 {strides = array<i32>} : memref<288x512xf32, #tpu.memory_space<vmem>>, vector<32x512xf32>,
    %c497_i32_53 = arith.constant 497 : i32
    %80 = tpu.dynamic_rotate %53 by %c497_i32_53 dim 1 : vector<32x512xf32>, i32 -> vector<32x512xf32>
    %c6_54 = arith.constant 6 : index
    %c0_55 = arith.constant 0 : index
    %81 = vector.load %arg3[%c6_54, %c0_55] : memref<9x512xf32, #tpu.memory_space<vmem>>, vector<1x512xf32>
    %82 = vector.broadcast %81 : vector<1x512xf32> to vector<32x512xf32>
    %83 = arith.mulf %80, %82 : vector<32x512xf32>
    %c192 = arith.constant 192 : index
    %c0_56 = arith.constant 0 : index
    %84 = vector.load %arg5[%c192, %c0_56] : memref<288x512xf32, #tpu.memory_space<vmem>>, vector<32x512xf32>
    tpu.vector_store %arg5[%c192, %c0_56], %83 {strides = array<i32>} : memref<288x512xf32, #tpu.memory_space<vmem>>, vector<32x512xf32>,
    %c496_i32_57 = arith.constant 496 : i32
    %85 = tpu.dynamic_rotate %53 by %c496_i32_57 dim 1 : vector<32x512xf32>, i32 -> vector<32x512xf32>
    %c7_58 = arith.constant 7 : index
    %c0_59 = arith.constant 0 : index
    %86 = vector.load %arg3[%c7_58, %c0_59] : memref<9x512xf32, #tpu.memory_space<vmem>>, vector<1x512xf32>
    %87 = vector.broadcast %86 : vector<1x512xf32> to vector<32x512xf32>
    %88 = arith.mulf %85, %87 : vector<32x512xf32>
    %c224 = arith.constant 224 : index
    %c0_60 = arith.constant 0 : index
    %89 = vector.load %arg5[%c224, %c0_60] : memref<288x512xf32, #tpu.memory_space<vmem>>, vector<32x512xf32>
    tpu.vector_store %arg5[%c224, %c0_60], %88 {strides = array<i32>} : memref<288x512xf32, #tpu.memory_space<vmem>>, vector<32x512xf32>,
    %c495_i32_61 = arith.constant 495 : i32
    %90 = tpu.dynamic_rotate %53 by %c495_i32_61 dim 1 : vector<32x512xf32>, i32 -> vector<32x512xf32>
    %c8_62 = arith.constant 8 : index
    %c0_63 = arith.constant 0 : index
    %91 = vector.load %arg3[%c8_62, %c0_63] : memref<9x512xf32, #tpu.memory_space<vmem>>, vector<1x512xf32>
    %92 = vector.broadcast %91 : vector<1x512xf32> to vector<32x512xf32>
    %93 = arith.mulf %90, %92 : vector<32x512xf32>
    %c256 = arith.constant 256 : index
    %c0_64 = arith.constant 0 : index
    %94 = vector.load %arg5[%c256, %c0_64] : memref<288x512xf32, #tpu.memory_space<vmem>>, vector<32x512xf32>
    tpu.vector_store %arg5[%c256, %c0_64], %93 {strides = array<i32>} : memref<288x512xf32, #tpu.memory_space<vmem>>, vector<32x512xf32>,
    %c0_65 = arith.constant 0 : index
    %c0_66 = arith.constant 0 : index
    %95 = vector.load %arg5[%c0_65, %c0_66] : memref<288x512xf32, #tpu.memory_space<vmem>>, vector<288x512xf32>
    %c32_67 = arith.constant 32 : index
    %c0_68 = arith.constant 0 : index
    %96 = vector.load %arg1[%c32_67, %c0_68] : memref<384x288xbf16, #tpu.memory_space<vmem>>, vector<32x288xbf16>
    %97 = arith.truncf %95 : vector<288x512xf32> to vector<288x512xbf16>
    %cst_69 = arith.constant dense<0.000000e+00> : vector<32x512xf32>
    %98 = tpu.matmul %96, %97, %cst_69 {dimension_numbers = #tpu.dot_dimension_numbers<[1], [0], [0], [1], [0, 0, 1, 1], [], []>} : vector<32x288xbf16>, vector<288x512xbf16>, vector<32x512xf32> -> vector<32x512xf32>
    %c0_70 = arith.constant 0 : index
    %c1_71 = arith.constant 1 : index
    %99 = vector.load %arg2[%c0_70, %c1_71] : memref<32x12xf32, #tpu.memory_space<vmem>>, vector<32x1xf32>
    %100 = vector.broadcast %99 : vector<32x1xf32> to vector<32x512xf32>
    %101 = arith.addf %98, %100 : vector<32x512xf32>
    %cst_72 = arith.constant 0.000000e+00 : f32
    %102 = vector.broadcast %cst_72 : f32 to vector<32x512xf32>
    %103 = arith.cmpf oge, %101, %102 : vector<32x512xf32>
    %cst_73 = arith.constant 0.00999999977 : f32
    %104 = vector.broadcast %cst_73 : f32 to vector<32x512xf32>
    %105 = arith.mulf %104, %101 : vector<32x512xf32>
    %106 = arith.select %103, %101, %105 : vector<32x512xi1>, vector<32x512xf32>
    %c64_74 = arith.constant 64 : index
    %c0_75 = arith.constant 0 : index
    %107 = vector.load %arg1[%c64_74, %c0_75] : memref<384x288xbf16, #tpu.memory_space<vmem>>, vector<16x32xbf16>
    %108 = arith.truncf %106 : vector<32x512xf32> to vector<32x512xbf16>
    %cst_76 = arith.constant dense<0.000000e+00> : vector<16x512xf32>
    %109 = tpu.matmul %107, %108, %cst_76 {dimension_numbers = #tpu.dot_dimension_numbers<[1], [0], [0], [1], [0, 0, 1, 1], [], []>} : vector<16x32xbf16>, vector<32x512xbf16>, vector<16x512xf32> -> vector<16x512xf32>
    %c0_77 = arith.constant 0 : index
    %c2_78 = arith.constant 2 : index
    %110 = vector.load %arg2[%c0_77, %c2_78] : memref<32x12xf32, #tpu.memory_space<vmem>>, vector<16x1xf32>
    %111 = vector.broadcast %110 : vector<16x1xf32> to vector<16x512xf32>
    %112 = arith.addf %109, %111 : vector<16x512xf32>
    %cst_79 = arith.constant 0.000000e+00 : f32
    %113 = vector.broadcast %cst_79 : f32 to vector<16x512xf32>
    %114 = arith.cmpf oge, %112, %113 : vector<16x512xf32>
    %cst_80 = arith.constant 0.00999999977 : f32
    %115 = vector.broadcast %cst_80 : f32 to vector<16x512xf32>
    %116 = arith.mulf %115, %112 : vector<16x512xf32>
    %117 = arith.select %114, %112, %116 : vector<16x512xi1>, vector<16x512xf32>
    %c96_81 = arith.constant 96 : index
    %c0_82 = arith.constant 0 : index
    %118 = vector.load %arg1[%c96_81, %c0_82] : memref<384x288xbf16, #tpu.memory_space<vmem>>, vector<8x16xbf16>
    %119 = arith.truncf %117 : vector<16x512xf32> to vector<16x512xbf16>
    %cst_83 = arith.constant dense<0.000000e+00> : vector<8x512xf32>
    %120 = tpu.matmul %118, %119, %cst_83 {dimension_numbers = #tpu.dot_dimension_numbers<[1], [0], [0], [1], [0, 0, 1, 1], [], []>} : vector<8x16xbf16>, vector<16x512xbf16>, vector<8x512xf32> -> vector<8x512xf32>
    %c0_84 = arith.constant 0 : index
    %c3_85 = arith.constant 3 : index
    %121 = vector.load %arg2[%c0_84, %c3_85] : memref<32x12xf32, #tpu.memory_space<vmem>>, vector<8x1xf32>
    %122 = vector.broadcast %121 : vector<8x1xf32> to vector<8x512xf32>
    %123 = arith.addf %120, %122 : vector<8x512xf32>
    %c0_86 = arith.constant 0 : index
    %c0_87 = arith.constant 0 : index
    %124 = vector.load %arg4[%c0_86, %c0_87] : memref<16x512xf32, #tpu.memory_space<vmem>>, vector<8x512xf32>
    tpu.vector_store %arg4[%c0_86, %c0_87], %123 {strides = array<i32>} : memref<16x512xf32, #tpu.memory_space<vmem>>, vector<8x512xf32>,
    %125 = tpu.concatenate %0, %123 in 0 : vector<8x512xf32>, vector<8x512xf32> -> vector<16x512xf32>
    %c17_i32_88 = arith.constant 17 : i32
    %126 = tpu.dynamic_rotate %125 by %c17_i32_88 dim 1 : vector<16x512xf32>, i32 -> vector<16x512xf32>
    %c0_89 = arith.constant 0 : index
    %c0_90 = arith.constant 0 : index
    %127 = vector.load %arg3[%c0_89, %c0_90] : memref<9x512xf32, #tpu.memory_space<vmem>>, vector<1x512xf32>
    %128 = vector.broadcast %127 : vector<1x512xf32> to vector<16x512xf32>
    %129 = arith.mulf %126, %128 : vector<16x512xf32>
    %c0_91 = arith.constant 0 : index
    %c0_92 = arith.constant 0 : index
    %130 = vector.load %arg6[%c0_91, %c0_92] : memref<144x512xf32, #tpu.memory_space<vmem>>, vector<16x512xf32>
    tpu.vector_store %arg6[%c0_91, %c0_92], %129 {strides = array<i32>} : memref<144x512xf32, #tpu.memory_space<vmem>>, vector<16x512xf32>,
    %c16_i32_93 = arith.constant 16 : i32
    %131 = tpu.dynamic_rotate %125 by %c16_i32_93 dim 1 : vector<16x512xf32>, i32 -> vector<16x512xf32>
    %c1_94 = arith.constant 1 : index
    %c0_95 = arith.constant 0 : index
    %132 = vector.load %arg3[%c1_94, %c0_95] : memref<9x512xf32, #tpu.memory_space<vmem>>, vector<1x512xf32>
    %133 = vector.broadcast %132 : vector<1x512xf32> to vector<16x512xf32>
    %134 = arith.mulf %131, %133 : vector<16x512xf32>
    %c16_96 = arith.constant 16 : index
    %c0_97 = arith.constant 0 : index
    %135 = vector.load %arg6[%c16_96, %c0_97] : memref<144x512xf32, #tpu.memory_space<vmem>>, vector<16x512xf32>
    tpu.vector_store %arg6[%c16_96, %c0_97], %134 {strides = array<i32>} : memref<144x512xf32, #tpu.memory_space<vmem>>, vector<16x512xf32>,
    %c15_i32_98 = arith.constant 15 : i32
    %136 = tpu.dynamic_rotate %125 by %c15_i32_98 dim 1 : vector<16x512xf32>, i32 -> vector<16x512xf32>
    %c2_99 = arith.constant 2 : index
    %c0_100 = arith.constant 0 : index
    %137 = vector.load %arg3[%c2_99, %c0_100] : memref<9x512xf32, #tpu.memory_space<vmem>>, vector<1x512xf32>
    %138 = vector.broadcast %137 : vector<1x512xf32> to vector<16x512xf32>
    %139 = arith.mulf %136, %138 : vector<16x512xf32>
    %c32_101 = arith.constant 32 : index
    %c0_102 = arith.constant 0 : index
    %140 = vector.load %arg6[%c32_101, %c0_102] : memref<144x512xf32, #tpu.memory_space<vmem>>, vector<16x512xf32>
    tpu.vector_store %arg6[%c32_101, %c0_102], %139 {strides = array<i32>} : memref<144x512xf32, #tpu.memory_space<vmem>>, vector<16x512xf32>,
    %c1_i32_103 = arith.constant 1 : i32
    %141 = tpu.dynamic_rotate %125 by %c1_i32_103 dim 1 : vector<16x512xf32>, i32 -> vector<16x512xf32>
    %c3_104 = arith.constant 3 : index
    %c0_105 = arith.constant 0 : index
    %142 = vector.load %arg3[%c3_104, %c0_105] : memref<9x512xf32, #tpu.memory_space<vmem>>, vector<1x512xf32>
    %143 = vector.broadcast %142 : vector<1x512xf32> to vector<16x512xf32>
    %144 = arith.mulf %141, %143 : vector<16x512xf32>
    %c48_106 = arith.constant 48 : index
    %c0_107 = arith.constant 0 : index
    %145 = vector.load %arg6[%c48_106, %c0_107] : memref<144x512xf32, #tpu.memory_space<vmem>>, vector<16x512xf32>
    tpu.vector_store %arg6[%c48_106, %c0_107], %144 {strides = array<i32>} : memref<144x512xf32, #tpu.memory_space<vmem>>, vector<16x512xf32>,
    %c64_108 = arith.constant 64 : index
    %c0_109 = arith.constant 0 : index
    %146 = vector.load %arg6[%c64_108, %c0_109] : memref<144x512xf32, #tpu.memory_space<vmem>>, vector<16x512xf32>
    tpu.vector_store %arg6[%c64_108, %c0_109], %125 {strides = array<i32>} : memref<144x512xf32, #tpu.memory_space<vmem>>, vector<16x512xf32>,
    %c511_i32_110 = arith.constant 511 : i32
    %147 = tpu.dynamic_rotate %125 by %c511_i32_110 dim 1 : vector<16x512xf32>, i32 -> vector<16x512xf32>
    %c5_111 = arith.constant 5 : index
    %c0_112 = arith.constant 0 : index
    %148 = vector.load %arg3[%c5_111, %c0_112] : memref<9x512xf32, #tpu.memory_space<vmem>>, vector<1x512xf32>
    %149 = vector.broadcast %148 : vector<1x512xf32> to vector<16x512xf32>
    %150 = arith.mulf %147, %149 : vector<16x512xf32>
    %c80 = arith.constant 80 : index
    %c0_113 = arith.constant 0 : index
    %151 = vector.load %arg6[%c80, %c0_113] : memref<144x512xf32, #tpu.memory_space<vmem>>, vector<16x512xf32>
    tpu.vector_store %arg6[%c80, %c0_113], %150 {strides = array<i32>} : memref<144x512xf32, #tpu.memory_space<vmem>>, vector<16x512xf32>,
    %c497_i32_114 = arith.constant 497 : i32
    %152 = tpu.dynamic_rotate %125 by %c497_i32_114 dim 1 : vector<16x512xf32>, i32 -> vector<16x512xf32>
    %c6_115 = arith.constant 6 : index
    %c0_116 = arith.constant 0 : index
    %153 = vector.load %arg3[%c6_115, %c0_116] : memref<9x512xf32, #tpu.memory_space<vmem>>, vector<1x512xf32>
    %154 = vector.broadcast %153 : vector<1x512xf32> to vector<16x512xf32>
    %155 = arith.mulf %152, %154 : vector<16x512xf32>
    %c96_117 = arith.constant 96 : index
    %c0_118 = arith.constant 0 : index
    %156 = vector.load %arg6[%c96_117, %c0_118] : memref<144x512xf32, #tpu.memory_space<vmem>>, vector<16x512xf32>
    tpu.vector_store %arg6[%c96_117, %c0_118], %155 {strides = array<i32>} : memref<144x512xf32, #tpu.memory_space<vmem>>, vector<16x512xf32>,
    %c496_i32_119 = arith.constant 496 : i32
    %157 = tpu.dynamic_rotate %125 by %c496_i32_119 dim 1 : vector<16x512xf32>, i32 -> vector<16x512xf32>
    %c7_120 = arith.constant 7 : index
    %c0_121 = arith.constant 0 : index
    %158 = vector.load %arg3[%c7_120, %c0_121] : memref<9x512xf32, #tpu.memory_space<vmem>>, vector<1x512xf32>
    %159 = vector.broadcast %158 : vector<1x512xf32> to vector<16x512xf32>
    %160 = arith.mulf %157, %159 : vector<16x512xf32>
    %c112 = arith.constant 112 : index
    %c0_122 = arith.constant 0 : index
    %161 = vector.load %arg6[%c112, %c0_122] : memref<144x512xf32, #tpu.memory_space<vmem>>, vector<16x512xf32>
    tpu.vector_store %arg6[%c112, %c0_122], %160 {strides = array<i32>} : memref<144x512xf32, #tpu.memory_space<vmem>>, vector<16x512xf32>,
    %c495_i32_123 = arith.constant 495 : i32
    %162 = tpu.dynamic_rotate %125 by %c495_i32_123 dim 1 : vector<16x512xf32>, i32 -> vector<16x512xf32>
    %c8_124 = arith.constant 8 : index
    %c0_125 = arith.constant 0 : index
    %163 = vector.load %arg3[%c8_124, %c0_125] : memref<9x512xf32, #tpu.memory_space<vmem>>, vector<1x512xf32>
    %164 = vector.broadcast %163 : vector<1x512xf32> to vector<16x512xf32>
    %165 = arith.mulf %162, %164 : vector<16x512xf32>
    %c128_126 = arith.constant 128 : index
    %c0_127 = arith.constant 0 : index
    %166 = vector.load %arg6[%c128_126, %c0_127] : memref<144x512xf32, #tpu.memory_space<vmem>>, vector<16x512xf32>
    tpu.vector_store %arg6[%c128_126, %c0_127], %165 {strides = array<i32>} : memref<144x512xf32, #tpu.memory_space<vmem>>, vector<16x512xf32>,
    %c0_128 = arith.constant 0 : index
    %c0_129 = arith.constant 0 : index
    %167 = vector.load %arg6[%c0_128, %c0_129] : memref<144x512xf32, #tpu.memory_space<vmem>>, vector<144x512xf32>
    %c128_130 = arith.constant 128 : index
    %c0_131 = arith.constant 0 : index
    %168 = vector.load %arg1[%c128_130, %c0_131] : memref<384x288xbf16, #tpu.memory_space<vmem>>, vector<16x144xbf16>
    %169 = arith.truncf %167 : vector<144x512xf32> to vector<144x512xbf16>
    %cst_132 = arith.constant dense<0.000000e+00> : vector<16x512xf32>
    %170 = tpu.matmul %168, %169, %cst_132 {dimension_numbers = #tpu.dot_dimension_numbers<[1], [0], [0], [1], [0, 0, 1, 1], [], []>} : vector<16x144xbf16>, vector<144x512xbf16>, vector<16x512xf32> -> vector<16x512xf32>
    %c0_133 = arith.constant 0 : index
    %c4 = arith.constant 4 : index
    %171 = vector.load %arg2[%c0_133, %c4] : memref<32x12xf32, #tpu.memory_space<vmem>>, vector<16x1xf32>
    %172 = vector.broadcast %171 : vector<16x1xf32> to vector<16x512xf32>
    %173 = arith.addf %170, %172 : vector<16x512xf32>
    %cst_134 = arith.constant 0.000000e+00 : f32
    %174 = vector.broadcast %cst_134 : f32 to vector<16x512xf32>
    %175 = arith.cmpf oge, %173, %174 : vector<16x512xf32>
    %cst_135 = arith.constant 0.00999999977 : f32
    %176 = vector.broadcast %cst_135 : f32 to vector<16x512xf32>
    %177 = arith.mulf %176, %173 : vector<16x512xf32>
    %178 = arith.select %175, %173, %177 : vector<16x512xi1>, vector<16x512xf32>
    %c17_i32_136 = arith.constant 17 : i32
    %179 = tpu.dynamic_rotate %178 by %c17_i32_136 dim 1 : vector<16x512xf32>, i32 -> vector<16x512xf32>
    %c0_137 = arith.constant 0 : index
    %c0_138 = arith.constant 0 : index
    %180 = vector.load %arg3[%c0_137, %c0_138] : memref<9x512xf32, #tpu.memory_space<vmem>>, vector<1x512xf32>
    %181 = vector.broadcast %180 : vector<1x512xf32> to vector<16x512xf32>
    %182 = arith.mulf %179, %181 : vector<16x512xf32>
    %c0_139 = arith.constant 0 : index
    %c0_140 = arith.constant 0 : index
    %183 = vector.load %arg5[%c0_139, %c0_140] : memref<288x512xf32, #tpu.memory_space<vmem>>, vector<16x512xf32>
    tpu.vector_store %arg5[%c0_139, %c0_140], %182 {strides = array<i32>} : memref<288x512xf32, #tpu.memory_space<vmem>>, vector<16x512xf32>,
    %c16_i32_141 = arith.constant 16 : i32
    %184 = tpu.dynamic_rotate %178 by %c16_i32_141 dim 1 : vector<16x512xf32>, i32 -> vector<16x512xf32>
    %c1_142 = arith.constant 1 : index
    %c0_143 = arith.constant 0 : index
    %185 = vector.load %arg3[%c1_142, %c0_143] : memref<9x512xf32, #tpu.memory_space<vmem>>, vector<1x512xf32>
    %186 = vector.broadcast %185 : vector<1x512xf32> to vector<16x512xf32>
    %187 = arith.mulf %184, %186 : vector<16x512xf32>
    %c16_144 = arith.constant 16 : index
    %c0_145 = arith.constant 0 : index
    %188 = vector.load %arg5[%c16_144, %c0_145] : memref<288x512xf32, #tpu.memory_space<vmem>>, vector<16x512xf32>
    tpu.vector_store %arg5[%c16_144, %c0_145], %187 {strides = array<i32>} : memref<288x512xf32, #tpu.memory_space<vmem>>, vector<16x512xf32>,
    %c15_i32_146 = arith.constant 15 : i32
    %189 = tpu.dynamic_rotate %178 by %c15_i32_146 dim 1 : vector<16x512xf32>, i32 -> vector<16x512xf32>
    %c2_147 = arith.constant 2 : index
    %c0_148 = arith.constant 0 : index
    %190 = vector.load %arg3[%c2_147, %c0_148] : memref<9x512xf32, #tpu.memory_space<vmem>>, vector<1x512xf32>
    %191 = vector.broadcast %190 : vector<1x512xf32> to vector<16x512xf32>
    %192 = arith.mulf %189, %191 : vector<16x512xf32>
    %c32_149 = arith.constant 32 : index
    %c0_150 = arith.constant 0 : index
    %193 = vector.load %arg5[%c32_149, %c0_150] : memref<288x512xf32, #tpu.memory_space<vmem>>, vector<16x512xf32>
    tpu.vector_store %arg5[%c32_149, %c0_150], %192 {strides = array<i32>} : memref<288x512xf32, #tpu.memory_space<vmem>>, vector<16x512xf32>,
    %c1_i32_151 = arith.constant 1 : i32
    %194 = tpu.dynamic_rotate %178 by %c1_i32_151 dim 1 : vector<16x512xf32>, i32 -> vector<16x512xf32>
    %c3_152 = arith.constant 3 : index
    %c0_153 = arith.constant 0 : index
    %195 = vector.load %arg3[%c3_152, %c0_153] : memref<9x512xf32, #tpu.memory_space<vmem>>, vector<1x512xf32>
    %196 = vector.broadcast %195 : vector<1x512xf32> to vector<16x512xf32>
    %197 = arith.mulf %194, %196 : vector<16x512xf32>
    %c48_154 = arith.constant 48 : index
    %c0_155 = arith.constant 0 : index
    %198 = vector.load %arg5[%c48_154, %c0_155] : memref<288x512xf32, #tpu.memory_space<vmem>>, vector<16x512xf32>
    tpu.vector_store %arg5[%c48_154, %c0_155], %197 {strides = array<i32>} : memref<288x512xf32, #tpu.memory_space<vmem>>, vector<16x512xf32>,
    %c64_156 = arith.constant 64 : index
    %c0_157 = arith.constant 0 : index
    %199 = vector.load %arg5[%c64_156, %c0_157] : memref<288x512xf32, #tpu.memory_space<vmem>>, vector<16x512xf32>
    tpu.vector_store %arg5[%c64_156, %c0_157], %178 {strides = array<i32>} : memref<288x512xf32, #tpu.memory_space<vmem>>, vector<16x512xf32>,
    %c511_i32_158 = arith.constant 511 : i32
    %200 = tpu.dynamic_rotate %178 by %c511_i32_158 dim 1 : vector<16x512xf32>, i32 -> vector<16x512xf32>
    %c5_159 = arith.constant 5 : index
    %c0_160 = arith.constant 0 : index
    %201 = vector.load %arg3[%c5_159, %c0_160] : memref<9x512xf32, #tpu.memory_space<vmem>>, vector<1x512xf32>
    %202 = vector.broadcast %201 : vector<1x512xf32> to vector<16x512xf32>
    %203 = arith.mulf %200, %202 : vector<16x512xf32>
    %c80_161 = arith.constant 80 : index
    %c0_162 = arith.constant 0 : index
    %204 = vector.load %arg5[%c80_161, %c0_162] : memref<288x512xf32, #tpu.memory_space<vmem>>, vector<16x512xf32>
    tpu.vector_store %arg5[%c80_161, %c0_162], %203 {strides = array<i32>} : memref<288x512xf32, #tpu.memory_space<vmem>>, vector<16x512xf32>,
    %c497_i32_163 = arith.constant 497 : i32
    %205 = tpu.dynamic_rotate %178 by %c497_i32_163 dim 1 : vector<16x512xf32>, i32 -> vector<16x512xf32>
    %c6_164 = arith.constant 6 : index
    %c0_165 = arith.constant 0 : index
    %206 = vector.load %arg3[%c6_164, %c0_165] : memref<9x512xf32, #tpu.memory_space<vmem>>, vector<1x512xf32>
    %207 = vector.broadcast %206 : vector<1x512xf32> to vector<16x512xf32>
    %208 = arith.mulf %205, %207 : vector<16x512xf32>
    %c96_166 = arith.constant 96 : index
    %c0_167 = arith.constant 0 : index
    %209 = vector.load %arg5[%c96_166, %c0_167] : memref<288x512xf32, #tpu.memory_space<vmem>>, vector<16x512xf32>
    tpu.vector_store %arg5[%c96_166, %c0_167], %208 {strides = array<i32>} : memref<288x512xf32, #tpu.memory_space<vmem>>, vector<16x512xf32>,
    %c496_i32_168 = arith.constant 496 : i32
    %210 = tpu.dynamic_rotate %178 by %c496_i32_168 dim 1 : vector<16x512xf32>, i32 -> vector<16x512xf32>
    %c7_169 = arith.constant 7 : index
    %c0_170 = arith.constant 0 : index
    %211 = vector.load %arg3[%c7_169, %c0_170] : memref<9x512xf32, #tpu.memory_space<vmem>>, vector<1x512xf32>
    %212 = vector.broadcast %211 : vector<1x512xf32> to vector<16x512xf32>
    %213 = arith.mulf %210, %212 : vector<16x512xf32>
    %c112_171 = arith.constant 112 : index
    %c0_172 = arith.constant 0 : index
    %214 = vector.load %arg5[%c112_171, %c0_172] : memref<288x512xf32, #tpu.memory_space<vmem>>, vector<16x512xf32>
    tpu.vector_store %arg5[%c112_171, %c0_172], %213 {strides = array<i32>} : memref<288x512xf32, #tpu.memory_space<vmem>>, vector<16x512xf32>,
    %c495_i32_173 = arith.constant 495 : i32
    %215 = tpu.dynamic_rotate %178 by %c495_i32_173 dim 1 : vector<16x512xf32>, i32 -> vector<16x512xf32>
    %c8_174 = arith.constant 8 : index
    %c0_175 = arith.constant 0 : index
    %216 = vector.load %arg3[%c8_174, %c0_175] : memref<9x512xf32, #tpu.memory_space<vmem>>, vector<1x512xf32>
    %217 = vector.broadcast %216 : vector<1x512xf32> to vector<16x512xf32>
    %218 = arith.mulf %215, %217 : vector<16x512xf32>
    %c128_176 = arith.constant 128 : index
    %c0_177 = arith.constant 0 : index
    %219 = vector.load %arg5[%c128_176, %c0_177] : memref<288x512xf32, #tpu.memory_space<vmem>>, vector<16x512xf32>
    tpu.vector_store %arg5[%c128_176, %c0_177], %218 {strides = array<i32>} : memref<288x512xf32, #tpu.memory_space<vmem>>, vector<16x512xf32>,
    %c0_178 = arith.constant 0 : index
    %c0_179 = arith.constant 0 : index
    %220 = vector.load %arg5[%c0_178, %c0_179] : memref<288x512xf32, #tpu.memory_space<vmem>>, vector<144x512xf32>
    %c160_180 = arith.constant 160 : index
    %c0_181 = arith.constant 0 : index
    %221 = vector.load %arg1[%c160_180, %c0_181] : memref<384x288xbf16, #tpu.memory_space<vmem>>, vector<16x144xbf16>
    %222 = arith.truncf %220 : vector<144x512xf32> to vector<144x512xbf16>
    %cst_182 = arith.constant dense<0.000000e+00> : vector<16x512xf32>
    %223 = tpu.matmul %221, %222, %cst_182 {dimension_numbers = #tpu.dot_dimension_numbers<[1], [0], [0], [1], [0, 0, 1, 1], [], []>} : vector<16x144xbf16>, vector<144x512xbf16>, vector<16x512xf32> -> vector<16x512xf32>
    %c0_183 = arith.constant 0 : index
    %c5_184 = arith.constant 5 : index
    %224 = vector.load %arg2[%c0_183, %c5_184] : memref<32x12xf32, #tpu.memory_space<vmem>>, vector<16x1xf32>
    %225 = vector.broadcast %224 : vector<16x1xf32> to vector<16x512xf32>
    %226 = arith.addf %223, %225 : vector<16x512xf32>
    %cst_185 = arith.constant 0.000000e+00 : f32
    %227 = vector.broadcast %cst_185 : f32 to vector<16x512xf32>
    %228 = arith.cmpf oge, %226, %227 : vector<16x512xf32>
    %cst_186 = arith.constant 0.00999999977 : f32
    %229 = vector.broadcast %cst_186 : f32 to vector<16x512xf32>
    %230 = arith.mulf %229, %226 : vector<16x512xf32>
    %231 = arith.select %228, %226, %230 : vector<16x512xi1>, vector<16x512xf32>
    %c192_187 = arith.constant 192 : index
    %c0_188 = arith.constant 0 : index
    %232 = vector.load %arg1[%c192_187, %c0_188] : memref<384x288xbf16, #tpu.memory_space<vmem>>, vector<8x16xbf16>
    %233 = arith.truncf %231 : vector<16x512xf32> to vector<16x512xbf16>
    %cst_189 = arith.constant dense<0.000000e+00> : vector<8x512xf32>
    %234 = tpu.matmul %232, %233, %cst_189 {dimension_numbers = #tpu.dot_dimension_numbers<[1], [0], [0], [1], [0, 0, 1, 1], [], []>} : vector<8x16xbf16>, vector<16x512xbf16>, vector<8x512xf32> -> vector<8x512xf32>
    %c0_190 = arith.constant 0 : index
    %c6_191 = arith.constant 6 : index
    %235 = vector.load %arg2[%c0_190, %c6_191] : memref<32x12xf32, #tpu.memory_space<vmem>>, vector<8x1xf32>
    %236 = vector.broadcast %235 : vector<8x1xf32> to vector<8x512xf32>
    %237 = arith.addf %234, %236 : vector<8x512xf32>
    %cst_192 = arith.constant 0.000000e+00 : f32
    %238 = vector.broadcast %cst_192 : f32 to vector<8x512xf32>
    %239 = arith.cmpf oge, %237, %238 : vector<8x512xf32>
    %cst_193 = arith.constant 0.00999999977 : f32
    %240 = vector.broadcast %cst_193 : f32 to vector<8x512xf32>
    %241 = arith.mulf %240, %237 : vector<8x512xf32>
    %242 = arith.select %239, %237, %241 : vector<8x512xi1>, vector<8x512xf32>
    %c224_194 = arith.constant 224 : index
    %c0_195 = arith.constant 0 : index
    %243 = vector.load %arg1[%c224_194, %c0_195] : memref<384x288xbf16, #tpu.memory_space<vmem>>, vector<4x8xbf16>
    %244 = arith.truncf %242 : vector<8x512xf32> to vector<8x512xbf16>
    %cst_196 = arith.constant dense<0.000000e+00> : vector<4x512xf32>
    %245 = tpu.matmul %243, %244, %cst_196 {dimension_numbers = #tpu.dot_dimension_numbers<[1], [0], [0], [1], [0, 0, 1, 1], [], []>} : vector<4x8xbf16>, vector<8x512xbf16>, vector<4x512xf32> -> vector<4x512xf32>
    %c0_197 = arith.constant 0 : index
    %c7_198 = arith.constant 7 : index
    %246 = vector.load %arg2[%c0_197, %c7_198] : memref<32x12xf32, #tpu.memory_space<vmem>>, vector<4x1xf32>
    %247 = vector.broadcast %246 : vector<4x1xf32> to vector<4x512xf32>
    %248 = arith.addf %245, %247 : vector<4x512xf32>
    %c17_i32_199 = arith.constant 17 : i32
    %249 = tpu.dynamic_rotate %248 by %c17_i32_199 dim 1 : vector<4x512xf32>, i32 -> vector<4x512xf32>
    %c0_200 = arith.constant 0 : index
    %c0_201 = arith.constant 0 : index
    %250 = vector.load %arg3[%c0_200, %c0_201] : memref<9x512xf32, #tpu.memory_space<vmem>>, vector<1x512xf32>
    %251 = vector.broadcast %250 : vector<1x512xf32> to vector<4x512xf32>
    %252 = arith.mulf %249, %251 : vector<4x512xf32>
    %c8_202 = arith.constant 8 : index
    %c0_203 = arith.constant 0 : index
    %253 = vector.load %arg6[%c8_202, %c0_203] : memref<144x512xf32, #tpu.memory_space<vmem>>, vector<4x512xf32>
    tpu.vector_store %arg6[%c8_202, %c0_203], %252 {strides = array<i32>} : memref<144x512xf32, #tpu.memory_space<vmem>>, vector<4x512xf32>,
    %c16_i32_204 = arith.constant 16 : i32
    %254 = tpu.dynamic_rotate %248 by %c16_i32_204 dim 1 : vector<4x512xf32>, i32 -> vector<4x512xf32>
    %c1_205 = arith.constant 1 : index
    %c0_206 = arith.constant 0 : index
    %255 = vector.load %arg3[%c1_205, %c0_206] : memref<9x512xf32, #tpu.memory_space<vmem>>, vector<1x512xf32>
    %256 = vector.broadcast %255 : vector<1x512xf32> to vector<4x512xf32>
    %257 = arith.mulf %254, %256 : vector<4x512xf32>
    %c24_207 = arith.constant 24 : index
    %c0_208 = arith.constant 0 : index
    %258 = vector.load %arg6[%c24_207, %c0_208] : memref<144x512xf32, #tpu.memory_space<vmem>>, vector<4x512xf32>
    tpu.vector_store %arg6[%c24_207, %c0_208], %257 {strides = array<i32>} : memref<144x512xf32, #tpu.memory_space<vmem>>, vector<4x512xf32>,
    %c15_i32_209 = arith.constant 15 : i32
    %259 = tpu.dynamic_rotate %248 by %c15_i32_209 dim 1 : vector<4x512xf32>, i32 -> vector<4x512xf32>
    %c2_210 = arith.constant 2 : index
    %c0_211 = arith.constant 0 : index
    %260 = vector.load %arg3[%c2_210, %c0_211] : memref<9x512xf32, #tpu.memory_space<vmem>>, vector<1x512xf32>
    %261 = vector.broadcast %260 : vector<1x512xf32> to vector<4x512xf32>
    %262 = arith.mulf %259, %261 : vector<4x512xf32>
    %c40_212 = arith.constant 40 : index
    %c0_213 = arith.constant 0 : index
    %263 = vector.load %arg6[%c40_212, %c0_213] : memref<144x512xf32, #tpu.memory_space<vmem>>, vector<4x512xf32>
    tpu.vector_store %arg6[%c40_212, %c0_213], %262 {strides = array<i32>} : memref<144x512xf32, #tpu.memory_space<vmem>>, vector<4x512xf32>,
    %c1_i32_214 = arith.constant 1 : i32
    %264 = tpu.dynamic_rotate %248 by %c1_i32_214 dim 1 : vector<4x512xf32>, i32 -> vector<4x512xf32>
    %c3_215 = arith.constant 3 : index
    %c0_216 = arith.constant 0 : index
    %265 = vector.load %arg3[%c3_215, %c0_216] : memref<9x512xf32, #tpu.memory_space<vmem>>, vector<1x512xf32>
    %266 = vector.broadcast %265 : vector<1x512xf32> to vector<4x512xf32>
    %267 = arith.mulf %264, %266 : vector<4x512xf32>
    %c56_217 = arith.constant 56 : index
    %c0_218 = arith.constant 0 : index
    %268 = vector.load %arg6[%c56_217, %c0_218] : memref<144x512xf32, #tpu.memory_space<vmem>>, vector<4x512xf32>
    tpu.vector_store %arg6[%c56_217, %c0_218], %267 {strides = array<i32>} : memref<144x512xf32, #tpu.memory_space<vmem>>, vector<4x512xf32>,
    %c72 = arith.constant 72 : index
    %c0_219 = arith.constant 0 : index
    %269 = vector.load %arg6[%c72, %c0_219] : memref<144x512xf32, #tpu.memory_space<vmem>>, vector<4x512xf32>
    tpu.vector_store %arg6[%c72, %c0_219], %248 {strides = array<i32>} : memref<144x512xf32, #tpu.memory_space<vmem>>, vector<4x512xf32>,
    %c511_i32_220 = arith.constant 511 : i32
    %270 = tpu.dynamic_rotate %248 by %c511_i32_220 dim 1 : vector<4x512xf32>, i32 -> vector<4x512xf32>
    %c5_221 = arith.constant 5 : index
    %c0_222 = arith.constant 0 : index
    %271 = vector.load %arg3[%c5_221, %c0_222] : memref<9x512xf32, #tpu.memory_space<vmem>>, vector<1x512xf32>
    %272 = vector.broadcast %271 : vector<1x512xf32> to vector<4x512xf32>
    %273 = arith.mulf %270, %272 : vector<4x512xf32>
    %c88 = arith.constant 88 : index
    %c0_223 = arith.constant 0 : index
    %274 = vector.load %arg6[%c88, %c0_223] : memref<144x512xf32, #tpu.memory_space<vmem>>, vector<4x512xf32>
    tpu.vector_store %arg6[%c88, %c0_223], %273 {strides = array<i32>} : memref<144x512xf32, #tpu.memory_space<vmem>>, vector<4x512xf32>,
    %c497_i32_224 = arith.constant 497 : i32
    %275 = tpu.dynamic_rotate %248 by %c497_i32_224 dim 1 : vector<4x512xf32>, i32 -> vector<4x512xf32>
    %c6_225 = arith.constant 6 : index
    %c0_226 = arith.constant 0 : index
    %276 = vector.load %arg3[%c6_225, %c0_226] : memref<9x512xf32, #tpu.memory_space<vmem>>, vector<1x512xf32>
    %277 = vector.broadcast %276 : vector<1x512xf32> to vector<4x512xf32>
    %278 = arith.mulf %275, %277 : vector<4x512xf32>
    %c104 = arith.constant 104 : index
    %c0_227 = arith.constant 0 : index
    %279 = vector.load %arg6[%c104, %c0_227] : memref<144x512xf32, #tpu.memory_space<vmem>>, vector<4x512xf32>
    tpu.vector_store %arg6[%c104, %c0_227], %278 {strides = array<i32>} : memref<144x512xf32, #tpu.memory_space<vmem>>, vector<4x512xf32>,
    %c496_i32_228 = arith.constant 496 : i32
    %280 = tpu.dynamic_rotate %248 by %c496_i32_228 dim 1 : vector<4x512xf32>, i32 -> vector<4x512xf32>
    %c7_229 = arith.constant 7 : index
    %c0_230 = arith.constant 0 : index
    %281 = vector.load %arg3[%c7_229, %c0_230] : memref<9x512xf32, #tpu.memory_space<vmem>>, vector<1x512xf32>
    %282 = vector.broadcast %281 : vector<1x512xf32> to vector<4x512xf32>
    %283 = arith.mulf %280, %282 : vector<4x512xf32>
    %c120 = arith.constant 120 : index
    %c0_231 = arith.constant 0 : index
    %284 = vector.load %arg6[%c120, %c0_231] : memref<144x512xf32, #tpu.memory_space<vmem>>, vector<4x512xf32>
    tpu.vector_store %arg6[%c120, %c0_231], %283 {strides = array<i32>} : memref<144x512xf32, #tpu.memory_space<vmem>>, vector<4x512xf32>,
    %c495_i32_232 = arith.constant 495 : i32
    %285 = tpu.dynamic_rotate %248 by %c495_i32_232 dim 1 : vector<4x512xf32>, i32 -> vector<4x512xf32>
    %c8_233 = arith.constant 8 : index
    %c0_234 = arith.constant 0 : index
    %286 = vector.load %arg3[%c8_233, %c0_234] : memref<9x512xf32, #tpu.memory_space<vmem>>, vector<1x512xf32>
    %287 = vector.broadcast %286 : vector<1x512xf32> to vector<4x512xf32>
    %288 = arith.mulf %285, %287 : vector<4x512xf32>
    %c136 = arith.constant 136 : index
    %c0_235 = arith.constant 0 : index
    %289 = vector.load %arg6[%c136, %c0_235] : memref<144x512xf32, #tpu.memory_space<vmem>>, vector<4x512xf32>
    tpu.vector_store %arg6[%c136, %c0_235], %288 {strides = array<i32>} : memref<144x512xf32, #tpu.memory_space<vmem>>, vector<4x512xf32>,
    %c0_236 = arith.constant 0 : index
    %c0_237 = arith.constant 0 : index
    %290 = vector.load %arg6[%c0_236, %c0_237] : memref<144x512xf32, #tpu.memory_space<vmem>>, vector<144x512xf32>
    %c256_238 = arith.constant 256 : index
    %c0_239 = arith.constant 0 : index
    %291 = vector.load %arg1[%c256_238, %c0_239] : memref<384x288xbf16, #tpu.memory_space<vmem>>, vector<16x144xbf16>
    %292 = arith.truncf %290 : vector<144x512xf32> to vector<144x512xbf16>
    %cst_240 = arith.constant dense<0.000000e+00> : vector<16x512xf32>
    %293 = tpu.matmul %291, %292, %cst_240 {dimension_numbers = #tpu.dot_dimension_numbers<[1], [0], [0], [1], [0, 0, 1, 1], [], []>} : vector<16x144xbf16>, vector<144x512xbf16>, vector<16x512xf32> -> vector<16x512xf32>
    %c0_241 = arith.constant 0 : index
    %c8_242 = arith.constant 8 : index
    %294 = vector.load %arg2[%c0_241, %c8_242] : memref<32x12xf32, #tpu.memory_space<vmem>>, vector<16x1xf32>
    %295 = vector.broadcast %294 : vector<16x1xf32> to vector<16x512xf32>
    %296 = arith.addf %293, %295 : vector<16x512xf32>
    %cst_243 = arith.constant 0.000000e+00 : f32
    %297 = vector.broadcast %cst_243 : f32 to vector<16x512xf32>
    %298 = arith.cmpf oge, %296, %297 : vector<16x512xf32>
    %cst_244 = arith.constant 0.00999999977 : f32
    %299 = vector.broadcast %cst_244 : f32 to vector<16x512xf32>
    %300 = arith.mulf %299, %296 : vector<16x512xf32>
    %301 = arith.select %298, %296, %300 : vector<16x512xi1>, vector<16x512xf32>
    %c17_i32_245 = arith.constant 17 : i32
    %302 = tpu.dynamic_rotate %301 by %c17_i32_245 dim 1 : vector<16x512xf32>, i32 -> vector<16x512xf32>
    %c0_246 = arith.constant 0 : index
    %c0_247 = arith.constant 0 : index
    %303 = vector.load %arg3[%c0_246, %c0_247] : memref<9x512xf32, #tpu.memory_space<vmem>>, vector<1x512xf32>
    %304 = vector.broadcast %303 : vector<1x512xf32> to vector<16x512xf32>
    %305 = arith.mulf %302, %304 : vector<16x512xf32>
    %c0_248 = arith.constant 0 : index
    %c0_249 = arith.constant 0 : index
    %306 = vector.load %arg5[%c0_248, %c0_249] : memref<288x512xf32, #tpu.memory_space<vmem>>, vector<16x512xf32>
    tpu.vector_store %arg5[%c0_248, %c0_249], %305 {strides = array<i32>} : memref<288x512xf32, #tpu.memory_space<vmem>>, vector<16x512xf32>,
    %c16_i32_250 = arith.constant 16 : i32
    %307 = tpu.dynamic_rotate %301 by %c16_i32_250 dim 1 : vector<16x512xf32>, i32 -> vector<16x512xf32>
    %c1_251 = arith.constant 1 : index
    %c0_252 = arith.constant 0 : index
    %308 = vector.load %arg3[%c1_251, %c0_252] : memref<9x512xf32, #tpu.memory_space<vmem>>, vector<1x512xf32>
    %309 = vector.broadcast %308 : vector<1x512xf32> to vector<16x512xf32>
    %310 = arith.mulf %307, %309 : vector<16x512xf32>
    %c16_253 = arith.constant 16 : index
    %c0_254 = arith.constant 0 : index
    %311 = vector.load %arg5[%c16_253, %c0_254] : memref<288x512xf32, #tpu.memory_space<vmem>>, vector<16x512xf32>
    tpu.vector_store %arg5[%c16_253, %c0_254], %310 {strides = array<i32>} : memref<288x512xf32, #tpu.memory_space<vmem>>, vector<16x512xf32>,
    %c15_i32_255 = arith.constant 15 : i32
    %312 = tpu.dynamic_rotate %301 by %c15_i32_255 dim 1 : vector<16x512xf32>, i32 -> vector<16x512xf32>
    %c2_256 = arith.constant 2 : index
    %c0_257 = arith.constant 0 : index
    %313 = vector.load %arg3[%c2_256, %c0_257] : memref<9x512xf32, #tpu.memory_space<vmem>>, vector<1x512xf32>
    %314 = vector.broadcast %313 : vector<1x512xf32> to vector<16x512xf32>
    %315 = arith.mulf %312, %314 : vector<16x512xf32>
    %c32_258 = arith.constant 32 : index
    %c0_259 = arith.constant 0 : index
    %316 = vector.load %arg5[%c32_258, %c0_259] : memref<288x512xf32, #tpu.memory_space<vmem>>, vector<16x512xf32>
    tpu.vector_store %arg5[%c32_258, %c0_259], %315 {strides = array<i32>} : memref<288x512xf32, #tpu.memory_space<vmem>>, vector<16x512xf32>,
    %c1_i32_260 = arith.constant 1 : i32
    %317 = tpu.dynamic_rotate %301 by %c1_i32_260 dim 1 : vector<16x512xf32>, i32 -> vector<16x512xf32>
    %c3_261 = arith.constant 3 : index
    %c0_262 = arith.constant 0 : index
    %318 = vector.load %arg3[%c3_261, %c0_262] : memref<9x512xf32, #tpu.memory_space<vmem>>, vector<1x512xf32>
    %319 = vector.broadcast %318 : vector<1x512xf32> to vector<16x512xf32>
    %320 = arith.mulf %317, %319 : vector<16x512xf32>
    %c48_263 = arith.constant 48 : index
    %c0_264 = arith.constant 0 : index
    %321 = vector.load %arg5[%c48_263, %c0_264] : memref<288x512xf32, #tpu.memory_space<vmem>>, vector<16x512xf32>
    tpu.vector_store %arg5[%c48_263, %c0_264], %320 {strides = array<i32>} : memref<288x512xf32, #tpu.memory_space<vmem>>, vector<16x512xf32>,
    %c64_265 = arith.constant 64 : index
    %c0_266 = arith.constant 0 : index
    %322 = vector.load %arg5[%c64_265, %c0_266] : memref<288x512xf32, #tpu.memory_space<vmem>>, vector<16x512xf32>
    tpu.vector_store %arg5[%c64_265, %c0_266], %301 {strides = array<i32>} : memref<288x512xf32, #tpu.memory_space<vmem>>, vector<16x512xf32>,
    %c511_i32_267 = arith.constant 511 : i32
    %323 = tpu.dynamic_rotate %301 by %c511_i32_267 dim 1 : vector<16x512xf32>, i32 -> vector<16x512xf32>
    %c5_268 = arith.constant 5 : index
    %c0_269 = arith.constant 0 : index
    %324 = vector.load %arg3[%c5_268, %c0_269] : memref<9x512xf32, #tpu.memory_space<vmem>>, vector<1x512xf32>
    %325 = vector.broadcast %324 : vector<1x512xf32> to vector<16x512xf32>
    %326 = arith.mulf %323, %325 : vector<16x512xf32>
    %c80_270 = arith.constant 80 : index
    %c0_271 = arith.constant 0 : index
    %327 = vector.load %arg5[%c80_270, %c0_271] : memref<288x512xf32, #tpu.memory_space<vmem>>, vector<16x512xf32>
    tpu.vector_store %arg5[%c80_270, %c0_271], %326 {strides = array<i32>} : memref<288x512xf32, #tpu.memory_space<vmem>>, vector<16x512xf32>,
    %c497_i32_272 = arith.constant 497 : i32
    %328 = tpu.dynamic_rotate %301 by %c497_i32_272 dim 1 : vector<16x512xf32>, i32 -> vector<16x512xf32>
    %c6_273 = arith.constant 6 : index
    %c0_274 = arith.constant 0 : index
    %329 = vector.load %arg3[%c6_273, %c0_274] : memref<9x512xf32, #tpu.memory_space<vmem>>, vector<1x512xf32>
    %330 = vector.broadcast %329 : vector<1x512xf32> to vector<16x512xf32>
    %331 = arith.mulf %328, %330 : vector<16x512xf32>
    %c96_275 = arith.constant 96 : index
    %c0_276 = arith.constant 0 : index
    %332 = vector.load %arg5[%c96_275, %c0_276] : memref<288x512xf32, #tpu.memory_space<vmem>>, vector<16x512xf32>
    tpu.vector_store %arg5[%c96_275, %c0_276], %331 {strides = array<i32>} : memref<288x512xf32, #tpu.memory_space<vmem>>, vector<16x512xf32>,
    %c496_i32_277 = arith.constant 496 : i32
    %333 = tpu.dynamic_rotate %301 by %c496_i32_277 dim 1 : vector<16x512xf32>, i32 -> vector<16x512xf32>
    %c7_278 = arith.constant 7 : index
    %c0_279 = arith.constant 0 : index
    %334 = vector.load %arg3[%c7_278, %c0_279] : memref<9x512xf32, #tpu.memory_space<vmem>>, vector<1x512xf32>
    %335 = vector.broadcast %334 : vector<1x512xf32> to vector<16x512xf32>
    %336 = arith.mulf %333, %335 : vector<16x512xf32>
    %c112_280 = arith.constant 112 : index
    %c0_281 = arith.constant 0 : index
    %337 = vector.load %arg5[%c112_280, %c0_281] : memref<288x512xf32, #tpu.memory_space<vmem>>, vector<16x512xf32>
    tpu.vector_store %arg5[%c112_280, %c0_281], %336 {strides = array<i32>} : memref<288x512xf32, #tpu.memory_space<vmem>>, vector<16x512xf32>,
    %c495_i32_282 = arith.constant 495 : i32
    %338 = tpu.dynamic_rotate %301 by %c495_i32_282 dim 1 : vector<16x512xf32>, i32 -> vector<16x512xf32>
    %c8_283 = arith.constant 8 : index
    %c0_284 = arith.constant 0 : index
    %339 = vector.load %arg3[%c8_283, %c0_284] : memref<9x512xf32, #tpu.memory_space<vmem>>, vector<1x512xf32>
    %340 = vector.broadcast %339 : vector<1x512xf32> to vector<16x512xf32>
    %341 = arith.mulf %338, %340 : vector<16x512xf32>
    %c128_285 = arith.constant 128 : index
    %c0_286 = arith.constant 0 : index
    %342 = vector.load %arg5[%c128_285, %c0_286] : memref<288x512xf32, #tpu.memory_space<vmem>>, vector<16x512xf32>
    tpu.vector_store %arg5[%c128_285, %c0_286], %341 {strides = array<i32>} : memref<288x512xf32, #tpu.memory_space<vmem>>, vector<16x512xf32>,
    %c0_287 = arith.constant 0 : index
    %c0_288 = arith.constant 0 : index
    %343 = vector.load %arg5[%c0_287, %c0_288] : memref<288x512xf32, #tpu.memory_space<vmem>>, vector<144x512xf32>
    %c288 = arith.constant 288 : index
    %c0_289 = arith.constant 0 : index
    %344 = vector.load %arg1[%c288, %c0_289] : memref<384x288xbf16, #tpu.memory_space<vmem>>, vector<16x144xbf16>
    %345 = arith.truncf %343 : vector<144x512xf32> to vector<144x512xbf16>
    %cst_290 = arith.constant dense<0.000000e+00> : vector<16x512xf32>
    %346 = tpu.matmul %344, %345, %cst_290 {dimension_numbers = #tpu.dot_dimension_numbers<[1], [0], [0], [1], [0, 0, 1, 1], [], []>} : vector<16x144xbf16>, vector<144x512xbf16>, vector<16x512xf32> -> vector<16x512xf32>
    %c0_291 = arith.constant 0 : index
    %c9 = arith.constant 9 : index
    %347 = vector.load %arg2[%c0_291, %c9] : memref<32x12xf32, #tpu.memory_space<vmem>>, vector<16x1xf32>
    %348 = vector.broadcast %347 : vector<16x1xf32> to vector<16x512xf32>
    %349 = arith.addf %346, %348 : vector<16x512xf32>
    %cst_292 = arith.constant 0.000000e+00 : f32
    %350 = vector.broadcast %cst_292 : f32 to vector<16x512xf32>
    %351 = arith.cmpf oge, %349, %350 : vector<16x512xf32>
    %cst_293 = arith.constant 0.00999999977 : f32
    %352 = vector.broadcast %cst_293 : f32 to vector<16x512xf32>
    %353 = arith.mulf %352, %349 : vector<16x512xf32>
    %354 = arith.select %351, %349, %353 : vector<16x512xi1>, vector<16x512xf32>
    %c320 = arith.constant 320 : index
    %c0_294 = arith.constant 0 : index
    %355 = vector.load %arg1[%c320, %c0_294] : memref<384x288xbf16, #tpu.memory_space<vmem>>, vector<8x16xbf16>
    %356 = arith.truncf %354 : vector<16x512xf32> to vector<16x512xbf16>
    %cst_295 = arith.constant dense<0.000000e+00> : vector<8x512xf32>
    %357 = tpu.matmul %355, %356, %cst_295 {dimension_numbers = #tpu.dot_dimension_numbers<[1], [0], [0], [1], [0, 0, 1, 1], [], []>} : vector<8x16xbf16>, vector<16x512xbf16>, vector<8x512xf32> -> vector<8x512xf32>
    %c0_296 = arith.constant 0 : index
    %c10 = arith.constant 10 : index
    %358 = vector.load %arg2[%c0_296, %c10] : memref<32x12xf32, #tpu.memory_space<vmem>>, vector<8x1xf32>
    %359 = vector.broadcast %358 : vector<8x1xf32> to vector<8x512xf32>
    %360 = arith.addf %357, %359 : vector<8x512xf32>
    %cst_297 = arith.constant 0.000000e+00 : f32
    %361 = vector.broadcast %cst_297 : f32 to vector<8x512xf32>
    %362 = arith.cmpf oge, %360, %361 : vector<8x512xf32>
    %cst_298 = arith.constant 0.00999999977 : f32
    %363 = vector.broadcast %cst_298 : f32 to vector<8x512xf32>
    %364 = arith.mulf %363, %360 : vector<8x512xf32>
    %365 = arith.select %362, %360, %364 : vector<8x512xi1>, vector<8x512xf32>
    %c352 = arith.constant 352 : index
    %c0_299 = arith.constant 0 : index
    %366 = vector.load %arg1[%c352, %c0_299] : memref<384x288xbf16, #tpu.memory_space<vmem>>, vector<4x8xbf16>
    %367 = arith.truncf %365 : vector<8x512xf32> to vector<8x512xbf16>
    %cst_300 = arith.constant dense<0.000000e+00> : vector<4x512xf32>
    %368 = tpu.matmul %366, %367, %cst_300 {dimension_numbers = #tpu.dot_dimension_numbers<[1], [0], [0], [1], [0, 0, 1, 1], [], []>} : vector<4x8xbf16>, vector<8x512xbf16>, vector<4x512xf32> -> vector<4x512xf32>
    %c0_301 = arith.constant 0 : index
    %c11 = arith.constant 11 : index
    %369 = vector.load %arg2[%c0_301, %c11] : memref<32x12xf32, #tpu.memory_space<vmem>>, vector<4x1xf32>
    %370 = vector.broadcast %369 : vector<4x1xf32> to vector<4x512xf32>
    %371 = arith.addf %368, %370 : vector<4x512xf32>
    %372 = tpu.concatenate %248, %371 in 0 : vector<4x512xf32>, vector<4x512xf32> -> vector<8x512xf32>
    %c8_302 = arith.constant 8 : index
    %c0_303 = arith.constant 0 : index
    %373 = vector.load %arg4[%c8_302, %c0_303] : memref<16x512xf32, #tpu.memory_space<vmem>>, vector<8x512xf32>
    tpu.vector_store %arg4[%c8_302, %c0_303], %372 {strides = array<i32>} : memref<16x512xf32, #tpu.memory_space<vmem>>, vector<8x512xf32>,
    return
  }
}

</mosaic_0001>

<llo_original>
// kernel: forward.1
$region0: #{forward.1}
  #allocation0 [shape = 'u32[]', space=smem, size = 0x4, offset = 0x4, fixed_abs, tag = 'smem constant byte address 0x4 - core index']
  #allocation1 [shape = 'u32[144,128]{1,0:T(1,128)}', space=vmem, size = 0x12000, scoped, tag = 'internal scratch']
  #allocation2 [shape = 'f32[288,512]{1,0:T(8,128)}', space=vmem, size = 0x90000, scoped, tag = 'scratch operand']
  #allocation3 [shape = 'f32[144,512]{1,0:T(8,128)}', space=vmem, size = 0x48000, scoped, tag = 'scratch operand']
  %s0 = inlined_call_operand.vmem [shape: f32[8,512], index: 0, kind: input, shape index: {}]
  %s1 = inlined_call_operand.vmem [shape: bf16[384,288], index: 1, kind: input, shape index: {}]
  %s2 = inlined_call_operand.vmem [shape: f32[32,12], index: 2, kind: input, shape index: {}]
  %s3 = inlined_call_operand.vmem [shape: f32[9,512], index: 3, kind: input, shape index: {}]
  %s4 = inlined_call_operand.vmem [shape: f32[16,512], index: 4, kind: output, shape index: {}]
  %s5 = sld [smem:[#allocation0]]
  $region26: #{forward.1} parent=0
    _
  %s7 = ssub.s32 1, %s5
  %s8 = scalar_select 0, %s7, %s5
  // Predicated region
  $region2: #{forward.1} parent=0 // pred_check
    _
  $region3: #{forward.1} parent=0 // pred_check_branch
    %10 = sbr.rel (0) target = $region5
  $region4: #{forward.1} parent=0 // pred_region
    _
  $region5: #{forward.1} parent=0 // pred_fallthru
    _
  // Predicated region
  $region6: #{forward.1} parent=0 // pred_check
    _
  $region7: #{forward.1} parent=0 // pred_check_branch
    %12 = sbr.rel (0) target = $region9
  $region8: #{forward.1} parent=0 // pred_region
    _
  $region9: #{forward.1} parent=0 // pred_fallthru
    _
  // Predicated region
  $region10: #{forward.1} parent=0 // pred_check
    _
  $region11: #{forward.1} parent=0 // pred_check_branch
    %14 = sbr.rel (0) target = $region13
  $region12: #{forward.1} parent=0 // pred_region
    _
  $region13: #{forward.1} parent=0 // pred_fallthru
    _
  // Predicated region
  $region14: #{forward.1} parent=0 // pred_check
    _
  $region15: #{forward.1} parent=0 // pred_check_branch
    %16 = sbr.rel (0) target = $region17
  $region16: #{forward.1} parent=0 // pred_region
    _
  $region17: #{forward.1} parent=0 // pred_fallthru
    _
  %v18 = vld [vmem:[%s0] sm:$0xff]
  %v19 = vld [vmem:[%s0 + $0x8] sm:$0xff]
  %v20 = vld [vmem:[%s0 + $0x10] sm:$0xff]
  %v21 = vld [vmem:[%s0 + $0x18] sm:$0xff]
  %22 = vrot.lane.b32.xlu0 %v18, 17
  %v23 = vpop.permute.xlu0 %22
  %24 = vrot.lane.b32.xlu0 %v19, 17
  %v25 = vpop.permute.xlu0 %24
  %26 = vrot.lane.b32.xlu0 %v20, 17
  %v27 = vpop.permute.xlu0 %26
  %28 = vrot.lane.b32.xlu0 %v21, 17
  %v29 = vpop.permute.xlu0 %28
  %v30 = vlaneseq
  %v31 = vand.u32 %v30, 127
  %vm32 = vcmp.lt.s32.totalorder %v31, 17
  %v33 = vsel %vm32, %v27, %v29
  %v34 = vsel %vm32, %v25, %v27
  %v35 = vsel %vm32, %v23, %v25
  %v36 = vsel %vm32, %v29, %v23
  %v37 = vld [vmem:[%s3] ss:$8 sm:$0xf]
  %v39 = vlaneseq
  %v40 = vshrl.u32 %v39, 7
  %v41 = vsub.s32 0, %v40
  %v42 = vrot.slane %v37, %v41
  %v43 = vlaneseq
  %v44 = vshrl.u32 %v43, 7
  %v45 = vsub.s32 1, %v44
  %v46 = vrot.slane %v37, %v45
  %v47 = vlaneseq
  %v48 = vshrl.u32 %v47, 7
  %v49 = vsub.s32 2, %v48
  %v50 = vrot.slane %v37, %v49
  %v51 = vlaneseq
  %v52 = vshrl.u32 %v51, 7
  %v53 = vsub.s32 3, %v52
  %v54 = vrot.slane %v37, %v53
  %v59 = vmul.f32 %v36, %v42
  %v60 = vmul.f32 %v35, %v46
  %v61 = vmul.f32 %v34, %v50
  %v62 = vmul.f32 %v33, %v54
  %63 = vst [vmem:[#allocation2] sm:$0xff] %v59
  %64 = vst [vmem:[#allocation2 + $0x8] sm:$0xff] %v60
  %65 = vst [vmem:[#allocation2 + $0x10] sm:$0xff] %v61
  %66 = vst [vmem:[#allocation2 + $0x18] sm:$0xff] %v62
  %67 = vrot.lane.b32.xlu0 %v18, 16
  %v68 = vpop.permute.xlu0 %67
  %69 = vrot.lane.b32.xlu0 %v19, 16
  %v70 = vpop.permute.xlu0 %69
  %71 = vrot.lane.b32.xlu0 %v20, 16
  %v72 = vpop.permute.xlu0 %71
  %73 = vrot.lane.b32.xlu0 %v21, 16
  %v74 = vpop.permute.xlu0 %73
  %vm75 = vcmp.lt.s32.totalorder %v31, 16
  %v76 = vsel %vm75, %v72, %v74
  %v77 = vsel %vm75, %v70, %v72
  %v78 = vsel %vm75, %v68, %v70
  %v79 = vsel %vm75, %v74, %v68
  %s80 = scalar_lea.vmem %s3, 1
  %v81 = vld [vmem:[%s80] ss:$8 sm:$0xf]
  %v83 = vlaneseq
  %v84 = vshrl.u32 %v83, 7
  %v85 = vsub.s32 0, %v84
  %v86 = vrot.slane %v81, %v85
  %v87 = vlaneseq
  %v88 = vshrl.u32 %v87, 7
  %v89 = vsub.s32 1, %v88
  %v90 = vrot.slane %v81, %v89
  %v91 = vlaneseq
  %v92 = vshrl.u32 %v91, 7
  %v93 = vsub.s32 2, %v92
  %v94 = vrot.slane %v81, %v93
  %v95 = vlaneseq
  %v96 = vshrl.u32 %v95, 7
  %v97 = vsub.s32 3, %v96
  %v98 = vrot.slane %v81, %v97
  %v103 = vmul.f32 %v79, %v86
  %v104 = vmul.f32 %v78, %v90
  %v105 = vmul.f32 %v77, %v94
  %v106 = vmul.f32 %v76, %v98
  %107 = vst [vmem:[#allocation2 + $0x20] sm:$0xff] %v103
  %108 = vst [vmem:[#allocation2 + $0x28] sm:$0xff] %v104
  %109 = vst [vmem:[#allocation2 + $0x30] sm:$0xff] %v105
  %110 = vst [vmem:[#allocation2 + $0x38] sm:$0xff] %v106
  %111 = vrot.lane.b32.xlu0 %v18, 15
  %v112 = vpop.permute.xlu0 %111
  %113 = vrot.lane.b32.xlu0 %v19, 15
  %v114 = vpop.permute.xlu0 %113
  %115 = vrot.lane.b32.xlu0 %v20, 15
  %v116 = vpop.permute.xlu0 %115
  %117 = vrot.lane.b32.xlu0 %v21, 15
  %v118 = vpop.permute.xlu0 %117
  %vm119 = vcmp.lt.s32.totalorder %v31, 15
  %v120 = vsel %vm119, %v116, %v118
  %v121 = vsel %vm119, %v114, %v116
  %v122 = vsel %vm119, %v112, %v114
  %v123 = vsel %vm119, %v118, %v112
  %s124 = scalar_lea.vmem %s3, 2
  %v125 = vld [vmem:[%s124] ss:$8 sm:$0xf]
  %v127 = vlaneseq
  %v128 = vshrl.u32 %v127, 7
  %v129 = vsub.s32 0, %v128
  %v130 = vrot.slane %v125, %v129
  %v131 = vlaneseq
  %v132 = vshrl.u32 %v131, 7
  %v133 = vsub.s32 1, %v132
  %v134 = vrot.slane %v125, %v133
  %v135 = vlaneseq
  %v136 = vshrl.u32 %v135, 7
  %v137 = vsub.s32 2, %v136
  %v138 = vrot.slane %v125, %v137
  %v139 = vlaneseq
  %v140 = vshrl.u32 %v139, 7
  %v141 = vsub.s32 3, %v140
  %v142 = vrot.slane %v125, %v141
  %v147 = vmul.f32 %v123, %v130
  %v148 = vmul.f32 %v122, %v134
  %v149 = vmul.f32 %v121, %v138
  %v150 = vmul.f32 %v120, %v142
  %151 = vst [vmem:[#allocation2 + $0x40] sm:$0xff] %v147
  %152 = vst [vmem:[#allocation2 + $0x48] sm:$0xff] %v148
  %153 = vst [vmem:[#allocation2 + $0x50] sm:$0xff] %v149
  %154 = vst [vmem:[#allocation2 + $0x58] sm:$0xff] %v150
  %155 = vrot.lane.b32.xlu0 %v18, 1
  %v156 = vpop.permute.xlu0 %155
  %157 = vrot.lane.b32.xlu0 %v19, 1
  %v158 = vpop.permute.xlu0 %157
  %159 = vrot.lane.b32.xlu0 %v20, 1
  %v160 = vpop.permute.xlu0 %159
  %161 = vrot.lane.b32.xlu0 %v21, 1
  %v162 = vpop.permute.xlu0 %161
  %vm163 = vcmp.lt.s32.totalorder %v31, 1
  %v164 = vsel %vm163, %v160, %v162
  %v165 = vsel %vm163, %v158, %v160
  %v166 = vsel %vm163, %v156, %v158
  %v167 = vsel %vm163, %v162, %v156
  %s168 = scalar_lea.vmem %s3, 3
  %v169 = vld [vmem:[%s168] ss:$8 sm:$0xf]
  %v171 = vlaneseq
  %v172 = vshrl.u32 %v171, 7
  %v173 = vsub.s32 0, %v172
  %v174 = vrot.slane %v169, %v173
  %v175 = vlaneseq
  %v176 = vshrl.u32 %v175, 7
  %v177 = vsub.s32 1, %v176
  %v178 = vrot.slane %v169, %v177
  %v179 = vlaneseq
  %v180 = vshrl.u32 %v179, 7
  %v181 = vsub.s32 2, %v180
  %v182 = vrot.slane %v169, %v181
  %v183 = vlaneseq
  %v184 = vshrl.u32 %v183, 7
  %v185 = vsub.s32 3, %v184
  %v186 = vrot.slane %v169, %v185
  %v191 = vmul.f32 %v167, %v174
  %v192 = vmul.f32 %v166, %v178
  %v193 = vmul.f32 %v165, %v182
  %v194 = vmul.f32 %v164, %v186
  %195 = vst [vmem:[#allocation2 + $0x60] sm:$0xff] %v191
  %196 = vst [vmem:[#allocation2 + $0x68] sm:$0xff] %v192
  %197 = vst [vmem:[#allocation2 + $0x70] sm:$0xff] %v193
  %198 = vst [vmem:[#allocation2 + $0x78] sm:$0xff] %v194
  %199 = vst [vmem:[#allocation2 + $0x80] sm:$0xff] %v18
  %200 = vst [vmem:[#allocation2 + $0x88] sm:$0xff] %v19
  %201 = vst [vmem:[#allocation2 + $0x90] sm:$0xff] %v20
  %202 = vst [vmem:[#allocation2 + $0x98] sm:$0xff] %v21
  %203 = vrot.lane.b32.xlu0 %v18, 127
  %v204 = vpop.permute.xlu0 %203
  %205 = vrot.lane.b32.xlu0 %v19, 127
  %v206 = vpop.permute.xlu0 %205
  %207 = vrot.lane.b32.xlu0 %v20, 127
  %v208 = vpop.permute.xlu0 %207
  %209 = vrot.lane.b32.xlu0 %v21, 127
  %v210 = vpop.permute.xlu0 %209
  %vm211 = vcmp.lt.s32.totalorder %v31, 127
  %v212 = vsel %vm211, %v208, %v210
  %v213 = vsel %vm211, %v206, %v208
  %v214 = vsel %vm211, %v204, %v206
  %v215 = vsel %vm211, %v210, %v204
  %s216 = scalar_lea.vmem %s3, 5
  %v217 = vld [vmem:[%s216] ss:$8 sm:$0xf]
  %v219 = vlaneseq
  %v220 = vshrl.u32 %v219, 7
  %v221 = vsub.s32 0, %v220
  %v222 = vrot.slane %v217, %v221
  %v223 = vlaneseq
  %v224 = vshrl.u32 %v223, 7
  %v225 = vsub.s32 1, %v224
  %v226 = vrot.slane %v217, %v225
  %v227 = vlaneseq
  %v228 = vshrl.u32 %v227, 7
  %v229 = vsub.s32 2, %v228
  %v230 = vrot.slane %v217, %v229
  %v231 = vlaneseq
  %v232 = vshrl.u32 %v231, 7
  %v233 = vsub.s32 3, %v232
  %v234 = vrot.slane %v217, %v233
  %v239 = vmul.f32 %v214, %v222
  %v240 = vmul.f32 %v213, %v226
  %v241 = vmul.f32 %v212, %v230
  %v242 = vmul.f32 %v215, %v234
  %243 = vst [vmem:[#allocation2 + $0xa0] sm:$0xff] %v239
  %244 = vst [vmem:[#allocation2 + $0xa8] sm:$0xff] %v240
  %245 = vst [vmem:[#allocation2 + $0xb0] sm:$0xff] %v241
  %246 = vst [vmem:[#allocation2 + $0xb8] sm:$0xff] %v242
  %247 = vrot.lane.b32.xlu0 %v18, 113
  %v248 = vpop.permute.xlu0 %247
  %249 = vrot.lane.b32.xlu0 %v19, 113
  %v250 = vpop.permute.xlu0 %249
  %251 = vrot.lane.b32.xlu0 %v20, 113
  %v252 = vpop.permute.xlu0 %251
  %253 = vrot.lane.b32.xlu0 %v21, 113
  %v254 = vpop.permute.xlu0 %253
  %vm255 = vcmp.lt.s32.totalorder %v31, 113
  %v256 = vsel %vm255, %v252, %v254
  %v257 = vsel %vm255, %v250, %v252
  %v258 = vsel %vm255, %v248, %v250
  %v259 = vsel %vm255, %v254, %v248
  %s260 = scalar_lea.vmem %s3, 6
  %v261 = vld [vmem:[%s260] ss:$8 sm:$0xf]
  %v263 = vlaneseq
  %v264 = vshrl.u32 %v263, 7
  %v265 = vsub.s32 0, %v264
  %v266 = vrot.slane %v261, %v265
  %v267 = vlaneseq
  %v268 = vshrl.u32 %v267, 7
  %v269 = vsub.s32 1, %v268
  %v270 = vrot.slane %v261, %v269
  %v271 = vlaneseq
  %v272 = vshrl.u32 %v271, 7
  %v273 = vsub.s32 2, %v272
  %v274 = vrot.slane %v261, %v273
  %v275 = vlaneseq
  %v276 = vshrl.u32 %v275, 7
  %v277 = vsub.s32 3, %v276
  %v278 = vrot.slane %v261, %v277
  %v283 = vmul.f32 %v258, %v266
  %v284 = vmul.f32 %v257, %v270
  %v285 = vmul.f32 %v256, %v274
  %v286 = vmul.f32 %v259, %v278
  %287 = vst [vmem:[#allocation2 + $0xc0] sm:$0xff] %v283
  %288 = vst [vmem:[#allocation2 + $0xc8] sm:$0xff] %v284
  %289 = vst [vmem:[#allocation2 + $0xd0] sm:$0xff] %v285
  %290 = vst [vmem:[#allocation2 + $0xd8] sm:$0xff] %v286
  %291 = vrot.lane.b32.xlu0 %v18, 112
  %v292 = vpop.permute.xlu0 %291
  %293 = vrot.lane.b32.xlu0 %v19, 112
  %v294 = vpop.permute.xlu0 %293
  %295 = vrot.lane.b32.xlu0 %v20, 112
  %v296 = vpop.permute.xlu0 %295
  %297 = vrot.lane.b32.xlu0 %v21, 112
  %v298 = vpop.permute.xlu0 %297
  %vm299 = vcmp.lt.s32.totalorder %v31, 112
  %v300 = vsel %vm299, %v296, %v298
  %v301 = vsel %vm299, %v294, %v296
  %v302 = vsel %vm299, %v292, %v294
  %v303 = vsel %vm299, %v298, %v292
  %s304 = scalar_lea.vmem %s3, 7
  %v305 = vld [vmem:[%s304] ss:$8 sm:$0xf]
  %v307 = vlaneseq
  %v308 = vshrl.u32 %v307, 7
  %v309 = vsub.s32 0, %v308
  %v310 = vrot.slane %v305, %v309
  %v311 = vlaneseq
  %v312 = vshrl.u32 %v311, 7
  %v313 = vsub.s32 1, %v312
  %v314 = vrot.slane %v305, %v313
  %v315 = vlaneseq
  %v316 = vshrl.u32 %v315, 7
  %v317 = vsub.s32 2, %v316
  %v318 = vrot.slane %v305, %v317
  %v319 = vlaneseq
  %v320 = vshrl.u32 %v319, 7
  %v321 = vsub.s32 3, %v320
  %v322 = vrot.slane %v305, %v321
  %v327 = vmul.f32 %v302, %v310
  %v328 = vmul.f32 %v301, %v314
  %v329 = vmul.f32 %v300, %v318
  %v330 = vmul.f32 %v303, %v322
  %331 = vst [vmem:[#allocation2 + $0xe0] sm:$0xff] %v327
  %332 = vst [vmem:[#allocation2 + $0xe8] sm:$0xff] %v328
  %333 = vst [vmem:[#allocation2 + $0xf0] sm:$0xff] %v329
  %334 = vst [vmem:[#allocation2 + $0xf8] sm:$0xff] %v330
  %335 = vrot.lane.b32.xlu0 %v18, 111
  %v336 = vpop.permute.xlu0 %335
  %337 = vrot.lane.b32.xlu0 %v19, 111
  %v338 = vpop.permute.xlu0 %337
  %339 = vrot.lane.b32.xlu0 %v20, 111
  %v340 = vpop.permute.xlu0 %339
  %341 = vrot.lane.b32.xlu0 %v21, 111
  %v342 = vpop.permute.xlu0 %341
  %vm343 = vcmp.lt.s32.totalorder %v31, 111
  %v344 = vsel %vm343, %v340, %v342
  %v345 = vsel %vm343, %v338, %v340
  %v346 = vsel %vm343, %v336, %v338
  %v347 = vsel %vm343, %v342, %v336
  %s348 = scalar_lea.vmem %s3, 32
  %v349 = vld [vmem:[%s348] ss:$8 sm:$0xf]
  %v351 = vlaneseq
  %v352 = vshrl.u32 %v351, 7
  %v353 = vsub.s32 0, %v352
  %v354 = vrot.slane %v349, %v353
  %v355 = vlaneseq
  %v356 = vshrl.u32 %v355, 7
  %v357 = vsub.s32 1, %v356
  %v358 = vrot.slane %v349, %v357
  %v359 = vlaneseq
  %v360 = vshrl.u32 %v359, 7
  %v361 = vsub.s32 2, %v360
  %v362 = vrot.slane %v349, %v361
  %v363 = vlaneseq
  %v364 = vshrl.u32 %v363, 7
  %v365 = vsub.s32 3, %v364
  %v366 = vrot.slane %v349, %v365
  %v371 = vmul.f32 %v346, %v354
  %v372 = vmul.f32 %v345, %v358
  %v373 = vmul.f32 %v344, %v362
  %v374 = vmul.f32 %v347, %v366
  %375 = vst [vmem:[#allocation2 + $0x100] sm:$0xff] %v371
  %376 = vst [vmem:[#allocation2 + $0x108] sm:$0xff] %v372
  %377 = vst [vmem:[#allocation2 + $0x110] sm:$0xff] %v373
  %378 = vst [vmem:[#allocation2 + $0x118] sm:$0xff] %v374
  %v379 = vld [vmem:[#allocation2] sm:$0xff]
  %v380 = vld [vmem:[#allocation2 + $0x8] sm:$0xff]
  %v381 = vld [vmem:[#allocation2 + $0x10] sm:$0xff]
  %v382 = vld [vmem:[#allocation2 + $0x18] sm:$0xff]
  %v383 = vld [vmem:[#allocation2 + $0x20] sm:$0xff]
  %v384 = vld [vmem:[#allocation2 + $0x28] sm:$0xff]
  %v385 = vld [vmem:[#allocation2 + $0x30] sm:$0xff]
  %v386 = vld [vmem:[#allocation2 + $0x38] sm:$0xff]
  %v387 = vld [vmem:[#allocation2 + $0x40] sm:$0xff]
  %v388 = vld [vmem:[#allocation2 + $0x48] sm:$0xff]
  %v389 = vld [vmem:[#allocation2 + $0x50] sm:$0xff]
  %v390 = vld [vmem:[#allocation2 + $0x58] sm:$0xff]
  %v391 = vld [vmem:[#allocation2 + $0x60] sm:$0xff]
  %v392 = vld [vmem:[#allocation2 + $0x68] sm:$0xff]
  %v393 = vld [vmem:[#allocation2 + $0x70] sm:$0xff]
  %v394 = vld [vmem:[#allocation2 + $0x78] sm:$0xff]
  %v395 = vld [vmem:[#allocation2 + $0x80] sm:$0xff]
  %v396 = vld [vmem:[#allocation2 + $0x88] sm:$0xff]
  %v397 = vld [vmem:[#allocation2 + $0x90] sm:$0xff]
  %v398 = vld [vmem:[#allocation2 + $0x98] sm:$0xff]
  %v399 = vld [vmem:[#allocation2 + $0xa0] sm:$0xff]
  %v400 = vld [vmem:[#allocation2 + $0xa8] sm:$0xff]
  %v401 = vld [vmem:[#allocation2 + $0xb0] sm:$0xff]
  %v402 = vld [vmem:[#allocation2 + $0xb8] sm:$0xff]
  %v403 = vld [vmem:[#allocation2 + $0xc0] sm:$0xff]
  %v404 = vld [vmem:[#allocation2 + $0xc8] sm:$0xff]
  %v405 = vld [vmem:[#allocation2 + $0xd0] sm:$0xff]
  %v406 = vld [vmem:[#allocation2 + $0xd8] sm:$0xff]
  %v407 = vld [vmem:[#allocation2 + $0xe0] sm:$0xff]
  %v408 = vld [vmem:[#allocation2 + $0xe8] sm:$0xff]
  %v409 = vld [vmem:[#allocation2 + $0xf0] sm:$0xff]
  %v410 = vld [vmem:[#allocation2 + $0xf8] sm:$0xff]
  %v411 = vld [vmem:[#allocation2 + $0x100] sm:$0xff]
  %v412 = vld [vmem:[#allocation2 + $0x108] sm:$0xff]
  %v413 = vld [vmem:[#allocation2 + $0x110] sm:$0xff]
  %v414 = vld [vmem:[#allocation2 + $0x118] sm:$0xff]
  %v415 = vld [vmem:[%s1] sm:$0xf]
  %v416 = vld [vmem:[%s1 + $0xc] sm:$0xf]
  %v417 = vld [vmem:[%s1 + $0x18] sm:$0xf]
  %v418 = vld [vmem:[%s1 + $0x24] sm:$0xf]
  %v419 = vpack.c.bf16 %v383, %v379
  %v420 = vpack.c.bf16 %v384, %v380
  %v421 = vpack.c.bf16 %v385, %v381
  %v422 = vpack.c.bf16 %v386, %v382
  %v423 = vpack.c.bf16 %v391, %v387
  %v424 = vpack.c.bf16 %v392, %v388
  %v425 = vpack.c.bf16 %v393, %v389
  %v426 = vpack.c.bf16 %v394, %v390
  %v427 = vpack.c.bf16 %v399, %v395
  %v428 = vpack.c.bf16 %v400, %v396
  %v429 = vpack.c.bf16 %v401, %v397
  %v430 = vpack.c.bf16 %v402, %v398
  %v431 = vpack.c.bf16 %v407, %v403
  %v432 = vpack.c.bf16 %v408, %v404
  %v433 = vpack.c.bf16 %v409, %v405
  %v434 = vpack.c.bf16 %v410, %v406
  %v435 = vpack.c.bf16 %v411, %v411
  %v436 = vpack.c.bf16 %v412, %v412
  %v437 = vpack.c.bf16 %v413, %v413
  %v438 = vpack.c.bf16 %v414, %v414
  %v439 = vld [vmem:[%s2] sm:$0xff]
  %v440 = vld [vmem:[%s2 + $0x8] sm:$0xff]
  %v441 = vld [vmem:[%s2 + $0x10] sm:$0xff]
  %v442 = vld [vmem:[%s2 + $0x18] sm:$0xff]
  %444 = vset.pattern.permute.xlu0 0
  %445 = vperm.xlu0 %444, %v439
  %v446 = vpop.permute.xlu0 %445
  %449 = vset.pattern.permute.xlu0 0
  %450 = vperm.xlu0 %449, %v440
  %v451 = vpop.permute.xlu0 %450
  %454 = vset.pattern.permute.xlu0 0
  %455 = vperm.xlu0 %454, %v441
  %v456 = vpop.permute.xlu0 %455
  %459 = vset.pattern.permute.xlu0 0
  %460 = vperm.xlu0 %459, %v442
  %v461 = vpop.permute.xlu0 %460
  %v467 = vunpack.c.l.b16 %v415
  %v468 = vunpack.c.l.b16 %v416
  %v469 = vunpack.c.l.b16 %v417
  %v470 = vunpack.c.l.b16 %v418
  %v471 = vpack.c.b16 %v468, %v467
  %v472 = vpack.c.b16 %v470, %v469
  %vm473 = vcmask 588800
  %v475 = vsel %vm473, %v471, 0
  %v478 = vsel %vm473, %v472, 0
  %vm480 = vcmask 1043456
  %v482 = vsel %vm480, %v435, 0
  %v485 = vsel %vm480, %v436, 0
  %v488 = vsel %vm480, %v437, 0
  %v491 = vsel %vm480, %v438, 0
  %493 = vmatprep.subr.bf16.mxu0 %v420
  %494 = vmatpush1.bf16.msra.mxu0 %v419
  %495 = vmatprep.subr.bf16.mxu0 %v424
  %496 = vmatpush1.bf16.msra.mxu0 %v423
  %497 = vmatprep.subr.bf16.mxu0 %v428
  %498 = vmatpush1.bf16.msra.mxu0 %v427
  %499 = vmatprep.subr.bf16.mxu0 %v432
  %500 = vmatpush1.bf16.msra.mxu0 %v431
  %501 = vmatprep.subr.bf16.mxu0 %v485
  %502 = vmatpush1.bf16.msra.mxu0 %v482
  %503 = vmatprep.subr.bf16.mxu0 0
  %504 = vmatpush1.bf16.msra.mxu0 0
  %505 = vmatprep.subr.bf16.mxu0 0
  %506 = vmatpush1.bf16.msra.mxu0 0
  %507 = vmatprep.subr.bf16.mxu0 0
  %508 = vmatpush1.bf16.msra.mxu0 0
  %509 = vmatprep.subr.bf16.mxu0 0
  %510 = vmatpush1.bf16.msra.mxu0 0
  %511 = vmatprep.subr.bf16.mxu0 0
  %512 = vmatpush1.bf16.msra.mxu0 0
  %513 = vmatprep.subr.bf16.mxu0 0
  %514 = vmatpush1.bf16.msra.mxu0 0
  %515 = vmatprep.subr.bf16.mxu0 0
  %516 = vmatpush1.bf16.msra.mxu0 0
  %517 = vmatprep.subr.bf16.mxu0 0
  %518 = vmatpush1.bf16.msra.mxu0 0
  %519 = vmatprep.subr.bf16.mxu0 0
  %520 = vmatpush1.bf16.msra.mxu0 0
  %521 = vmatprep.subr.bf16.mxu0 0
  %522 = vmatpush1.bf16.msra.mxu0 0
  %523 = vmatprep.subr.bf16.mxu0 0
  %524 = vmatpush1.bf16.msra.mxu0 0
  %525 = vmatprep.mubr.bf16.mxu0 0
  %526 = vmatmul.mubr.bf16.gmra.mrb[0].mxu0 %v475
  %v527 = vpop.f32.mrb[0].mxu0
  %v528 = vadd.f32 %v446, %v527
  %v529 = vpop.f32.mrb[0].mxu0
  %v530 = vadd.f32 %v446, %v529
  %v531 = vpop.f32.mrb[0].mxu0
  %v532 = vadd.f32 %v451, %v531
  %v533 = vpop.f32.mrb[0].mxu0
  %v534 = vadd.f32 %v451, %v533
  %535 = vmatprep.mubr.bf16.mxu0 0
  %536 = vmatmul.mubr.bf16.gmra.mrb[0].mxu0 %v478
  %v537 = vpop.f32.mrb[0].mxu0
  %v538 = vadd.f32 %v456, %v537
  %v539 = vpop.f32.mrb[0].mxu0
  %v540 = vadd.f32 %v456, %v539
  %v541 = vpop.f32.mrb[0].mxu0
  %v542 = vadd.f32 %v461, %v541
  %v543 = vpop.f32.mrb[0].mxu0
  %v544 = vadd.f32 %v461, %v543
  %545 = vdwg.mxu0
  %546 = vmatprep.subr.bf16.mxu0 %v422
  %547 = vmatpush1.bf16.msra.mxu0 %v421
  %548 = vmatprep.subr.bf16.mxu0 %v426
  %549 = vmatpush1.bf16.msra.mxu0 %v425
  %550 = vmatprep.subr.bf16.mxu0 %v430
  %551 = vmatpush1.bf16.msra.mxu0 %v429
  %552 = vmatprep.subr.bf16.mxu0 %v434
  %553 = vmatpush1.bf16.msra.mxu0 %v433
  %554 = vmatprep.subr.bf16.mxu0 %v491
  %555 = vmatpush1.bf16.msra.mxu0 %v488
  %556 = vmatprep.subr.bf16.mxu0 0
  %557 = vmatpush1.bf16.msra.mxu0 0
  %558 = vmatprep.subr.bf16.mxu0 0
  %559 = vmatpush1.bf16.msra.mxu0 0
  %560 = vmatprep.subr.bf16.mxu0 0
  %561 = vmatpush1.bf16.msra.mxu0 0
  %562 = vmatprep.subr.bf16.mxu0 0
  %563 = vmatpush1.bf16.msra.mxu0 0
  %564 = vmatprep.subr.bf16.mxu0 0
  %565 = vmatpush1.bf16.msra.mxu0 0
  %566 = vmatprep.subr.bf16.mxu0 0
  %567 = vmatpush1.bf16.msra.mxu0 0
  %568 = vmatprep.subr.bf16.mxu0 0
  %569 = vmatpush1.bf16.msra.mxu0 0
  %570 = vmatprep.subr.bf16.mxu0 0
  %571 = vmatpush1.bf16.msra.mxu0 0
  %572 = vmatprep.subr.bf16.mxu0 0
  %573 = vmatpush1.bf16.msra.mxu0 0
  %574 = vmatprep.subr.bf16.mxu0 0
  %575 = vmatpush1.bf16.msra.mxu0 0
  %576 = vmatprep.subr.bf16.mxu0 0
  %577 = vmatpush1.bf16.msra.mxu0 0
  %578 = vmatprep.mubr.bf16.mxu0 0
  %579 = vmatmul.mubr.bf16.gmra.mrb[0].mxu0 %v475
  %v580 = vpop.f32.mrb[0].mxu0
  %v581 = vadd.f32 %v446, %v580
  %v582 = vpop.f32.mrb[0].mxu0
  %v583 = vadd.f32 %v446, %v582
  %v584 = vpop.f32.mrb[0].mxu0
  %v585 = vadd.f32 %v451, %v584
  %v586 = vpop.f32.mrb[0].mxu0
  %v587 = vadd.f32 %v451, %v586
  %588 = vmatprep.mubr.bf16.mxu0 0
  %589 = vmatmul.mubr.bf16.gmra.mrb[0].mxu0 %v478
  %v590 = vpop.f32.mrb[0].mxu0
  %v591 = vadd.f32 %v456, %v590
  %v592 = vpop.f32.mrb[0].mxu0
  %v593 = vadd.f32 %v456, %v592
  %v594 = vpop.f32.mrb[0].mxu0
  %v595 = vadd.f32 %v461, %v594
  %v596 = vpop.f32.mrb[0].mxu0
  %v597 = vadd.f32 %v461, %v596
  %598 = vdwg.mxu0
  %vm599 = vcmp.ge.f32.partialorder %v528, 0.0
  %vm600 = vcmp.ge.f32.partialorder %v530, 0.0
  %vm601 = vcmp.ge.f32.partialorder %v581, 0.0
  %vm602 = vcmp.ge.f32.partialorder %v583, 0.0
  %vm603 = vcmp.ge.f32.partialorder %v532, 0.0
  %vm604 = vcmp.ge.f32.partialorder %v534, 0.0
  %vm605 = vcmp.ge.f32.partialorder %v585, 0.0
  %vm606 = vcmp.ge.f32.partialorder %v587, 0.0
  %vm607 = vcmp.ge.f32.partialorder %v538, 0.0
  %vm608 = vcmp.ge.f32.partialorder %v540, 0.0
  %vm609 = vcmp.ge.f32.partialorder %v591, 0.0
  %vm610 = vcmp.ge.f32.partialorder %v593, 0.0
  %vm611 = vcmp.ge.f32.partialorder %v542, 0.0
  %vm612 = vcmp.ge.f32.partialorder %v544, 0.0
  %vm613 = vcmp.ge.f32.partialorder %v595, 0.0
  %vm614 = vcmp.ge.f32.partialorder %v597, 0.0
  %v615 = vmul.f32 %v528, 0.01
  %v616 = vmul.f32 %v530, 0.01
  %v617 = vmul.f32 %v581, 0.01
  %v618 = vmul.f32 %v583, 0.01
  %v619 = vmul.f32 %v532, 0.01
  %v620 = vmul.f32 %v534, 0.01
  %v621 = vmul.f32 %v585, 0.01
  %v622 = vmul.f32 %v587, 0.01
  %v623 = vmul.f32 %v538, 0.01
  %v624 = vmul.f32 %v540, 0.01
  %v625 = vmul.f32 %v591, 0.01
  %v626 = vmul.f32 %v593, 0.01
  %v627 = vmul.f32 %v542, 0.01
  %v628 = vmul.f32 %v544, 0.01
  %v629 = vmul.f32 %v595, 0.01
  %v630 = vmul.f32 %v597, 0.01
  %v631 = vsel %vm599, %v528, %v615
  %v632 = vsel %vm600, %v530, %v616
  %v633 = vsel %vm601, %v581, %v617
  %v634 = vsel %vm602, %v583, %v618
  %v635 = vsel %vm603, %v532, %v619
  %v636 = vsel %vm604, %v534, %v620
  %v637 = vsel %vm605, %v585, %v621
  %v638 = vsel %vm606, %v587, %v622
  %v639 = vsel %vm607, %v538, %v623
  %v640 = vsel %vm608, %v540, %v624
  %v641 = vsel %vm609, %v591, %v625
  %v642 = vsel %vm610, %v593, %v626
  %v643 = vsel %vm611, %v542, %v627
  %v644 = vsel %vm612, %v544, %v628
  %v645 = vsel %vm613, %v595, %v629
  %v646 = vsel %vm614, %v597, %v630
  %647 = vrot.lane.b32.xlu0 %v631, 17
  %v648 = vpop.permute.xlu0 %647
  %649 = vrot.lane.b32.xlu0 %v635, 17
  %v650 = vpop.permute.xlu0 %649
  %651 = vrot.lane.b32.xlu0 %v639, 17
  %v652 = vpop.permute.xlu0 %651
  %653 = vrot.lane.b32.xlu0 %v643, 17
  %v654 = vpop.permute.xlu0 %653
  %655 = vrot.lane.b32.xlu0 %v632, 17
  %v656 = vpop.permute.xlu0 %655
  %657 = vrot.lane.b32.xlu0 %v636, 17
  %v658 = vpop.permute.xlu0 %657
  %659 = vrot.lane.b32.xlu0 %v640, 17
  %v660 = vpop.permute.xlu0 %659
  %661 = vrot.lane.b32.xlu0 %v644, 17
  %v662 = vpop.permute.xlu0 %661
  %663 = vrot.lane.b32.xlu0 %v633, 17
  %v664 = vpop.permute.xlu0 %663
  %665 = vrot.lane.b32.xlu0 %v637, 17
  %v666 = vpop.permute.xlu0 %665
  %667 = vrot.lane.b32.xlu0 %v641, 17
  %v668 = vpop.permute.xlu0 %667
  %669 = vrot.lane.b32.xlu0 %v645, 17
  %v670 = vpop.permute.xlu0 %669
  %671 = vrot.lane.b32.xlu0 %v634, 17
  %v672 = vpop.permute.xlu0 %671
  %673 = vrot.lane.b32.xlu0 %v638, 17
  %v674 = vpop.permute.xlu0 %673
  %675 = vrot.lane.b32.xlu0 %v642, 17
  %v676 = vpop.permute.xlu0 %675
  %677 = vrot.lane.b32.xlu0 %v646, 17
  %v678 = vpop.permute.xlu0 %677
  %v679 = vsel %vm32, %v664, %v672
  %v680 = vsel %vm32, %v666, %v674
  %v681 = vsel %vm32, %v668, %v676
  %v682 = vsel %vm32, %v670, %v678
  %v683 = vsel %vm32, %v656, %v664
  %v684 = vsel %vm32, %v658, %v666
  %v685 = vsel %vm32, %v660, %v668
  %v686 = vsel %vm32, %v662, %v670
  %v687 = vsel %vm32, %v648, %v656
  %v688 = vsel %vm32, %v650, %v658
  %v689 = vsel %vm32, %v652, %v660
  %v690 = vsel %vm32, %v654, %v662
  %v691 = vsel %vm32, %v672, %v648
  %v692 = vsel %vm32, %v674, %v650
  %v693 = vsel %vm32, %v676, %v652
  %v694 = vsel %vm32, %v678, %v654
  %v695 = vld [vmem:[%s3] ss:$8 sm:$0xf]
  %v697 = vlaneseq
  %v698 = vshrl.u32 %v697, 7
  %v699 = vsub.s32 0, %v698
  %v700 = vrot.slane %v695, %v699
  %v701 = vlaneseq
  %v702 = vshrl.u32 %v701, 7
  %v703 = vsub.s32 1, %v702
  %v704 = vrot.slane %v695, %v703
  %v705 = vlaneseq
  %v706 = vshrl.u32 %v705, 7
  %v707 = vsub.s32 2, %v706
  %v708 = vrot.slane %v695, %v707
  %v709 = vlaneseq
  %v710 = vshrl.u32 %v709, 7
  %v711 = vsub.s32 3, %v710
  %v712 = vrot.slane %v695, %v711
  %v717 = vmul.f32 %v691, %v700
  %v718 = vmul.f32 %v687, %v704
  %v719 = vmul.f32 %v683, %v708
  %v720 = vmul.f32 %v679, %v712
  %v721 = vmul.f32 %v692, %v700
  %v722 = vmul.f32 %v688, %v704
  %v723 = vmul.f32 %v684, %v708
  %v724 = vmul.f32 %v680, %v712
  %v725 = vmul.f32 %v693, %v700
  %v726 = vmul.f32 %v689, %v704
  %v727 = vmul.f32 %v685, %v708
  %v728 = vmul.f32 %v681, %v712
  %v729 = vmul.f32 %v694, %v700
  %v730 = vmul.f32 %v690, %v704
  %v731 = vmul.f32 %v686, %v708
  %v732 = vmul.f32 %v682, %v712
  %733 = vst [vmem:[#allocation2] sm:$0xff] %v717
  %734 = vst [vmem:[#allocation2 + $0x8] sm:$0xff] %v718
  %735 = vst [vmem:[#allocation2 + $0x10] sm:$0xff] %v719
  %736 = vst [vmem:[#allocation2 + $0x18] sm:$0xff] %v720
  %737 = vst [vmem:[#allocation2 + $0x20] sm:$0xff] %v721
  %738 = vst [vmem:[#allocation2 + $0x28] sm:$0xff] %v722
  %739 = vst [vmem:[#allocation2 + $0x30] sm:$0xff] %v723
  %740 = vst [vmem:[#allocation2 + $0x38] sm:$0xff] %v724
  %741 = vst [vmem:[#allocation2 + $0x40] sm:$0xff] %v725
  %742 = vst [vmem:[#allocation2 + $0x48] sm:$0xff] %v726
  %743 = vst [vmem:[#allocation2 + $0x50] sm:$0xff] %v727
  %744 = vst [vmem:[#allocation2 + $0x58] sm:$0xff] %v728
  %745 = vst [vmem:[#allocation2 + $0x60] sm:$0xff] %v729
  %746 = vst [vmem:[#allocation2 + $0x68] sm:$0xff] %v730
  %747 = vst [vmem:[#allocation2 + $0x70] sm:$0xff] %v731
  %748 = vst [vmem:[#allocation2 + $0x78] sm:$0xff] %v732
  %749 = vrot.lane.b32.xlu0 %v631, 16
  %v750 = vpop.permute.xlu0 %749
  %751 = vrot.lane.b32.xlu0 %v635, 16
  %v752 = vpop.permute.xlu0 %751
  %753 = vrot.lane.b32.xlu0 %v639, 16
  %v754 = vpop.permute.xlu0 %753
  %755 = vrot.lane.b32.xlu0 %v643, 16
  %v756 = vpop.permute.xlu0 %755
  %757 = vrot.lane.b32.xlu0 %v632, 16
  %v758 = vpop.permute.xlu0 %757
  %759 = vrot.lane.b32.xlu0 %v636, 16
  %v760 = vpop.permute.xlu0 %759
  %761 = vrot.lane.b32.xlu0 %v640, 16
  %v762 = vpop.permute.xlu0 %761
  %763 = vrot.lane.b32.xlu0 %v644, 16
  %v764 = vpop.permute.xlu0 %763
  %765 = vrot.lane.b32.xlu0 %v633, 16
  %v766 = vpop.permute.xlu0 %765
  %767 = vrot.lane.b32.xlu0 %v637, 16
  %v768 = vpop.permute.xlu0 %767
  %769 = vrot.lane.b32.xlu0 %v641, 16
  %v770 = vpop.permute.xlu0 %769
  %771 = vrot.lane.b32.xlu0 %v645, 16
  %v772 = vpop.permute.xlu0 %771
  %773 = vrot.lane.b32.xlu0 %v634, 16
  %v774 = vpop.permute.xlu0 %773
  %775 = vrot.lane.b32.xlu0 %v638, 16
  %v776 = vpop.permute.xlu0 %775
  %777 = vrot.lane.b32.xlu0 %v642, 16
  %v778 = vpop.permute.xlu0 %777
  %779 = vrot.lane.b32.xlu0 %v646, 16
  %v780 = vpop.permute.xlu0 %779
  %v781 = vsel %vm75, %v766, %v774
  %v782 = vsel %vm75, %v768, %v776
  %v783 = vsel %vm75, %v770, %v778
  %v784 = vsel %vm75, %v772, %v780
  %v785 = vsel %vm75, %v758, %v766
  %v786 = vsel %vm75, %v760, %v768
  %v787 = vsel %vm75, %v762, %v770
  %v788 = vsel %vm75, %v764, %v772
  %v789 = vsel %vm75, %v750, %v758
  %v790 = vsel %vm75, %v752, %v760
  %v791 = vsel %vm75, %v754, %v762
  %v792 = vsel %vm75, %v756, %v764
  %v793 = vsel %vm75, %v774, %v750
  %v794 = vsel %vm75, %v776, %v752
  %v795 = vsel %vm75, %v778, %v754
  %v796 = vsel %vm75, %v780, %v756
  %v797 = vld [vmem:[%s80] ss:$8 sm:$0xf]
  %v799 = vlaneseq
  %v800 = vshrl.u32 %v799, 7
  %v801 = vsub.s32 0, %v800
  %v802 = vrot.slane %v797, %v801
  %v803 = vlaneseq
  %v804 = vshrl.u32 %v803, 7
  %v805 = vsub.s32 1, %v804
  %v806 = vrot.slane %v797, %v805
  %v807 = vlaneseq
  %v808 = vshrl.u32 %v807, 7
  %v809 = vsub.s32 2, %v808
  %v810 = vrot.slane %v797, %v809
  %v811 = vlaneseq
  %v812 = vshrl.u32 %v811, 7
  %v813 = vsub.s32 3, %v812
  %v814 = vrot.slane %v797, %v813
  %v819 = vmul.f32 %v793, %v802
  %v820 = vmul.f32 %v789, %v806
  %v821 = vmul.f32 %v785, %v810
  %v822 = vmul.f32 %v781, %v814
  %v823 = vmul.f32 %v794, %v802
  %v824 = vmul.f32 %v790, %v806
  %v825 = vmul.f32 %v786, %v810
  %v826 = vmul.f32 %v782, %v814
  %v827 = vmul.f32 %v795, %v802
  %v828 = vmul.f32 %v791, %v806
  %v829 = vmul.f32 %v787, %v810
  %v830 = vmul.f32 %v783, %v814
  %v831 = vmul.f32 %v796, %v802
  %v832 = vmul.f32 %v792, %v806
  %v833 = vmul.f32 %v788, %v810
  %v834 = vmul.f32 %v784, %v814
  %835 = vst [vmem:[#allocation2 + $0x80] sm:$0xff] %v819
  %836 = vst [vmem:[#allocation2 + $0x88] sm:$0xff] %v820
  %837 = vst [vmem:[#allocation2 + $0x90] sm:$0xff] %v821
  %838 = vst [vmem:[#allocation2 + $0x98] sm:$0xff] %v822
  %839 = vst [vmem:[#allocation2 + $0xa0] sm:$0xff] %v823
  %840 = vst [vmem:[#allocation2 + $0xa8] sm:$0xff] %v824
  %841 = vst [vmem:[#allocation2 + $0xb0] sm:$0xff] %v825
  %842 = vst [vmem:[#allocation2 + $0xb8] sm:$0xff] %v826
  %843 = vst [vmem:[#allocation2 + $0xc0] sm:$0xff] %v827
  %844 = vst [vmem:[#allocation2 + $0xc8] sm:$0xff] %v828
  %845 = vst [vmem:[#allocation2 + $0xd0] sm:$0xff] %v829
  %846 = vst [vmem:[#allocation2 + $0xd8] sm:$0xff] %v830
  %847 = vst [vmem:[#allocation2 + $0xe0] sm:$0xff] %v831
  %848 = vst [vmem:[#allocation2 + $0xe8] sm:$0xff] %v832
  %849 = vst [vmem:[#allocation2 + $0xf0] sm:$0xff] %v833
  %850 = vst [vmem:[#allocation2 + $0xf8] sm:$0xff] %v834
  %851 = vrot.lane.b32.xlu0 %v631, 15
  %v852 = vpop.permute.xlu0 %851
  %853 = vrot.lane.b32.xlu0 %v635, 15
  %v854 = vpop.permute.xlu0 %853
  %855 = vrot.lane.b32.xlu0 %v639, 15
  %v856 = vpop.permute.xlu0 %855
  %857 = vrot.lane.b32.xlu0 %v643, 15
  %v858 = vpop.permute.xlu0 %857
  %859 = vrot.lane.b32.xlu0 %v632, 15
  %v860 = vpop.permute.xlu0 %859
  %861 = vrot.lane.b32.xlu0 %v636, 15
  %v862 = vpop.permute.xlu0 %861
  %863 = vrot.lane.b32.xlu0 %v640, 15
  %v864 = vpop.permute.xlu0 %863
  %865 = vrot.lane.b32.xlu0 %v644, 15
  %v866 = vpop.permute.xlu0 %865
  %867 = vrot.lane.b32.xlu0 %v633, 15
  %v868 = vpop.permute.xlu0 %867
  %869 = vrot.lane.b32.xlu0 %v637, 15
  %v870 = vpop.permute.xlu0 %869
  %871 = vrot.lane.b32.xlu0 %v641, 15
  %v872 = vpop.permute.xlu0 %871
  %873 = vrot.lane.b32.xlu0 %v645, 15
  %v874 = vpop.permute.xlu0 %873
  %875 = vrot.lane.b32.xlu0 %v634, 15
  %v876 = vpop.permute.xlu0 %875
  %877 = vrot.lane.b32.xlu0 %v638, 15
  %v878 = vpop.permute.xlu0 %877
  %879 = vrot.lane.b32.xlu0 %v642, 15
  %v880 = vpop.permute.xlu0 %879
  %881 = vrot.lane.b32.xlu0 %v646, 15
  %v882 = vpop.permute.xlu0 %881
  %v883 = vsel %vm119, %v868, %v876
  %v884 = vsel %vm119, %v870, %v878
  %v885 = vsel %vm119, %v872, %v880
  %v886 = vsel %vm119, %v874, %v882
  %v887 = vsel %vm119, %v860, %v868
  %v888 = vsel %vm119, %v862, %v870
  %v889 = vsel %vm119, %v864, %v872
  %v890 = vsel %vm119, %v866, %v874
  %v891 = vsel %vm119, %v852, %v860
  %v892 = vsel %vm119, %v854, %v862
  %v893 = vsel %vm119, %v856, %v864
  %v894 = vsel %vm119, %v858, %v866
  %v895 = vsel %vm119, %v876, %v852
  %v896 = vsel %vm119, %v878, %v854
  %v897 = vsel %vm119, %v880, %v856
  %v898 = vsel %vm119, %v882, %v858
  %v899 = vld [vmem:[%s124] ss:$8 sm:$0xf]
  %v901 = vlaneseq
  %v902 = vshrl.u32 %v901, 7
  %v903 = vsub.s32 0, %v902
  %v904 = vrot.slane %v899, %v903
  %v905 = vlaneseq
  %v906 = vshrl.u32 %v905, 7
  %v907 = vsub.s32 1, %v906
  %v908 = vrot.slane %v899, %v907
  %v909 = vlaneseq
  %v910 = vshrl.u32 %v909, 7
  %v911 = vsub.s32 2, %v910
  %v912 = vrot.slane %v899, %v911
  %v913 = vlaneseq
  %v914 = vshrl.u32 %v913, 7
  %v915 = vsub.s32 3, %v914
  %v916 = vrot.slane %v899, %v915
  %v921 = vmul.f32 %v895, %v904
  %v922 = vmul.f32 %v891, %v908
  %v923 = vmul.f32 %v887, %v912
  %v924 = vmul.f32 %v883, %v916
  %v925 = vmul.f32 %v896, %v904
  %v926 = vmul.f32 %v892, %v908
  %v927 = vmul.f32 %v888, %v912
  %v928 = vmul.f32 %v884, %v916
  %v929 = vmul.f32 %v897, %v904
  %v930 = vmul.f32 %v893, %v908
  %v931 = vmul.f32 %v889, %v912
  %v932 = vmul.f32 %v885, %v916
  %v933 = vmul.f32 %v898, %v904
  %v934 = vmul.f32 %v894, %v908
  %v935 = vmul.f32 %v890, %v912
  %v936 = vmul.f32 %v886, %v916
  %937 = vst [vmem:[#allocation2 + $0x100] sm:$0xff] %v921
  %938 = vst [vmem:[#allocation2 + $0x108] sm:$0xff] %v922
  %939 = vst [vmem:[#allocation2 + $0x110] sm:$0xff] %v923
  %940 = vst [vmem:[#allocation2 + $0x118] sm:$0xff] %v924
  %941 = vst [vmem:[#allocation2 + $0x120] sm:$0xff] %v925
  %942 = vst [vmem:[#allocation2 + $0x128] sm:$0xff] %v926
  %943 = vst [vmem:[#allocation2 + $0x130] sm:$0xff] %v927
  %944 = vst [vmem:[#allocation2 + $0x138] sm:$0xff] %v928
  %945 = vst [vmem:[#allocation2 + $0x140] sm:$0xff] %v929
  %946 = vst [vmem:[#allocation2 + $0x148] sm:$0xff] %v930
  %947 = vst [vmem:[#allocation2 + $0x150] sm:$0xff] %v931
  %948 = vst [vmem:[#allocation2 + $0x158] sm:$0xff] %v932
  %949 = vst [vmem:[#allocation2 + $0x160] sm:$0xff] %v933
  %950 = vst [vmem:[#allocation2 + $0x168] sm:$0xff] %v934
  %951 = vst [vmem:[#allocation2 + $0x170] sm:$0xff] %v935
  %952 = vst [vmem:[#allocation2 + $0x178] sm:$0xff] %v936
  %953 = vrot.lane.b32.xlu0 %v631, 1
  %v954 = vpop.permute.xlu0 %953
  %955 = vrot.lane.b32.xlu0 %v635, 1
  %v956 = vpop.permute.xlu0 %955
  %957 = vrot.lane.b32.xlu0 %v639, 1
  %v958 = vpop.permute.xlu0 %957
  %959 = vrot.lane.b32.xlu0 %v643, 1
  %v960 = vpop.permute.xlu0 %959
  %961 = vrot.lane.b32.xlu0 %v632, 1
  %v962 = vpop.permute.xlu0 %961
  %963 = vrot.lane.b32.xlu0 %v636, 1
  %v964 = vpop.permute.xlu0 %963
  %965 = vrot.lane.b32.xlu0 %v640, 1
  %v966 = vpop.permute.xlu0 %965
  %967 = vrot.lane.b32.xlu0 %v644, 1
  %v968 = vpop.permute.xlu0 %967
  %969 = vrot.lane.b32.xlu0 %v633, 1
  %v970 = vpop.permute.xlu0 %969
  %971 = vrot.lane.b32.xlu0 %v637, 1
  %v972 = vpop.permute.xlu0 %971
  %973 = vrot.lane.b32.xlu0 %v641, 1
  %v974 = vpop.permute.xlu0 %973
  %975 = vrot.lane.b32.xlu0 %v645, 1
  %v976 = vpop.permute.xlu0 %975
  %977 = vrot.lane.b32.xlu0 %v634, 1
  %v978 = vpop.permute.xlu0 %977
  %979 = vrot.lane.b32.xlu0 %v638, 1
  %v980 = vpop.permute.xlu0 %979
  %981 = vrot.lane.b32.xlu0 %v642, 1
  %v982 = vpop.permute.xlu0 %981
  %983 = vrot.lane.b32.xlu0 %v646, 1
  %v984 = vpop.permute.xlu0 %983
  %v985 = vsel %vm163, %v970, %v978
  %v986 = vsel %vm163, %v972, %v980
  %v987 = vsel %vm163, %v974, %v982
  %v988 = vsel %vm163, %v976, %v984
  %v989 = vsel %vm163, %v962, %v970
  %v990 = vsel %vm163, %v964, %v972
  %v991 = vsel %vm163, %v966, %v974
  %v992 = vsel %vm163, %v968, %v976
  %v993 = vsel %vm163, %v954, %v962
  %v994 = vsel %vm163, %v956, %v964
  %v995 = vsel %vm163, %v958, %v966
  %v996 = vsel %vm163, %v960, %v968
  %v997 = vsel %vm163, %v978, %v954
  %v998 = vsel %vm163, %v980, %v956
  %v999 = vsel %vm163, %v982, %v958
  %v1000 = vsel %vm163, %v984, %v960
  %v1001 = vld [vmem:[%s168] ss:$8 sm:$0xf]
  %v1003 = vlaneseq
  %v1004 = vshrl.u32 %v1003, 7
  %v1005 = vsub.s32 0, %v1004
  %v1006 = vrot.slane %v1001, %v1005
  %v1007 = vlaneseq
  %v1008 = vshrl.u32 %v1007, 7
  %v1009 = vsub.s32 1, %v1008
  %v1010 = vrot.slane %v1001, %v1009
  %v1011 = vlaneseq
  %v1012 = vshrl.u32 %v1011, 7
  %v1013 = vsub.s32 2, %v1012
  %v1014 = vrot.slane %v1001, %v1013
  %v1015 = vlaneseq
  %v1016 = vshrl.u32 %v1015, 7
  %v1017 = vsub.s32 3, %v1016
  %v1018 = vrot.slane %v1001, %v1017
  %v1023 = vmul.f32 %v997, %v1006
  %v1024 = vmul.f32 %v993, %v1010
  %v1025 = vmul.f32 %v989, %v1014
  %v1026 = vmul.f32 %v985, %v1018
  %v1027 = vmul.f32 %v998, %v1006
  %v1028 = vmul.f32 %v994, %v1010
  %v1029 = vmul.f32 %v990, %v1014
  %v1030 = vmul.f32 %v986, %v1018
  %v1031 = vmul.f32 %v999, %v1006
  %v1032 = vmul.f32 %v995, %v1010
  %v1033 = vmul.f32 %v991, %v1014
  %v1034 = vmul.f32 %v987, %v1018
  %v1035 = vmul.f32 %v1000, %v1006
  %v1036 = vmul.f32 %v996, %v1010
  %v1037 = vmul.f32 %v992, %v1014
  %v1038 = vmul.f32 %v988, %v1018
  %1039 = vst [vmem:[#allocation2 + $0x180] sm:$0xff] %v1023
  %1040 = vst [vmem:[#allocation2 + $0x188] sm:$0xff] %v1024
  %1041 = vst [vmem:[#allocation2 + $0x190] sm:$0xff] %v1025
  %1042 = vst [vmem:[#allocation2 + $0x198] sm:$0xff] %v1026
  %1043 = vst [vmem:[#allocation2 + $0x1a0] sm:$0xff] %v1027
  %1044 = vst [vmem:[#allocation2 + $0x1a8] sm:$0xff] %v1028
  %1045 = vst [vmem:[#allocation2 + $0x1b0] sm:$0xff] %v1029
  %1046 = vst [vmem:[#allocation2 + $0x1b8] sm:$0xff] %v1030
  %1047 = vst [vmem:[#allocation2 + $0x1c0] sm:$0xff] %v1031
  %1048 = vst [vmem:[#allocation2 + $0x1c8] sm:$0xff] %v1032
  %1049 = vst [vmem:[#allocation2 + $0x1d0] sm:$0xff] %v1033
  %1050 = vst [vmem:[#allocation2 + $0x1d8] sm:$0xff] %v1034
  %1051 = vst [vmem:[#allocation2 + $0x1e0] sm:$0xff] %v1035
  %1052 = vst [vmem:[#allocation2 + $0x1e8] sm:$0xff] %v1036
  %1053 = vst [vmem:[#allocation2 + $0x1f0] sm:$0xff] %v1037
  %1054 = vst [vmem:[#allocation2 + $0x1f8] sm:$0xff] %v1038
  %1055 = vst [vmem:[#allocation2 + $0x200] sm:$0xff] %v631
  %1056 = vst [vmem:[#allocation2 + $0x208] sm:$0xff] %v632
  %1057 = vst [vmem:[#allocation2 + $0x210] sm:$0xff] %v633
  %1058 = vst [vmem:[#allocation2 + $0x218] sm:$0xff] %v634
  %1059 = vst [vmem:[#allocation2 + $0x220] sm:$0xff] %v635
  %1060 = vst [vmem:[#allocation2 + $0x228] sm:$0xff] %v636
  %1061 = vst [vmem:[#allocation2 + $0x230] sm:$0xff] %v637
  %1062 = vst [vmem:[#allocation2 + $0x238] sm:$0xff] %v638
  %1063 = vst [vmem:[#allocation2 + $0x240] sm:$0xff] %v639
  %1064 = vst [vmem:[#allocation2 + $0x248] sm:$0xff] %v640
  %1065 = vst [vmem:[#allocation2 + $0x250] sm:$0xff] %v641
  %1066 = vst [vmem:[#allocation2 + $0x258] sm:$0xff] %v642
  %1067 = vst [vmem:[#allocation2 + $0x260] sm:$0xff] %v643
  %1068 = vst [vmem:[#allocation2 + $0x268] sm:$0xff] %v644
  %1069 = vst [vmem:[#allocation2 + $0x270] sm:$0xff] %v645
  %1070 = vst [vmem:[#allocation2 + $0x278] sm:$0xff] %v646
  %1071 = vrot.lane.b32.xlu0 %v631, 127
  %v1072 = vpop.permute.xlu0 %1071
  %1073 = vrot.lane.b32.xlu0 %v635, 127
  %v1074 = vpop.permute.xlu0 %1073
  %1075 = vrot.lane.b32.xlu0 %v639, 127
  %v1076 = vpop.permute.xlu0 %1075
  %1077 = vrot.lane.b32.xlu0 %v643, 127
  %v1078 = vpop.permute.xlu0 %1077
  %1079 = vrot.lane.b32.xlu0 %v632, 127
  %v1080 = vpop.permute.xlu0 %1079
  %1081 = vrot.lane.b32.xlu0 %v636, 127
  %v1082 = vpop.permute.xlu0 %1081
  %1083 = vrot.lane.b32.xlu0 %v640, 127
  %v1084 = vpop.permute.xlu0 %1083
  %1085 = vrot.lane.b32.xlu0 %v644, 127
  %v1086 = vpop.permute.xlu0 %1085
  %1087 = vrot.lane.b32.xlu0 %v633, 127
  %v1088 = vpop.permute.xlu0 %1087
  %1089 = vrot.lane.b32.xlu0 %v637, 127
  %v1090 = vpop.permute.xlu0 %1089
  %1091 = vrot.lane.b32.xlu0 %v641, 127
  %v1092 = vpop.permute.xlu0 %1091
  %1093 = vrot.lane.b32.xlu0 %v645, 127
  %v1094 = vpop.permute.xlu0 %1093
  %1095 = vrot.lane.b32.xlu0 %v634, 127
  %v1096 = vpop.permute.xlu0 %1095
  %1097 = vrot.lane.b32.xlu0 %v638, 127
  %v1098 = vpop.permute.xlu0 %1097
  %1099 = vrot.lane.b32.xlu0 %v642, 127
  %v1100 = vpop.permute.xlu0 %1099
  %1101 = vrot.lane.b32.xlu0 %v646, 127
  %v1102 = vpop.permute.xlu0 %1101
  %v1103 = vsel %vm211, %v1088, %v1096
  %v1104 = vsel %vm211, %v1090, %v1098
  %v1105 = vsel %vm211, %v1092, %v1100
  %v1106 = vsel %vm211, %v1094, %v1102
  %v1107 = vsel %vm211, %v1080, %v1088
  %v1108 = vsel %vm211, %v1082, %v1090
  %v1109 = vsel %vm211, %v1084, %v1092
  %v1110 = vsel %vm211, %v1086, %v1094
  %v1111 = vsel %vm211, %v1072, %v1080
  %v1112 = vsel %vm211, %v1074, %v1082
  %v1113 = vsel %vm211, %v1076, %v1084
  %v1114 = vsel %vm211, %v1078, %v1086
  %v1115 = vsel %vm211, %v1096, %v1072
  %v1116 = vsel %vm211, %v1098, %v1074
  %v1117 = vsel %vm211, %v1100, %v1076
  %v1118 = vsel %vm211, %v1102, %v1078
  %v1119 = vld [vmem:[%s216] ss:$8 sm:$0xf]
  %v1121 = vlaneseq
  %v1122 = vshrl.u32 %v1121, 7
  %v1123 = vsub.s32 0, %v1122
  %v1124 = vrot.slane %v1119, %v1123
  %v1125 = vlaneseq
  %v1126 = vshrl.u32 %v1125, 7
  %v1127 = vsub.s32 1, %v1126
  %v1128 = vrot.slane %v1119, %v1127
  %v1129 = vlaneseq
  %v1130 = vshrl.u32 %v1129, 7
  %v1131 = vsub.s32 2, %v1130
  %v1132 = vrot.slane %v1119, %v1131
  %v1133 = vlaneseq
  %v1134 = vshrl.u32 %v1133, 7
  %v1135 = vsub.s32 3, %v1134
  %v1136 = vrot.slane %v1119, %v1135
  %v1141 = vmul.f32 %v1111, %v1124
  %v1142 = vmul.f32 %v1107, %v1128
  %v1143 = vmul.f32 %v1103, %v1132
  %v1144 = vmul.f32 %v1115, %v1136
  %v1145 = vmul.f32 %v1112, %v1124
  %v1146 = vmul.f32 %v1108, %v1128
  %v1147 = vmul.f32 %v1104, %v1132
  %v1148 = vmul.f32 %v1116, %v1136
  %v1149 = vmul.f32 %v1113, %v1124
  %v1150 = vmul.f32 %v1109, %v1128
  %v1151 = vmul.f32 %v1105, %v1132
  %v1152 = vmul.f32 %v1117, %v1136
  %v1153 = vmul.f32 %v1114, %v1124
  %v1154 = vmul.f32 %v1110, %v1128
  %v1155 = vmul.f32 %v1106, %v1132
  %v1156 = vmul.f32 %v1118, %v1136
  %1157 = vst [vmem:[#allocation2 + $0x280] sm:$0xff] %v1141
  %1158 = vst [vmem:[#allocation2 + $0x288] sm:$0xff] %v1142
  %1159 = vst [vmem:[#allocation2 + $0x290] sm:$0xff] %v1143
  %1160 = vst [vmem:[#allocation2 + $0x298] sm:$0xff] %v1144
  %1161 = vst [vmem:[#allocation2 + $0x2a0] sm:$0xff] %v1145
  %1162 = vst [vmem:[#allocation2 + $0x2a8] sm:$0xff] %v1146
  %1163 = vst [vmem:[#allocation2 + $0x2b0] sm:$0xff] %v1147
  %1164 = vst [vmem:[#allocation2 + $0x2b8] sm:$0xff] %v1148
  %1165 = vst [vmem:[#allocation2 + $0x2c0] sm:$0xff] %v1149
  %1166 = vst [vmem:[#allocation2 + $0x2c8] sm:$0xff] %v1150
  %1167 = vst [vmem:[#allocation2 + $0x2d0] sm:$0xff] %v1151
  %1168 = vst [vmem:[#allocation2 + $0x2d8] sm:$0xff] %v1152
  %1169 = vst [vmem:[#allocation2 + $0x2e0] sm:$0xff] %v1153
  %1170 = vst [vmem:[#allocation2 + $0x2e8] sm:$0xff] %v1154
  %1171 = vst [vmem:[#allocation2 + $0x2f0] sm:$0xff] %v1155
  %1172 = vst [vmem:[#allocation2 + $0x2f8] sm:$0xff] %v1156
  %1173 = vrot.lane.b32.xlu0 %v631, 113
  %v1174 = vpop.permute.xlu0 %1173
  %1175 = vrot.lane.b32.xlu0 %v635, 113
  %v1176 = vpop.permute.xlu0 %1175
  %1177 = vrot.lane.b32.xlu0 %v639, 113
  %v1178 = vpop.permute.xlu0 %1177
  %1179 = vrot.lane.b32.xlu0 %v643, 113
  %v1180 = vpop.permute.xlu0 %1179
  %1181 = vrot.lane.b32.xlu0 %v632, 113
  %v1182 = vpop.permute.xlu0 %1181
  %1183 = vrot.lane.b32.xlu0 %v636, 113
  %v1184 = vpop.permute.xlu0 %1183
  %1185 = vrot.lane.b32.xlu0 %v640, 113
  %v1186 = vpop.permute.xlu0 %1185
  %1187 = vrot.lane.b32.xlu0 %v644, 113
  %v1188 = vpop.permute.xlu0 %1187
  %1189 = vrot.lane.b32.xlu0 %v633, 113
  %v1190 = vpop.permute.xlu0 %1189
  %1191 = vrot.lane.b32.xlu0 %v637, 113
  %v1192 = vpop.permute.xlu0 %1191
  %1193 = vrot.lane.b32.xlu0 %v641, 113
  %v1194 = vpop.permute.xlu0 %1193
  %1195 = vrot.lane.b32.xlu0 %v645, 113
  %v1196 = vpop.permute.xlu0 %1195
  %1197 = vrot.lane.b32.xlu0 %v634, 113
  %v1198 = vpop.permute.xlu0 %1197
  %1199 = vrot.lane.b32.xlu0 %v638, 113
  %v1200 = vpop.permute.xlu0 %1199
  %1201 = vrot.lane.b32.xlu0 %v642, 113
  %v1202 = vpop.permute.xlu0 %1201
  %1203 = vrot.lane.b32.xlu0 %v646, 113
  %v1204 = vpop.permute.xlu0 %1203
  %v1205 = vsel %vm255, %v1190, %v1198
  %v1206 = vsel %vm255, %v1192, %v1200
  %v1207 = vsel %vm255, %v1194, %v1202
  %v1208 = vsel %vm255, %v1196, %v1204
  %v1209 = vsel %vm255, %v1182, %v1190
  %v1210 = vsel %vm255, %v1184, %v1192
  %v1211 = vsel %vm255, %v1186, %v1194
  %v1212 = vsel %vm255, %v1188, %v1196
  %v1213 = vsel %vm255, %v1174, %v1182
  %v1214 = vsel %vm255, %v1176, %v1184
  %v1215 = vsel %vm255, %v1178, %v1186
  %v1216 = vsel %vm255, %v1180, %v1188
  %v1217 = vsel %vm255, %v1198, %v1174
  %v1218 = vsel %vm255, %v1200, %v1176
  %v1219 = vsel %vm255, %v1202, %v1178
  %v1220 = vsel %vm255, %v1204, %v1180
  %v1221 = vld [vmem:[%s260] ss:$8 sm:$0xf]
  %v1223 = vlaneseq
  %v1224 = vshrl.u32 %v1223, 7
  %v1225 = vsub.s32 0, %v1224
  %v1226 = vrot.slane %v1221, %v1225
  %v1227 = vlaneseq
  %v1228 = vshrl.u32 %v1227, 7
  %v1229 = vsub.s32 1, %v1228
  %v1230 = vrot.slane %v1221, %v1229
  %v1231 = vlaneseq
  %v1232 = vshrl.u32 %v1231, 7
  %v1233 = vsub.s32 2, %v1232
  %v1234 = vrot.slane %v1221, %v1233
  %v1235 = vlaneseq
  %v1236 = vshrl.u32 %v1235, 7
  %v1237 = vsub.s32 3, %v1236
  %v1238 = vrot.slane %v1221, %v1237
  %v1243 = vmul.f32 %v1213, %v1226
  %v1244 = vmul.f32 %v1209, %v1230
  %v1245 = vmul.f32 %v1205, %v1234
  %v1246 = vmul.f32 %v1217, %v1238
  %v1247 = vmul.f32 %v1214, %v1226
  %v1248 = vmul.f32 %v1210, %v1230
  %v1249 = vmul.f32 %v1206, %v1234
  %v1250 = vmul.f32 %v1218, %v1238
  %v1251 = vmul.f32 %v1215, %v1226
  %v1252 = vmul.f32 %v1211, %v1230
  %v1253 = vmul.f32 %v1207, %v1234
  %v1254 = vmul.f32 %v1219, %v1238
  %v1255 = vmul.f32 %v1216, %v1226
  %v1256 = vmul.f32 %v1212, %v1230
  %v1257 = vmul.f32 %v1208, %v1234
  %v1258 = vmul.f32 %v1220, %v1238
  %1259 = vst [vmem:[#allocation2 + $0x300] sm:$0xff] %v1243
  %1260 = vst [vmem:[#allocation2 + $0x308] sm:$0xff] %v1244
  %1261 = vst [vmem:[#allocation2 + $0x310] sm:$0xff] %v1245
  %1262 = vst [vmem:[#allocation2 + $0x318] sm:$0xff] %v1246
  %1263 = vst [vmem:[#allocation2 + $0x320] sm:$0xff] %v1247
  %1264 = vst [vmem:[#allocation2 + $0x328] sm:$0xff] %v1248
  %1265 = vst [vmem:[#allocation2 + $0x330] sm:$0xff] %v1249
  %1266 = vst [vmem:[#allocation2 + $0x338] sm:$0xff] %v1250
  %1267 = vst [vmem:[#allocation2 + $0x340] sm:$0xff] %v1251
  %1268 = vst [vmem:[#allocation2 + $0x348] sm:$0xff] %v1252
  %1269 = vst [vmem:[#allocation2 + $0x350] sm:$0xff] %v1253
  %1270 = vst [vmem:[#allocation2 + $0x358] sm:$0xff] %v1254
  %1271 = vst [vmem:[#allocation2 + $0x360] sm:$0xff] %v1255
  %1272 = vst [vmem:[#allocation2 + $0x368] sm:$0xff] %v1256
  %1273 = vst [vmem:[#allocation2 + $0x370] sm:$0xff] %v1257
  %1274 = vst [vmem:[#allocation2 + $0x378] sm:$0xff] %v1258
  %1275 = vrot.lane.b32.xlu0 %v631, 112
  %v1276 = vpop.permute.xlu0 %1275
  %1277 = vrot.lane.b32.xlu0 %v635, 112
  %v1278 = vpop.permute.xlu0 %1277
  %1279 = vrot.lane.b32.xlu0 %v639, 112
  %v1280 = vpop.permute.xlu0 %1279
  %1281 = vrot.lane.b32.xlu0 %v643, 112
  %v1282 = vpop.permute.xlu0 %1281
  %1283 = vrot.lane.b32.xlu0 %v632, 112
  %v1284 = vpop.permute.xlu0 %1283
  %1285 = vrot.lane.b32.xlu0 %v636, 112
  %v1286 = vpop.permute.xlu0 %1285
  %1287 = vrot.lane.b32.xlu0 %v640, 112
  %v1288 = vpop.permute.xlu0 %1287
  %1289 = vrot.lane.b32.xlu0 %v644, 112
  %v1290 = vpop.permute.xlu0 %1289
  %1291 = vrot.lane.b32.xlu0 %v633, 112
  %v1292 = vpop.permute.xlu0 %1291
  %1293 = vrot.lane.b32.xlu0 %v637, 112
  %v1294 = vpop.permute.xlu0 %1293
  %1295 = vrot.lane.b32.xlu0 %v641, 112
  %v1296 = vpop.permute.xlu0 %1295
  %1297 = vrot.lane.b32.xlu0 %v645, 112
  %v1298 = vpop.permute.xlu0 %1297
  %1299 = vrot.lane.b32.xlu0 %v634, 112
  %v1300 = vpop.permute.xlu0 %1299
  %1301 = vrot.lane.b32.xlu0 %v638, 112
  %v1302 = vpop.permute.xlu0 %1301
  %1303 = vrot.lane.b32.xlu0 %v642, 112
  %v1304 = vpop.permute.xlu0 %1303
  %1305 = vrot.lane.b32.xlu0 %v646, 112
  %v1306 = vpop.permute.xlu0 %1305
  %v1307 = vsel %vm299, %v1292, %v1300
  %v1308 = vsel %vm299, %v1294, %v1302
  %v1309 = vsel %vm299, %v1296, %v1304
  %v1310 = vsel %vm299, %v1298, %v1306
  %v1311 = vsel %vm299, %v1284, %v1292
  %v1312 = vsel %vm299, %v1286, %v1294
  %v1313 = vsel %vm299, %v1288, %v1296
  %v1314 = vsel %vm299, %v1290, %v1298
  %v1315 = vsel %vm299, %v1276, %v1284
  %v1316 = vsel %vm299, %v1278, %v1286
  %v1317 = vsel %vm299, %v1280, %v1288
  %v1318 = vsel %vm299, %v1282, %v1290
  %v1319 = vsel %vm299, %v1300, %v1276
  %v1320 = vsel %vm299, %v1302, %v1278
  %v1321 = vsel %vm299, %v1304, %v1280
  %v1322 = vsel %vm299, %v1306, %v1282
  %v1323 = vld [vmem:[%s304] ss:$8 sm:$0xf]
  %v1325 = vlaneseq
  %v1326 = vshrl.u32 %v1325, 7
  %v1327 = vsub.s32 0, %v1326
  %v1328 = vrot.slane %v1323, %v1327
  %v1329 = vlaneseq
  %v1330 = vshrl.u32 %v1329, 7
  %v1331 = vsub.s32 1, %v1330
  %v1332 = vrot.slane %v1323, %v1331
  %v1333 = vlaneseq
  %v1334 = vshrl.u32 %v1333, 7
  %v1335 = vsub.s32 2, %v1334
  %v1336 = vrot.slane %v1323, %v1335
  %v1337 = vlaneseq
  %v1338 = vshrl.u32 %v1337, 7
  %v1339 = vsub.s32 3, %v1338
  %v1340 = vrot.slane %v1323, %v1339
  %v1345 = vmul.f32 %v1315, %v1328
  %v1346 = vmul.f32 %v1311, %v1332
  %v1347 = vmul.f32 %v1307, %v1336
  %v1348 = vmul.f32 %v1319, %v1340
  %v1349 = vmul.f32 %v1316, %v1328
  %v1350 = vmul.f32 %v1312, %v1332
  %v1351 = vmul.f32 %v1308, %v1336
  %v1352 = vmul.f32 %v1320, %v1340
  %v1353 = vmul.f32 %v1317, %v1328
  %v1354 = vmul.f32 %v1313, %v1332
  %v1355 = vmul.f32 %v1309, %v1336
  %v1356 = vmul.f32 %v1321, %v1340
  %v1357 = vmul.f32 %v1318, %v1328
  %v1358 = vmul.f32 %v1314, %v1332
  %v1359 = vmul.f32 %v1310, %v1336
  %v1360 = vmul.f32 %v1322, %v1340
  %1361 = vst [vmem:[#allocation2 + $0x380] sm:$0xff] %v1345
  %1362 = vst [vmem:[#allocation2 + $0x388] sm:$0xff] %v1346
  %1363 = vst [vmem:[#allocation2 + $0x390] sm:$0xff] %v1347
  %1364 = vst [vmem:[#allocation2 + $0x398] sm:$0xff] %v1348
  %1365 = vst [vmem:[#allocation2 + $0x3a0] sm:$0xff] %v1349
  %1366 = vst [vmem:[#allocation2 + $0x3a8] sm:$0xff] %v1350
  %1367 = vst [vmem:[#allocation2 + $0x3b0] sm:$0xff] %v1351
  %1368 = vst [vmem:[#allocation2 + $0x3b8] sm:$0xff] %v1352
  %1369 = vst [vmem:[#allocation2 + $0x3c0] sm:$0xff] %v1353
  %1370 = vst [vmem:[#allocation2 + $0x3c8] sm:$0xff] %v1354
  %1371 = vst [vmem:[#allocation2 + $0x3d0] sm:$0xff] %v1355
  %1372 = vst [vmem:[#allocation2 + $0x3d8] sm:$0xff] %v1356
  %1373 = vst [vmem:[#allocation2 + $0x3e0] sm:$0xff] %v1357
  %1374 = vst [vmem:[#allocation2 + $0x3e8] sm:$0xff] %v1358
  %1375 = vst [vmem:[#allocation2 + $0x3f0] sm:$0xff] %v1359
  %1376 = vst [vmem:[#allocation2 + $0x3f8] sm:$0xff] %v1360
  %1377 = vrot.lane.b32.xlu0 %v631, 111
  %v1378 = vpop.permute.xlu0 %1377
  %1379 = vrot.lane.b32.xlu0 %v635, 111
  %v1380 = vpop.permute.xlu0 %1379
  %1381 = vrot.lane.b32.xlu0 %v639, 111
  %v1382 = vpop.permute.xlu0 %1381
  %1383 = vrot.lane.b32.xlu0 %v643, 111
  %v1384 = vpop.permute.xlu0 %1383
  %1385 = vrot.lane.b32.xlu0 %v632, 111
  %v1386 = vpop.permute.xlu0 %1385
  %1387 = vrot.lane.b32.xlu0 %v636, 111
  %v1388 = vpop.permute.xlu0 %1387
  %1389 = vrot.lane.b32.xlu0 %v640, 111
  %v1390 = vpop.permute.xlu0 %1389
  %1391 = vrot.lane.b32.xlu0 %v644, 111
  %v1392 = vpop.permute.xlu0 %1391
  %1393 = vrot.lane.b32.xlu0 %v633, 111
  %v1394 = vpop.permute.xlu0 %1393
  %1395 = vrot.lane.b32.xlu0 %v637, 111
  %v1396 = vpop.permute.xlu0 %1395
  %1397 = vrot.lane.b32.xlu0 %v641, 111
  %v1398 = vpop.permute.xlu0 %1397
  %1399 = vrot.lane.b32.xlu0 %v645, 111
  %v1400 = vpop.permute.xlu0 %1399
  %1401 = vrot.lane.b32.xlu0 %v634, 111
  %v1402 = vpop.permute.xlu0 %1401
  %1403 = vrot.lane.b32.xlu0 %v638, 111
  %v1404 = vpop.permute.xlu0 %1403
  %1405 = vrot.lane.b32.xlu0 %v642, 111
  %v1406 = vpop.permute.xlu0 %1405
  %1407 = vrot.lane.b32.xlu0 %v646, 111
  %v1408 = vpop.permute.xlu0 %1407
  %v1409 = vsel %vm343, %v1394, %v1402
  %v1410 = vsel %vm343, %v1396, %v1404
  %v1411 = vsel %vm343, %v1398, %v1406
  %v1412 = vsel %vm343, %v1400, %v1408
  %v1413 = vsel %vm343, %v1386, %v1394
  %v1414 = vsel %vm343, %v1388, %v1396
  %v1415 = vsel %vm343, %v1390, %v1398
  %v1416 = vsel %vm343, %v1392, %v1400
  %v1417 = vsel %vm343, %v1378, %v1386
  %v1418 = vsel %vm343, %v1380, %v1388
  %v1419 = vsel %vm343, %v1382, %v1390
  %v1420 = vsel %vm343, %v1384, %v1392
  %v1421 = vsel %vm343, %v1402, %v1378
  %v1422 = vsel %vm343, %v1404, %v1380
  %v1423 = vsel %vm343, %v1406, %v1382
  %v1424 = vsel %vm343, %v1408, %v1384
  %v1425 = vld [vmem:[%s348] ss:$8 sm:$0xf]
  %v1427 = vlaneseq
  %v1428 = vshrl.u32 %v1427, 7
  %v1429 = vsub.s32 0, %v1428
  %v1430 = vrot.slane %v1425, %v1429
  %v1431 = vlaneseq
  %v1432 = vshrl.u32 %v1431, 7
  %v1433 = vsub.s32 1, %v1432
  %v1434 = vrot.slane %v1425, %v1433
  %v1435 = vlaneseq
  %v1436 = vshrl.u32 %v1435, 7
  %v1437 = vsub.s32 2, %v1436
  %v1438 = vrot.slane %v1425, %v1437
  %v1439 = vlaneseq
  %v1440 = vshrl.u32 %v1439, 7
  %v1441 = vsub.s32 3, %v1440
  %v1442 = vrot.slane %v1425, %v1441
  %v1447 = vmul.f32 %v1417, %v1430
  %v1448 = vmul.f32 %v1413, %v1434
  %v1449 = vmul.f32 %v1409, %v1438
  %v1450 = vmul.f32 %v1421, %v1442
  %v1451 = vmul.f32 %v1418, %v1430
  %v1452 = vmul.f32 %v1414, %v1434
  %v1453 = vmul.f32 %v1410, %v1438
  %v1454 = vmul.f32 %v1422, %v1442
  %v1455 = vmul.f32 %v1419, %v1430
  %v1456 = vmul.f32 %v1415, %v1434
  %v1457 = vmul.f32 %v1411, %v1438
  %v1458 = vmul.f32 %v1423, %v1442
  %v1459 = vmul.f32 %v1420, %v1430
  %v1460 = vmul.f32 %v1416, %v1434
  %v1461 = vmul.f32 %v1412, %v1438
  %v1462 = vmul.f32 %v1424, %v1442
  %1463 = vst [vmem:[#allocation2 + $0x400] sm:$0xff] %v1447
  %1464 = vst [vmem:[#allocation2 + $0x408] sm:$0xff] %v1448
  %1465 = vst [vmem:[#allocation2 + $0x410] sm:$0xff] %v1449
  %1466 = vst [vmem:[#allocation2 + $0x418] sm:$0xff] %v1450
  %1467 = vst [vmem:[#allocation2 + $0x420] sm:$0xff] %v1451
  %1468 = vst [vmem:[#allocation2 + $0x428] sm:$0xff] %v1452
  %1469 = vst [vmem:[#allocation2 + $0x430] sm:$0xff] %v1453
  %1470 = vst [vmem:[#allocation2 + $0x438] sm:$0xff] %v1454
  %1471 = vst [vmem:[#allocation2 + $0x440] sm:$0xff] %v1455
  %1472 = vst [vmem:[#allocation2 + $0x448] sm:$0xff] %v1456
  %1473 = vst [vmem:[#allocation2 + $0x450] sm:$0xff] %v1457
  %1474 = vst [vmem:[#allocation2 + $0x458] sm:$0xff] %v1458
  %1475 = vst [vmem:[#allocation2 + $0x460] sm:$0xff] %v1459
  %1476 = vst [vmem:[#allocation2 + $0x468] sm:$0xff] %v1460
  %1477 = vst [vmem:[#allocation2 + $0x470] sm:$0xff] %v1461
  %1478 = vst [vmem:[#allocation2 + $0x478] sm:$0xff] %v1462
  %v1479 = vld [vmem:[#allocation2] sm:$0xff]
  %v1480 = vld [vmem:[#allocation2 + $0x8] sm:$0xff]
  %v1481 = vld [vmem:[#allocation2 + $0x10] sm:$0xff]
  %v1482 = vld [vmem:[#allocation2 + $0x18] sm:$0xff]
  %v1483 = vld [vmem:[#allocation2 + $0x20] sm:$0xff]
  %v1484 = vld [vmem:[#allocation2 + $0x28] sm:$0xff]
  %v1485 = vld [vmem:[#allocation2 + $0x30] sm:$0xff]
  %v1486 = vld [vmem:[#allocation2 + $0x38] sm:$0xff]
  %v1487 = vld [vmem:[#allocation2 + $0x40] sm:$0xff]
  %v1488 = vld [vmem:[#allocation2 + $0x48] sm:$0xff]
  %v1489 = vld [vmem:[#allocation2 + $0x50] sm:$0xff]
  %v1490 = vld [vmem:[#allocation2 + $0x58] sm:$0xff]
  %v1491 = vld [vmem:[#allocation2 + $0x60] sm:$0xff]
  %v1492 = vld [vmem:[#allocation2 + $0x68] sm:$0xff]
  %v1493 = vld [vmem:[#allocation2 + $0x70] sm:$0xff]
  %v1494 = vld [vmem:[#allocation2 + $0x78] sm:$0xff]
  %v1495 = vld [vmem:[#allocation2 + $0x80] sm:$0xff]
  %v1496 = vld [vmem:[#allocation2 + $0x88] sm:$0xff]
  %v1497 = vld [vmem:[#allocation2 + $0x90] sm:$0xff]
  %v1498 = vld [vmem:[#allocation2 + $0x98] sm:$0xff]
  %v1499 = vld [vmem:[#allocation2 + $0xa0] sm:$0xff]
  %v1500 = vld [vmem:[#allocation2 + $0xa8] sm:$0xff]
  %v1501 = vld [vmem:[#allocation2 + $0xb0] sm:$0xff]
  %v1502 = vld [vmem:[#allocation2 + $0xb8] sm:$0xff]
  %v1503 = vld [vmem:[#allocation2 + $0xc0] sm:$0xff]
  %v1504 = vld [vmem:[#allocation2 + $0xc8] sm:$0xff]
  %v1505 = vld [vmem:[#allocation2 + $0xd0] sm:$0xff]
  %v1506 = vld [vmem:[#allocation2 + $0xd8] sm:$0xff]
  %v1507 = vld [vmem:[#allocation2 + $0xe0] sm:$0xff]
  %v1508 = vld [vmem:[#allocation2 + $0xe8] sm:$0xff]
  %v1509 = vld [vmem:[#allocation2 + $0xf0] sm:$0xff]
  %v1510 = vld [vmem:[#allocation2 + $0xf8] sm:$0xff]
  %v1511 = vld [vmem:[#allocation2 + $0x100] sm:$0xff]
  %v1512 = vld [vmem:[#allocation2 + $0x108] sm:$0xff]
  %v1513 = vld [vmem:[#allocation2 + $0x110] sm:$0xff]
  %v1514 = vld [vmem:[#allocation2 + $0x118] sm:$0xff]
  %v1515 = vld [vmem:[#allocation2 + $0x120] sm:$0xff]
  %v1516 = vld [vmem:[#allocation2 + $0x128] sm:$0xff]
  %v1517 = vld [vmem:[#allocation2 + $0x130] sm:$0xff]
  %v1518 = vld [vmem:[#allocation2 + $0x138] sm:$0xff]
  %v1519 = vld [vmem:[#allocation2 + $0x140] sm:$0xff]
  %v1520 = vld [vmem:[#allocation2 + $0x148] sm:$0xff]
  %v1521 = vld [vmem:[#allocation2 + $0x150] sm:$0xff]
  %v1522 = vld [vmem:[#allocation2 + $0x158] sm:$0xff]
  %v1523 = vld [vmem:[#allocation2 + $0x160] sm:$0xff]
  %v1524 = vld [vmem:[#allocation2 + $0x168] sm:$0xff]
  %v1525 = vld [vmem:[#allocation2 + $0x170] sm:$0xff]
  %v1526 = vld [vmem:[#allocation2 + $0x178] sm:$0xff]
  %v1527 = vld [vmem:[#allocation2 + $0x180] sm:$0xff]
  %v1528 = vld [vmem:[#allocation2 + $0x188] sm:$0xff]
  %v1529 = vld [vmem:[#allocation2 + $0x190] sm:$0xff]
  %v1530 = vld [vmem:[#allocation2 + $0x198] sm:$0xff]
  %v1531 = vld [vmem:[#allocation2 + $0x1a0] sm:$0xff]
  %v1532 = vld [vmem:[#allocation2 + $0x1a8] sm:$0xff]
  %v1533 = vld [vmem:[#allocation2 + $0x1b0] sm:$0xff]
  %v1534 = vld [vmem:[#allocation2 + $0x1b8] sm:$0xff]
  %v1535 = vld [vmem:[#allocation2 + $0x1c0] sm:$0xff]
  %v1536 = vld [vmem:[#allocation2 + $0x1c8] sm:$0xff]
  %v1537 = vld [vmem:[#allocation2 + $0x1d0] sm:$0xff]
  %v1538 = vld [vmem:[#allocation2 + $0x1d8] sm:$0xff]
  %v1539 = vld [vmem:[#allocation2 + $0x1e0] sm:$0xff]
  %v1540 = vld [vmem:[#allocation2 + $0x1e8] sm:$0xff]
  %v1541 = vld [vmem:[#allocation2 + $0x1f0] sm:$0xff]
  %v1542 = vld [vmem:[#allocation2 + $0x1f8] sm:$0xff]
  %v1543 = vld [vmem:[#allocation2 + $0x200] sm:$0xff]
  %v1544 = vld [vmem:[#allocation2 + $0x208] sm:$0xff]
  %v1545 = vld [vmem:[#allocation2 + $0x210] sm:$0xff]
  %v1546 = vld [vmem:[#allocation2 + $0x218] sm:$0xff]
  %v1547 = vld [vmem:[#allocation2 + $0x220] sm:$0xff]
  %v1548 = vld [vmem:[#allocation2 + $0x228] sm:$0xff]
  %v1549 = vld [vmem:[#allocation2 + $0x230] sm:$0xff]
  %v1550 = vld [vmem:[#allocation2 + $0x238] sm:$0xff]
  %v1551 = vld [vmem:[#allocation2 + $0x240] sm:$0xff]
  %v1552 = vld [vmem:[#allocation2 + $0x248] sm:$0xff]
  %v1553 = vld [vmem:[#allocation2 + $0x250] sm:$0xff]
  %v1554 = vld [vmem:[#allocation2 + $0x258] sm:$0xff]
  %v1555 = vld [vmem:[#allocation2 + $0x260] sm:$0xff]
  %v1556 = vld [vmem:[#allocation2 + $0x268] sm:$0xff]
  %v1557 = vld [vmem:[#allocation2 + $0x270] sm:$0xff]
  %v1558 = vld [vmem:[#allocation2 + $0x278] sm:$0xff]
  %v1559 = vld [vmem:[#allocation2 + $0x280] sm:$0xff]
  %v1560 = vld [vmem:[#allocation2 + $0x288] sm:$0xff]
  %v1561 = vld [vmem:[#allocation2 + $0x290] sm:$0xff]
  %v1562 = vld [vmem:[#allocation2 + $0x298] sm:$0xff]
  %v1563 = vld [vmem:[#allocation2 + $0x2a0] sm:$0xff]
  %v1564 = vld [vmem:[#allocation2 + $0x2a8] sm:$0xff]
  %v1565 = vld [vmem:[#allocation2 + $0x2b0] sm:$0xff]
  %v1566 = vld [vmem:[#allocation2 + $0x2b8] sm:$0xff]
  %v1567 = vld [vmem:[#allocation2 + $0x2c0] sm:$0xff]
  %v1568 = vld [vmem:[#allocation2 + $0x2c8] sm:$0xff]
  %v1569 = vld [vmem:[#allocation2 + $0x2d0] sm:$0xff]
  %v1570 = vld [vmem:[#allocation2 + $0x2d8] sm:$0xff]
  %v1571 = vld [vmem:[#allocation2 + $0x2e0] sm:$0xff]
  %v1572 = vld [vmem:[#allocation2 + $0x2e8] sm:$0xff]
  %v1573 = vld [vmem:[#allocation2 + $0x2f0] sm:$0xff]
  %v1574 = vld [vmem:[#allocation2 + $0x2f8] sm:$0xff]
  %v1575 = vld [vmem:[#allocation2 + $0x300] sm:$0xff]
  %v1576 = vld [vmem:[#allocation2 + $0x308] sm:$0xff]
  %v1577 = vld [vmem:[#allocation2 + $0x310] sm:$0xff]
  %v1578 = vld [vmem:[#allocation2 + $0x318] sm:$0xff]
  %v1579 = vld [vmem:[#allocation2 + $0x320] sm:$0xff]
  %v1580 = vld [vmem:[#allocation2 + $0x328] sm:$0xff]
  %v1581 = vld [vmem:[#allocation2 + $0x330] sm:$0xff]
  %v1582 = vld [vmem:[#allocation2 + $0x338] sm:$0xff]
  %v1583 = vld [vmem:[#allocation2 + $0x340] sm:$0xff]
  %v1584 = vld [vmem:[#allocation2 + $0x348] sm:$0xff]
  %v1585 = vld [vmem:[#allocation2 + $0x350] sm:$0xff]
  %v1586 = vld [vmem:[#allocation2 + $0x358] sm:$0xff]
  %v1587 = vld [vmem:[#allocation2 + $0x360] sm:$0xff]
  %v1588 = vld [vmem:[#allocation2 + $0x368] sm:$0xff]
  %v1589 = vld [vmem:[#allocation2 + $0x370] sm:$0xff]
  %v1590 = vld [vmem:[#allocation2 + $0x378] sm:$0xff]
  %v1591 = vld [vmem:[#allocation2 + $0x380] sm:$0xff]
  %v1592 = vld [vmem:[#allocation2 + $0x388] sm:$0xff]
  %v1593 = vld [vmem:[#allocation2 + $0x390] sm:$0xff]
  %v1594 = vld [vmem:[#allocation2 + $0x398] sm:$0xff]
  %v1595 = vld [vmem:[#allocation2 + $0x3a0] sm:$0xff]
  %v1596 = vld [vmem:[#allocation2 + $0x3a8] sm:$0xff]
  %v1597 = vld [vmem:[#allocation2 + $0x3b0] sm:$0xff]
  %v1598 = vld [vmem:[#allocation2 + $0x3b8] sm:$0xff]
  %v1599 = vld [vmem:[#allocation2 + $0x3c0] sm:$0xff]
  %v1600 = vld [vmem:[#allocation2 + $0x3c8] sm:$0xff]
  %v1601 = vld [vmem:[#allocation2 + $0x3d0] sm:$0xff]
  %v1602 = vld [vmem:[#allocation2 + $0x3d8] sm:$0xff]
  %v1603 = vld [vmem:[#allocation2 + $0x3e0] sm:$0xff]
  %v1604 = vld [vmem:[#allocation2 + $0x3e8] sm:$0xff]
  %v1605 = vld [vmem:[#allocation2 + $0x3f0] sm:$0xff]
  %v1606 = vld [vmem:[#allocation2 + $0x3f8] sm:$0xff]
  %v1607 = vld [vmem:[#allocation2 + $0x400] sm:$0xff]
  %v1608 = vld [vmem:[#allocation2 + $0x408] sm:$0xff]
  %v1609 = vld [vmem:[#allocation2 + $0x410] sm:$0xff]
  %v1610 = vld [vmem:[#allocation2 + $0x418] sm:$0xff]
  %v1611 = vld [vmem:[#allocation2 + $0x420] sm:$0xff]
  %v1612 = vld [vmem:[#allocation2 + $0x428] sm:$0xff]
  %v1613 = vld [vmem:[#allocation2 + $0x430] sm:$0xff]
  %v1614 = vld [vmem:[#allocation2 + $0x438] sm:$0xff]
  %v1615 = vld [vmem:[#allocation2 + $0x440] sm:$0xff]
  %v1616 = vld [vmem:[#allocation2 + $0x448] sm:$0xff]
  %v1617 = vld [vmem:[#allocation2 + $0x450] sm:$0xff]
  %v1618 = vld [vmem:[#allocation2 + $0x458] sm:$0xff]
  %v1619 = vld [vmem:[#allocation2 + $0x460] sm:$0xff]
  %v1620 = vld [vmem:[#allocation2 + $0x468] sm:$0xff]
  %v1621 = vld [vmem:[#allocation2 + $0x470] sm:$0xff]
  %v1622 = vld [vmem:[#allocation2 + $0x478] sm:$0xff]
  %v1623 = vld [vmem:[%s1 + $0x30] sm:$0xff]
  %v1624 = vld [vmem:[%s1 + $0x38] sm:$0xf]
  %v1625 = vld [vmem:[%s1 + $0x3c] sm:$0xff]
  %v1626 = vld [vmem:[%s1 + $0x44] sm:$0xf]
  %v1627 = vld [vmem:[%s1 + $0x48] sm:$0xff]
  %v1628 = vld [vmem:[%s1 + $0x50] sm:$0xf]
  %v1629 = vld [vmem:[%s1 + $0x54] sm:$0xff]
  %v1630 = vld [vmem:[%s1 + $0x5c] sm:$0xf]
  %v1631 = vpack.c.bf16 %v1483, %v1479
  %v1632 = vpack.c.bf16 %v1484, %v1480
  %v1633 = vpack.c.bf16 %v1485, %v1481
  %v1634 = vpack.c.bf16 %v1486, %v1482
  %v1635 = vpack.c.bf16 %v1491, %v1487
  %v1636 = vpack.c.bf16 %v1492, %v1488
  %v1637 = vpack.c.bf16 %v1493, %v1489
  %v1638 = vpack.c.bf16 %v1494, %v1490
  %v1639 = vpack.c.bf16 %v1499, %v1495
  %v1640 = vpack.c.bf16 %v1500, %v1496
  %v1641 = vpack.c.bf16 %v1501, %v1497
  %v1642 = vpack.c.bf16 %v1502, %v1498
  %v1643 = vpack.c.bf16 %v1507, %v1503
  %v1644 = vpack.c.bf16 %v1508, %v1504
  %v1645 = vpack.c.bf16 %v1509, %v1505
  %v1646 = vpack.c.bf16 %v1510, %v1506
  %v1647 = vpack.c.bf16 %v1515, %v1511
  %v1648 = vpack.c.bf16 %v1516, %v1512
  %v1649 = vpack.c.bf16 %v1517, %v1513
  %v1650 = vpack.c.bf16 %v1518, %v1514
  %v1651 = vpack.c.bf16 %v1523, %v1519
  %v1652 = vpack.c.bf16 %v1524, %v1520
  %v1653 = vpack.c.bf16 %v1525, %v1521
  %v1654 = vpack.c.bf16 %v1526, %v1522
  %v1655 = vpack.c.bf16 %v1531, %v1527
  %v1656 = vpack.c.bf16 %v1532, %v1528
  %v1657 = vpack.c.bf16 %v1533, %v1529
  %v1658 = vpack.c.bf16 %v1534, %v1530
  %v1659 = vpack.c.bf16 %v1539, %v1535
  %v1660 = vpack.c.bf16 %v1540, %v1536
  %v1661 = vpack.c.bf16 %v1541, %v1537
  %v1662 = vpack.c.bf16 %v1542, %v1538
  %v1663 = vpack.c.bf16 %v1547, %v1543
  %v1664 = vpack.c.bf16 %v1548, %v1544
  %v1665 = vpack.c.bf16 %v1549, %v1545
  %v1666 = vpack.c.bf16 %v1550, %v1546
  %v1667 = vpack.c.bf16 %v1555, %v1551
  %v1668 = vpack.c.bf16 %v1556, %v1552
  %v1669 = vpack.c.bf16 %v1557, %v1553
  %v1670 = vpack.c.bf16 %v1558, %v1554
  %v1671 = vpack.c.bf16 %v1563, %v1559
  %v1672 = vpack.c.bf16 %v1564, %v1560
  %v1673 = vpack.c.bf16 %v1565, %v1561
  %v1674 = vpack.c.bf16 %v1566, %v1562
  %v1675 = vpack.c.bf16 %v1571, %v1567
  %v1676 = vpack.c.bf16 %v1572, %v1568
  %v1677 = vpack.c.bf16 %v1573, %v1569
  %v1678 = vpack.c.bf16 %v1574, %v1570
  %v1679 = vpack.c.bf16 %v1579, %v1575
  %v1680 = vpack.c.bf16 %v1580, %v1576
  %v1681 = vpack.c.bf16 %v1581, %v1577
  %v1682 = vpack.c.bf16 %v1582, %v1578
  %v1683 = vpack.c.bf16 %v1587, %v1583
  %v1684 = vpack.c.bf16 %v1588, %v1584
  %v1685 = vpack.c.bf16 %v1589, %v1585
  %v1686 = vpack.c.bf16 %v1590, %v1586
  %v1687 = vpack.c.bf16 %v1595, %v1591
  %v1688 = vpack.c.bf16 %v1596, %v1592
  %v1689 = vpack.c.bf16 %v1597, %v1593
  %v1690 = vpack.c.bf16 %v1598, %v1594
  %v1691 = vpack.c.bf16 %v1603, %v1599
  %v1692 = vpack.c.bf16 %v1604, %v1600
  %v1693 = vpack.c.bf16 %v1605, %v1601
  %v1694 = vpack.c.bf16 %v1606, %v1602
  %v1695 = vpack.c.bf16 %v1611, %v1607
  %v1696 = vpack.c.bf16 %v1612, %v1608
  %v1697 = vpack.c.bf16 %v1613, %v1609
  %v1698 = vpack.c.bf16 %v1614, %v1610
  %v1699 = vpack.c.bf16 %v1619, %v1615
  %v1700 = vpack.c.bf16 %v1620, %v1616
  %v1701 = vpack.c.bf16 %v1621, %v1617
  %v1702 = vpack.c.bf16 %v1622, %v1618
  %v1703 = vld [vmem:[%s2] sm:$0xff]
  %v1704 = vld [vmem:[%s2 + $0x8] sm:$0xff]
  %v1705 = vld [vmem:[%s2 + $0x10] sm:$0xff]
  %v1706 = vld [vmem:[%s2 + $0x18] sm:$0xff]
  %1708 = vset.pattern.permute.xlu0 1
  %1709 = vperm.xlu0 %1708, %v1703
  %v1710 = vpop.permute.xlu0 %1709
  %1713 = vset.pattern.permute.xlu0 1
  %1714 = vperm.xlu0 %1713, %v1704
  %v1715 = vpop.permute.xlu0 %1714
  %1718 = vset.pattern.permute.xlu0 1
  %1719 = vperm.xlu0 %1718, %v1705
  %v1720 = vpop.permute.xlu0 %1719
  %1723 = vset.pattern.permute.xlu0 1
  %1724 = vperm.xlu0 %1723, %v1706
  %v1725 = vpop.permute.xlu0 %1724
  %v1735 = vunpack.c.l.b16 %v1623
  %v1736 = vunpack.c.h.b16 %v1623
  %v1737 = vunpack.c.l.b16 %v1624
  %v1738 = vunpack.c.l.b16 %v1625
  %v1739 = vunpack.c.h.b16 %v1625
  %v1740 = vunpack.c.l.b16 %v1626
  %v1741 = vunpack.c.l.b16 %v1627
  %v1742 = vunpack.c.h.b16 %v1627
  %v1743 = vunpack.c.l.b16 %v1628
  %v1744 = vunpack.c.l.b16 %v1629
  %v1745 = vunpack.c.h.b16 %v1629
  %v1746 = vunpack.c.l.b16 %v1630
  %v1747 = vpack.c.b16 %v1738, %v1735
  %v1748 = vpack.c.b16 %v1739, %v1736
  %v1749 = vpack.c.b16 %v1740, %v1737
  %v1750 = vpack.c.b16 %v1744, %v1741
  %v1751 = vpack.c.b16 %v1745, %v1742
  %v1752 = vpack.c.b16 %v1746, %v1743
  %vm1757 = vcmask 261120
  %v1759 = vsel %vm1757, %v1749, 0
  %v1762 = vsel %vm1757, %v1752, 0
  %1764 = vmatprep.subr.bf16.mxu0 %v1632
  %1765 = vmatpush1.bf16.msra.mxu0 %v1631
  %1766 = vmatprep.subr.bf16.mxu0 %v1636
  %1767 = vmatpush1.bf16.msra.mxu0 %v1635
  %1768 = vmatprep.subr.bf16.mxu0 %v1640
  %1769 = vmatpush1.bf16.msra.mxu0 %v1639
  %1770 = vmatprep.subr.bf16.mxu0 %v1644
  %1771 = vmatpush1.bf16.msra.mxu0 %v1643
  %1772 = vmatprep.subr.bf16.mxu0 %v1648
  %1773 = vmatpush1.bf16.msra.mxu0 %v1647
  %1774 = vmatprep.subr.bf16.mxu0 %v1652
  %1775 = vmatpush1.bf16.msra.mxu0 %v1651
  %1776 = vmatprep.subr.bf16.mxu0 %v1656
  %1777 = vmatpush1.bf16.msra.mxu0 %v1655
  %1778 = vmatprep.subr.bf16.mxu0 %v1660
  %1779 = vmatpush1.bf16.msra.mxu0 %v1659
  %1780 = vmatprep.subr.bf16.mxu0 %v1664
  %1781 = vmatpush1.bf16.msra.mxu0 %v1663
  %1782 = vmatprep.subr.bf16.mxu0 %v1668
  %1783 = vmatpush1.bf16.msra.mxu0 %v1667
  %1784 = vmatprep.subr.bf16.mxu0 %v1672
  %1785 = vmatpush1.bf16.msra.mxu0 %v1671
  %1786 = vmatprep.subr.bf16.mxu0 %v1676
  %1787 = vmatpush1.bf16.msra.mxu0 %v1675
  %1788 = vmatprep.subr.bf16.mxu0 %v1680
  %1789 = vmatpush1.bf16.msra.mxu0 %v1679
  %1790 = vmatprep.subr.bf16.mxu0 %v1684
  %1791 = vmatpush1.bf16.msra.mxu0 %v1683
  %1792 = vmatprep.subr.bf16.mxu0 %v1688
  %1793 = vmatpush1.bf16.msra.mxu0 %v1687
  %1794 = vmatprep.subr.bf16.mxu0 %v1692
  %1795 = vmatpush1.bf16.msra.mxu0 %v1691
  %1796 = vmatprep.mubr.bf16.mxu0 %v1748
  %1797 = vmatmul.mubr.bf16.gmra.mrb[0].mxu0 %v1747
  %v1798 = vpop.f32.mrb[0].mxu0
  %v1799 = vadd.f32 %v1710, %v1798
  %v1800 = vpop.f32.mrb[0].mxu0
  %v1801 = vadd.f32 %v1710, %v1800
  %v1802 = vpop.f32.mrb[0].mxu0
  %v1803 = vadd.f32 %v1715, %v1802
  %v1804 = vpop.f32.mrb[0].mxu0
  %v1805 = vadd.f32 %v1715, %v1804
  %1806 = vmatprep.mubr.bf16.mxu0 %v1751
  %1807 = vmatmul.mubr.bf16.gmra.mrb[0].mxu0 %v1750
  %v1808 = vpop.f32.mrb[0].mxu0
  %v1809 = vadd.f32 %v1720, %v1808
  %v1810 = vpop.f32.mrb[0].mxu0
  %v1811 = vadd.f32 %v1720, %v1810
  %v1812 = vpop.f32.mrb[0].mxu0
  %v1813 = vadd.f32 %v1725, %v1812
  %v1814 = vpop.f32.mrb[0].mxu0
  %v1815 = vadd.f32 %v1725, %v1814
  %1816 = vdwg.mxu0
  %1817 = vmatprep.subr.bf16.mxu0 %v1696
  %1818 = vmatpush1.bf16.msra.mxu0 %v1695
  %1819 = vmatprep.subr.bf16.mxu0 %v1700
  %1820 = vmatpush1.bf16.msra.mxu0 %v1699
  %1821 = vmatprep.subr.bf16.mxu0 0
  %1822 = vmatpush1.bf16.msra.mxu0 0
  %1823 = vmatprep.subr.bf16.mxu0 0
  %1824 = vmatpush1.bf16.msra.mxu0 0
  %1825 = vmatprep.subr.bf16.mxu0 0
  %1826 = vmatpush1.bf16.msra.mxu0 0
  %1827 = vmatprep.subr.bf16.mxu0 0
  %1828 = vmatpush1.bf16.msra.mxu0 0
  %1829 = vmatprep.subr.bf16.mxu0 0
  %1830 = vmatpush1.bf16.msra.mxu0 0
  %1831 = vmatprep.subr.bf16.mxu0 0
  %1832 = vmatpush1.bf16.msra.mxu0 0
  %1833 = vmatprep.subr.bf16.mxu0 0
  %1834 = vmatpush1.bf16.msra.mxu0 0
  %1835 = vmatprep.subr.bf16.mxu0 0
  %1836 = vmatpush1.bf16.msra.mxu0 0
  %1837 = vmatprep.subr.bf16.mxu0 0
  %1838 = vmatpush1.bf16.msra.mxu0 0
  %1839 = vmatprep.subr.bf16.mxu0 0
  %1840 = vmatpush1.bf16.msra.mxu0 0
  %1841 = vmatprep.subr.bf16.mxu0 0
  %1842 = vmatpush1.bf16.msra.mxu0 0
  %1843 = vmatprep.subr.bf16.mxu0 0
  %1844 = vmatpush1.bf16.msra.mxu0 0
  %1845 = vmatprep.subr.bf16.mxu0 0
  %1846 = vmatpush1.bf16.msra.mxu0 0
  %1847 = vmatprep.subr.bf16.mxu0 0
  %1848 = vmatpush1.bf16.msra.mxu0 0
  %1849 = vmatprep.mubr.bf16.mxu0 0
  %1850 = vmatmul.mubr.bf16.gmra.mrb[0].mxu0 %v1759
  %v1851 = vpop.f32.mrb[0].mxu0
  %v1852 = vadd.f32 %v1799, %v1851
  %v1853 = vpop.f32.mrb[0].mxu0
  %v1854 = vadd.f32 %v1801, %v1853
  %v1855 = vpop.f32.mrb[0].mxu0
  %v1856 = vadd.f32 %v1803, %v1855
  %v1857 = vpop.f32.mrb[0].mxu0
  %v1858 = vadd.f32 %v1805, %v1857
  %1859 = vmatprep.mubr.bf16.mxu0 0
  %1860 = vmatmul.mubr.bf16.gmra.mrb[0].mxu0 %v1762
  %v1861 = vpop.f32.mrb[0].mxu0
  %v1862 = vadd.f32 %v1809, %v1861
  %v1863 = vpop.f32.mrb[0].mxu0
  %v1864 = vadd.f32 %v1811, %v1863
  %v1865 = vpop.f32.mrb[0].mxu0
  %v1866 = vadd.f32 %v1813, %v1865
  %v1867 = vpop.f32.mrb[0].mxu0
  %v1868 = vadd.f32 %v1815, %v1867
  %1869 = vdwg.mxu0
  %1870 = vmatprep.subr.bf16.mxu0 %v1634
  %1871 = vmatpush1.bf16.msra.mxu0 %v1633
  %1872 = vmatprep.subr.bf16.mxu0 %v1638
  %1873 = vmatpush1.bf16.msra.mxu0 %v1637
  %1874 = vmatprep.subr.bf16.mxu0 %v1642
  %1875 = vmatpush1.bf16.msra.mxu0 %v1641
  %1876 = vmatprep.subr.bf16.mxu0 %v1646
  %1877 = vmatpush1.bf16.msra.mxu0 %v1645
  %1878 = vmatprep.subr.bf16.mxu0 %v1650
  %1879 = vmatpush1.bf16.msra.mxu0 %v1649
  %1880 = vmatprep.subr.bf16.mxu0 %v1654
  %1881 = vmatpush1.bf16.msra.mxu0 %v1653
  %1882 = vmatprep.subr.bf16.mxu0 %v1658
  %1883 = vmatpush1.bf16.msra.mxu0 %v1657
  %1884 = vmatprep.subr.bf16.mxu0 %v1662
  %1885 = vmatpush1.bf16.msra.mxu0 %v1661
  %1886 = vmatprep.subr.bf16.mxu0 %v1666
  %1887 = vmatpush1.bf16.msra.mxu0 %v1665
  %1888 = vmatprep.subr.bf16.mxu0 %v1670
  %1889 = vmatpush1.bf16.msra.mxu0 %v1669
  %1890 = vmatprep.subr.bf16.mxu0 %v1674
  %1891 = vmatpush1.bf16.msra.mxu0 %v1673
  %1892 = vmatprep.subr.bf16.mxu0 %v1678
  %1893 = vmatpush1.bf16.msra.mxu0 %v1677
  %1894 = vmatprep.subr.bf16.mxu0 %v1682
  %1895 = vmatpush1.bf16.msra.mxu0 %v1681
  %1896 = vmatprep.subr.bf16.mxu0 %v1686
  %1897 = vmatpush1.bf16.msra.mxu0 %v1685
  %1898 = vmatprep.subr.bf16.mxu0 %v1690
  %1899 = vmatpush1.bf16.msra.mxu0 %v1689
  %1900 = vmatprep.subr.bf16.mxu0 %v1694
  %1901 = vmatpush1.bf16.msra.mxu0 %v1693
  %1902 = vmatprep.mubr.bf16.mxu0 %v1748
  %1903 = vmatmul.mubr.bf16.gmra.mrb[0].mxu0 %v1747
  %v1904 = vpop.f32.mrb[0].mxu0
  %v1905 = vadd.f32 %v1710, %v1904
  %v1906 = vpop.f32.mrb[0].mxu0
  %v1907 = vadd.f32 %v1710, %v1906
  %v1908 = vpop.f32.mrb[0].mxu0
  %v1909 = vadd.f32 %v1715, %v1908
  %v1910 = vpop.f32.mrb[0].mxu0
  %v1911 = vadd.f32 %v1715, %v1910
  %1912 = vmatprep.mubr.bf16.mxu0 %v1751
  %1913 = vmatmul.mubr.bf16.gmra.mrb[0].mxu0 %v1750
  %v1914 = vpop.f32.mrb[0].mxu0
  %v1915 = vadd.f32 %v1720, %v1914
  %v1916 = vpop.f32.mrb[0].mxu0
  %v1917 = vadd.f32 %v1720, %v1916
  %v1918 = vpop.f32.mrb[0].mxu0
  %v1919 = vadd.f32 %v1725, %v1918
  %v1920 = vpop.f32.mrb[0].mxu0
  %v1921 = vadd.f32 %v1725, %v1920
  %1922 = vdwg.mxu0
  %1923 = vmatprep.subr.bf16.mxu0 %v1698
  %1924 = vmatpush1.bf16.msra.mxu0 %v1697
  %1925 = vmatprep.subr.bf16.mxu0 %v1702
  %1926 = vmatpush1.bf16.msra.mxu0 %v1701
  %1927 = vmatprep.subr.bf16.mxu0 0
  %1928 = vmatpush1.bf16.msra.mxu0 0
  %1929 = vmatprep.subr.bf16.mxu0 0
  %1930 = vmatpush1.bf16.msra.mxu0 0
  %1931 = vmatprep.subr.bf16.mxu0 0
  %1932 = vmatpush1.bf16.msra.mxu0 0
  %1933 = vmatprep.subr.bf16.mxu0 0
  %1934 = vmatpush1.bf16.msra.mxu0 0
  %1935 = vmatprep.subr.bf16.mxu0 0
  %1936 = vmatpush1.bf16.msra.mxu0 0
  %1937 = vmatprep.subr.bf16.mxu0 0
  %1938 = vmatpush1.bf16.msra.mxu0 0
  %1939 = vmatprep.subr.bf16.mxu0 0
  %1940 = vmatpush1.bf16.msra.mxu0 0
  %1941 = vmatprep.subr.bf16.mxu0 0
  %1942 = vmatpush1.bf16.msra.mxu0 0
  %1943 = vmatprep.subr.bf16.mxu0 0
  %1944 = vmatpush1.bf16.msra.mxu0 0
  %1945 = vmatprep.subr.bf16.mxu0 0
  %1946 = vmatpush1.bf16.msra.mxu0 0
  %1947 = vmatprep.subr.bf16.mxu0 0
  %1948 = vmatpush1.bf16.msra.mxu0 0
  %1949 = vmatprep.subr.bf16.mxu0 0
  %1950 = vmatpush1.bf16.msra.mxu0 0
  %1951 = vmatprep.subr.bf16.mxu0 0
  %1952 = vmatpush1.bf16.msra.mxu0 0
  %1953 = vmatprep.subr.bf16.mxu0 0
  %1954 = vmatpush1.bf16.msra.mxu0 0
  %1955 = vmatprep.mubr.bf16.mxu0 0
  %1956 = vmatmul.mubr.bf16.gmra.mrb[0].mxu0 %v1759
  %v1957 = vpop.f32.mrb[0].mxu0
  %v1958 = vadd.f32 %v1905, %v1957
  %v1959 = vpop.f32.mrb[0].mxu0
  %v1960 = vadd.f32 %v1907, %v1959
  %v1961 = vpop.f32.mrb[0].mxu0
  %v1962 = vadd.f32 %v1909, %v1961
  %v1963 = vpop.f32.mrb[0].mxu0
  %v1964 = vadd.f32 %v1911, %v1963
  %1965 = vmatprep.mubr.bf16.mxu0 0
  %1966 = vmatmul.mubr.bf16.gmra.mrb[0].mxu0 %v1762
  %v1967 = vpop.f32.mrb[0].mxu0
  %v1968 = vadd.f32 %v1915, %v1967
  %v1969 = vpop.f32.mrb[0].mxu0
  %v1970 = vadd.f32 %v1917, %v1969
  %v1971 = vpop.f32.mrb[0].mxu0
  %v1972 = vadd.f32 %v1919, %v1971
  %v1973 = vpop.f32.mrb[0].mxu0
  %v1974 = vadd.f32 %v1921, %v1973
  %1975 = vdwg.mxu0
  %vm1976 = vcmp.ge.f32.partialorder %v1852, 0.0
  %vm1977 = vcmp.ge.f32.partialorder %v1854, 0.0
  %vm1978 = vcmp.ge.f32.partialorder %v1958, 0.0
  %vm1979 = vcmp.ge.f32.partialorder %v1960, 0.0
  %vm1980 = vcmp.ge.f32.partialorder %v1856, 0.0
  %vm1981 = vcmp.ge.f32.partialorder %v1858, 0.0
  %vm1982 = vcmp.ge.f32.partialorder %v1962, 0.0
  %vm1983 = vcmp.ge.f32.partialorder %v1964, 0.0
  %vm1984 = vcmp.ge.f32.partialorder %v1862, 0.0
  %vm1985 = vcmp.ge.f32.partialorder %v1864, 0.0
  %vm1986 = vcmp.ge.f32.partialorder %v1968, 0.0
  %vm1987 = vcmp.ge.f32.partialorder %v1970, 0.0
  %vm1988 = vcmp.ge.f32.partialorder %v1866, 0.0
  %vm1989 = vcmp.ge.f32.partialorder %v1868, 0.0
  %vm1990 = vcmp.ge.f32.partialorder %v1972, 0.0
  %vm1991 = vcmp.ge.f32.partialorder %v1974, 0.0
  %v1992 = vmul.f32 %v1852, 0.01
  %v1993 = vmul.f32 %v1854, 0.01
  %v1994 = vmul.f32 %v1958, 0.01
  %v1995 = vmul.f32 %v1960, 0.01
  %v1996 = vmul.f32 %v1856, 0.01
  %v1997 = vmul.f32 %v1858, 0.01
  %v1998 = vmul.f32 %v1962, 0.01
  %v1999 = vmul.f32 %v1964, 0.01
  %v2000 = vmul.f32 %v1862, 0.01
  %v2001 = vmul.f32 %v1864, 0.01
  %v2002 = vmul.f32 %v1968, 0.01
  %v2003 = vmul.f32 %v1970, 0.01
  %v2004 = vmul.f32 %v1866, 0.01
  %v2005 = vmul.f32 %v1868, 0.01
  %v2006 = vmul.f32 %v1972, 0.01
  %v2007 = vmul.f32 %v1974, 0.01
  %v2008 = vsel %vm1976, %v1852, %v1992
  %v2009 = vsel %vm1977, %v1854, %v1993
  %v2010 = vsel %vm1978, %v1958, %v1994
  %v2011 = vsel %vm1979, %v1960, %v1995
  %v2012 = vsel %vm1980, %v1856, %v1996
  %v2013 = vsel %vm1981, %v1858, %v1997
  %v2014 = vsel %vm1982, %v1962, %v1998
  %v2015 = vsel %vm1983, %v1964, %v1999
  %v2016 = vsel %vm1984, %v1862, %v2000
  %v2017 = vsel %vm1985, %v1864, %v2001
  %v2018 = vsel %vm1986, %v1968, %v2002
  %v2019 = vsel %vm1987, %v1970, %v2003
  %v2020 = vsel %vm1988, %v1866, %v2004
  %v2021 = vsel %vm1989, %v1868, %v2005
  %v2022 = vsel %vm1990, %v1972, %v2006
  %v2023 = vsel %vm1991, %v1974, %v2007
  %v2024 = vld [vmem:[%s1 + $0x60] sm:$0xf]
  %v2025 = vld [vmem:[%s1 + $0x6c] sm:$0xf]
  %v2026 = vpack.c.bf16 %v2012, %v2008
  %v2027 = vpack.c.bf16 %v2013, %v2009
  %v2028 = vpack.c.bf16 %v2014, %v2010
  %v2029 = vpack.c.bf16 %v2015, %v2011
  %v2030 = vpack.c.bf16 %v2020, %v2016
  %v2031 = vpack.c.bf16 %v2021, %v2017
  %v2032 = vpack.c.bf16 %v2022, %v2018
  %v2033 = vpack.c.bf16 %v2023, %v2019
  %v2034 = vld [vmem:[%s2] sm:$0xff]
  %v2035 = vld [vmem:[%s2 + $0x8] sm:$0xff]
  %2037 = vset.pattern.permute.xlu0 2
  %2038 = vperm.xlu0 %2037, %v2034
  %v2039 = vpop.permute.xlu0 %2038
  %2042 = vset.pattern.permute.xlu0 2
  %2043 = vperm.xlu0 %2042, %v2035
  %v2044 = vpop.permute.xlu0 %2043
  %v2048 = vunpack.c.l.b16 %v2024
  %v2049 = vunpack.c.l.b16 %v2025
  %v2050 = vpack.c.b16 %v2049, %v2048
  %v2052 = vsel %vm1757, %v2050, 0
  %2054 = vmatprep.subr.bf16.mxu0 %v2027
  %2055 = vmatpush1.bf16.msra.mxu0 %v2026
  %2056 = vmatprep.subr.bf16.mxu0 %v2031
  %2057 = vmatpush1.bf16.msra.mxu0 %v2030
  %2058 = vmatprep.subr.bf16.mxu0 0
  %2059 = vmatpush1.bf16.msra.mxu0 0
  %2060 = vmatprep.subr.bf16.mxu0 0
  %2061 = vmatpush1.bf16.msra.mxu0 0
  %2062 = vmatprep.subr.bf16.mxu0 0
  %2063 = vmatpush1.bf16.msra.mxu0 0
  %2064 = vmatprep.subr.bf16.mxu0 0
  %2065 = vmatpush1.bf16.msra.mxu0 0
  %2066 = vmatprep.subr.bf16.mxu0 0
  %2067 = vmatpush1.bf16.msra.mxu0 0
  %2068 = vmatprep.subr.bf16.mxu0 0
  %2069 = vmatpush1.bf16.msra.mxu0 0
  %2070 = vmatprep.subr.bf16.mxu0 0
  %2071 = vmatpush1.bf16.msra.mxu0 0
  %2072 = vmatprep.subr.bf16.mxu0 0
  %2073 = vmatpush1.bf16.msra.mxu0 0
  %2074 = vmatprep.subr.bf16.mxu0 0
  %2075 = vmatpush1.bf16.msra.mxu0 0
  %2076 = vmatprep.subr.bf16.mxu0 0
  %2077 = vmatpush1.bf16.msra.mxu0 0
  %2078 = vmatprep.subr.bf16.mxu0 0
  %2079 = vmatpush1.bf16.msra.mxu0 0
  %2080 = vmatprep.subr.bf16.mxu0 0
  %2081 = vmatpush1.bf16.msra.mxu0 0
  %2082 = vmatprep.subr.bf16.mxu0 0
  %2083 = vmatpush1.bf16.msra.mxu0 0
  %2084 = vmatprep.subr.bf16.mxu0 0
  %2085 = vmatpush1.bf16.msra.mxu0 0
  %2086 = vmatprep.mubr.bf16.mxu0 0
  %2087 = vmatmul.mubr.bf16.gmra.mrb[0].mxu0 %v2052
  %v2088 = vpop.f32.mrb[0].mxu0
  %v2089 = vadd.f32 %v2039, %v2088
  %v2090 = vpop.f32.mrb[0].mxu0
  %v2091 = vadd.f32 %v2039, %v2090
  %v2092 = vpop.f32.mrb[0].mxu0
  %v2093 = vadd.f32 %v2044, %v2092
  %v2094 = vpop.f32.mrb[0].mxu0
  %v2095 = vadd.f32 %v2044, %v2094
  %2096 = vdwg.mxu0
  %2097 = vmatprep.subr.bf16.mxu0 %v2029
  %2098 = vmatpush1.bf16.msra.mxu0 %v2028
  %2099 = vmatprep.subr.bf16.mxu0 %v2033
  %2100 = vmatpush1.bf16.msra.mxu0 %v2032
  %2101 = vmatprep.subr.bf16.mxu0 0
  %2102 = vmatpush1.bf16.msra.mxu0 0
  %2103 = vmatprep.subr.bf16.mxu0 0
  %2104 = vmatpush1.bf16.msra.mxu0 0
  %2105 = vmatprep.subr.bf16.mxu0 0
  %2106 = vmatpush1.bf16.msra.mxu0 0
  %2107 = vmatprep.subr.bf16.mxu0 0
  %2108 = vmatpush1.bf16.msra.mxu0 0
  %2109 = vmatprep.subr.bf16.mxu0 0
  %2110 = vmatpush1.bf16.msra.mxu0 0
  %2111 = vmatprep.subr.bf16.mxu0 0
  %2112 = vmatpush1.bf16.msra.mxu0 0
  %2113 = vmatprep.subr.bf16.mxu0 0
  %2114 = vmatpush1.bf16.msra.mxu0 0
  %2115 = vmatprep.subr.bf16.mxu0 0
  %2116 = vmatpush1.bf16.msra.mxu0 0
  %2117 = vmatprep.subr.bf16.mxu0 0
  %2118 = vmatpush1.bf16.msra.mxu0 0
  %2119 = vmatprep.subr.bf16.mxu0 0
  %2120 = vmatpush1.bf16.msra.mxu0 0
  %2121 = vmatprep.subr.bf16.mxu0 0
  %2122 = vmatpush1.bf16.msra.mxu0 0
  %2123 = vmatprep.subr.bf16.mxu0 0
  %2124 = vmatpush1.bf16.msra.mxu0 0
  %2125 = vmatprep.subr.bf16.mxu0 0
  %2126 = vmatpush1.bf16.msra.mxu0 0
  %2127 = vmatprep.subr.bf16.mxu0 0
  %2128 = vmatpush1.bf16.msra.mxu0 0
  %2129 = vmatprep.mubr.bf16.mxu0 0
  %2130 = vmatmul.mubr.bf16.gmra.mrb[0].mxu0 %v2052
  %v2131 = vpop.f32.mrb[0].mxu0
  %v2132 = vadd.f32 %v2039, %v2131
  %v2133 = vpop.f32.mrb[0].mxu0
  %v2134 = vadd.f32 %v2039, %v2133
  %v2135 = vpop.f32.mrb[0].mxu0
  %v2136 = vadd.f32 %v2044, %v2135
  %v2137 = vpop.f32.mrb[0].mxu0
  %v2138 = vadd.f32 %v2044, %v2137
  %2139 = vdwg.mxu0
  %vm2140 = vcmp.ge.f32.partialorder %v2089, 0.0
  %vm2141 = vcmp.ge.f32.partialorder %v2091, 0.0
  %vm2142 = vcmp.ge.f32.partialorder %v2132, 0.0
  %vm2143 = vcmp.ge.f32.partialorder %v2134, 0.0
  %vm2144 = vcmp.ge.f32.partialorder %v2093, 0.0
  %vm2145 = vcmp.ge.f32.partialorder %v2095, 0.0
  %vm2146 = vcmp.ge.f32.partialorder %v2136, 0.0
  %vm2147 = vcmp.ge.f32.partialorder %v2138, 0.0
  %v2148 = vmul.f32 %v2089, 0.01
  %v2149 = vmul.f32 %v2091, 0.01
  %v2150 = vmul.f32 %v2132, 0.01
  %v2151 = vmul.f32 %v2134, 0.01
  %v2152 = vmul.f32 %v2093, 0.01
  %v2153 = vmul.f32 %v2095, 0.01
  %v2154 = vmul.f32 %v2136, 0.01
  %v2155 = vmul.f32 %v2138, 0.01
  %v2156 = vsel %vm2140, %v2089, %v2148
  %v2157 = vsel %vm2141, %v2091, %v2149
  %v2158 = vsel %vm2142, %v2132, %v2150
  %v2159 = vsel %vm2143, %v2134, %v2151
  %v2160 = vsel %vm2144, %v2093, %v2152
  %v2161 = vsel %vm2145, %v2095, %v2153
  %v2162 = vsel %vm2146, %v2136, %v2154
  %v2163 = vsel %vm2147, %v2138, %v2155
  %v2164 = vld [vmem:[%s1 + $0x90] sm:$0xf]
  %v2165 = vpack.c.bf16 %v2160, %v2156
  %v2166 = vpack.c.bf16 %v2161, %v2157
  %v2167 = vpack.c.bf16 %v2162, %v2158
  %v2168 = vpack.c.bf16 %v2163, %v2159
  %v2169 = vld [vmem:[%s2] sm:$0xff]
  %2171 = vset.pattern.permute.xlu0 3
  %2172 = vperm.xlu0 %2171, %v2169
  %v2173 = vpop.permute.xlu0 %2172
  %vm2175 = vcmask 130048
  %v2177 = vsel %vm2175, %v2164, 0
  %2179 = vmatprep.subr.bf16.mxu0 %v2166
  %2180 = vmatpush1.bf16.msra.mxu0 %v2165
  %2181 = vmatprep.subr.bf16.mxu0 0
  %2182 = vmatpush1.bf16.msra.mxu0 0
  %2183 = vmatprep.subr.bf16.mxu0 0
  %2184 = vmatpush1.bf16.msra.mxu0 0
  %2185 = vmatprep.subr.bf16.mxu0 0
  %2186 = vmatpush1.bf16.msra.mxu0 0
  %2187 = vmatprep.subr.bf16.mxu0 0
  %2188 = vmatpush1.bf16.msra.mxu0 0
  %2189 = vmatprep.subr.bf16.mxu0 0
  %2190 = vmatpush1.bf16.msra.mxu0 0
  %2191 = vmatprep.subr.bf16.mxu0 0
  %2192 = vmatpush1.bf16.msra.mxu0 0
  %2193 = vmatprep.subr.bf16.mxu0 0
  %2194 = vmatpush1.bf16.msra.mxu0 0
  %2195 = vmatprep.subr.bf16.mxu0 0
  %2196 = vmatpush1.bf16.msra.mxu0 0
  %2197 = vmatprep.subr.bf16.mxu0 0
  %2198 = vmatpush1.bf16.msra.mxu0 0
  %2199 = vmatprep.subr.bf16.mxu0 0
  %2200 = vmatpush1.bf16.msra.mxu0 0
  %2201 = vmatprep.subr.bf16.mxu0 0
  %2202 = vmatpush1.bf16.msra.mxu0 0
  %2203 = vmatprep.subr.bf16.mxu0 0
  %2204 = vmatpush1.bf16.msra.mxu0 0
  %2205 = vmatprep.subr.bf16.mxu0 0
  %2206 = vmatpush1.bf16.msra.mxu0 0
  %2207 = vmatprep.subr.bf16.mxu0 0
  %2208 = vmatpush1.bf16.msra.mxu0 0
  %2209 = vmatprep.subr.bf16.mxu0 0
  %2210 = vmatpush1.bf16.msra.mxu0 0
  %2211 = vmatprep.mubr.bf16.mxu0 0
  %2212 = vmatmul.mubr.bf16.gmra.mrb[0].mxu0 %v2177
  %v2213 = vpop.f32.mrb[0].mxu0
  %v2214 = vadd.f32 %v2173, %v2213
  %v2215 = vpop.f32.mrb[0].mxu0
  %v2216 = vadd.f32 %v2173, %v2215
  %v2217 = vpop.f32.mrb[0].mxu0
  %v2218 = vpop.f32.mrb[0].mxu0
  %2219 = vdwg.mxu0
  %2220 = vmatprep.subr.bf16.mxu0 %v2168
  %2221 = vmatpush1.bf16.msra.mxu0 %v2167
  %2222 = vmatprep.subr.bf16.mxu0 0
  %2223 = vmatpush1.bf16.msra.mxu0 0
  %2224 = vmatprep.subr.bf16.mxu0 0
  %2225 = vmatpush1.bf16.msra.mxu0 0
  %2226 = vmatprep.subr.bf16.mxu0 0
  %2227 = vmatpush1.bf16.msra.mxu0 0
  %2228 = vmatprep.subr.bf16.mxu0 0
  %2229 = vmatpush1.bf16.msra.mxu0 0
  %2230 = vmatprep.subr.bf16.mxu0 0
  %2231 = vmatpush1.bf16.msra.mxu0 0
  %2232 = vmatprep.subr.bf16.mxu0 0
  %2233 = vmatpush1.bf16.msra.mxu0 0
  %2234 = vmatprep.subr.bf16.mxu0 0
  %2235 = vmatpush1.bf16.msra.mxu0 0
  %2236 = vmatprep.subr.bf16.mxu0 0
  %2237 = vmatpush1.bf16.msra.mxu0 0
  %2238 = vmatprep.subr.bf16.mxu0 0
  %2239 = vmatpush1.bf16.msra.mxu0 0
  %2240 = vmatprep.subr.bf16.mxu0 0
  %2241 = vmatpush1.bf16.msra.mxu0 0
  %2242 = vmatprep.subr.bf16.mxu0 0
  %2243 = vmatpush1.bf16.msra.mxu0 0
  %2244 = vmatprep.subr.bf16.mxu0 0
  %2245 = vmatpush1.bf16.msra.mxu0 0
  %2246 = vmatprep.subr.bf16.mxu0 0
  %2247 = vmatpush1.bf16.msra.mxu0 0
  %2248 = vmatprep.subr.bf16.mxu0 0
  %2249 = vmatpush1.bf16.msra.mxu0 0
  %2250 = vmatprep.subr.bf16.mxu0 0
  %2251 = vmatpush1.bf16.msra.mxu0 0
  %2252 = vmatprep.mubr.bf16.mxu0 0
  %2253 = vmatmul.mubr.bf16.gmra.mrb[0].mxu0 %v2177
  %v2254 = vpop.f32.mrb[0].mxu0
  %v2255 = vadd.f32 %v2173, %v2254
  %v2256 = vpop.f32.mrb[0].mxu0
  %v2257 = vadd.f32 %v2173, %v2256
  %v2258 = vpop.f32.mrb[0].mxu0
  %v2259 = vpop.f32.mrb[0].mxu0
  %2260 = vdwg.mxu0
  %2261 = vst [vmem:[%s4] sm:$0xff] %v2214
  %2262 = vst [vmem:[%s4 + $0x8] sm:$0xff] %v2216
  %2263 = vst [vmem:[%s4 + $0x10] sm:$0xff] %v2255
  %2264 = vst [vmem:[%s4 + $0x18] sm:$0xff] %v2257
  %2265 = vrot.lane.b32.xlu0 %v2214, 17
  %v2266 = vpop.permute.xlu0 %2265
  %2267 = vrot.lane.b32.xlu0 %v2216, 17
  %v2268 = vpop.permute.xlu0 %2267
  %2269 = vrot.lane.b32.xlu0 %v2255, 17
  %v2270 = vpop.permute.xlu0 %2269
  %2271 = vrot.lane.b32.xlu0 %v2257, 17
  %v2272 = vpop.permute.xlu0 %2271
  %v2273 = vsel %vm32, %v2270, %v2272
  %v2274 = vsel %vm32, %v2268, %v2270
  %v2275 = vsel %vm32, %v2266, %v2268
  %v2276 = vsel %vm32, %v2272, %v2266
  %v2277 = vld [vmem:[%s3] ss:$8 sm:$0xf]
  %v2279 = vlaneseq
  %v2280 = vshrl.u32 %v2279, 7
  %v2281 = vsub.s32 0, %v2280
  %v2282 = vrot.slane %v2277, %v2281
  %v2283 = vlaneseq
  %v2284 = vshrl.u32 %v2283, 7
  %v2285 = vsub.s32 1, %v2284
  %v2286 = vrot.slane %v2277, %v2285
  %v2287 = vlaneseq
  %v2288 = vshrl.u32 %v2287, 7
  %v2289 = vsub.s32 2, %v2288
  %v2290 = vrot.slane %v2277, %v2289
  %v2291 = vlaneseq
  %v2292 = vshrl.u32 %v2291, 7
  %v2293 = vsub.s32 3, %v2292
  %v2294 = vrot.slane %v2277, %v2293
  %v2299 = vmul.f32 %v36, %v2282
  %v2300 = vmul.f32 %v35, %v2286
  %v2301 = vmul.f32 %v34, %v2290
  %v2302 = vmul.f32 %v33, %v2294
  %v2303 = vmul.f32 %v2276, %v2282
  %v2304 = vmul.f32 %v2275, %v2286
  %v2305 = vmul.f32 %v2274, %v2290
  %v2306 = vmul.f32 %v2273, %v2294
  %2307 = vst [vmem:[#allocation3] sm:$0xff] %v2299
  %2308 = vst [vmem:[#allocation3 + $0x8] sm:$0xff] %v2300
  %2309 = vst [vmem:[#allocation3 + $0x10] sm:$0xff] %v2301
  %2310 = vst [vmem:[#allocation3 + $0x18] sm:$0xff] %v2302
  %2311 = vst [vmem:[#allocation3 + $0x20] sm:$0xff] %v2303
  %2312 = vst [vmem:[#allocation3 + $0x28] sm:$0xff] %v2304
  %2313 = vst [vmem:[#allocation3 + $0x30] sm:$0xff] %v2305
  %2314 = vst [vmem:[#allocation3 + $0x38] sm:$0xff] %v2306
  %2315 = vrot.lane.b32.xlu0 %v2214, 16
  %v2316 = vpop.permute.xlu0 %2315
  %2317 = vrot.lane.b32.xlu0 %v2216, 16
  %v2318 = vpop.permute.xlu0 %2317
  %2319 = vrot.lane.b32.xlu0 %v2255, 16
  %v2320 = vpop.permute.xlu0 %2319
  %2321 = vrot.lane.b32.xlu0 %v2257, 16
  %v2322 = vpop.permute.xlu0 %2321
  %v2323 = vsel %vm75, %v2320, %v2322
  %v2324 = vsel %vm75, %v2318, %v2320
  %v2325 = vsel %vm75, %v2316, %v2318
  %v2326 = vsel %vm75, %v2322, %v2316
  %v2327 = vld [vmem:[%s80] ss:$8 sm:$0xf]
  %v2329 = vlaneseq
  %v2330 = vshrl.u32 %v2329, 7
  %v2331 = vsub.s32 0, %v2330
  %v2332 = vrot.slane %v2327, %v2331
  %v2333 = vlaneseq
  %v2334 = vshrl.u32 %v2333, 7
  %v2335 = vsub.s32 1, %v2334
  %v2336 = vrot.slane %v2327, %v2335
  %v2337 = vlaneseq
  %v2338 = vshrl.u32 %v2337, 7
  %v2339 = vsub.s32 2, %v2338
  %v2340 = vrot.slane %v2327, %v2339
  %v2341 = vlaneseq
  %v2342 = vshrl.u32 %v2341, 7
  %v2343 = vsub.s32 3, %v2342
  %v2344 = vrot.slane %v2327, %v2343
  %v2349 = vmul.f32 %v79, %v2332
  %v2350 = vmul.f32 %v78, %v2336
  %v2351 = vmul.f32 %v77, %v2340
  %v2352 = vmul.f32 %v76, %v2344
  %v2353 = vmul.f32 %v2326, %v2332
  %v2354 = vmul.f32 %v2325, %v2336
  %v2355 = vmul.f32 %v2324, %v2340
  %v2356 = vmul.f32 %v2323, %v2344
  %2357 = vst [vmem:[#allocation3 + $0x40] sm:$0xff] %v2349
  %2358 = vst [vmem:[#allocation3 + $0x48] sm:$0xff] %v2350
  %2359 = vst [vmem:[#allocation3 + $0x50] sm:$0xff] %v2351
  %2360 = vst [vmem:[#allocation3 + $0x58] sm:$0xff] %v2352
  %2361 = vst [vmem:[#allocation3 + $0x60] sm:$0xff] %v2353
  %2362 = vst [vmem:[#allocation3 + $0x68] sm:$0xff] %v2354
  %2363 = vst [vmem:[#allocation3 + $0x70] sm:$0xff] %v2355
  %2364 = vst [vmem:[#allocation3 + $0x78] sm:$0xff] %v2356
  %2365 = vrot.lane.b32.xlu0 %v2214, 15
  %v2366 = vpop.permute.xlu0 %2365
  %2367 = vrot.lane.b32.xlu0 %v2216, 15
  %v2368 = vpop.permute.xlu0 %2367
  %2369 = vrot.lane.b32.xlu0 %v2255, 15
  %v2370 = vpop.permute.xlu0 %2369
  %2371 = vrot.lane.b32.xlu0 %v2257, 15
  %v2372 = vpop.permute.xlu0 %2371
  %v2373 = vsel %vm119, %v2370, %v2372
  %v2374 = vsel %vm119, %v2368, %v2370
  %v2375 = vsel %vm119, %v2366, %v2368
  %v2376 = vsel %vm119, %v2372, %v2366
  %v2377 = vld [vmem:[%s124] ss:$8 sm:$0xf]
  %v2379 = vlaneseq
  %v2380 = vshrl.u32 %v2379, 7
  %v2381 = vsub.s32 0, %v2380
  %v2382 = vrot.slane %v2377, %v2381
  %v2383 = vlaneseq
  %v2384 = vshrl.u32 %v2383, 7
  %v2385 = vsub.s32 1, %v2384
  %v2386 = vrot.slane %v2377, %v2385
  %v2387 = vlaneseq
  %v2388 = vshrl.u32 %v2387, 7
  %v2389 = vsub.s32 2, %v2388
  %v2390 = vrot.slane %v2377, %v2389
  %v2391 = vlaneseq
  %v2392 = vshrl.u32 %v2391, 7
  %v2393 = vsub.s32 3, %v2392
  %v2394 = vrot.slane %v2377, %v2393
  %v2399 = vmul.f32 %v123, %v2382
  %v2400 = vmul.f32 %v122, %v2386
  %v2401 = vmul.f32 %v121, %v2390
  %v2402 = vmul.f32 %v120, %v2394
  %v2403 = vmul.f32 %v2376, %v2382
  %v2404 = vmul.f32 %v2375, %v2386
  %v2405 = vmul.f32 %v2374, %v2390
  %v2406 = vmul.f32 %v2373, %v2394
  %2407 = vst [vmem:[#allocation3 + $0x80] sm:$0xff] %v2399
  %2408 = vst [vmem:[#allocation3 + $0x88] sm:$0xff] %v2400
  %2409 = vst [vmem:[#allocation3 + $0x90] sm:$0xff] %v2401
  %2410 = vst [vmem:[#allocation3 + $0x98] sm:$0xff] %v2402
  %2411 = vst [vmem:[#allocation3 + $0xa0] sm:$0xff] %v2403
  %2412 = vst [vmem:[#allocation3 + $0xa8] sm:$0xff] %v2404
  %2413 = vst [vmem:[#allocation3 + $0xb0] sm:$0xff] %v2405
  %2414 = vst [vmem:[#allocation3 + $0xb8] sm:$0xff] %v2406
  %2415 = vrot.lane.b32.xlu0 %v2214, 1
  %v2416 = vpop.permute.xlu0 %2415
  %2417 = vrot.lane.b32.xlu0 %v2216, 1
  %v2418 = vpop.permute.xlu0 %2417
  %2419 = vrot.lane.b32.xlu0 %v2255, 1
  %v2420 = vpop.permute.xlu0 %2419
  %2421 = vrot.lane.b32.xlu0 %v2257, 1
  %v2422 = vpop.permute.xlu0 %2421
  %v2423 = vsel %vm163, %v2420, %v2422
  %v2424 = vsel %vm163, %v2418, %v2420
  %v2425 = vsel %vm163, %v2416, %v2418
  %v2426 = vsel %vm163, %v2422, %v2416
  %v2427 = vld [vmem:[%s168] ss:$8 sm:$0xf]
  %v2429 = vlaneseq
  %v2430 = vshrl.u32 %v2429, 7
  %v2431 = vsub.s32 0, %v2430
  %v2432 = vrot.slane %v2427, %v2431
  %v2433 = vlaneseq
  %v2434 = vshrl.u32 %v2433, 7
  %v2435 = vsub.s32 1, %v2434
  %v2436 = vrot.slane %v2427, %v2435
  %v2437 = vlaneseq
  %v2438 = vshrl.u32 %v2437, 7
  %v2439 = vsub.s32 2, %v2438
  %v2440 = vrot.slane %v2427, %v2439
  %v2441 = vlaneseq
  %v2442 = vshrl.u32 %v2441, 7
  %v2443 = vsub.s32 3, %v2442
  %v2444 = vrot.slane %v2427, %v2443
  %v2449 = vmul.f32 %v167, %v2432
  %v2450 = vmul.f32 %v166, %v2436
  %v2451 = vmul.f32 %v165, %v2440
  %v2452 = vmul.f32 %v164, %v2444
  %v2453 = vmul.f32 %v2426, %v2432
  %v2454 = vmul.f32 %v2425, %v2436
  %v2455 = vmul.f32 %v2424, %v2440
  %v2456 = vmul.f32 %v2423, %v2444
  %2457 = vst [vmem:[#allocation3 + $0xc0] sm:$0xff] %v2449
  %2458 = vst [vmem:[#allocation3 + $0xc8] sm:$0xff] %v2450
  %2459 = vst [vmem:[#allocation3 + $0xd0] sm:$0xff] %v2451
  %2460 = vst [vmem:[#allocation3 + $0xd8] sm:$0xff] %v2452
  %2461 = vst [vmem:[#allocation3 + $0xe0] sm:$0xff] %v2453
  %2462 = vst [vmem:[#allocation3 + $0xe8] sm:$0xff] %v2454
  %2463 = vst [vmem:[#allocation3 + $0xf0] sm:$0xff] %v2455
  %2464 = vst [vmem:[#allocation3 + $0xf8] sm:$0xff] %v2456
  %2465 = vst [vmem:[#allocation3 + $0x100] sm:$0xff] %v18
  %2466 = vst [vmem:[#allocation3 + $0x108] sm:$0xff] %v19
  %2467 = vst [vmem:[#allocation3 + $0x110] sm:$0xff] %v20
  %2468 = vst [vmem:[#allocation3 + $0x118] sm:$0xff] %v21
  %2469 = vst [vmem:[#allocation3 + $0x120] sm:$0xff] %v2214
  %2470 = vst [vmem:[#allocation3 + $0x128] sm:$0xff] %v2216
  %2471 = vst [vmem:[#allocation3 + $0x130] sm:$0xff] %v2255
  %2472 = vst [vmem:[#allocation3 + $0x138] sm:$0xff] %v2257
  %2473 = vrot.lane.b32.xlu0 %v2214, 127
  %v2474 = vpop.permute.xlu0 %2473
  %2475 = vrot.lane.b32.xlu0 %v2216, 127
  %v2476 = vpop.permute.xlu0 %2475
  %2477 = vrot.lane.b32.xlu0 %v2255, 127
  %v2478 = vpop.permute.xlu0 %2477
  %2479 = vrot.lane.b32.xlu0 %v2257, 127
  %v2480 = vpop.permute.xlu0 %2479
  %v2481 = vsel %vm211, %v2478, %v2480
  %v2482 = vsel %vm211, %v2476, %v2478
  %v2483 = vsel %vm211, %v2474, %v2476
  %v2484 = vsel %vm211, %v2480, %v2474
  %v2485 = vld [vmem:[%s216] ss:$8 sm:$0xf]
  %v2487 = vlaneseq
  %v2488 = vshrl.u32 %v2487, 7
  %v2489 = vsub.s32 0, %v2488
  %v2490 = vrot.slane %v2485, %v2489
  %v2491 = vlaneseq
  %v2492 = vshrl.u32 %v2491, 7
  %v2493 = vsub.s32 1, %v2492
  %v2494 = vrot.slane %v2485, %v2493
  %v2495 = vlaneseq
  %v2496 = vshrl.u32 %v2495, 7
  %v2497 = vsub.s32 2, %v2496
  %v2498 = vrot.slane %v2485, %v2497
  %v2499 = vlaneseq
  %v2500 = vshrl.u32 %v2499, 7
  %v2501 = vsub.s32 3, %v2500
  %v2502 = vrot.slane %v2485, %v2501
  %v2507 = vmul.f32 %v214, %v2490
  %v2508 = vmul.f32 %v213, %v2494
  %v2509 = vmul.f32 %v212, %v2498
  %v2510 = vmul.f32 %v215, %v2502
  %v2511 = vmul.f32 %v2483, %v2490
  %v2512 = vmul.f32 %v2482, %v2494
  %v2513 = vmul.f32 %v2481, %v2498
  %v2514 = vmul.f32 %v2484, %v2502
  %2515 = vst [vmem:[#allocation3 + $0x140] sm:$0xff] %v2507
  %2516 = vst [vmem:[#allocation3 + $0x148] sm:$0xff] %v2508
  %2517 = vst [vmem:[#allocation3 + $0x150] sm:$0xff] %v2509
  %2518 = vst [vmem:[#allocation3 + $0x158] sm:$0xff] %v2510
  %2519 = vst [vmem:[#allocation3 + $0x160] sm:$0xff] %v2511
  %2520 = vst [vmem:[#allocation3 + $0x168] sm:$0xff] %v2512
  %2521 = vst [vmem:[#allocation3 + $0x170] sm:$0xff] %v2513
  %2522 = vst [vmem:[#allocation3 + $0x178] sm:$0xff] %v2514
  %2523 = vrot.lane.b32.xlu0 %v2214, 113
  %v2524 = vpop.permute.xlu0 %2523
  %2525 = vrot.lane.b32.xlu0 %v2216, 113
  %v2526 = vpop.permute.xlu0 %2525
  %2527 = vrot.lane.b32.xlu0 %v2255, 113
  %v2528 = vpop.permute.xlu0 %2527
  %2529 = vrot.lane.b32.xlu0 %v2257, 113
  %v2530 = vpop.permute.xlu0 %2529
  %v2531 = vsel %vm255, %v2528, %v2530
  %v2532 = vsel %vm255, %v2526, %v2528
  %v2533 = vsel %vm255, %v2524, %v2526
  %v2534 = vsel %vm255, %v2530, %v2524
  %v2535 = vld [vmem:[%s260] ss:$8 sm:$0xf]
  %v2537 = vlaneseq
  %v2538 = vshrl.u32 %v2537, 7
  %v2539 = vsub.s32 0, %v2538
  %v2540 = vrot.slane %v2535, %v2539
  %v2541 = vlaneseq
  %v2542 = vshrl.u32 %v2541, 7
  %v2543 = vsub.s32 1, %v2542
  %v2544 = vrot.slane %v2535, %v2543
  %v2545 = vlaneseq
  %v2546 = vshrl.u32 %v2545, 7
  %v2547 = vsub.s32 2, %v2546
  %v2548 = vrot.slane %v2535, %v2547
  %v2549 = vlaneseq
  %v2550 = vshrl.u32 %v2549, 7
  %v2551 = vsub.s32 3, %v2550
  %v2552 = vrot.slane %v2535, %v2551
  %v2557 = vmul.f32 %v258, %v2540
  %v2558 = vmul.f32 %v257, %v2544
  %v2559 = vmul.f32 %v256, %v2548
  %v2560 = vmul.f32 %v259, %v2552
  %v2561 = vmul.f32 %v2533, %v2540
  %v2562 = vmul.f32 %v2532, %v2544
  %v2563 = vmul.f32 %v2531, %v2548
  %v2564 = vmul.f32 %v2534, %v2552
  %2565 = vst [vmem:[#allocation3 + $0x180] sm:$0xff] %v2557
  %2566 = vst [vmem:[#allocation3 + $0x188] sm:$0xff] %v2558
  %2567 = vst [vmem:[#allocation3 + $0x190] sm:$0xff] %v2559
  %2568 = vst [vmem:[#allocation3 + $0x198] sm:$0xff] %v2560
  %2569 = vst [vmem:[#allocation3 + $0x1a0] sm:$0xff] %v2561
  %2570 = vst [vmem:[#allocation3 + $0x1a8] sm:$0xff] %v2562
  %2571 = vst [vmem:[#allocation3 + $0x1b0] sm:$0xff] %v2563
  %2572 = vst [vmem:[#allocation3 + $0x1b8] sm:$0xff] %v2564
  %2573 = vrot.lane.b32.xlu0 %v2214, 112
  %v2574 = vpop.permute.xlu0 %2573
  %2575 = vrot.lane.b32.xlu0 %v2216, 112
  %v2576 = vpop.permute.xlu0 %2575
  %2577 = vrot.lane.b32.xlu0 %v2255, 112
  %v2578 = vpop.permute.xlu0 %2577
  %2579 = vrot.lane.b32.xlu0 %v2257, 112
  %v2580 = vpop.permute.xlu0 %2579
  %v2581 = vsel %vm299, %v2578, %v2580
  %v2582 = vsel %vm299, %v2576, %v2578
  %v2583 = vsel %vm299, %v2574, %v2576
  %v2584 = vsel %vm299, %v2580, %v2574
  %v2585 = vld [vmem:[%s304] ss:$8 sm:$0xf]
  %v2587 = vlaneseq
  %v2588 = vshrl.u32 %v2587, 7
  %v2589 = vsub.s32 0, %v2588
  %v2590 = vrot.slane %v2585, %v2589
  %v2591 = vlaneseq
  %v2592 = vshrl.u32 %v2591, 7
  %v2593 = vsub.s32 1, %v2592
  %v2594 = vrot.slane %v2585, %v2593
  %v2595 = vlaneseq
  %v2596 = vshrl.u32 %v2595, 7
  %v2597 = vsub.s32 2, %v2596
  %v2598 = vrot.slane %v2585, %v2597
  %v2599 = vlaneseq
  %v2600 = vshrl.u32 %v2599, 7
  %v2601 = vsub.s32 3, %v2600
  %v2602 = vrot.slane %v2585, %v2601
  %v2607 = vmul.f32 %v302, %v2590
  %v2608 = vmul.f32 %v301, %v2594
  %v2609 = vmul.f32 %v300, %v2598
  %v2610 = vmul.f32 %v303, %v2602
  %v2611 = vmul.f32 %v2583, %v2590
  %v2612 = vmul.f32 %v2582, %v2594
  %v2613 = vmul.f32 %v2581, %v2598
  %v2614 = vmul.f32 %v2584, %v2602
  %2615 = vst [vmem:[#allocation3 + $0x1c0] sm:$0xff] %v2607
  %2616 = vst [vmem:[#allocation3 + $0x1c8] sm:$0xff] %v2608
  %2617 = vst [vmem:[#allocation3 + $0x1d0] sm:$0xff] %v2609
  %2618 = vst [vmem:[#allocation3 + $0x1d8] sm:$0xff] %v2610
  %2619 = vst [vmem:[#allocation3 + $0x1e0] sm:$0xff] %v2611
  %2620 = vst [vmem:[#allocation3 + $0x1e8] sm:$0xff] %v2612
  %2621 = vst [vmem:[#allocation3 + $0x1f0] sm:$0xff] %v2613
  %2622 = vst [vmem:[#allocation3 + $0x1f8] sm:$0xff] %v2614
  %2623 = vrot.lane.b32.xlu0 %v2214, 111
  %v2624 = vpop.permute.xlu0 %2623
  %2625 = vrot.lane.b32.xlu0 %v2216, 111
  %v2626 = vpop.permute.xlu0 %2625
  %2627 = vrot.lane.b32.xlu0 %v2255, 111
  %v2628 = vpop.permute.xlu0 %2627
  %2629 = vrot.lane.b32.xlu0 %v2257, 111
  %v2630 = vpop.permute.xlu0 %2629
  %v2631 = vsel %vm343, %v2628, %v2630
  %v2632 = vsel %vm343, %v2626, %v2628
  %v2633 = vsel %vm343, %v2624, %v2626
  %v2634 = vsel %vm343, %v2630, %v2624
  %v2635 = vld [vmem:[%s348] ss:$8 sm:$0xf]
  %v2637 = vlaneseq
  %v2638 = vshrl.u32 %v2637, 7
  %v2639 = vsub.s32 0, %v2638
  %v2640 = vrot.slane %v2635, %v2639
  %v2641 = vlaneseq
  %v2642 = vshrl.u32 %v2641, 7
  %v2643 = vsub.s32 1, %v2642
  %v2644 = vrot.slane %v2635, %v2643
  %v2645 = vlaneseq
  %v2646 = vshrl.u32 %v2645, 7
  %v2647 = vsub.s32 2, %v2646
  %v2648 = vrot.slane %v2635, %v2647
  %v2649 = vlaneseq
  %v2650 = vshrl.u32 %v2649, 7
  %v2651 = vsub.s32 3, %v2650
  %v2652 = vrot.slane %v2635, %v2651
  %v2657 = vmul.f32 %v346, %v2640
  %v2658 = vmul.f32 %v345, %v2644
  %v2659 = vmul.f32 %v344, %v2648
  %v2660 = vmul.f32 %v347, %v2652
  %v2661 = vmul.f32 %v2633, %v2640
  %v2662 = vmul.f32 %v2632, %v2644
  %v2663 = vmul.f32 %v2631, %v2648
  %v2664 = vmul.f32 %v2634, %v2652
  %2665 = vst [vmem:[#allocation3 + $0x200] sm:$0xff] %v2657
  %2666 = vst [vmem:[#allocation3 + $0x208] sm:$0xff] %v2658
  %2667 = vst [vmem:[#allocation3 + $0x210] sm:$0xff] %v2659
  %2668 = vst [vmem:[#allocation3 + $0x218] sm:$0xff] %v2660
  %2669 = vst [vmem:[#allocation3 + $0x220] sm:$0xff] %v2661
  %2670 = vst [vmem:[#allocation3 + $0x228] sm:$0xff] %v2662
  %2671 = vst [vmem:[#allocation3 + $0x230] sm:$0xff] %v2663
  %2672 = vst [vmem:[#allocation3 + $0x238] sm:$0xff] %v2664
  %v2673 = vld [vmem:[#allocation3] sm:$0xff]
  %v2674 = vld [vmem:[#allocation3 + $0x8] sm:$0xff]
  %v2675 = vld [vmem:[#allocation3 + $0x10] sm:$0xff]
  %v2676 = vld [vmem:[#allocation3 + $0x18] sm:$0xff]
  %v2677 = vld [vmem:[#allocation3 + $0x20] sm:$0xff]
  %v2678 = vld [vmem:[#allocation3 + $0x28] sm:$0xff]
  %v2679 = vld [vmem:[#allocation3 + $0x30] sm:$0xff]
  %v2680 = vld [vmem:[#allocation3 + $0x38] sm:$0xff]
  %v2681 = vld [vmem:[#allocation3 + $0x40] sm:$0xff]
  %v2682 = vld [vmem:[#allocation3 + $0x48] sm:$0xff]
  %v2683 = vld [vmem:[#allocation3 + $0x50] sm:$0xff]
  %v2684 = vld [vmem:[#allocation3 + $0x58] sm:$0xff]
  %v2685 = vld [vmem:[#allocation3 + $0x60] sm:$0xff]
  %v2686 = vld [vmem:[#allocation3 + $0x68] sm:$0xff]
  %v2687 = vld [vmem:[#allocation3 + $0x70] sm:$0xff]
  %v2688 = vld [vmem:[#allocation3 + $0x78] sm:$0xff]
  %v2689 = vld [vmem:[#allocation3 + $0x80] sm:$0xff]
  %v2690 = vld [vmem:[#allocation3 + $0x88] sm:$0xff]
  %v2691 = vld [vmem:[#allocation3 + $0x90] sm:$0xff]
  %v2692 = vld [vmem:[#allocation3 + $0x98] sm:$0xff]
  %v2693 = vld [vmem:[#allocation3 + $0xa0] sm:$0xff]
  %v2694 = vld [vmem:[#allocation3 + $0xa8] sm:$0xff]
  %v2695 = vld [vmem:[#allocation3 + $0xb0] sm:$0xff]
  %v2696 = vld [vmem:[#allocation3 + $0xb8] sm:$0xff]
  %v2697 = vld [vmem:[#allocation3 + $0xc0] sm:$0xff]
  %v2698 = vld [vmem:[#allocation3 + $0xc8] sm:$0xff]
  %v2699 = vld [vmem:[#allocation3 + $0xd0] sm:$0xff]
  %v2700 = vld [vmem:[#allocation3 + $0xd8] sm:$0xff]
  %v2701 = vld [vmem:[#allocation3 + $0xe0] sm:$0xff]
  %v2702 = vld [vmem:[#allocation3 + $0xe8] sm:$0xff]
  %v2703 = vld [vmem:[#allocation3 + $0xf0] sm:$0xff]
  %v2704 = vld [vmem:[#allocation3 + $0xf8] sm:$0xff]
  %v2705 = vld [vmem:[#allocation3 + $0x100] sm:$0xff]
  %v2706 = vld [vmem:[#allocation3 + $0x108] sm:$0xff]
  %v2707 = vld [vmem:[#allocation3 + $0x110] sm:$0xff]
  %v2708 = vld [vmem:[#allocation3 + $0x118] sm:$0xff]
  %v2709 = vld [vmem:[#allocation3 + $0x120] sm:$0xff]
  %v2710 = vld [vmem:[#allocation3 + $0x128] sm:$0xff]
  %v2711 = vld [vmem:[#allocation3 + $0x130] sm:$0xff]
  %v2712 = vld [vmem:[#allocation3 + $0x138] sm:$0xff]
  %v2713 = vld [vmem:[#allocation3 + $0x140] sm:$0xff]
  %v2714 = vld [vmem:[#allocation3 + $0x148] sm:$0xff]
  %v2715 = vld [vmem:[#allocation3 + $0x150] sm:$0xff]
  %v2716 = vld [vmem:[#allocation3 + $0x158] sm:$0xff]
  %v2717 = vld [vmem:[#allocation3 + $0x160] sm:$0xff]
  %v2718 = vld [vmem:[#allocation3 + $0x168] sm:$0xff]
  %v2719 = vld [vmem:[#allocation3 + $0x170] sm:$0xff]
  %v2720 = vld [vmem:[#allocation3 + $0x178] sm:$0xff]
  %v2721 = vld [vmem:[#allocation3 + $0x180] sm:$0xff]
  %v2722 = vld [vmem:[#allocation3 + $0x188] sm:$0xff]
  %v2723 = vld [vmem:[#allocation3 + $0x190] sm:$0xff]
  %v2724 = vld [vmem:[#allocation3 + $0x198] sm:$0xff]
  %v2725 = vld [vmem:[#allocation3 + $0x1a0] sm:$0xff]
  %v2726 = vld [vmem:[#allocation3 + $0x1a8] sm:$0xff]
  %v2727 = vld [vmem:[#allocation3 + $0x1b0] sm:$0xff]
  %v2728 = vld [vmem:[#allocation3 + $0x1b8] sm:$0xff]
  %v2729 = vld [vmem:[#allocation3 + $0x1c0] sm:$0xff]
  %v2730 = vld [vmem:[#allocation3 + $0x1c8] sm:$0xff]
  %v2731 = vld [vmem:[#allocation3 + $0x1d0] sm:$0xff]
  %v2732 = vld [vmem:[#allocation3 + $0x1d8] sm:$0xff]
  %v2733 = vld [vmem:[#allocation3 + $0x1e0] sm:$0xff]
  %v2734 = vld [vmem:[#allocation3 + $0x1e8] sm:$0xff]
  %v2735 = vld [vmem:[#allocation3 + $0x1f0] sm:$0xff]
  %v2736 = vld [vmem:[#allocation3 + $0x1f8] sm:$0xff]
  %v2737 = vld [vmem:[#allocation3 + $0x200] sm:$0xff]
  %v2738 = vld [vmem:[#allocation3 + $0x208] sm:$0xff]
  %v2739 = vld [vmem:[#allocation3 + $0x210] sm:$0xff]
  %v2740 = vld [vmem:[#allocation3 + $0x218] sm:$0xff]
  %v2741 = vld [vmem:[#allocation3 + $0x220] sm:$0xff]
  %v2742 = vld [vmem:[#allocation3 + $0x228] sm:$0xff]
  %v2743 = vld [vmem:[#allocation3 + $0x230] sm:$0xff]
  %v2744 = vld [vmem:[#allocation3 + $0x238] sm:$0xff]
  %v2745 = vld [vmem:[%s1 + $0xc0] sm:$0xff]
  %v2746 = vld [vmem:[%s1 + $0xcc] sm:$0xff]
  %v2747 = vpack.c.bf16 %v2677, %v2673
  %v2748 = vpack.c.bf16 %v2678, %v2674
  %v2749 = vpack.c.bf16 %v2679, %v2675
  %v2750 = vpack.c.bf16 %v2680, %v2676
  %v2751 = vpack.c.bf16 %v2685, %v2681
  %v2752 = vpack.c.bf16 %v2686, %v2682
  %v2753 = vpack.c.bf16 %v2687, %v2683
  %v2754 = vpack.c.bf16 %v2688, %v2684
  %v2755 = vpack.c.bf16 %v2693, %v2689
  %v2756 = vpack.c.bf16 %v2694, %v2690
  %v2757 = vpack.c.bf16 %v2695, %v2691
  %v2758 = vpack.c.bf16 %v2696, %v2692
  %v2759 = vpack.c.bf16 %v2701, %v2697
  %v2760 = vpack.c.bf16 %v2702, %v2698
  %v2761 = vpack.c.bf16 %v2703, %v2699
  %v2762 = vpack.c.bf16 %v2704, %v2700
  %v2763 = vpack.c.bf16 %v2709, %v2705
  %v2764 = vpack.c.bf16 %v2710, %v2706
  %v2765 = vpack.c.bf16 %v2711, %v2707
  %v2766 = vpack.c.bf16 %v2712, %v2708
  %v2767 = vpack.c.bf16 %v2717, %v2713
  %v2768 = vpack.c.bf16 %v2718, %v2714
  %v2769 = vpack.c.bf16 %v2719, %v2715
  %v2770 = vpack.c.bf16 %v2720, %v2716
  %v2771 = vpack.c.bf16 %v2725, %v2721
  %v2772 = vpack.c.bf16 %v2726, %v2722
  %v2773 = vpack.c.bf16 %v2727, %v2723
  %v2774 = vpack.c.bf16 %v2728, %v2724
  %v2775 = vpack.c.bf16 %v2733, %v2729
  %v2776 = vpack.c.bf16 %v2734, %v2730
  %v2777 = vpack.c.bf16 %v2735, %v2731
  %v2778 = vpack.c.bf16 %v2736, %v2732
  %v2779 = vpack.c.bf16 %v2741, %v2737
  %v2780 = vpack.c.bf16 %v2742, %v2738
  %v2781 = vpack.c.bf16 %v2743, %v2739
  %v2782 = vpack.c.bf16 %v2744, %v2740
  %v2783 = vld [vmem:[%s2] sm:$0xff]
  %v2784 = vld [vmem:[%s2 + $0x8] sm:$0xff]
  %2786 = vset.pattern.permute.xlu0 4
  %2787 = vperm.xlu0 %2786, %v2783
  %v2788 = vpop.permute.xlu0 %2787
  %2791 = vset.pattern.permute.xlu0 4
  %2792 = vperm.xlu0 %2791, %v2784
  %v2793 = vpop.permute.xlu0 %2792
  %v2797 = vunpack.c.l.b16 %v2745
  %v2798 = vunpack.c.h.b16 %v2745
  %v2799 = vunpack.c.l.b16 %v2746
  %v2800 = vunpack.c.h.b16 %v2746
  %v2801 = vpack.c.b16 %v2799, %v2797
  %v2802 = vpack.c.b16 %v2800, %v2798
  %v2805 = vsel %vm2175, %v2802, 0
  %2807 = vmatprep.subr.bf16.mxu0 %v2748
  %2808 = vmatpush1.bf16.msra.mxu0 %v2747
  %2809 = vmatprep.subr.bf16.mxu0 %v2752
  %2810 = vmatpush1.bf16.msra.mxu0 %v2751
  %2811 = vmatprep.subr.bf16.mxu0 %v2756
  %2812 = vmatpush1.bf16.msra.mxu0 %v2755
  %2813 = vmatprep.subr.bf16.mxu0 %v2760
  %2814 = vmatpush1.bf16.msra.mxu0 %v2759
  %2815 = vmatprep.subr.bf16.mxu0 %v2764
  %2816 = vmatpush1.bf16.msra.mxu0 %v2763
  %2817 = vmatprep.subr.bf16.mxu0 %v2768
  %2818 = vmatpush1.bf16.msra.mxu0 %v2767
  %2819 = vmatprep.subr.bf16.mxu0 %v2772
  %2820 = vmatpush1.bf16.msra.mxu0 %v2771
  %2821 = vmatprep.subr.bf16.mxu0 %v2776
  %2822 = vmatpush1.bf16.msra.mxu0 %v2775
  %2823 = vmatprep.subr.bf16.mxu0 %v2780
  %2824 = vmatpush1.bf16.msra.mxu0 %v2779
  %2825 = vmatprep.subr.bf16.mxu0 0
  %2826 = vmatpush1.bf16.msra.mxu0 0
  %2827 = vmatprep.subr.bf16.mxu0 0
  %2828 = vmatpush1.bf16.msra.mxu0 0
  %2829 = vmatprep.subr.bf16.mxu0 0
  %2830 = vmatpush1.bf16.msra.mxu0 0
  %2831 = vmatprep.subr.bf16.mxu0 0
  %2832 = vmatpush1.bf16.msra.mxu0 0
  %2833 = vmatprep.subr.bf16.mxu0 0
  %2834 = vmatpush1.bf16.msra.mxu0 0
  %2835 = vmatprep.subr.bf16.mxu0 0
  %2836 = vmatpush1.bf16.msra.mxu0 0
  %2837 = vmatprep.subr.bf16.mxu0 0
  %2838 = vmatpush1.bf16.msra.mxu0 0
  %2839 = vmatprep.mubr.bf16.mxu0 %v2805
  %2840 = vmatmul.mubr.bf16.gmra.mrb[0].mxu0 %v2801
  %v2841 = vpop.f32.mrb[0].mxu0
  %v2842 = vadd.f32 %v2788, %v2841
  %v2843 = vpop.f32.mrb[0].mxu0
  %v2844 = vadd.f32 %v2788, %v2843
  %v2845 = vpop.f32.mrb[0].mxu0
  %v2846 = vadd.f32 %v2793, %v2845
  %v2847 = vpop.f32.mrb[0].mxu0
  %v2848 = vadd.f32 %v2793, %v2847
  %2849 = vdwg.mxu0
  %2850 = vmatprep.subr.bf16.mxu0 %v2750
  %2851 = vmatpush1.bf16.msra.mxu0 %v2749
  %2852 = vmatprep.subr.bf16.mxu0 %v2754
  %2853 = vmatpush1.bf16.msra.mxu0 %v2753
  %2854 = vmatprep.subr.bf16.mxu0 %v2758
  %2855 = vmatpush1.bf16.msra.mxu0 %v2757
  %2856 = vmatprep.subr.bf16.mxu0 %v2762
  %2857 = vmatpush1.bf16.msra.mxu0 %v2761
  %2858 = vmatprep.subr.bf16.mxu0 %v2766
  %2859 = vmatpush1.bf16.msra.mxu0 %v2765
  %2860 = vmatprep.subr.bf16.mxu0 %v2770
  %2861 = vmatpush1.bf16.msra.mxu0 %v2769
  %2862 = vmatprep.subr.bf16.mxu0 %v2774
  %2863 = vmatpush1.bf16.msra.mxu0 %v2773
  %2864 = vmatprep.subr.bf16.mxu0 %v2778
  %2865 = vmatpush1.bf16.msra.mxu0 %v2777
  %2866 = vmatprep.subr.bf16.mxu0 %v2782
  %2867 = vmatpush1.bf16.msra.mxu0 %v2781
  %2868 = vmatprep.subr.bf16.mxu0 0
  %2869 = vmatpush1.bf16.msra.mxu0 0
  %2870 = vmatprep.subr.bf16.mxu0 0
  %2871 = vmatpush1.bf16.msra.mxu0 0
  %2872 = vmatprep.subr.bf16.mxu0 0
  %2873 = vmatpush1.bf16.msra.mxu0 0
  %2874 = vmatprep.subr.bf16.mxu0 0
  %2875 = vmatpush1.bf16.msra.mxu0 0
  %2876 = vmatprep.subr.bf16.mxu0 0
  %2877 = vmatpush1.bf16.msra.mxu0 0
  %2878 = vmatprep.subr.bf16.mxu0 0
  %2879 = vmatpush1.bf16.msra.mxu0 0
  %2880 = vmatprep.subr.bf16.mxu0 0
  %2881 = vmatpush1.bf16.msra.mxu0 0
  %2882 = vmatprep.mubr.bf16.mxu0 %v2805
  %2883 = vmatmul.mubr.bf16.gmra.mrb[0].mxu0 %v2801
  %v2884 = vpop.f32.mrb[0].mxu0
  %v2885 = vadd.f32 %v2788, %v2884
  %v2886 = vpop.f32.mrb[0].mxu0
  %v2887 = vadd.f32 %v2788, %v2886
  %v2888 = vpop.f32.mrb[0].mxu0
  %v2889 = vadd.f32 %v2793, %v2888
  %v2890 = vpop.f32.mrb[0].mxu0
  %v2891 = vadd.f32 %v2793, %v2890
  %2892 = vdwg.mxu0
  %vm2893 = vcmp.ge.f32.partialorder %v2842, 0.0
  %vm2894 = vcmp.ge.f32.partialorder %v2844, 0.0
  %vm2895 = vcmp.ge.f32.partialorder %v2885, 0.0
  %vm2896 = vcmp.ge.f32.partialorder %v2887, 0.0
  %vm2897 = vcmp.ge.f32.partialorder %v2846, 0.0
  %vm2898 = vcmp.ge.f32.partialorder %v2848, 0.0
  %vm2899 = vcmp.ge.f32.partialorder %v2889, 0.0
  %vm2900 = vcmp.ge.f32.partialorder %v2891, 0.0
  %v2901 = vmul.f32 %v2842, 0.01
  %v2902 = vmul.f32 %v2844, 0.01
  %v2903 = vmul.f32 %v2885, 0.01
  %v2904 = vmul.f32 %v2887, 0.01
  %v2905 = vmul.f32 %v2846, 0.01
  %v2906 = vmul.f32 %v2848, 0.01
  %v2907 = vmul.f32 %v2889, 0.01
  %v2908 = vmul.f32 %v2891, 0.01
  %v2909 = vsel %vm2893, %v2842, %v2901
  %v2910 = vsel %vm2894, %v2844, %v2902
  %v2911 = vsel %vm2895, %v2885, %v2903
  %v2912 = vsel %vm2896, %v2887, %v2904
  %v2913 = vsel %vm2897, %v2846, %v2905
  %v2914 = vsel %vm2898, %v2848, %v2906
  %v2915 = vsel %vm2899, %v2889, %v2907
  %v2916 = vsel %vm2900, %v2891, %v2908
  %2917 = vrot.lane.b32.xlu0 %v2909, 17
  %v2918 = vpop.permute.xlu0 %2917
  %2919 = vrot.lane.b32.xlu0 %v2913, 17
  %v2920 = vpop.permute.xlu0 %2919
  %2921 = vrot.lane.b32.xlu0 %v2910, 17
  %v2922 = vpop.permute.xlu0 %2921
  %2923 = vrot.lane.b32.xlu0 %v2914, 17
  %v2924 = vpop.permute.xlu0 %2923
  %2925 = vrot.lane.b32.xlu0 %v2911, 17
  %v2926 = vpop.permute.xlu0 %2925
  %2927 = vrot.lane.b32.xlu0 %v2915, 17
  %v2928 = vpop.permute.xlu0 %2927
  %2929 = vrot.lane.b32.xlu0 %v2912, 17
  %v2930 = vpop.permute.xlu0 %2929
  %2931 = vrot.lane.b32.xlu0 %v2916, 17
  %v2932 = vpop.permute.xlu0 %2931
  %v2933 = vsel %vm32, %v2926, %v2930
  %v2934 = vsel %vm32, %v2928, %v2932
  %v2935 = vsel %vm32, %v2922, %v2926
  %v2936 = vsel %vm32, %v2924, %v2928
  %v2937 = vsel %vm32, %v2918, %v2922
  %v2938 = vsel %vm32, %v2920, %v2924
  %v2939 = vsel %vm32, %v2930, %v2918
  %v2940 = vsel %vm32, %v2932, %v2920
  %v2941 = vld [vmem:[%s3] ss:$8 sm:$0xf]
  %v2943 = vlaneseq
  %v2944 = vshrl.u32 %v2943, 7
  %v2945 = vsub.s32 0, %v2944
  %v2946 = vrot.slane %v2941, %v2945
  %v2947 = vlaneseq
  %v2948 = vshrl.u32 %v2947, 7
  %v2949 = vsub.s32 1, %v2948
  %v2950 = vrot.slane %v2941, %v2949
  %v2951 = vlaneseq
  %v2952 = vshrl.u32 %v2951, 7
  %v2953 = vsub.s32 2, %v2952
  %v2954 = vrot.slane %v2941, %v2953
  %v2955 = vlaneseq
  %v2956 = vshrl.u32 %v2955, 7
  %v2957 = vsub.s32 3, %v2956
  %v2958 = vrot.slane %v2941, %v2957
  %v2963 = vmul.f32 %v2939, %v2946
  %v2964 = vmul.f32 %v2937, %v2950
  %v2965 = vmul.f32 %v2935, %v2954
  %v2966 = vmul.f32 %v2933, %v2958
  %v2967 = vmul.f32 %v2940, %v2946
  %v2968 = vmul.f32 %v2938, %v2950
  %v2969 = vmul.f32 %v2936, %v2954
  %v2970 = vmul.f32 %v2934, %v2958
  %2971 = vst [vmem:[#allocation2] sm:$0xff] %v2963
  %2972 = vst [vmem:[#allocation2 + $0x8] sm:$0xff] %v2964
  %2973 = vst [vmem:[#allocation2 + $0x10] sm:$0xff] %v2965
  %2974 = vst [vmem:[#allocation2 + $0x18] sm:$0xff] %v2966
  %2975 = vst [vmem:[#allocation2 + $0x20] sm:$0xff] %v2967
  %2976 = vst [vmem:[#allocation2 + $0x28] sm:$0xff] %v2968
  %2977 = vst [vmem:[#allocation2 + $0x30] sm:$0xff] %v2969
  %2978 = vst [vmem:[#allocation2 + $0x38] sm:$0xff] %v2970
  %2979 = vrot.lane.b32.xlu0 %v2909, 16
  %v2980 = vpop.permute.xlu0 %2979
  %2981 = vrot.lane.b32.xlu0 %v2913, 16
  %v2982 = vpop.permute.xlu0 %2981
  %2983 = vrot.lane.b32.xlu0 %v2910, 16
  %v2984 = vpop.permute.xlu0 %2983
  %2985 = vrot.lane.b32.xlu0 %v2914, 16
  %v2986 = vpop.permute.xlu0 %2985
  %2987 = vrot.lane.b32.xlu0 %v2911, 16
  %v2988 = vpop.permute.xlu0 %2987
  %2989 = vrot.lane.b32.xlu0 %v2915, 16
  %v2990 = vpop.permute.xlu0 %2989
  %2991 = vrot.lane.b32.xlu0 %v2912, 16
  %v2992 = vpop.permute.xlu0 %2991
  %2993 = vrot.lane.b32.xlu0 %v2916, 16
  %v2994 = vpop.permute.xlu0 %2993
  %v2995 = vsel %vm75, %v2988, %v2992
  %v2996 = vsel %vm75, %v2990, %v2994
  %v2997 = vsel %vm75, %v2984, %v2988
  %v2998 = vsel %vm75, %v2986, %v2990
  %v2999 = vsel %vm75, %v2980, %v2984
  %v3000 = vsel %vm75, %v2982, %v2986
  %v3001 = vsel %vm75, %v2992, %v2980
  %v3002 = vsel %vm75, %v2994, %v2982
  %v3003 = vld [vmem:[%s80] ss:$8 sm:$0xf]
  %v3005 = vlaneseq
  %v3006 = vshrl.u32 %v3005, 7
  %v3007 = vsub.s32 0, %v3006
  %v3008 = vrot.slane %v3003, %v3007
  %v3009 = vlaneseq
  %v3010 = vshrl.u32 %v3009, 7
  %v3011 = vsub.s32 1, %v3010
  %v3012 = vrot.slane %v3003, %v3011
  %v3013 = vlaneseq
  %v3014 = vshrl.u32 %v3013, 7
  %v3015 = vsub.s32 2, %v3014
  %v3016 = vrot.slane %v3003, %v3015
  %v3017 = vlaneseq
  %v3018 = vshrl.u32 %v3017, 7
  %v3019 = vsub.s32 3, %v3018
  %v3020 = vrot.slane %v3003, %v3019
  %v3025 = vmul.f32 %v3001, %v3008
  %v3026 = vmul.f32 %v2999, %v3012
  %v3027 = vmul.f32 %v2997, %v3016
  %v3028 = vmul.f32 %v2995, %v3020
  %v3029 = vmul.f32 %v3002, %v3008
  %v3030 = vmul.f32 %v3000, %v3012
  %v3031 = vmul.f32 %v2998, %v3016
  %v3032 = vmul.f32 %v2996, %v3020
  %3033 = vst [vmem:[#allocation2 + $0x40] sm:$0xff] %v3025
  %3034 = vst [vmem:[#allocation2 + $0x48] sm:$0xff] %v3026
  %3035 = vst [vmem:[#allocation2 + $0x50] sm:$0xff] %v3027
  %3036 = vst [vmem:[#allocation2 + $0x58] sm:$0xff] %v3028
  %3037 = vst [vmem:[#allocation2 + $0x60] sm:$0xff] %v3029
  %3038 = vst [vmem:[#allocation2 + $0x68] sm:$0xff] %v3030
  %3039 = vst [vmem:[#allocation2 + $0x70] sm:$0xff] %v3031
  %3040 = vst [vmem:[#allocation2 + $0x78] sm:$0xff] %v3032
  %3041 = vrot.lane.b32.xlu0 %v2909, 15
  %v3042 = vpop.permute.xlu0 %3041
  %3043 = vrot.lane.b32.xlu0 %v2913, 15
  %v3044 = vpop.permute.xlu0 %3043
  %3045 = vrot.lane.b32.xlu0 %v2910, 15
  %v3046 = vpop.permute.xlu0 %3045
  %3047 = vrot.lane.b32.xlu0 %v2914, 15
  %v3048 = vpop.permute.xlu0 %3047
  %3049 = vrot.lane.b32.xlu0 %v2911, 15
  %v3050 = vpop.permute.xlu0 %3049
  %3051 = vrot.lane.b32.xlu0 %v2915, 15
  %v3052 = vpop.permute.xlu0 %3051
  %3053 = vrot.lane.b32.xlu0 %v2912, 15
  %v3054 = vpop.permute.xlu0 %3053
  %3055 = vrot.lane.b32.xlu0 %v2916, 15
  %v3056 = vpop.permute.xlu0 %3055
  %v3057 = vsel %vm119, %v3050, %v3054
  %v3058 = vsel %vm119, %v3052, %v3056
  %v3059 = vsel %vm119, %v3046, %v3050
  %v3060 = vsel %vm119, %v3048, %v3052
  %v3061 = vsel %vm119, %v3042, %v3046
  %v3062 = vsel %vm119, %v3044, %v3048
  %v3063 = vsel %vm119, %v3054, %v3042
  %v3064 = vsel %vm119, %v3056, %v3044
  %v3065 = vld [vmem:[%s124] ss:$8 sm:$0xf]
  %v3067 = vlaneseq
  %v3068 = vshrl.u32 %v3067, 7
  %v3069 = vsub.s32 0, %v3068
  %v3070 = vrot.slane %v3065, %v3069
  %v3071 = vlaneseq
  %v3072 = vshrl.u32 %v3071, 7
  %v3073 = vsub.s32 1, %v3072
  %v3074 = vrot.slane %v3065, %v3073
  %v3075 = vlaneseq
  %v3076 = vshrl.u32 %v3075, 7
  %v3077 = vsub.s32 2, %v3076
  %v3078 = vrot.slane %v3065, %v3077
  %v3079 = vlaneseq
  %v3080 = vshrl.u32 %v3079, 7
  %v3081 = vsub.s32 3, %v3080
  %v3082 = vrot.slane %v3065, %v3081
  %v3087 = vmul.f32 %v3063, %v3070
  %v3088 = vmul.f32 %v3061, %v3074
  %v3089 = vmul.f32 %v3059, %v3078
  %v3090 = vmul.f32 %v3057, %v3082
  %v3091 = vmul.f32 %v3064, %v3070
  %v3092 = vmul.f32 %v3062, %v3074
  %v3093 = vmul.f32 %v3060, %v3078
  %v3094 = vmul.f32 %v3058, %v3082
  %3095 = vst [vmem:[#allocation2 + $0x80] sm:$0xff] %v3087
  %3096 = vst [vmem:[#allocation2 + $0x88] sm:$0xff] %v3088
  %3097 = vst [vmem:[#allocation2 + $0x90] sm:$0xff] %v3089
  %3098 = vst [vmem:[#allocation2 + $0x98] sm:$0xff] %v3090
  %3099 = vst [vmem:[#allocation2 + $0xa0] sm:$0xff] %v3091
  %3100 = vst [vmem:[#allocation2 + $0xa8] sm:$0xff] %v3092
  %3101 = vst [vmem:[#allocation2 + $0xb0] sm:$0xff] %v3093
  %3102 = vst [vmem:[#allocation2 + $0xb8] sm:$0xff] %v3094
  %3103 = vrot.lane.b32.xlu0 %v2909, 1
  %v3104 = vpop.permute.xlu0 %3103
  %3105 = vrot.lane.b32.xlu0 %v2913, 1
  %v3106 = vpop.permute.xlu0 %3105
  %3107 = vrot.lane.b32.xlu0 %v2910, 1
  %v3108 = vpop.permute.xlu0 %3107
  %3109 = vrot.lane.b32.xlu0 %v2914, 1
  %v3110 = vpop.permute.xlu0 %3109
  %3111 = vrot.lane.b32.xlu0 %v2911, 1
  %v3112 = vpop.permute.xlu0 %3111
  %3113 = vrot.lane.b32.xlu0 %v2915, 1
  %v3114 = vpop.permute.xlu0 %3113
  %3115 = vrot.lane.b32.xlu0 %v2912, 1
  %v3116 = vpop.permute.xlu0 %3115
  %3117 = vrot.lane.b32.xlu0 %v2916, 1
  %v3118 = vpop.permute.xlu0 %3117
  %v3119 = vsel %vm163, %v3112, %v3116
  %v3120 = vsel %vm163, %v3114, %v3118
  %v3121 = vsel %vm163, %v3108, %v3112
  %v3122 = vsel %vm163, %v3110, %v3114
  %v3123 = vsel %vm163, %v3104, %v3108
  %v3124 = vsel %vm163, %v3106, %v3110
  %v3125 = vsel %vm163, %v3116, %v3104
  %v3126 = vsel %vm163, %v3118, %v3106
  %v3127 = vld [vmem:[%s168] ss:$8 sm:$0xf]
  %v3129 = vlaneseq
  %v3130 = vshrl.u32 %v3129, 7
  %v3131 = vsub.s32 0, %v3130
  %v3132 = vrot.slane %v3127, %v3131
  %v3133 = vlaneseq
  %v3134 = vshrl.u32 %v3133, 7
  %v3135 = vsub.s32 1, %v3134
  %v3136 = vrot.slane %v3127, %v3135
  %v3137 = vlaneseq
  %v3138 = vshrl.u32 %v3137, 7
  %v3139 = vsub.s32 2, %v3138
  %v3140 = vrot.slane %v3127, %v3139
  %v3141 = vlaneseq
  %v3142 = vshrl.u32 %v3141, 7
  %v3143 = vsub.s32 3, %v3142
  %v3144 = vrot.slane %v3127, %v3143
  %v3149 = vmul.f32 %v3125, %v3132
  %v3150 = vmul.f32 %v3123, %v3136
  %v3151 = vmul.f32 %v3121, %v3140
  %v3152 = vmul.f32 %v3119, %v3144
  %v3153 = vmul.f32 %v3126, %v3132
  %v3154 = vmul.f32 %v3124, %v3136
  %v3155 = vmul.f32 %v3122, %v3140
  %v3156 = vmul.f32 %v3120, %v3144
  %3157 = vst [vmem:[#allocation2 + $0xc0] sm:$0xff] %v3149
  %3158 = vst [vmem:[#allocation2 + $0xc8] sm:$0xff] %v3150
  %3159 = vst [vmem:[#allocation2 + $0xd0] sm:$0xff] %v3151
  %3160 = vst [vmem:[#allocation2 + $0xd8] sm:$0xff] %v3152
  %3161 = vst [vmem:[#allocation2 + $0xe0] sm:$0xff] %v3153
  %3162 = vst [vmem:[#allocation2 + $0xe8] sm:$0xff] %v3154
  %3163 = vst [vmem:[#allocation2 + $0xf0] sm:$0xff] %v3155
  %3164 = vst [vmem:[#allocation2 + $0xf8] sm:$0xff] %v3156
  %3165 = vst [vmem:[#allocation2 + $0x100] sm:$0xff] %v2909
  %3166 = vst [vmem:[#allocation2 + $0x108] sm:$0xff] %v2910
  %3167 = vst [vmem:[#allocation2 + $0x110] sm:$0xff] %v2911
  %3168 = vst [vmem:[#allocation2 + $0x118] sm:$0xff] %v2912
  %3169 = vst [vmem:[#allocation2 + $0x120] sm:$0xff] %v2913
  %3170 = vst [vmem:[#allocation2 + $0x128] sm:$0xff] %v2914
  %3171 = vst [vmem:[#allocation2 + $0x130] sm:$0xff] %v2915
  %3172 = vst [vmem:[#allocation2 + $0x138] sm:$0xff] %v2916
  %3173 = vrot.lane.b32.xlu0 %v2909, 127
  %v3174 = vpop.permute.xlu0 %3173
  %3175 = vrot.lane.b32.xlu0 %v2913, 127
  %v3176 = vpop.permute.xlu0 %3175
  %3177 = vrot.lane.b32.xlu0 %v2910, 127
  %v3178 = vpop.permute.xlu0 %3177
  %3179 = vrot.lane.b32.xlu0 %v2914, 127
  %v3180 = vpop.permute.xlu0 %3179
  %3181 = vrot.lane.b32.xlu0 %v2911, 127
  %v3182 = vpop.permute.xlu0 %3181
  %3183 = vrot.lane.b32.xlu0 %v2915, 127
  %v3184 = vpop.permute.xlu0 %3183
  %3185 = vrot.lane.b32.xlu0 %v2912, 127
  %v3186 = vpop.permute.xlu0 %3185
  %3187 = vrot.lane.b32.xlu0 %v2916, 127
  %v3188 = vpop.permute.xlu0 %3187
  %v3189 = vsel %vm211, %v3182, %v3186
  %v3190 = vsel %vm211, %v3184, %v3188
  %v3191 = vsel %vm211, %v3178, %v3182
  %v3192 = vsel %vm211, %v3180, %v3184
  %v3193 = vsel %vm211, %v3174, %v3178
  %v3194 = vsel %vm211, %v3176, %v3180
  %v3195 = vsel %vm211, %v3186, %v3174
  %v3196 = vsel %vm211, %v3188, %v3176
  %v3197 = vld [vmem:[%s216] ss:$8 sm:$0xf]
  %v3199 = vlaneseq
  %v3200 = vshrl.u32 %v3199, 7
  %v3201 = vsub.s32 0, %v3200
  %v3202 = vrot.slane %v3197, %v3201
  %v3203 = vlaneseq
  %v3204 = vshrl.u32 %v3203, 7
  %v3205 = vsub.s32 1, %v3204
  %v3206 = vrot.slane %v3197, %v3205
  %v3207 = vlaneseq
  %v3208 = vshrl.u32 %v3207, 7
  %v3209 = vsub.s32 2, %v3208
  %v3210 = vrot.slane %v3197, %v3209
  %v3211 = vlaneseq
  %v3212 = vshrl.u32 %v3211, 7
  %v3213 = vsub.s32 3, %v3212
  %v3214 = vrot.slane %v3197, %v3213
  %v3219 = vmul.f32 %v3193, %v3202
  %v3220 = vmul.f32 %v3191, %v3206
  %v3221 = vmul.f32 %v3189, %v3210
  %v3222 = vmul.f32 %v3195, %v3214
  %v3223 = vmul.f32 %v3194, %v3202
  %v3224 = vmul.f32 %v3192, %v3206
  %v3225 = vmul.f32 %v3190, %v3210
  %v3226 = vmul.f32 %v3196, %v3214
  %3227 = vst [vmem:[#allocation2 + $0x140] sm:$0xff] %v3219
  %3228 = vst [vmem:[#allocation2 + $0x148] sm:$0xff] %v3220
  %3229 = vst [vmem:[#allocation2 + $0x150] sm:$0xff] %v3221
  %3230 = vst [vmem:[#allocation2 + $0x158] sm:$0xff] %v3222
  %3231 = vst [vmem:[#allocation2 + $0x160] sm:$0xff] %v3223
  %3232 = vst [vmem:[#allocation2 + $0x168] sm:$0xff] %v3224
  %3233 = vst [vmem:[#allocation2 + $0x170] sm:$0xff] %v3225
  %3234 = vst [vmem:[#allocation2 + $0x178] sm:$0xff] %v3226
  %3235 = vrot.lane.b32.xlu0 %v2909, 113
  %v3236 = vpop.permute.xlu0 %3235
  %3237 = vrot.lane.b32.xlu0 %v2913, 113
  %v3238 = vpop.permute.xlu0 %3237
  %3239 = vrot.lane.b32.xlu0 %v2910, 113
  %v3240 = vpop.permute.xlu0 %3239
  %3241 = vrot.lane.b32.xlu0 %v2914, 113
  %v3242 = vpop.permute.xlu0 %3241
  %3243 = vrot.lane.b32.xlu0 %v2911, 113
  %v3244 = vpop.permute.xlu0 %3243
  %3245 = vrot.lane.b32.xlu0 %v2915, 113
  %v3246 = vpop.permute.xlu0 %3245
  %3247 = vrot.lane.b32.xlu0 %v2912, 113
  %v3248 = vpop.permute.xlu0 %3247
  %3249 = vrot.lane.b32.xlu0 %v2916, 113
  %v3250 = vpop.permute.xlu0 %3249
  %v3251 = vsel %vm255, %v3244, %v3248
  %v3252 = vsel %vm255, %v3246, %v3250
  %v3253 = vsel %vm255, %v3240, %v3244
  %v3254 = vsel %vm255, %v3242, %v3246
  %v3255 = vsel %vm255, %v3236, %v3240
  %v3256 = vsel %vm255, %v3238, %v3242
  %v3257 = vsel %vm255, %v3248, %v3236
  %v3258 = vsel %vm255, %v3250, %v3238
  %v3259 = vld [vmem:[%s260] ss:$8 sm:$0xf]
  %v3261 = vlaneseq
  %v3262 = vshrl.u32 %v3261, 7
  %v3263 = vsub.s32 0, %v3262
  %v3264 = vrot.slane %v3259, %v3263
  %v3265 = vlaneseq
  %v3266 = vshrl.u32 %v3265, 7
  %v3267 = vsub.s32 1, %v3266
  %v3268 = vrot.slane %v3259, %v3267
  %v3269 = vlaneseq
  %v3270 = vshrl.u32 %v3269, 7
  %v3271 = vsub.s32 2, %v3270
  %v3272 = vrot.slane %v3259, %v3271
  %v3273 = vlaneseq
  %v3274 = vshrl.u32 %v3273, 7
  %v3275 = vsub.s32 3, %v3274
  %v3276 = vrot.slane %v3259, %v3275
  %v3281 = vmul.f32 %v3255, %v3264
  %v3282 = vmul.f32 %v3253, %v3268
  %v3283 = vmul.f32 %v3251, %v3272
  %v3284 = vmul.f32 %v3257, %v3276
  %v3285 = vmul.f32 %v3256, %v3264
  %v3286 = vmul.f32 %v3254, %v3268
  %v3287 = vmul.f32 %v3252, %v3272
  %v3288 = vmul.f32 %v3258, %v3276
  %3289 = vst [vmem:[#allocation2 + $0x180] sm:$0xff] %v3281
  %3290 = vst [vmem:[#allocation2 + $0x188] sm:$0xff] %v3282
  %3291 = vst [vmem:[#allocation2 + $0x190] sm:$0xff] %v3283
  %3292 = vst [vmem:[#allocation2 + $0x198] sm:$0xff] %v3284
  %3293 = vst [vmem:[#allocation2 + $0x1a0] sm:$0xff] %v3285
  %3294 = vst [vmem:[#allocation2 + $0x1a8] sm:$0xff] %v3286
  %3295 = vst [vmem:[#allocation2 + $0x1b0] sm:$0xff] %v3287
  %3296 = vst [vmem:[#allocation2 + $0x1b8] sm:$0xff] %v3288
  %3297 = vrot.lane.b32.xlu0 %v2909, 112
  %v3298 = vpop.permute.xlu0 %3297
  %3299 = vrot.lane.b32.xlu0 %v2913, 112
  %v3300 = vpop.permute.xlu0 %3299
  %3301 = vrot.lane.b32.xlu0 %v2910, 112
  %v3302 = vpop.permute.xlu0 %3301
  %3303 = vrot.lane.b32.xlu0 %v2914, 112
  %v3304 = vpop.permute.xlu0 %3303
  %3305 = vrot.lane.b32.xlu0 %v2911, 112
  %v3306 = vpop.permute.xlu0 %3305
  %3307 = vrot.lane.b32.xlu0 %v2915, 112
  %v3308 = vpop.permute.xlu0 %3307
  %3309 = vrot.lane.b32.xlu0 %v2912, 112
  %v3310 = vpop.permute.xlu0 %3309
  %3311 = vrot.lane.b32.xlu0 %v2916, 112
  %v3312 = vpop.permute.xlu0 %3311
  %v3313 = vsel %vm299, %v3306, %v3310
  %v3314 = vsel %vm299, %v3308, %v3312
  %v3315 = vsel %vm299, %v3302, %v3306
  %v3316 = vsel %vm299, %v3304, %v3308
  %v3317 = vsel %vm299, %v3298, %v3302
  %v3318 = vsel %vm299, %v3300, %v3304
  %v3319 = vsel %vm299, %v3310, %v3298
  %v3320 = vsel %vm299, %v3312, %v3300
  %v3321 = vld [vmem:[%s304] ss:$8 sm:$0xf]
  %v3323 = vlaneseq
  %v3324 = vshrl.u32 %v3323, 7
  %v3325 = vsub.s32 0, %v3324
  %v3326 = vrot.slane %v3321, %v3325
  %v3327 = vlaneseq
  %v3328 = vshrl.u32 %v3327, 7
  %v3329 = vsub.s32 1, %v3328
  %v3330 = vrot.slane %v3321, %v3329
  %v3331 = vlaneseq
  %v3332 = vshrl.u32 %v3331, 7
  %v3333 = vsub.s32 2, %v3332
  %v3334 = vrot.slane %v3321, %v3333
  %v3335 = vlaneseq
  %v3336 = vshrl.u32 %v3335, 7
  %v3337 = vsub.s32 3, %v3336
  %v3338 = vrot.slane %v3321, %v3337
  %v3343 = vmul.f32 %v3317, %v3326
  %v3344 = vmul.f32 %v3315, %v3330
  %v3345 = vmul.f32 %v3313, %v3334
  %v3346 = vmul.f32 %v3319, %v3338
  %v3347 = vmul.f32 %v3318, %v3326
  %v3348 = vmul.f32 %v3316, %v3330
  %v3349 = vmul.f32 %v3314, %v3334
  %v3350 = vmul.f32 %v3320, %v3338
  %3351 = vst [vmem:[#allocation2 + $0x1c0] sm:$0xff] %v3343
  %3352 = vst [vmem:[#allocation2 + $0x1c8] sm:$0xff] %v3344
  %3353 = vst [vmem:[#allocation2 + $0x1d0] sm:$0xff] %v3345
  %3354 = vst [vmem:[#allocation2 + $0x1d8] sm:$0xff] %v3346
  %3355 = vst [vmem:[#allocation2 + $0x1e0] sm:$0xff] %v3347
  %3356 = vst [vmem:[#allocation2 + $0x1e8] sm:$0xff] %v3348
  %3357 = vst [vmem:[#allocation2 + $0x1f0] sm:$0xff] %v3349
  %3358 = vst [vmem:[#allocation2 + $0x1f8] sm:$0xff] %v3350
  %3359 = vrot.lane.b32.xlu0 %v2909, 111
  %v3360 = vpop.permute.xlu0 %3359
  %3361 = vrot.lane.b32.xlu0 %v2913, 111
  %v3362 = vpop.permute.xlu0 %3361
  %3363 = vrot.lane.b32.xlu0 %v2910, 111
  %v3364 = vpop.permute.xlu0 %3363
  %3365 = vrot.lane.b32.xlu0 %v2914, 111
  %v3366 = vpop.permute.xlu0 %3365
  %3367 = vrot.lane.b32.xlu0 %v2911, 111
  %v3368 = vpop.permute.xlu0 %3367
  %3369 = vrot.lane.b32.xlu0 %v2915, 111
  %v3370 = vpop.permute.xlu0 %3369
  %3371 = vrot.lane.b32.xlu0 %v2912, 111
  %v3372 = vpop.permute.xlu0 %3371
  %3373 = vrot.lane.b32.xlu0 %v2916, 111
  %v3374 = vpop.permute.xlu0 %3373
  %v3375 = vsel %vm343, %v3368, %v3372
  %v3376 = vsel %vm343, %v3370, %v3374
  %v3377 = vsel %vm343, %v3364, %v3368
  %v3378 = vsel %vm343, %v3366, %v3370
  %v3379 = vsel %vm343, %v3360, %v3364
  %v3380 = vsel %vm343, %v3362, %v3366
  %v3381 = vsel %vm343, %v3372, %v3360
  %v3382 = vsel %vm343, %v3374, %v3362
  %v3383 = vld [vmem:[%s348] ss:$8 sm:$0xf]
  %v3385 = vlaneseq
  %v3386 = vshrl.u32 %v3385, 7
  %v3387 = vsub.s32 0, %v3386
  %v3388 = vrot.slane %v3383, %v3387
  %v3389 = vlaneseq
  %v3390 = vshrl.u32 %v3389, 7
  %v3391 = vsub.s32 1, %v3390
  %v3392 = vrot.slane %v3383, %v3391
  %v3393 = vlaneseq
  %v3394 = vshrl.u32 %v3393, 7
  %v3395 = vsub.s32 2, %v3394
  %v3396 = vrot.slane %v3383, %v3395
  %v3397 = vlaneseq
  %v3398 = vshrl.u32 %v3397, 7
  %v3399 = vsub.s32 3, %v3398
  %v3400 = vrot.slane %v3383, %v3399
  %v3405 = vmul.f32 %v3379, %v3388
  %v3406 = vmul.f32 %v3377, %v3392
  %v3407 = vmul.f32 %v3375, %v3396
  %v3408 = vmul.f32 %v3381, %v3400
  %v3409 = vmul.f32 %v3380, %v3388
  %v3410 = vmul.f32 %v3378, %v3392
  %v3411 = vmul.f32 %v3376, %v3396
  %v3412 = vmul.f32 %v3382, %v3400
  %3413 = vst [vmem:[#allocation2 + $0x200] sm:$0xff] %v3405
  %3414 = vst [vmem:[#allocation2 + $0x208] sm:$0xff] %v3406
  %3415 = vst [vmem:[#allocation2 + $0x210] sm:$0xff] %v3407
  %3416 = vst [vmem:[#allocation2 + $0x218] sm:$0xff] %v3408
  %3417 = vst [vmem:[#allocation2 + $0x220] sm:$0xff] %v3409
  %3418 = vst [vmem:[#allocation2 + $0x228] sm:$0xff] %v3410
  %3419 = vst [vmem:[#allocation2 + $0x230] sm:$0xff] %v3411
  %3420 = vst [vmem:[#allocation2 + $0x238] sm:$0xff] %v3412
  %v3421 = vld [vmem:[#allocation2] sm:$0xff]
  %v3422 = vld [vmem:[#allocation2 + $0x8] sm:$0xff]
  %v3423 = vld [vmem:[#allocation2 + $0x10] sm:$0xff]
  %v3424 = vld [vmem:[#allocation2 + $0x18] sm:$0xff]
  %v3425 = vld [vmem:[#allocation2 + $0x20] sm:$0xff]
  %v3426 = vld [vmem:[#allocation2 + $0x28] sm:$0xff]
  %v3427 = vld [vmem:[#allocation2 + $0x30] sm:$0xff]
  %v3428 = vld [vmem:[#allocation2 + $0x38] sm:$0xff]
  %v3429 = vld [vmem:[#allocation2 + $0x40] sm:$0xff]
  %v3430 = vld [vmem:[#allocation2 + $0x48] sm:$0xff]
  %v3431 = vld [vmem:[#allocation2 + $0x50] sm:$0xff]
  %v3432 = vld [vmem:[#allocation2 + $0x58] sm:$0xff]
  %v3433 = vld [vmem:[#allocation2 + $0x60] sm:$0xff]
  %v3434 = vld [vmem:[#allocation2 + $0x68] sm:$0xff]
  %v3435 = vld [vmem:[#allocation2 + $0x70] sm:$0xff]
  %v3436 = vld [vmem:[#allocation2 + $0x78] sm:$0xff]
  %v3437 = vld [vmem:[#allocation2 + $0x80] sm:$0xff]
  %v3438 = vld [vmem:[#allocation2 + $0x88] sm:$0xff]
  %v3439 = vld [vmem:[#allocation2 + $0x90] sm:$0xff]
  %v3440 = vld [vmem:[#allocation2 + $0x98] sm:$0xff]
  %v3441 = vld [vmem:[#allocation2 + $0xa0] sm:$0xff]
  %v3442 = vld [vmem:[#allocation2 + $0xa8] sm:$0xff]
  %v3443 = vld [vmem:[#allocation2 + $0xb0] sm:$0xff]
  %v3444 = vld [vmem:[#allocation2 + $0xb8] sm:$0xff]
  %v3445 = vld [vmem:[#allocation2 + $0xc0] sm:$0xff]
  %v3446 = vld [vmem:[#allocation2 + $0xc8] sm:$0xff]
  %v3447 = vld [vmem:[#allocation2 + $0xd0] sm:$0xff]
  %v3448 = vld [vmem:[#allocation2 + $0xd8] sm:$0xff]
  %v3449 = vld [vmem:[#allocation2 + $0xe0] sm:$0xff]
  %v3450 = vld [vmem:[#allocation2 + $0xe8] sm:$0xff]
  %v3451 = vld [vmem:[#allocation2 + $0xf0] sm:$0xff]
  %v3452 = vld [vmem:[#allocation2 + $0xf8] sm:$0xff]
  %v3453 = vld [vmem:[#allocation2 + $0x100] sm:$0xff]
  %v3454 = vld [vmem:[#allocation2 + $0x108] sm:$0xff]
  %v3455 = vld [vmem:[#allocation2 + $0x110] sm:$0xff]
  %v3456 = vld [vmem:[#allocation2 + $0x118] sm:$0xff]
  %v3457 = vld [vmem:[#allocation2 + $0x120] sm:$0xff]
  %v3458 = vld [vmem:[#allocation2 + $0x128] sm:$0xff]
  %v3459 = vld [vmem:[#allocation2 + $0x130] sm:$0xff]
  %v3460 = vld [vmem:[#allocation2 + $0x138] sm:$0xff]
  %v3461 = vld [vmem:[#allocation2 + $0x140] sm:$0xff]
  %v3462 = vld [vmem:[#allocation2 + $0x148] sm:$0xff]
  %v3463 = vld [vmem:[#allocation2 + $0x150] sm:$0xff]
  %v3464 = vld [vmem:[#allocation2 + $0x158] sm:$0xff]
  %v3465 = vld [vmem:[#allocation2 + $0x160] sm:$0xff]
  %v3466 = vld [vmem:[#allocation2 + $0x168] sm:$0xff]
  %v3467 = vld [vmem:[#allocation2 + $0x170] sm:$0xff]
  %v3468 = vld [vmem:[#allocation2 + $0x178] sm:$0xff]
  %v3469 = vld [vmem:[#allocation2 + $0x180] sm:$0xff]
  %v3470 = vld [vmem:[#allocation2 + $0x188] sm:$0xff]
  %v3471 = vld [vmem:[#allocation2 + $0x190] sm:$0xff]
  %v3472 = vld [vmem:[#allocation2 + $0x198] sm:$0xff]
  %v3473 = vld [vmem:[#allocation2 + $0x1a0] sm:$0xff]
  %v3474 = vld [vmem:[#allocation2 + $0x1a8] sm:$0xff]
  %v3475 = vld [vmem:[#allocation2 + $0x1b0] sm:$0xff]
  %v3476 = vld [vmem:[#allocation2 + $0x1b8] sm:$0xff]
  %v3477 = vld [vmem:[#allocation2 + $0x1c0] sm:$0xff]
  %v3478 = vld [vmem:[#allocation2 + $0x1c8] sm:$0xff]
  %v3479 = vld [vmem:[#allocation2 + $0x1d0] sm:$0xff]
  %v3480 = vld [vmem:[#allocation2 + $0x1d8] sm:$0xff]
  %v3481 = vld [vmem:[#allocation2 + $0x1e0] sm:$0xff]
  %v3482 = vld [vmem:[#allocation2 + $0x1e8] sm:$0xff]
  %v3483 = vld [vmem:[#allocation2 + $0x1f0] sm:$0xff]
  %v3484 = vld [vmem:[#allocation2 + $0x1f8] sm:$0xff]
  %v3485 = vld [vmem:[#allocation2 + $0x200] sm:$0xff]
  %v3486 = vld [vmem:[#allocation2 + $0x208] sm:$0xff]
  %v3487 = vld [vmem:[#allocation2 + $0x210] sm:$0xff]
  %v3488 = vld [vmem:[#allocation2 + $0x218] sm:$0xff]
  %v3489 = vld [vmem:[#allocation2 + $0x220] sm:$0xff]
  %v3490 = vld [vmem:[#allocation2 + $0x228] sm:$0xff]
  %v3491 = vld [vmem:[#allocation2 + $0x230] sm:$0xff]
  %v3492 = vld [vmem:[#allocation2 + $0x238] sm:$0xff]
  %v3493 = vld [vmem:[%s1 + $0xf0] sm:$0xff]
  %v3494 = vld [vmem:[%s1 + $0xfc] sm:$0xff]
  %v3495 = vpack.c.bf16 %v3425, %v3421
  %v3496 = vpack.c.bf16 %v3426, %v3422
  %v3497 = vpack.c.bf16 %v3427, %v3423
  %v3498 = vpack.c.bf16 %v3428, %v3424
  %v3499 = vpack.c.bf16 %v3433, %v3429
  %v3500 = vpack.c.bf16 %v3434, %v3430
  %v3501 = vpack.c.bf16 %v3435, %v3431
  %v3502 = vpack.c.bf16 %v3436, %v3432
  %v3503 = vpack.c.bf16 %v3441, %v3437
  %v3504 = vpack.c.bf16 %v3442, %v3438
  %v3505 = vpack.c.bf16 %v3443, %v3439
  %v3506 = vpack.c.bf16 %v3444, %v3440
  %v3507 = vpack.c.bf16 %v3449, %v3445
  %v3508 = vpack.c.bf16 %v3450, %v3446
  %v3509 = vpack.c.bf16 %v3451, %v3447
  %v3510 = vpack.c.bf16 %v3452, %v3448
  %v3511 = vpack.c.bf16 %v3457, %v3453
  %v3512 = vpack.c.bf16 %v3458, %v3454
  %v3513 = vpack.c.bf16 %v3459, %v3455
  %v3514 = vpack.c.bf16 %v3460, %v3456
  %v3515 = vpack.c.bf16 %v3465, %v3461
  %v3516 = vpack.c.bf16 %v3466, %v3462
  %v3517 = vpack.c.bf16 %v3467, %v3463
  %v3518 = vpack.c.bf16 %v3468, %v3464
  %v3519 = vpack.c.bf16 %v3473, %v3469
  %v3520 = vpack.c.bf16 %v3474, %v3470
  %v3521 = vpack.c.bf16 %v3475, %v3471
  %v3522 = vpack.c.bf16 %v3476, %v3472
  %v3523 = vpack.c.bf16 %v3481, %v3477
  %v3524 = vpack.c.bf16 %v3482, %v3478
  %v3525 = vpack.c.bf16 %v3483, %v3479
  %v3526 = vpack.c.bf16 %v3484, %v3480
  %v3527 = vpack.c.bf16 %v3489, %v3485
  %v3528 = vpack.c.bf16 %v3490, %v3486
  %v3529 = vpack.c.bf16 %v3491, %v3487
  %v3530 = vpack.c.bf16 %v3492, %v3488
  %v3531 = vld [vmem:[%s2] sm:$0xff]
  %v3532 = vld [vmem:[%s2 + $0x8] sm:$0xff]
  %3534 = vset.pattern.permute.xlu0 5
  %3535 = vperm.xlu0 %3534, %v3531
  %v3536 = vpop.permute.xlu0 %3535
  %3539 = vset.pattern.permute.xlu0 5
  %3540 = vperm.xlu0 %3539, %v3532
  %v3541 = vpop.permute.xlu0 %3540
  %v3545 = vunpack.c.l.b16 %v3493
  %v3546 = vunpack.c.h.b16 %v3493
  %v3547 = vunpack.c.l.b16 %v3494
  %v3548 = vunpack.c.h.b16 %v3494
  %v3549 = vpack.c.b16 %v3547, %v3545
  %v3550 = vpack.c.b16 %v3548, %v3546
  %v3553 = vsel %vm2175, %v3550, 0
  %3555 = vmatprep.subr.bf16.mxu0 %v3496
  %3556 = vmatpush1.bf16.msra.mxu0 %v3495
  %3557 = vmatprep.subr.bf16.mxu0 %v3500
  %3558 = vmatpush1.bf16.msra.mxu0 %v3499
  %3559 = vmatprep.subr.bf16.mxu0 %v3504
  %3560 = vmatpush1.bf16.msra.mxu0 %v3503
  %3561 = vmatprep.subr.bf16.mxu0 %v3508
  %3562 = vmatpush1.bf16.msra.mxu0 %v3507
  %3563 = vmatprep.subr.bf16.mxu0 %v3512
  %3564 = vmatpush1.bf16.msra.mxu0 %v3511
  %3565 = vmatprep.subr.bf16.mxu0 %v3516
  %3566 = vmatpush1.bf16.msra.mxu0 %v3515
  %3567 = vmatprep.subr.bf16.mxu0 %v3520
  %3568 = vmatpush1.bf16.msra.mxu0 %v3519
  %3569 = vmatprep.subr.bf16.mxu0 %v3524
  %3570 = vmatpush1.bf16.msra.mxu0 %v3523
  %3571 = vmatprep.subr.bf16.mxu0 %v3528
  %3572 = vmatpush1.bf16.msra.mxu0 %v3527
  %3573 = vmatprep.subr.bf16.mxu0 0
  %3574 = vmatpush1.bf16.msra.mxu0 0
  %3575 = vmatprep.subr.bf16.mxu0 0
  %3576 = vmatpush1.bf16.msra.mxu0 0
  %3577 = vmatprep.subr.bf16.mxu0 0
  %3578 = vmatpush1.bf16.msra.mxu0 0
  %3579 = vmatprep.subr.bf16.mxu0 0
  %3580 = vmatpush1.bf16.msra.mxu0 0
  %3581 = vmatprep.subr.bf16.mxu0 0
  %3582 = vmatpush1.bf16.msra.mxu0 0
  %3583 = vmatprep.subr.bf16.mxu0 0
  %3584 = vmatpush1.bf16.msra.mxu0 0
  %3585 = vmatprep.subr.bf16.mxu0 0
  %3586 = vmatpush1.bf16.msra.mxu0 0
  %3587 = vmatprep.mubr.bf16.mxu0 %v3553
  %3588 = vmatmul.mubr.bf16.gmra.mrb[0].mxu0 %v3549
  %v3589 = vpop.f32.mrb[0].mxu0
  %v3590 = vadd.f32 %v3536, %v3589
  %v3591 = vpop.f32.mrb[0].mxu0
  %v3592 = vadd.f32 %v3536, %v3591
  %v3593 = vpop.f32.mrb[0].mxu0
  %v3594 = vadd.f32 %v3541, %v3593
  %v3595 = vpop.f32.mrb[0].mxu0
  %v3596 = vadd.f32 %v3541, %v3595
  %3597 = vdwg.mxu0
  %3598 = vmatprep.subr.bf16.mxu0 %v3498
  %3599 = vmatpush1.bf16.msra.mxu0 %v3497
  %3600 = vmatprep.subr.bf16.mxu0 %v3502
  %3601 = vmatpush1.bf16.msra.mxu0 %v3501
  %3602 = vmatprep.subr.bf16.mxu0 %v3506
  %3603 = vmatpush1.bf16.msra.mxu0 %v3505
  %3604 = vmatprep.subr.bf16.mxu0 %v3510
  %3605 = vmatpush1.bf16.msra.mxu0 %v3509
  %3606 = vmatprep.subr.bf16.mxu0 %v3514
  %3607 = vmatpush1.bf16.msra.mxu0 %v3513
  %3608 = vmatprep.subr.bf16.mxu0 %v3518
  %3609 = vmatpush1.bf16.msra.mxu0 %v3517
  %3610 = vmatprep.subr.bf16.mxu0 %v3522
  %3611 = vmatpush1.bf16.msra.mxu0 %v3521
  %3612 = vmatprep.subr.bf16.mxu0 %v3526
  %3613 = vmatpush1.bf16.msra.mxu0 %v3525
  %3614 = vmatprep.subr.bf16.mxu0 %v3530
  %3615 = vmatpush1.bf16.msra.mxu0 %v3529
  %3616 = vmatprep.subr.bf16.mxu0 0
  %3617 = vmatpush1.bf16.msra.mxu0 0
  %3618 = vmatprep.subr.bf16.mxu0 0
  %3619 = vmatpush1.bf16.msra.mxu0 0
  %3620 = vmatprep.subr.bf16.mxu0 0
  %3621 = vmatpush1.bf16.msra.mxu0 0
  %3622 = vmatprep.subr.bf16.mxu0 0
  %3623 = vmatpush1.bf16.msra.mxu0 0
  %3624 = vmatprep.subr.bf16.mxu0 0
  %3625 = vmatpush1.bf16.msra.mxu0 0
  %3626 = vmatprep.subr.bf16.mxu0 0
  %3627 = vmatpush1.bf16.msra.mxu0 0
  %3628 = vmatprep.subr.bf16.mxu0 0
  %3629 = vmatpush1.bf16.msra.mxu0 0
  %3630 = vmatprep.mubr.bf16.mxu0 %v3553
  %3631 = vmatmul.mubr.bf16.gmra.mrb[0].mxu0 %v3549
  %v3632 = vpop.f32.mrb[0].mxu0
  %v3633 = vadd.f32 %v3536, %v3632
  %v3634 = vpop.f32.mrb[0].mxu0
  %v3635 = vadd.f32 %v3536, %v3634
  %v3636 = vpop.f32.mrb[0].mxu0
  %v3637 = vadd.f32 %v3541, %v3636
  %v3638 = vpop.f32.mrb[0].mxu0
  %v3639 = vadd.f32 %v3541, %v3638
  %3640 = vdwg.mxu0
  %vm3641 = vcmp.ge.f32.partialorder %v3590, 0.0
  %vm3642 = vcmp.ge.f32.partialorder %v3592, 0.0
  %vm3643 = vcmp.ge.f32.partialorder %v3633, 0.0
  %vm3644 = vcmp.ge.f32.partialorder %v3635, 0.0
  %vm3645 = vcmp.ge.f32.partialorder %v3594, 0.0
  %vm3646 = vcmp.ge.f32.partialorder %v3596, 0.0
  %vm3647 = vcmp.ge.f32.partialorder %v3637, 0.0
  %vm3648 = vcmp.ge.f32.partialorder %v3639, 0.0
  %v3649 = vmul.f32 %v3590, 0.01
  %v3650 = vmul.f32 %v3592, 0.01
  %v3651 = vmul.f32 %v3633, 0.01
  %v3652 = vmul.f32 %v3635, 0.01
  %v3653 = vmul.f32 %v3594, 0.01
  %v3654 = vmul.f32 %v3596, 0.01
  %v3655 = vmul.f32 %v3637, 0.01
  %v3656 = vmul.f32 %v3639, 0.01
  %v3657 = vsel %vm3641, %v3590, %v3649
  %v3658 = vsel %vm3642, %v3592, %v3650
  %v3659 = vsel %vm3643, %v3633, %v3651
  %v3660 = vsel %vm3644, %v3635, %v3652
  %v3661 = vsel %vm3645, %v3594, %v3653
  %v3662 = vsel %vm3646, %v3596, %v3654
  %v3663 = vsel %vm3647, %v3637, %v3655
  %v3664 = vsel %vm3648, %v3639, %v3656
  %v3665 = vld [vmem:[%s1 + $0x120] sm:$0xf]
  %v3666 = vpack.c.bf16 %v3661, %v3657
  %v3667 = vpack.c.bf16 %v3662, %v3658
  %v3668 = vpack.c.bf16 %v3663, %v3659
  %v3669 = vpack.c.bf16 %v3664, %v3660
  %v3670 = vld [vmem:[%s2] sm:$0xff]
  %3672 = vset.pattern.permute.xlu0 6
  %3673 = vperm.xlu0 %3672, %v3670
  %v3674 = vpop.permute.xlu0 %3673
  %v3677 = vsel %vm2175, %v3665, 0
  %3679 = vmatprep.subr.bf16.mxu0 %v3667
  %3680 = vmatpush1.bf16.msra.mxu0 %v3666
  %3681 = vmatprep.subr.bf16.mxu0 0
  %3682 = vmatpush1.bf16.msra.mxu0 0
  %3683 = vmatprep.subr.bf16.mxu0 0
  %3684 = vmatpush1.bf16.msra.mxu0 0
  %3685 = vmatprep.subr.bf16.mxu0 0
  %3686 = vmatpush1.bf16.msra.mxu0 0
  %3687 = vmatprep.subr.bf16.mxu0 0
  %3688 = vmatpush1.bf16.msra.mxu0 0
  %3689 = vmatprep.subr.bf16.mxu0 0
  %3690 = vmatpush1.bf16.msra.mxu0 0
  %3691 = vmatprep.subr.bf16.mxu0 0
  %3692 = vmatpush1.bf16.msra.mxu0 0
  %3693 = vmatprep.subr.bf16.mxu0 0
  %3694 = vmatpush1.bf16.msra.mxu0 0
  %3695 = vmatprep.subr.bf16.mxu0 0
  %3696 = vmatpush1.bf16.msra.mxu0 0
  %3697 = vmatprep.subr.bf16.mxu0 0
  %3698 = vmatpush1.bf16.msra.mxu0 0
  %3699 = vmatprep.subr.bf16.mxu0 0
  %3700 = vmatpush1.bf16.msra.mxu0 0
  %3701 = vmatprep.subr.bf16.mxu0 0
  %3702 = vmatpush1.bf16.msra.mxu0 0
  %3703 = vmatprep.subr.bf16.mxu0 0
  %3704 = vmatpush1.bf16.msra.mxu0 0
  %3705 = vmatprep.subr.bf16.mxu0 0
  %3706 = vmatpush1.bf16.msra.mxu0 0
  %3707 = vmatprep.subr.bf16.mxu0 0
  %3708 = vmatpush1.bf16.msra.mxu0 0
  %3709 = vmatprep.subr.bf16.mxu0 0
  %3710 = vmatpush1.bf16.msra.mxu0 0
  %3711 = vmatprep.mubr.bf16.mxu0 0
  %3712 = vmatmul.mubr.bf16.gmra.mrb[0].mxu0 %v3677
  %v3713 = vpop.f32.mrb[0].mxu0
  %v3714 = vadd.f32 %v3674, %v3713
  %v3715 = vpop.f32.mrb[0].mxu0
  %v3716 = vadd.f32 %v3674, %v3715
  %v3717 = vpop.f32.mrb[0].mxu0
  %v3718 = vpop.f32.mrb[0].mxu0
  %3719 = vdwg.mxu0
  %3720 = vmatprep.subr.bf16.mxu0 %v3669
  %3721 = vmatpush1.bf16.msra.mxu0 %v3668
  %3722 = vmatprep.subr.bf16.mxu0 0
  %3723 = vmatpush1.bf16.msra.mxu0 0
  %3724 = vmatprep.subr.bf16.mxu0 0
  %3725 = vmatpush1.bf16.msra.mxu0 0
  %3726 = vmatprep.subr.bf16.mxu0 0
  %3727 = vmatpush1.bf16.msra.mxu0 0
  %3728 = vmatprep.subr.bf16.mxu0 0
  %3729 = vmatpush1.bf16.msra.mxu0 0
  %3730 = vmatprep.subr.bf16.mxu0 0
  %3731 = vmatpush1.bf16.msra.mxu0 0
  %3732 = vmatprep.subr.bf16.mxu0 0
  %3733 = vmatpush1.bf16.msra.mxu0 0
  %3734 = vmatprep.subr.bf16.mxu0 0
  %3735 = vmatpush1.bf16.msra.mxu0 0
  %3736 = vmatprep.subr.bf16.mxu0 0
  %3737 = vmatpush1.bf16.msra.mxu0 0
  %3738 = vmatprep.subr.bf16.mxu0 0
  %3739 = vmatpush1.bf16.msra.mxu0 0
  %3740 = vmatprep.subr.bf16.mxu0 0
  %3741 = vmatpush1.bf16.msra.mxu0 0
  %3742 = vmatprep.subr.bf16.mxu0 0
  %3743 = vmatpush1.bf16.msra.mxu0 0
  %3744 = vmatprep.subr.bf16.mxu0 0
  %3745 = vmatpush1.bf16.msra.mxu0 0
  %3746 = vmatprep.subr.bf16.mxu0 0
  %3747 = vmatpush1.bf16.msra.mxu0 0
  %3748 = vmatprep.subr.bf16.mxu0 0
  %3749 = vmatpush1.bf16.msra.mxu0 0
  %3750 = vmatprep.subr.bf16.mxu0 0
  %3751 = vmatpush1.bf16.msra.mxu0 0
  %3752 = vmatprep.mubr.bf16.mxu0 0
  %3753 = vmatmul.mubr.bf16.gmra.mrb[0].mxu0 %v3677
  %v3754 = vpop.f32.mrb[0].mxu0
  %v3755 = vadd.f32 %v3674, %v3754
  %v3756 = vpop.f32.mrb[0].mxu0
  %v3757 = vadd.f32 %v3674, %v3756
  %v3758 = vpop.f32.mrb[0].mxu0
  %v3759 = vpop.f32.mrb[0].mxu0
  %3760 = vdwg.mxu0
  %vm3761 = vcmp.ge.f32.partialorder %v3714, 0.0
  %vm3762 = vcmp.ge.f32.partialorder %v3716, 0.0
  %vm3763 = vcmp.ge.f32.partialorder %v3755, 0.0
  %vm3764 = vcmp.ge.f32.partialorder %v3757, 0.0
  %v3765 = vmul.f32 %v3714, 0.01
  %v3766 = vmul.f32 %v3716, 0.01
  %v3767 = vmul.f32 %v3755, 0.01
  %v3768 = vmul.f32 %v3757, 0.01
  %v3769 = vsel %vm3761, %v3714, %v3765
  %v3770 = vsel %vm3762, %v3716, %v3766
  %v3771 = vsel %vm3763, %v3755, %v3767
  %v3772 = vsel %vm3764, %v3757, %v3768
  %v3773 = vld [vmem:[%s1 + $0x150] sm:$0x3]
  %v3774 = vpack.c.bf16 %v3769, %v3769
  %v3775 = vpack.c.bf16 %v3770, %v3770
  %v3776 = vpack.c.bf16 %v3771, %v3771
  %v3777 = vpack.c.bf16 %v3772, %v3772
  %v3778 = vld [vmem:[%s2] sm:$0xf]
  %3780 = vset.pattern.permute.xlu0 7
  %3781 = vperm.xlu0 %3780, %v3778
  %v3782 = vpop.permute.xlu0 %3781
  %vm3784 = vcmask 64512
  %v3786 = vsel %vm3784, %v3773, 0
  %v3789 = vsel %vm480, %v3774, 0
  %v3792 = vsel %vm480, %v3775, 0
  %v3795 = vsel %vm480, %v3776, 0
  %v3798 = vsel %vm480, %v3777, 0
  %3800 = vmatprep.subr.bf16.mxu0 %v3792
  %3801 = vmatpush1.bf16.msra.mxu0 %v3789
  %3802 = vmatprep.subr.bf16.mxu0 0
  %3803 = vmatpush1.bf16.msra.mxu0 0
  %3804 = vmatprep.subr.bf16.mxu0 0
  %3805 = vmatpush1.bf16.msra.mxu0 0
  %3806 = vmatprep.subr.bf16.mxu0 0
  %3807 = vmatpush1.bf16.msra.mxu0 0
  %3808 = vmatprep.subr.bf16.mxu0 0
  %3809 = vmatpush1.bf16.msra.mxu0 0
  %3810 = vmatprep.subr.bf16.mxu0 0
  %3811 = vmatpush1.bf16.msra.mxu0 0
  %3812 = vmatprep.subr.bf16.mxu0 0
  %3813 = vmatpush1.bf16.msra.mxu0 0
  %3814 = vmatprep.subr.bf16.mxu0 0
  %3815 = vmatpush1.bf16.msra.mxu0 0
  %3816 = vmatprep.subr.bf16.mxu0 0
  %3817 = vmatpush1.bf16.msra.mxu0 0
  %3818 = vmatprep.subr.bf16.mxu0 0
  %3819 = vmatpush1.bf16.msra.mxu0 0
  %3820 = vmatprep.subr.bf16.mxu0 0
  %3821 = vmatpush1.bf16.msra.mxu0 0
  %3822 = vmatprep.subr.bf16.mxu0 0
  %3823 = vmatpush1.bf16.msra.mxu0 0
  %3824 = vmatprep.subr.bf16.mxu0 0
  %3825 = vmatpush1.bf16.msra.mxu0 0
  %3826 = vmatprep.subr.bf16.mxu0 0
  %3827 = vmatpush1.bf16.msra.mxu0 0
  %3828 = vmatprep.subr.bf16.mxu0 0
  %3829 = vmatpush1.bf16.msra.mxu0 0
  %3830 = vmatprep.subr.bf16.mxu0 0
  %3831 = vmatpush1.bf16.msra.mxu0 0
  %3832 = vmatprep.mubr.bf16.mxu0 0
  %3833 = vmatmul.mubr.bf16.gmra.mrb[0].mxu0 %v3786
  %v3834 = vpop.f32.mrb[0].mxu0
  %v3835 = vadd.f32 %v3782, %v3834
  %v3836 = vpop.f32.mrb[0].mxu0
  %v3837 = vadd.f32 %v3782, %v3836
  %v3838 = vpop.f32.mrb[0].mxu0
  %v3839 = vpop.f32.mrb[0].mxu0
  %3840 = vdwg.mxu0
  %3841 = vmatprep.subr.bf16.mxu0 %v3798
  %3842 = vmatpush1.bf16.msra.mxu0 %v3795
  %3843 = vmatprep.subr.bf16.mxu0 0
  %3844 = vmatpush1.bf16.msra.mxu0 0
  %3845 = vmatprep.subr.bf16.mxu0 0
  %3846 = vmatpush1.bf16.msra.mxu0 0
  %3847 = vmatprep.subr.bf16.mxu0 0
  %3848 = vmatpush1.bf16.msra.mxu0 0
  %3849 = vmatprep.subr.bf16.mxu0 0
  %3850 = vmatpush1.bf16.msra.mxu0 0
  %3851 = vmatprep.subr.bf16.mxu0 0
  %3852 = vmatpush1.bf16.msra.mxu0 0
  %3853 = vmatprep.subr.bf16.mxu0 0
  %3854 = vmatpush1.bf16.msra.mxu0 0
  %3855 = vmatprep.subr.bf16.mxu0 0
  %3856 = vmatpush1.bf16.msra.mxu0 0
  %3857 = vmatprep.subr.bf16.mxu0 0
  %3858 = vmatpush1.bf16.msra.mxu0 0
  %3859 = vmatprep.subr.bf16.mxu0 0
  %3860 = vmatpush1.bf16.msra.mxu0 0
  %3861 = vmatprep.subr.bf16.mxu0 0
  %3862 = vmatpush1.bf16.msra.mxu0 0
  %3863 = vmatprep.subr.bf16.mxu0 0
  %3864 = vmatpush1.bf16.msra.mxu0 0
  %3865 = vmatprep.subr.bf16.mxu0 0
  %3866 = vmatpush1.bf16.msra.mxu0 0
  %3867 = vmatprep.subr.bf16.mxu0 0
  %3868 = vmatpush1.bf16.msra.mxu0 0
  %3869 = vmatprep.subr.bf16.mxu0 0
  %3870 = vmatpush1.bf16.msra.mxu0 0
  %3871 = vmatprep.subr.bf16.mxu0 0
  %3872 = vmatpush1.bf16.msra.mxu0 0
  %3873 = vmatprep.mubr.bf16.mxu0 0
  %3874 = vmatmul.mubr.bf16.gmra.mrb[0].mxu0 %v3786
  %v3875 = vpop.f32.mrb[0].mxu0
  %v3876 = vadd.f32 %v3782, %v3875
  %v3877 = vpop.f32.mrb[0].mxu0
  %v3878 = vadd.f32 %v3782, %v3877
  %v3879 = vpop.f32.mrb[0].mxu0
  %v3880 = vpop.f32.mrb[0].mxu0
  %3881 = vdwg.mxu0
  %3882 = vrot.lane.b32.xlu0 %v3835, 17
  %v3883 = vpop.permute.xlu0 %3882
  %3884 = vrot.lane.b32.xlu0 %v3837, 17
  %v3885 = vpop.permute.xlu0 %3884
  %3886 = vrot.lane.b32.xlu0 %v3876, 17
  %v3887 = vpop.permute.xlu0 %3886
  %3888 = vrot.lane.b32.xlu0 %v3878, 17
  %v3889 = vpop.permute.xlu0 %3888
  %v3890 = vsel %vm32, %v3887, %v3889
  %v3891 = vsel %vm32, %v3885, %v3887
  %v3892 = vsel %vm32, %v3883, %v3885
  %v3893 = vsel %vm32, %v3889, %v3883
  %v3894 = vld [vmem:[%s3] ss:$8 sm:$0xf]
  %v3896 = vlaneseq
  %v3897 = vshrl.u32 %v3896, 7
  %v3898 = vsub.s32 0, %v3897
  %v3899 = vrot.slane %v3894, %v3898
  %v3900 = vlaneseq
  %v3901 = vshrl.u32 %v3900, 7
  %v3902 = vsub.s32 1, %v3901
  %v3903 = vrot.slane %v3894, %v3902
  %v3904 = vlaneseq
  %v3905 = vshrl.u32 %v3904, 7
  %v3906 = vsub.s32 2, %v3905
  %v3907 = vrot.slane %v3894, %v3906
  %v3908 = vlaneseq
  %v3909 = vshrl.u32 %v3908, 7
  %v3910 = vsub.s32 3, %v3909
  %v3911 = vrot.slane %v3894, %v3910
  %v3916 = vmul.f32 %v3893, %v3899
  %v3917 = vmul.f32 %v3892, %v3903
  %v3918 = vmul.f32 %v3891, %v3907
  %v3919 = vmul.f32 %v3890, %v3911
  %3920 = vst [vmem:[#allocation3 + $0x20] sm:$0xf] %v3916
  %3921 = vst [vmem:[#allocation3 + $0x28] sm:$0xf] %v3917
  %3922 = vst [vmem:[#allocation3 + $0x30] sm:$0xf] %v3918
  %3923 = vst [vmem:[#allocation3 + $0x38] sm:$0xf] %v3919
  %3924 = vrot.lane.b32.xlu0 %v3835, 16
  %v3925 = vpop.permute.xlu0 %3924
  %3926 = vrot.lane.b32.xlu0 %v3837, 16
  %v3927 = vpop.permute.xlu0 %3926
  %3928 = vrot.lane.b32.xlu0 %v3876, 16
  %v3929 = vpop.permute.xlu0 %3928
  %3930 = vrot.lane.b32.xlu0 %v3878, 16
  %v3931 = vpop.permute.xlu0 %3930
  %v3932 = vsel %vm75, %v3929, %v3931
  %v3933 = vsel %vm75, %v3927, %v3929
  %v3934 = vsel %vm75, %v3925, %v3927
  %v3935 = vsel %vm75, %v3931, %v3925
  %v3936 = vld [vmem:[%s80] ss:$8 sm:$0xf]
  %v3938 = vlaneseq
  %v3939 = vshrl.u32 %v3938, 7
  %v3940 = vsub.s32 0, %v3939
  %v3941 = vrot.slane %v3936, %v3940
  %v3942 = vlaneseq
  %v3943 = vshrl.u32 %v3942, 7
  %v3944 = vsub.s32 1, %v3943
  %v3945 = vrot.slane %v3936, %v3944
  %v3946 = vlaneseq
  %v3947 = vshrl.u32 %v3946, 7
  %v3948 = vsub.s32 2, %v3947
  %v3949 = vrot.slane %v3936, %v3948
  %v3950 = vlaneseq
  %v3951 = vshrl.u32 %v3950, 7
  %v3952 = vsub.s32 3, %v3951
  %v3953 = vrot.slane %v3936, %v3952
  %v3958 = vmul.f32 %v3935, %v3941
  %v3959 = vmul.f32 %v3934, %v3945
  %v3960 = vmul.f32 %v3933, %v3949
  %v3961 = vmul.f32 %v3932, %v3953
  %3962 = vst [vmem:[#allocation3 + $0x60] sm:$0xf] %v3958
  %3963 = vst [vmem:[#allocation3 + $0x68] sm:$0xf] %v3959
  %3964 = vst [vmem:[#allocation3 + $0x70] sm:$0xf] %v3960
  %3965 = vst [vmem:[#allocation3 + $0x78] sm:$0xf] %v3961
  %3966 = vrot.lane.b32.xlu0 %v3835, 15
  %v3967 = vpop.permute.xlu0 %3966
  %3968 = vrot.lane.b32.xlu0 %v3837, 15
  %v3969 = vpop.permute.xlu0 %3968
  %3970 = vrot.lane.b32.xlu0 %v3876, 15
  %v3971 = vpop.permute.xlu0 %3970
  %3972 = vrot.lane.b32.xlu0 %v3878, 15
  %v3973 = vpop.permute.xlu0 %3972
  %v3974 = vsel %vm119, %v3971, %v3973
  %v3975 = vsel %vm119, %v3969, %v3971
  %v3976 = vsel %vm119, %v3967, %v3969
  %v3977 = vsel %vm119, %v3973, %v3967
  %v3978 = vld [vmem:[%s124] ss:$8 sm:$0xf]
  %v3980 = vlaneseq
  %v3981 = vshrl.u32 %v3980, 7
  %v3982 = vsub.s32 0, %v3981
  %v3983 = vrot.slane %v3978, %v3982
  %v3984 = vlaneseq
  %v3985 = vshrl.u32 %v3984, 7
  %v3986 = vsub.s32 1, %v3985
  %v3987 = vrot.slane %v3978, %v3986
  %v3988 = vlaneseq
  %v3989 = vshrl.u32 %v3988, 7
  %v3990 = vsub.s32 2, %v3989
  %v3991 = vrot.slane %v3978, %v3990
  %v3992 = vlaneseq
  %v3993 = vshrl.u32 %v3992, 7
  %v3994 = vsub.s32 3, %v3993
  %v3995 = vrot.slane %v3978, %v3994
  %v4000 = vmul.f32 %v3977, %v3983
  %v4001 = vmul.f32 %v3976, %v3987
  %v4002 = vmul.f32 %v3975, %v3991
  %v4003 = vmul.f32 %v3974, %v3995
  %4004 = vst [vmem:[#allocation3 + $0xa0] sm:$0xf] %v4000
  %4005 = vst [vmem:[#allocation3 + $0xa8] sm:$0xf] %v4001
  %4006 = vst [vmem:[#allocation3 + $0xb0] sm:$0xf] %v4002
  %4007 = vst [vmem:[#allocation3 + $0xb8] sm:$0xf] %v4003
  %4008 = vrot.lane.b32.xlu0 %v3835, 1
  %v4009 = vpop.permute.xlu0 %4008
  %4010 = vrot.lane.b32.xlu0 %v3837, 1
  %v4011 = vpop.permute.xlu0 %4010
  %4012 = vrot.lane.b32.xlu0 %v3876, 1
  %v4013 = vpop.permute.xlu0 %4012
  %4014 = vrot.lane.b32.xlu0 %v3878, 1
  %v4015 = vpop.permute.xlu0 %4014
  %v4016 = vsel %vm163, %v4013, %v4015
  %v4017 = vsel %vm163, %v4011, %v4013
  %v4018 = vsel %vm163, %v4009, %v4011
  %v4019 = vsel %vm163, %v4015, %v4009
  %v4020 = vld [vmem:[%s168] ss:$8 sm:$0xf]
  %v4022 = vlaneseq
  %v4023 = vshrl.u32 %v4022, 7
  %v4024 = vsub.s32 0, %v4023
  %v4025 = vrot.slane %v4020, %v4024
  %v4026 = vlaneseq
  %v4027 = vshrl.u32 %v4026, 7
  %v4028 = vsub.s32 1, %v4027
  %v4029 = vrot.slane %v4020, %v4028
  %v4030 = vlaneseq
  %v4031 = vshrl.u32 %v4030, 7
  %v4032 = vsub.s32 2, %v4031
  %v4033 = vrot.slane %v4020, %v4032
  %v4034 = vlaneseq
  %v4035 = vshrl.u32 %v4034, 7
  %v4036 = vsub.s32 3, %v4035
  %v4037 = vrot.slane %v4020, %v4036
  %v4042 = vmul.f32 %v4019, %v4025
  %v4043 = vmul.f32 %v4018, %v4029
  %v4044 = vmul.f32 %v4017, %v4033
  %v4045 = vmul.f32 %v4016, %v4037
  %4046 = vst [vmem:[#allocation3 + $0xe0] sm:$0xf] %v4042
  %4047 = vst [vmem:[#allocation3 + $0xe8] sm:$0xf] %v4043
  %4048 = vst [vmem:[#allocation3 + $0xf0] sm:$0xf] %v4044
  %4049 = vst [vmem:[#allocation3 + $0xf8] sm:$0xf] %v4045
  %4050 = vst [vmem:[#allocation3 + $0x120] sm:$0xf] %v3835
  %4051 = vst [vmem:[#allocation3 + $0x128] sm:$0xf] %v3837
  %4052 = vst [vmem:[#allocation3 + $0x130] sm:$0xf] %v3876
  %4053 = vst [vmem:[#allocation3 + $0x138] sm:$0xf] %v3878
  %4054 = vrot.lane.b32.xlu0 %v3835, 127
  %v4055 = vpop.permute.xlu0 %4054
  %4056 = vrot.lane.b32.xlu0 %v3837, 127
  %v4057 = vpop.permute.xlu0 %4056
  %4058 = vrot.lane.b32.xlu0 %v3876, 127
  %v4059 = vpop.permute.xlu0 %4058
  %4060 = vrot.lane.b32.xlu0 %v3878, 127
  %v4061 = vpop.permute.xlu0 %4060
  %v4062 = vsel %vm211, %v4059, %v4061
  %v4063 = vsel %vm211, %v4057, %v4059
  %v4064 = vsel %vm211, %v4055, %v4057
  %v4065 = vsel %vm211, %v4061, %v4055
  %v4066 = vld [vmem:[%s216] ss:$8 sm:$0xf]
  %v4068 = vlaneseq
  %v4069 = vshrl.u32 %v4068, 7
  %v4070 = vsub.s32 0, %v4069
  %v4071 = vrot.slane %v4066, %v4070
  %v4072 = vlaneseq
  %v4073 = vshrl.u32 %v4072, 7
  %v4074 = vsub.s32 1, %v4073
  %v4075 = vrot.slane %v4066, %v4074
  %v4076 = vlaneseq
  %v4077 = vshrl.u32 %v4076, 7
  %v4078 = vsub.s32 2, %v4077
  %v4079 = vrot.slane %v4066, %v4078
  %v4080 = vlaneseq
  %v4081 = vshrl.u32 %v4080, 7
  %v4082 = vsub.s32 3, %v4081
  %v4083 = vrot.slane %v4066, %v4082
  %v4088 = vmul.f32 %v4064, %v4071
  %v4089 = vmul.f32 %v4063, %v4075
  %v4090 = vmul.f32 %v4062, %v4079
  %v4091 = vmul.f32 %v4065, %v4083
  %4092 = vst [vmem:[#allocation3 + $0x160] sm:$0xf] %v4088
  %4093 = vst [vmem:[#allocation3 + $0x168] sm:$0xf] %v4089
  %4094 = vst [vmem:[#allocation3 + $0x170] sm:$0xf] %v4090
  %4095 = vst [vmem:[#allocation3 + $0x178] sm:$0xf] %v4091
  %4096 = vrot.lane.b32.xlu0 %v3835, 113
  %v4097 = vpop.permute.xlu0 %4096
  %4098 = vrot.lane.b32.xlu0 %v3837, 113
  %v4099 = vpop.permute.xlu0 %4098
  %4100 = vrot.lane.b32.xlu0 %v3876, 113
  %v4101 = vpop.permute.xlu0 %4100
  %4102 = vrot.lane.b32.xlu0 %v3878, 113
  %v4103 = vpop.permute.xlu0 %4102
  %v4104 = vsel %vm255, %v4101, %v4103
  %v4105 = vsel %vm255, %v4099, %v4101
  %v4106 = vsel %vm255, %v4097, %v4099
  %v4107 = vsel %vm255, %v4103, %v4097
  %v4108 = vld [vmem:[%s260] ss:$8 sm:$0xf]
  %v4110 = vlaneseq
  %v4111 = vshrl.u32 %v4110, 7
  %v4112 = vsub.s32 0, %v4111
  %v4113 = vrot.slane %v4108, %v4112
  %v4114 = vlaneseq
  %v4115 = vshrl.u32 %v4114, 7
  %v4116 = vsub.s32 1, %v4115
  %v4117 = vrot.slane %v4108, %v4116
  %v4118 = vlaneseq
  %v4119 = vshrl.u32 %v4118, 7
  %v4120 = vsub.s32 2, %v4119
  %v4121 = vrot.slane %v4108, %v4120
  %v4122 = vlaneseq
  %v4123 = vshrl.u32 %v4122, 7
  %v4124 = vsub.s32 3, %v4123
  %v4125 = vrot.slane %v4108, %v4124
  %v4130 = vmul.f32 %v4106, %v4113
  %v4131 = vmul.f32 %v4105, %v4117
  %v4132 = vmul.f32 %v4104, %v4121
  %v4133 = vmul.f32 %v4107, %v4125
  %4134 = vst [vmem:[#allocation3 + $0x1a0] sm:$0xf] %v4130
  %4135 = vst [vmem:[#allocation3 + $0x1a8] sm:$0xf] %v4131
  %4136 = vst [vmem:[#allocation3 + $0x1b0] sm:$0xf] %v4132
  %4137 = vst [vmem:[#allocation3 + $0x1b8] sm:$0xf] %v4133
  %4138 = vrot.lane.b32.xlu0 %v3835, 112
  %v4139 = vpop.permute.xlu0 %4138
  %4140 = vrot.lane.b32.xlu0 %v3837, 112
  %v4141 = vpop.permute.xlu0 %4140
  %4142 = vrot.lane.b32.xlu0 %v3876, 112
  %v4143 = vpop.permute.xlu0 %4142
  %4144 = vrot.lane.b32.xlu0 %v3878, 112
  %v4145 = vpop.permute.xlu0 %4144
  %v4146 = vsel %vm299, %v4143, %v4145
  %v4147 = vsel %vm299, %v4141, %v4143
  %v4148 = vsel %vm299, %v4139, %v4141
  %v4149 = vsel %vm299, %v4145, %v4139
  %v4150 = vld [vmem:[%s304] ss:$8 sm:$0xf]
  %v4152 = vlaneseq
  %v4153 = vshrl.u32 %v4152, 7
  %v4154 = vsub.s32 0, %v4153
  %v4155 = vrot.slane %v4150, %v4154
  %v4156 = vlaneseq
  %v4157 = vshrl.u32 %v4156, 7
  %v4158 = vsub.s32 1, %v4157
  %v4159 = vrot.slane %v4150, %v4158
  %v4160 = vlaneseq
  %v4161 = vshrl.u32 %v4160, 7
  %v4162 = vsub.s32 2, %v4161
  %v4163 = vrot.slane %v4150, %v4162
  %v4164 = vlaneseq
  %v4165 = vshrl.u32 %v4164, 7
  %v4166 = vsub.s32 3, %v4165
  %v4167 = vrot.slane %v4150, %v4166
  %v4172 = vmul.f32 %v4148, %v4155
  %v4173 = vmul.f32 %v4147, %v4159
  %v4174 = vmul.f32 %v4146, %v4163
  %v4175 = vmul.f32 %v4149, %v4167
  %4176 = vst [vmem:[#allocation3 + $0x1e0] sm:$0xf] %v4172
  %4177 = vst [vmem:[#allocation3 + $0x1e8] sm:$0xf] %v4173
  %4178 = vst [vmem:[#allocation3 + $0x1f0] sm:$0xf] %v4174
  %4179 = vst [vmem:[#allocation3 + $0x1f8] sm:$0xf] %v4175
  %4180 = vrot.lane.b32.xlu0 %v3835, 111
  %v4181 = vpop.permute.xlu0 %4180
  %4182 = vrot.lane.b32.xlu0 %v3837, 111
  %v4183 = vpop.permute.xlu0 %4182
  %4184 = vrot.lane.b32.xlu0 %v3876, 111
  %v4185 = vpop.permute.xlu0 %4184
  %4186 = vrot.lane.b32.xlu0 %v3878, 111
  %v4187 = vpop.permute.xlu0 %4186
  %v4188 = vsel %vm343, %v4185, %v4187
  %v4189 = vsel %vm343, %v4183, %v4185
  %v4190 = vsel %vm343, %v4181, %v4183
  %v4191 = vsel %vm343, %v4187, %v4181
  %v4192 = vld [vmem:[%s348] ss:$8 sm:$0xf]
  %v4194 = vlaneseq
  %v4195 = vshrl.u32 %v4194, 7
  %v4196 = vsub.s32 0, %v4195
  %v4197 = vrot.slane %v4192, %v4196
  %v4198 = vlaneseq
  %v4199 = vshrl.u32 %v4198, 7
  %v4200 = vsub.s32 1, %v4199
  %v4201 = vrot.slane %v4192, %v4200
  %v4202 = vlaneseq
  %v4203 = vshrl.u32 %v4202, 7
  %v4204 = vsub.s32 2, %v4203
  %v4205 = vrot.slane %v4192, %v4204
  %v4206 = vlaneseq
  %v4207 = vshrl.u32 %v4206, 7
  %v4208 = vsub.s32 3, %v4207
  %v4209 = vrot.slane %v4192, %v4208
  %v4214 = vmul.f32 %v4190, %v4197
  %v4215 = vmul.f32 %v4189, %v4201
  %v4216 = vmul.f32 %v4188, %v4205
  %v4217 = vmul.f32 %v4191, %v4209
  %4218 = vst [vmem:[#allocation3 + $0x220] sm:$0xf] %v4214
  %4219 = vst [vmem:[#allocation3 + $0x228] sm:$0xf] %v4215
  %4220 = vst [vmem:[#allocation3 + $0x230] sm:$0xf] %v4216
  %4221 = vst [vmem:[#allocation3 + $0x238] sm:$0xf] %v4217
  %v4222 = vld [vmem:[#allocation3] sm:$0xff]
  %v4223 = vld [vmem:[#allocation3 + $0x8] sm:$0xff]
  %v4224 = vld [vmem:[#allocation3 + $0x10] sm:$0xff]
  %v4225 = vld [vmem:[#allocation3 + $0x18] sm:$0xff]
  %v4226 = vld [vmem:[#allocation3 + $0x20] sm:$0xff]
  %v4227 = vld [vmem:[#allocation3 + $0x28] sm:$0xff]
  %v4228 = vld [vmem:[#allocation3 + $0x30] sm:$0xff]
  %v4229 = vld [vmem:[#allocation3 + $0x38] sm:$0xff]
  %v4230 = vld [vmem:[#allocation3 + $0x40] sm:$0xff]
  %v4231 = vld [vmem:[#allocation3 + $0x48] sm:$0xff]
  %v4232 = vld [vmem:[#allocation3 + $0x50] sm:$0xff]
  %v4233 = vld [vmem:[#allocation3 + $0x58] sm:$0xff]
  %v4234 = vld [vmem:[#allocation3 + $0x60] sm:$0xff]
  %v4235 = vld [vmem:[#allocation3 + $0x68] sm:$0xff]
  %v4236 = vld [vmem:[#allocation3 + $0x70] sm:$0xff]
  %v4237 = vld [vmem:[#allocation3 + $0x78] sm:$0xff]
  %v4238 = vld [vmem:[#allocation3 + $0x80] sm:$0xff]
  %v4239 = vld [vmem:[#allocation3 + $0x88] sm:$0xff]
  %v4240 = vld [vmem:[#allocation3 + $0x90] sm:$0xff]
  %v4241 = vld [vmem:[#allocation3 + $0x98] sm:$0xff]
  %v4242 = vld [vmem:[#allocation3 + $0xa0] sm:$0xff]
  %v4243 = vld [vmem:[#allocation3 + $0xa8] sm:$0xff]
  %v4244 = vld [vmem:[#allocation3 + $0xb0] sm:$0xff]
  %v4245 = vld [vmem:[#allocation3 + $0xb8] sm:$0xff]
  %v4246 = vld [vmem:[#allocation3 + $0xc0] sm:$0xff]
  %v4247 = vld [vmem:[#allocation3 + $0xc8] sm:$0xff]
  %v4248 = vld [vmem:[#allocation3 + $0xd0] sm:$0xff]
  %v4249 = vld [vmem:[#allocation3 + $0xd8] sm:$0xff]
  %v4250 = vld [vmem:[#allocation3 + $0xe0] sm:$0xff]
  %v4251 = vld [vmem:[#allocation3 + $0xe8] sm:$0xff]
  %v4252 = vld [vmem:[#allocation3 + $0xf0] sm:$0xff]
  %v4253 = vld [vmem:[#allocation3 + $0xf8] sm:$0xff]
  %v4254 = vld [vmem:[#allocation3 + $0x100] sm:$0xff]
  %v4255 = vld [vmem:[#allocation3 + $0x108] sm:$0xff]
  %v4256 = vld [vmem:[#allocation3 + $0x110] sm:$0xff]
  %v4257 = vld [vmem:[#allocation3 + $0x118] sm:$0xff]
  %v4258 = vld [vmem:[#allocation3 + $0x120] sm:$0xff]
  %v4259 = vld [vmem:[#allocation3 + $0x128] sm:$0xff]
  %v4260 = vld [vmem:[#allocation3 + $0x130] sm:$0xff]
  %v4261 = vld [vmem:[#allocation3 + $0x138] sm:$0xff]
  %v4262 = vld [vmem:[#allocation3 + $0x140] sm:$0xff]
  %v4263 = vld [vmem:[#allocation3 + $0x148] sm:$0xff]
  %v4264 = vld [vmem:[#allocation3 + $0x150] sm:$0xff]
  %v4265 = vld [vmem:[#allocation3 + $0x158] sm:$0xff]
  %v4266 = vld [vmem:[#allocation3 + $0x160] sm:$0xff]
  %v4267 = vld [vmem:[#allocation3 + $0x168] sm:$0xff]
  %v4268 = vld [vmem:[#allocation3 + $0x170] sm:$0xff]
  %v4269 = vld [vmem:[#allocation3 + $0x178] sm:$0xff]
  %v4270 = vld [vmem:[#allocation3 + $0x180] sm:$0xff]
  %v4271 = vld [vmem:[#allocation3 + $0x188] sm:$0xff]
  %v4272 = vld [vmem:[#allocation3 + $0x190] sm:$0xff]
  %v4273 = vld [vmem:[#allocation3 + $0x198] sm:$0xff]
  %v4274 = vld [vmem:[#allocation3 + $0x1a0] sm:$0xff]
  %v4275 = vld [vmem:[#allocation3 + $0x1a8] sm:$0xff]
  %v4276 = vld [vmem:[#allocation3 + $0x1b0] sm:$0xff]
  %v4277 = vld [vmem:[#allocation3 + $0x1b8] sm:$0xff]
  %v4278 = vld [vmem:[#allocation3 + $0x1c0] sm:$0xff]
  %v4279 = vld [vmem:[#allocation3 + $0x1c8] sm:$0xff]
  %v4280 = vld [vmem:[#allocation3 + $0x1d0] sm:$0xff]
  %v4281 = vld [vmem:[#allocation3 + $0x1d8] sm:$0xff]
  %v4282 = vld [vmem:[#allocation3 + $0x1e0] sm:$0xff]
  %v4283 = vld [vmem:[#allocation3 + $0x1e8] sm:$0xff]
  %v4284 = vld [vmem:[#allocation3 + $0x1f0] sm:$0xff]
  %v4285 = vld [vmem:[#allocation3 + $0x1f8] sm:$0xff]
  %v4286 = vld [vmem:[#allocation3 + $0x200] sm:$0xff]
  %v4287 = vld [vmem:[#allocation3 + $0x208] sm:$0xff]
  %v4288 = vld [vmem:[#allocation3 + $0x210] sm:$0xff]
  %v4289 = vld [vmem:[#allocation3 + $0x218] sm:$0xff]
  %v4290 = vld [vmem:[#allocation3 + $0x220] sm:$0xff]
  %v4291 = vld [vmem:[#allocation3 + $0x228] sm:$0xff]
  %v4292 = vld [vmem:[#allocation3 + $0x230] sm:$0xff]
  %v4293 = vld [vmem:[#allocation3 + $0x238] sm:$0xff]
  %v4294 = vld [vmem:[%s1 + $0x180] sm:$0xff]
  %v4295 = vld [vmem:[%s1 + $0x18c] sm:$0xff]
  %v4296 = vpack.c.bf16 %v4226, %v4222
  %v4297 = vpack.c.bf16 %v4227, %v4223
  %v4298 = vpack.c.bf16 %v4228, %v4224
  %v4299 = vpack.c.bf16 %v4229, %v4225
  %v4300 = vpack.c.bf16 %v4234, %v4230
  %v4301 = vpack.c.bf16 %v4235, %v4231
  %v4302 = vpack.c.bf16 %v4236, %v4232
  %v4303 = vpack.c.bf16 %v4237, %v4233
  %v4304 = vpack.c.bf16 %v4242, %v4238
  %v4305 = vpack.c.bf16 %v4243, %v4239
  %v4306 = vpack.c.bf16 %v4244, %v4240
  %v4307 = vpack.c.bf16 %v4245, %v4241
  %v4308 = vpack.c.bf16 %v4250, %v4246
  %v4309 = vpack.c.bf16 %v4251, %v4247
  %v4310 = vpack.c.bf16 %v4252, %v4248
  %v4311 = vpack.c.bf16 %v4253, %v4249
  %v4312 = vpack.c.bf16 %v4258, %v4254
  %v4313 = vpack.c.bf16 %v4259, %v4255
  %v4314 = vpack.c.bf16 %v4260, %v4256
  %v4315 = vpack.c.bf16 %v4261, %v4257
  %v4316 = vpack.c.bf16 %v4266, %v4262
  %v4317 = vpack.c.bf16 %v4267, %v4263
  %v4318 = vpack.c.bf16 %v4268, %v4264
  %v4319 = vpack.c.bf16 %v4269, %v4265
  %v4320 = vpack.c.bf16 %v4274, %v4270
  %v4321 = vpack.c.bf16 %v4275, %v4271
  %v4322 = vpack.c.bf16 %v4276, %v4272
  %v4323 = vpack.c.bf16 %v4277, %v4273
  %v4324 = vpack.c.bf16 %v4282, %v4278
  %v4325 = vpack.c.bf16 %v4283, %v4279
  %v4326 = vpack.c.bf16 %v4284, %v4280
  %v4327 = vpack.c.bf16 %v4285, %v4281
  %v4328 = vpack.c.bf16 %v4290, %v4286
  %v4329 = vpack.c.bf16 %v4291, %v4287
  %v4330 = vpack.c.bf16 %v4292, %v4288
  %v4331 = vpack.c.bf16 %v4293, %v4289
  %v4332 = vld [vmem:[%s2] sm:$0xff]
  %v4333 = vld [vmem:[%s2 + $0x8] sm:$0xff]
  %4335 = vset.pattern.permute.xlu0 8
  %4336 = vperm.xlu0 %4335, %v4332
  %v4337 = vpop.permute.xlu0 %4336
  %4340 = vset.pattern.permute.xlu0 8
  %4341 = vperm.xlu0 %4340, %v4333
  %v4342 = vpop.permute.xlu0 %4341
  %v4346 = vunpack.c.l.b16 %v4294
  %v4347 = vunpack.c.h.b16 %v4294
  %v4348 = vunpack.c.l.b16 %v4295
  %v4349 = vunpack.c.h.b16 %v4295
  %v4350 = vpack.c.b16 %v4348, %v4346
  %v4351 = vpack.c.b16 %v4349, %v4347
  %v4354 = vsel %vm2175, %v4351, 0
  %4356 = vmatprep.subr.bf16.mxu0 %v4297
  %4357 = vmatpush1.bf16.msra.mxu0 %v4296
  %4358 = vmatprep.subr.bf16.mxu0 %v4301
  %4359 = vmatpush1.bf16.msra.mxu0 %v4300
  %4360 = vmatprep.subr.bf16.mxu0 %v4305
  %4361 = vmatpush1.bf16.msra.mxu0 %v4304
  %4362 = vmatprep.subr.bf16.mxu0 %v4309
  %4363 = vmatpush1.bf16.msra.mxu0 %v4308
  %4364 = vmatprep.subr.bf16.mxu0 %v4313
  %4365 = vmatpush1.bf16.msra.mxu0 %v4312
  %4366 = vmatprep.subr.bf16.mxu0 %v4317
  %4367 = vmatpush1.bf16.msra.mxu0 %v4316
  %4368 = vmatprep.subr.bf16.mxu0 %v4321
  %4369 = vmatpush1.bf16.msra.mxu0 %v4320
  %4370 = vmatprep.subr.bf16.mxu0 %v4325
  %4371 = vmatpush1.bf16.msra.mxu0 %v4324
  %4372 = vmatprep.subr.bf16.mxu0 %v4329
  %4373 = vmatpush1.bf16.msra.mxu0 %v4328
  %4374 = vmatprep.subr.bf16.mxu0 0
  %4375 = vmatpush1.bf16.msra.mxu0 0
  %4376 = vmatprep.subr.bf16.mxu0 0
  %4377 = vmatpush1.bf16.msra.mxu0 0
  %4378 = vmatprep.subr.bf16.mxu0 0
  %4379 = vmatpush1.bf16.msra.mxu0 0
  %4380 = vmatprep.subr.bf16.mxu0 0
  %4381 = vmatpush1.bf16.msra.mxu0 0
  %4382 = vmatprep.subr.bf16.mxu0 0
  %4383 = vmatpush1.bf16.msra.mxu0 0
  %4384 = vmatprep.subr.bf16.mxu0 0
  %4385 = vmatpush1.bf16.msra.mxu0 0
  %4386 = vmatprep.subr.bf16.mxu0 0
  %4387 = vmatpush1.bf16.msra.mxu0 0
  %4388 = vmatprep.mubr.bf16.mxu0 %v4354
  %4389 = vmatmul.mubr.bf16.gmra.mrb[0].mxu0 %v4350
  %v4390 = vpop.f32.mrb[0].mxu0
  %v4391 = vadd.f32 %v4337, %v4390
  %v4392 = vpop.f32.mrb[0].mxu0
  %v4393 = vadd.f32 %v4337, %v4392
  %v4394 = vpop.f32.mrb[0].mxu0
  %v4395 = vadd.f32 %v4342, %v4394
  %v4396 = vpop.f32.mrb[0].mxu0
  %v4397 = vadd.f32 %v4342, %v4396
  %4398 = vdwg.mxu0
  %4399 = vmatprep.subr.bf16.mxu0 %v4299
  %4400 = vmatpush1.bf16.msra.mxu0 %v4298
  %4401 = vmatprep.subr.bf16.mxu0 %v4303
  %4402 = vmatpush1.bf16.msra.mxu0 %v4302
  %4403 = vmatprep.subr.bf16.mxu0 %v4307
  %4404 = vmatpush1.bf16.msra.mxu0 %v4306
  %4405 = vmatprep.subr.bf16.mxu0 %v4311
  %4406 = vmatpush1.bf16.msra.mxu0 %v4310
  %4407 = vmatprep.subr.bf16.mxu0 %v4315
  %4408 = vmatpush1.bf16.msra.mxu0 %v4314
  %4409 = vmatprep.subr.bf16.mxu0 %v4319
  %4410 = vmatpush1.bf16.msra.mxu0 %v4318
  %4411 = vmatprep.subr.bf16.mxu0 %v4323
  %4412 = vmatpush1.bf16.msra.mxu0 %v4322
  %4413 = vmatprep.subr.bf16.mxu0 %v4327
  %4414 = vmatpush1.bf16.msra.mxu0 %v4326
  %4415 = vmatprep.subr.bf16.mxu0 %v4331
  %4416 = vmatpush1.bf16.msra.mxu0 %v4330
  %4417 = vmatprep.subr.bf16.mxu0 0
  %4418 = vmatpush1.bf16.msra.mxu0 0
  %4419 = vmatprep.subr.bf16.mxu0 0
  %4420 = vmatpush1.bf16.msra.mxu0 0
  %4421 = vmatprep.subr.bf16.mxu0 0
  %4422 = vmatpush1.bf16.msra.mxu0 0
  %4423 = vmatprep.subr.bf16.mxu0 0
  %4424 = vmatpush1.bf16.msra.mxu0 0
  %4425 = vmatprep.subr.bf16.mxu0 0
  %4426 = vmatpush1.bf16.msra.mxu0 0
  %4427 = vmatprep.subr.bf16.mxu0 0
  %4428 = vmatpush1.bf16.msra.mxu0 0
  %4429 = vmatprep.subr.bf16.mxu0 0
  %4430 = vmatpush1.bf16.msra.mxu0 0
  %4431 = vmatprep.mubr.bf16.mxu0 %v4354
  %4432 = vmatmul.mubr.bf16.gmra.mrb[0].mxu0 %v4350
  %v4433 = vpop.f32.mrb[0].mxu0
  %v4434 = vadd.f32 %v4337, %v4433
  %v4435 = vpop.f32.mrb[0].mxu0
  %v4436 = vadd.f32 %v4337, %v4435
  %v4437 = vpop.f32.mrb[0].mxu0
  %v4438 = vadd.f32 %v4342, %v4437
  %v4439 = vpop.f32.mrb[0].mxu0
  %v4440 = vadd.f32 %v4342, %v4439
  %4441 = vdwg.mxu0
  %vm4442 = vcmp.ge.f32.partialorder %v4391, 0.0
  %vm4443 = vcmp.ge.f32.partialorder %v4393, 0.0
  %vm4444 = vcmp.ge.f32.partialorder %v4434, 0.0
  %vm4445 = vcmp.ge.f32.partialorder %v4436, 0.0
  %vm4446 = vcmp.ge.f32.partialorder %v4395, 0.0
  %vm4447 = vcmp.ge.f32.partialorder %v4397, 0.0
  %vm4448 = vcmp.ge.f32.partialorder %v4438, 0.0
  %vm4449 = vcmp.ge.f32.partialorder %v4440, 0.0
  %v4450 = vmul.f32 %v4391, 0.01
  %v4451 = vmul.f32 %v4393, 0.01
  %v4452 = vmul.f32 %v4434, 0.01
  %v4453 = vmul.f32 %v4436, 0.01
  %v4454 = vmul.f32 %v4395, 0.01
  %v4455 = vmul.f32 %v4397, 0.01
  %v4456 = vmul.f32 %v4438, 0.01
  %v4457 = vmul.f32 %v4440, 0.01
  %v4458 = vsel %vm4442, %v4391, %v4450
  %v4459 = vsel %vm4443, %v4393, %v4451
  %v4460 = vsel %vm4444, %v4434, %v4452
  %v4461 = vsel %vm4445, %v4436, %v4453
  %v4462 = vsel %vm4446, %v4395, %v4454
  %v4463 = vsel %vm4447, %v4397, %v4455
  %v4464 = vsel %vm4448, %v4438, %v4456
  %v4465 = vsel %vm4449, %v4440, %v4457
  %4466 = vrot.lane.b32.xlu0 %v4458, 17
  %v4467 = vpop.permute.xlu0 %4466
  %4468 = vrot.lane.b32.xlu0 %v4462, 17
  %v4469 = vpop.permute.xlu0 %4468
  %4470 = vrot.lane.b32.xlu0 %v4459, 17
  %v4471 = vpop.permute.xlu0 %4470
  %4472 = vrot.lane.b32.xlu0 %v4463, 17
  %v4473 = vpop.permute.xlu0 %4472
  %4474 = vrot.lane.b32.xlu0 %v4460, 17
  %v4475 = vpop.permute.xlu0 %4474
  %4476 = vrot.lane.b32.xlu0 %v4464, 17
  %v4477 = vpop.permute.xlu0 %4476
  %4478 = vrot.lane.b32.xlu0 %v4461, 17
  %v4479 = vpop.permute.xlu0 %4478
  %4480 = vrot.lane.b32.xlu0 %v4465, 17
  %v4481 = vpop.permute.xlu0 %4480
  %v4482 = vsel %vm32, %v4475, %v4479
  %v4483 = vsel %vm32, %v4477, %v4481
  %v4484 = vsel %vm32, %v4471, %v4475
  %v4485 = vsel %vm32, %v4473, %v4477
  %v4486 = vsel %vm32, %v4467, %v4471
  %v4487 = vsel %vm32, %v4469, %v4473
  %v4488 = vsel %vm32, %v4479, %v4467
  %v4489 = vsel %vm32, %v4481, %v4469
  %v4490 = vld [vmem:[%s3] ss:$8 sm:$0xf]
  %v4492 = vlaneseq
  %v4493 = vshrl.u32 %v4492, 7
  %v4494 = vsub.s32 0, %v4493
  %v4495 = vrot.slane %v4490, %v4494
  %v4496 = vlaneseq
  %v4497 = vshrl.u32 %v4496, 7
  %v4498 = vsub.s32 1, %v4497
  %v4499 = vrot.slane %v4490, %v4498
  %v4500 = vlaneseq
  %v4501 = vshrl.u32 %v4500, 7
  %v4502 = vsub.s32 2, %v4501
  %v4503 = vrot.slane %v4490, %v4502
  %v4504 = vlaneseq
  %v4505 = vshrl.u32 %v4504, 7
  %v4506 = vsub.s32 3, %v4505
  %v4507 = vrot.slane %v4490, %v4506
  %v4512 = vmul.f32 %v4488, %v4495
  %v4513 = vmul.f32 %v4486, %v4499
  %v4514 = vmul.f32 %v4484, %v4503
  %v4515 = vmul.f32 %v4482, %v4507
  %v4516 = vmul.f32 %v4489, %v4495
  %v4517 = vmul.f32 %v4487, %v4499
  %v4518 = vmul.f32 %v4485, %v4503
  %v4519 = vmul.f32 %v4483, %v4507
  %4520 = vst [vmem:[#allocation2] sm:$0xff] %v4512
  %4521 = vst [vmem:[#allocation2 + $0x8] sm:$0xff] %v4513
  %4522 = vst [vmem:[#allocation2 + $0x10] sm:$0xff] %v4514
  %4523 = vst [vmem:[#allocation2 + $0x18] sm:$0xff] %v4515
  %4524 = vst [vmem:[#allocation2 + $0x20] sm:$0xff] %v4516
  %4525 = vst [vmem:[#allocation2 + $0x28] sm:$0xff] %v4517
  %4526 = vst [vmem:[#allocation2 + $0x30] sm:$0xff] %v4518
  %4527 = vst [vmem:[#allocation2 + $0x38] sm:$0xff] %v4519
  %4528 = vrot.lane.b32.xlu0 %v4458, 16
  %v4529 = vpop.permute.xlu0 %4528
  %4530 = vrot.lane.b32.xlu0 %v4462, 16
  %v4531 = vpop.permute.xlu0 %4530
  %4532 = vrot.lane.b32.xlu0 %v4459, 16
  %v4533 = vpop.permute.xlu0 %4532
  %4534 = vrot.lane.b32.xlu0 %v4463, 16
  %v4535 = vpop.permute.xlu0 %4534
  %4536 = vrot.lane.b32.xlu0 %v4460, 16
  %v4537 = vpop.permute.xlu0 %4536
  %4538 = vrot.lane.b32.xlu0 %v4464, 16
  %v4539 = vpop.permute.xlu0 %4538
  %4540 = vrot.lane.b32.xlu0 %v4461, 16
  %v4541 = vpop.permute.xlu0 %4540
  %4542 = vrot.lane.b32.xlu0 %v4465, 16
  %v4543 = vpop.permute.xlu0 %4542
  %v4544 = vsel %vm75, %v4537, %v4541
  %v4545 = vsel %vm75, %v4539, %v4543
  %v4546 = vsel %vm75, %v4533, %v4537
  %v4547 = vsel %vm75, %v4535, %v4539
  %v4548 = vsel %vm75, %v4529, %v4533
  %v4549 = vsel %vm75, %v4531, %v4535
  %v4550 = vsel %vm75, %v4541, %v4529
  %v4551 = vsel %vm75, %v4543, %v4531
  %v4552 = vld [vmem:[%s80] ss:$8 sm:$0xf]
  %v4554 = vlaneseq
  %v4555 = vshrl.u32 %v4554, 7
  %v4556 = vsub.s32 0, %v4555
  %v4557 = vrot.slane %v4552, %v4556
  %v4558 = vlaneseq
  %v4559 = vshrl.u32 %v4558, 7
  %v4560 = vsub.s32 1, %v4559
  %v4561 = vrot.slane %v4552, %v4560
  %v4562 = vlaneseq
  %v4563 = vshrl.u32 %v4562, 7
  %v4564 = vsub.s32 2, %v4563
  %v4565 = vrot.slane %v4552, %v4564
  %v4566 = vlaneseq
  %v4567 = vshrl.u32 %v4566, 7
  %v4568 = vsub.s32 3, %v4567
  %v4569 = vrot.slane %v4552, %v4568
  %v4574 = vmul.f32 %v4550, %v4557
  %v4575 = vmul.f32 %v4548, %v4561
  %v4576 = vmul.f32 %v4546, %v4565
  %v4577 = vmul.f32 %v4544, %v4569
  %v4578 = vmul.f32 %v4551, %v4557
  %v4579 = vmul.f32 %v4549, %v4561
  %v4580 = vmul.f32 %v4547, %v4565
  %v4581 = vmul.f32 %v4545, %v4569
  %4582 = vst [vmem:[#allocation2 + $0x40] sm:$0xff] %v4574
  %4583 = vst [vmem:[#allocation2 + $0x48] sm:$0xff] %v4575
  %4584 = vst [vmem:[#allocation2 + $0x50] sm:$0xff] %v4576
  %4585 = vst [vmem:[#allocation2 + $0x58] sm:$0xff] %v4577
  %4586 = vst [vmem:[#allocation2 + $0x60] sm:$0xff] %v4578
  %4587 = vst [vmem:[#allocation2 + $0x68] sm:$0xff] %v4579
  %4588 = vst [vmem:[#allocation2 + $0x70] sm:$0xff] %v4580
  %4589 = vst [vmem:[#allocation2 + $0x78] sm:$0xff] %v4581
  %4590 = vrot.lane.b32.xlu0 %v4458, 15
  %v4591 = vpop.permute.xlu0 %4590
  %4592 = vrot.lane.b32.xlu0 %v4462, 15
  %v4593 = vpop.permute.xlu0 %4592
  %4594 = vrot.lane.b32.xlu0 %v4459, 15
  %v4595 = vpop.permute.xlu0 %4594
  %4596 = vrot.lane.b32.xlu0 %v4463, 15
  %v4597 = vpop.permute.xlu0 %4596
  %4598 = vrot.lane.b32.xlu0 %v4460, 15
  %v4599 = vpop.permute.xlu0 %4598
  %4600 = vrot.lane.b32.xlu0 %v4464, 15
  %v4601 = vpop.permute.xlu0 %4600
  %4602 = vrot.lane.b32.xlu0 %v4461, 15
  %v4603 = vpop.permute.xlu0 %4602
  %4604 = vrot.lane.b32.xlu0 %v4465, 15
  %v4605 = vpop.permute.xlu0 %4604
  %v4606 = vsel %vm119, %v4599, %v4603
  %v4607 = vsel %vm119, %v4601, %v4605
  %v4608 = vsel %vm119, %v4595, %v4599
  %v4609 = vsel %vm119, %v4597, %v4601
  %v4610 = vsel %vm119, %v4591, %v4595
  %v4611 = vsel %vm119, %v4593, %v4597
  %v4612 = vsel %vm119, %v4603, %v4591
  %v4613 = vsel %vm119, %v4605, %v4593
  %v4614 = vld [vmem:[%s124] ss:$8 sm:$0xf]
  %v4616 = vlaneseq
  %v4617 = vshrl.u32 %v4616, 7
  %v4618 = vsub.s32 0, %v4617
  %v4619 = vrot.slane %v4614, %v4618
  %v4620 = vlaneseq
  %v4621 = vshrl.u32 %v4620, 7
  %v4622 = vsub.s32 1, %v4621
  %v4623 = vrot.slane %v4614, %v4622
  %v4624 = vlaneseq
  %v4625 = vshrl.u32 %v4624, 7
  %v4626 = vsub.s32 2, %v4625
  %v4627 = vrot.slane %v4614, %v4626
  %v4628 = vlaneseq
  %v4629 = vshrl.u32 %v4628, 7
  %v4630 = vsub.s32 3, %v4629
  %v4631 = vrot.slane %v4614, %v4630
  %v4636 = vmul.f32 %v4612, %v4619
  %v4637 = vmul.f32 %v4610, %v4623
  %v4638 = vmul.f32 %v4608, %v4627
  %v4639 = vmul.f32 %v4606, %v4631
  %v4640 = vmul.f32 %v4613, %v4619
  %v4641 = vmul.f32 %v4611, %v4623
  %v4642 = vmul.f32 %v4609, %v4627
  %v4643 = vmul.f32 %v4607, %v4631
  %4644 = vst [vmem:[#allocation2 + $0x80] sm:$0xff] %v4636
  %4645 = vst [vmem:[#allocation2 + $0x88] sm:$0xff] %v4637
  %4646 = vst [vmem:[#allocation2 + $0x90] sm:$0xff] %v4638
  %4647 = vst [vmem:[#allocation2 + $0x98] sm:$0xff] %v4639
  %4648 = vst [vmem:[#allocation2 + $0xa0] sm:$0xff] %v4640
  %4649 = vst [vmem:[#allocation2 + $0xa8] sm:$0xff] %v4641
  %4650 = vst [vmem:[#allocation2 + $0xb0] sm:$0xff] %v4642
  %4651 = vst [vmem:[#allocation2 + $0xb8] sm:$0xff] %v4643
  %4652 = vrot.lane.b32.xlu0 %v4458, 1
  %v4653 = vpop.permute.xlu0 %4652
  %4654 = vrot.lane.b32.xlu0 %v4462, 1
  %v4655 = vpop.permute.xlu0 %4654
  %4656 = vrot.lane.b32.xlu0 %v4459, 1
  %v4657 = vpop.permute.xlu0 %4656
  %4658 = vrot.lane.b32.xlu0 %v4463, 1
  %v4659 = vpop.permute.xlu0 %4658
  %4660 = vrot.lane.b32.xlu0 %v4460, 1
  %v4661 = vpop.permute.xlu0 %4660
  %4662 = vrot.lane.b32.xlu0 %v4464, 1
  %v4663 = vpop.permute.xlu0 %4662
  %4664 = vrot.lane.b32.xlu0 %v4461, 1
  %v4665 = vpop.permute.xlu0 %4664
  %4666 = vrot.lane.b32.xlu0 %v4465, 1
  %v4667 = vpop.permute.xlu0 %4666
  %v4668 = vsel %vm163, %v4661, %v4665
  %v4669 = vsel %vm163, %v4663, %v4667
  %v4670 = vsel %vm163, %v4657, %v4661
  %v4671 = vsel %vm163, %v4659, %v4663
  %v4672 = vsel %vm163, %v4653, %v4657
  %v4673 = vsel %vm163, %v4655, %v4659
  %v4674 = vsel %vm163, %v4665, %v4653
  %v4675 = vsel %vm163, %v4667, %v4655
  %v4676 = vld [vmem:[%s168] ss:$8 sm:$0xf]
  %v4678 = vlaneseq
  %v4679 = vshrl.u32 %v4678, 7
  %v4680 = vsub.s32 0, %v4679
  %v4681 = vrot.slane %v4676, %v4680
  %v4682 = vlaneseq
  %v4683 = vshrl.u32 %v4682, 7
  %v4684 = vsub.s32 1, %v4683
  %v4685 = vrot.slane %v4676, %v4684
  %v4686 = vlaneseq
  %v4687 = vshrl.u32 %v4686, 7
  %v4688 = vsub.s32 2, %v4687
  %v4689 = vrot.slane %v4676, %v4688
  %v4690 = vlaneseq
  %v4691 = vshrl.u32 %v4690, 7
  %v4692 = vsub.s32 3, %v4691
  %v4693 = vrot.slane %v4676, %v4692
  %v4698 = vmul.f32 %v4674, %v4681
  %v4699 = vmul.f32 %v4672, %v4685
  %v4700 = vmul.f32 %v4670, %v4689
  %v4701 = vmul.f32 %v4668, %v4693
  %v4702 = vmul.f32 %v4675, %v4681
  %v4703 = vmul.f32 %v4673, %v4685
  %v4704 = vmul.f32 %v4671, %v4689
  %v4705 = vmul.f32 %v4669, %v4693
  %4706 = vst [vmem:[#allocation2 + $0xc0] sm:$0xff] %v4698
  %4707 = vst [vmem:[#allocation2 + $0xc8] sm:$0xff] %v4699
  %4708 = vst [vmem:[#allocation2 + $0xd0] sm:$0xff] %v4700
  %4709 = vst [vmem:[#allocation2 + $0xd8] sm:$0xff] %v4701
  %4710 = vst [vmem:[#allocation2 + $0xe0] sm:$0xff] %v4702
  %4711 = vst [vmem:[#allocation2 + $0xe8] sm:$0xff] %v4703
  %4712 = vst [vmem:[#allocation2 + $0xf0] sm:$0xff] %v4704
  %4713 = vst [vmem:[#allocation2 + $0xf8] sm:$0xff] %v4705
  %4714 = vst [vmem:[#allocation2 + $0x100] sm:$0xff] %v4458
  %4715 = vst [vmem:[#allocation2 + $0x108] sm:$0xff] %v4459
  %4716 = vst [vmem:[#allocation2 + $0x110] sm:$0xff] %v4460
  %4717 = vst [vmem:[#allocation2 + $0x118] sm:$0xff] %v4461
  %4718 = vst [vmem:[#allocation2 + $0x120] sm:$0xff] %v4462
  %4719 = vst [vmem:[#allocation2 + $0x128] sm:$0xff] %v4463
  %4720 = vst [vmem:[#allocation2 + $0x130] sm:$0xff] %v4464
  %4721 = vst [vmem:[#allocation2 + $0x138] sm:$0xff] %v4465
  %4722 = vrot.lane.b32.xlu0 %v4458, 127
  %v4723 = vpop.permute.xlu0 %4722
  %4724 = vrot.lane.b32.xlu0 %v4462, 127
  %v4725 = vpop.permute.xlu0 %4724
  %4726 = vrot.lane.b32.xlu0 %v4459, 127
  %v4727 = vpop.permute.xlu0 %4726
  %4728 = vrot.lane.b32.xlu0 %v4463, 127
  %v4729 = vpop.permute.xlu0 %4728
  %4730 = vrot.lane.b32.xlu0 %v4460, 127
  %v4731 = vpop.permute.xlu0 %4730
  %4732 = vrot.lane.b32.xlu0 %v4464, 127
  %v4733 = vpop.permute.xlu0 %4732
  %4734 = vrot.lane.b32.xlu0 %v4461, 127
  %v4735 = vpop.permute.xlu0 %4734
  %4736 = vrot.lane.b32.xlu0 %v4465, 127
  %v4737 = vpop.permute.xlu0 %4736
  %v4738 = vsel %vm211, %v4731, %v4735
  %v4739 = vsel %vm211, %v4733, %v4737
  %v4740 = vsel %vm211, %v4727, %v4731
  %v4741 = vsel %vm211, %v4729, %v4733
  %v4742 = vsel %vm211, %v4723, %v4727
  %v4743 = vsel %vm211, %v4725, %v4729
  %v4744 = vsel %vm211, %v4735, %v4723
  %v4745 = vsel %vm211, %v4737, %v4725
  %v4746 = vld [vmem:[%s216] ss:$8 sm:$0xf]
  %v4748 = vlaneseq
  %v4749 = vshrl.u32 %v4748, 7
  %v4750 = vsub.s32 0, %v4749
  %v4751 = vrot.slane %v4746, %v4750
  %v4752 = vlaneseq
  %v4753 = vshrl.u32 %v4752, 7
  %v4754 = vsub.s32 1, %v4753
  %v4755 = vrot.slane %v4746, %v4754
  %v4756 = vlaneseq
  %v4757 = vshrl.u32 %v4756, 7
  %v4758 = vsub.s32 2, %v4757
  %v4759 = vrot.slane %v4746, %v4758
  %v4760 = vlaneseq
  %v4761 = vshrl.u32 %v4760, 7
  %v4762 = vsub.s32 3, %v4761
  %v4763 = vrot.slane %v4746, %v4762
  %v4768 = vmul.f32 %v4742, %v4751
  %v4769 = vmul.f32 %v4740, %v4755
  %v4770 = vmul.f32 %v4738, %v4759
  %v4771 = vmul.f32 %v4744, %v4763
  %v4772 = vmul.f32 %v4743, %v4751
  %v4773 = vmul.f32 %v4741, %v4755
  %v4774 = vmul.f32 %v4739, %v4759
  %v4775 = vmul.f32 %v4745, %v4763
  %4776 = vst [vmem:[#allocation2 + $0x140] sm:$0xff] %v4768
  %4777 = vst [vmem:[#allocation2 + $0x148] sm:$0xff] %v4769
  %4778 = vst [vmem:[#allocation2 + $0x150] sm:$0xff] %v4770
  %4779 = vst [vmem:[#allocation2 + $0x158] sm:$0xff] %v4771
  %4780 = vst [vmem:[#allocation2 + $0x160] sm:$0xff] %v4772
  %4781 = vst [vmem:[#allocation2 + $0x168] sm:$0xff] %v4773
  %4782 = vst [vmem:[#allocation2 + $0x170] sm:$0xff] %v4774
  %4783 = vst [vmem:[#allocation2 + $0x178] sm:$0xff] %v4775
  %4784 = vrot.lane.b32.xlu0 %v4458, 113
  %v4785 = vpop.permute.xlu0 %4784
  %4786 = vrot.lane.b32.xlu0 %v4462, 113
  %v4787 = vpop.permute.xlu0 %4786
  %4788 = vrot.lane.b32.xlu0 %v4459, 113
  %v4789 = vpop.permute.xlu0 %4788
  %4790 = vrot.lane.b32.xlu0 %v4463, 113
  %v4791 = vpop.permute.xlu0 %4790
  %4792 = vrot.lane.b32.xlu0 %v4460, 113
  %v4793 = vpop.permute.xlu0 %4792
  %4794 = vrot.lane.b32.xlu0 %v4464, 113
  %v4795 = vpop.permute.xlu0 %4794
  %4796 = vrot.lane.b32.xlu0 %v4461, 113
  %v4797 = vpop.permute.xlu0 %4796
  %4798 = vrot.lane.b32.xlu0 %v4465, 113
  %v4799 = vpop.permute.xlu0 %4798
  %v4800 = vsel %vm255, %v4793, %v4797
  %v4801 = vsel %vm255, %v4795, %v4799
  %v4802 = vsel %vm255, %v4789, %v4793
  %v4803 = vsel %vm255, %v4791, %v4795
  %v4804 = vsel %vm255, %v4785, %v4789
  %v4805 = vsel %vm255, %v4787, %v4791
  %v4806 = vsel %vm255, %v4797, %v4785
  %v4807 = vsel %vm255, %v4799, %v4787
  %v4808 = vld [vmem:[%s260] ss:$8 sm:$0xf]
  %v4810 = vlaneseq
  %v4811 = vshrl.u32 %v4810, 7
  %v4812 = vsub.s32 0, %v4811
  %v4813 = vrot.slane %v4808, %v4812
  %v4814 = vlaneseq
  %v4815 = vshrl.u32 %v4814, 7
  %v4816 = vsub.s32 1, %v4815
  %v4817 = vrot.slane %v4808, %v4816
  %v4818 = vlaneseq
  %v4819 = vshrl.u32 %v4818, 7
  %v4820 = vsub.s32 2, %v4819
  %v4821 = vrot.slane %v4808, %v4820
  %v4822 = vlaneseq
  %v4823 = vshrl.u32 %v4822, 7
  %v4824 = vsub.s32 3, %v4823
  %v4825 = vrot.slane %v4808, %v4824
  %v4830 = vmul.f32 %v4804, %v4813
  %v4831 = vmul.f32 %v4802, %v4817
  %v4832 = vmul.f32 %v4800, %v4821
  %v4833 = vmul.f32 %v4806, %v4825
  %v4834 = vmul.f32 %v4805, %v4813
  %v4835 = vmul.f32 %v4803, %v4817
  %v4836 = vmul.f32 %v4801, %v4821
  %v4837 = vmul.f32 %v4807, %v4825
  %4838 = vst [vmem:[#allocation2 + $0x180] sm:$0xff] %v4830
  %4839 = vst [vmem:[#allocation2 + $0x188] sm:$0xff] %v4831
  %4840 = vst [vmem:[#allocation2 + $0x190] sm:$0xff] %v4832
  %4841 = vst [vmem:[#allocation2 + $0x198] sm:$0xff] %v4833
  %4842 = vst [vmem:[#allocation2 + $0x1a0] sm:$0xff] %v4834
  %4843 = vst [vmem:[#allocation2 + $0x1a8] sm:$0xff] %v4835
  %4844 = vst [vmem:[#allocation2 + $0x1b0] sm:$0xff] %v4836
  %4845 = vst [vmem:[#allocation2 + $0x1b8] sm:$0xff] %v4837
  %4846 = vrot.lane.b32.xlu0 %v4458, 112
  %v4847 = vpop.permute.xlu0 %4846
  %4848 = vrot.lane.b32.xlu0 %v4462, 112
  %v4849 = vpop.permute.xlu0 %4848
  %4850 = vrot.lane.b32.xlu0 %v4459, 112
  %v4851 = vpop.permute.xlu0 %4850
  %4852 = vrot.lane.b32.xlu0 %v4463, 112
  %v4853 = vpop.permute.xlu0 %4852
  %4854 = vrot.lane.b32.xlu0 %v4460, 112
  %v4855 = vpop.permute.xlu0 %4854
  %4856 = vrot.lane.b32.xlu0 %v4464, 112
  %v4857 = vpop.permute.xlu0 %4856
  %4858 = vrot.lane.b32.xlu0 %v4461, 112
  %v4859 = vpop.permute.xlu0 %4858
  %4860 = vrot.lane.b32.xlu0 %v4465, 112
  %v4861 = vpop.permute.xlu0 %4860
  %v4862 = vsel %vm299, %v4855, %v4859
  %v4863 = vsel %vm299, %v4857, %v4861
  %v4864 = vsel %vm299, %v4851, %v4855
  %v4865 = vsel %vm299, %v4853, %v4857
  %v4866 = vsel %vm299, %v4847, %v4851
  %v4867 = vsel %vm299, %v4849, %v4853
  %v4868 = vsel %vm299, %v4859, %v4847
  %v4869 = vsel %vm299, %v4861, %v4849
  %v4870 = vld [vmem:[%s304] ss:$8 sm:$0xf]
  %v4872 = vlaneseq
  %v4873 = vshrl.u32 %v4872, 7
  %v4874 = vsub.s32 0, %v4873
  %v4875 = vrot.slane %v4870, %v4874
  %v4876 = vlaneseq
  %v4877 = vshrl.u32 %v4876, 7
  %v4878 = vsub.s32 1, %v4877
  %v4879 = vrot.slane %v4870, %v4878
  %v4880 = vlaneseq
  %v4881 = vshrl.u32 %v4880, 7
  %v4882 = vsub.s32 2, %v4881
  %v4883 = vrot.slane %v4870, %v4882
  %v4884 = vlaneseq
  %v4885 = vshrl.u32 %v4884, 7
  %v4886 = vsub.s32 3, %v4885
  %v4887 = vrot.slane %v4870, %v4886
  %v4892 = vmul.f32 %v4866, %v4875
  %v4893 = vmul.f32 %v4864, %v4879
  %v4894 = vmul.f32 %v4862, %v4883
  %v4895 = vmul.f32 %v4868, %v4887
  %v4896 = vmul.f32 %v4867, %v4875
  %v4897 = vmul.f32 %v4865, %v4879
  %v4898 = vmul.f32 %v4863, %v4883
  %v4899 = vmul.f32 %v4869, %v4887
  %4900 = vst [vmem:[#allocation2 + $0x1c0] sm:$0xff] %v4892
  %4901 = vst [vmem:[#allocation2 + $0x1c8] sm:$0xff] %v4893
  %4902 = vst [vmem:[#allocation2 + $0x1d0] sm:$0xff] %v4894
  %4903 = vst [vmem:[#allocation2 + $0x1d8] sm:$0xff] %v4895
  %4904 = vst [vmem:[#allocation2 + $0x1e0] sm:$0xff] %v4896
  %4905 = vst [vmem:[#allocation2 + $0x1e8] sm:$0xff] %v4897
  %4906 = vst [vmem:[#allocation2 + $0x1f0] sm:$0xff] %v4898
  %4907 = vst [vmem:[#allocation2 + $0x1f8] sm:$0xff] %v4899
  %4908 = vrot.lane.b32.xlu0 %v4458, 111
  %v4909 = vpop.permute.xlu0 %4908
  %4910 = vrot.lane.b32.xlu0 %v4462, 111
  %v4911 = vpop.permute.xlu0 %4910
  %4912 = vrot.lane.b32.xlu0 %v4459, 111
  %v4913 = vpop.permute.xlu0 %4912
  %4914 = vrot.lane.b32.xlu0 %v4463, 111
  %v4915 = vpop.permute.xlu0 %4914
  %4916 = vrot.lane.b32.xlu0 %v4460, 111
  %v4917 = vpop.permute.xlu0 %4916
  %4918 = vrot.lane.b32.xlu0 %v4464, 111
  %v4919 = vpop.permute.xlu0 %4918
  %4920 = vrot.lane.b32.xlu0 %v4461, 111
  %v4921 = vpop.permute.xlu0 %4920
  %4922 = vrot.lane.b32.xlu0 %v4465, 111
  %v4923 = vpop.permute.xlu0 %4922
  %v4924 = vsel %vm343, %v4917, %v4921
  %v4925 = vsel %vm343, %v4919, %v4923
  %v4926 = vsel %vm343, %v4913, %v4917
  %v4927 = vsel %vm343, %v4915, %v4919
  %v4928 = vsel %vm343, %v4909, %v4913
  %v4929 = vsel %vm343, %v4911, %v4915
  %v4930 = vsel %vm343, %v4921, %v4909
  %v4931 = vsel %vm343, %v4923, %v4911
  %v4932 = vld [vmem:[%s348] ss:$8 sm:$0xf]
  %v4934 = vlaneseq
  %v4935 = vshrl.u32 %v4934, 7
  %v4936 = vsub.s32 0, %v4935
  %v4937 = vrot.slane %v4932, %v4936
  %v4938 = vlaneseq
  %v4939 = vshrl.u32 %v4938, 7
  %v4940 = vsub.s32 1, %v4939
  %v4941 = vrot.slane %v4932, %v4940
  %v4942 = vlaneseq
  %v4943 = vshrl.u32 %v4942, 7
  %v4944 = vsub.s32 2, %v4943
  %v4945 = vrot.slane %v4932, %v4944
  %v4946 = vlaneseq
  %v4947 = vshrl.u32 %v4946, 7
  %v4948 = vsub.s32 3, %v4947
  %v4949 = vrot.slane %v4932, %v4948
  %v4954 = vmul.f32 %v4928, %v4937
  %v4955 = vmul.f32 %v4926, %v4941
  %v4956 = vmul.f32 %v4924, %v4945
  %v4957 = vmul.f32 %v4930, %v4949
  %v4958 = vmul.f32 %v4929, %v4937
  %v4959 = vmul.f32 %v4927, %v4941
  %v4960 = vmul.f32 %v4925, %v4945
  %v4961 = vmul.f32 %v4931, %v4949
  %4962 = vst [vmem:[#allocation2 + $0x200] sm:$0xff] %v4954
  %4963 = vst [vmem:[#allocation2 + $0x208] sm:$0xff] %v4955
  %4964 = vst [vmem:[#allocation2 + $0x210] sm:$0xff] %v4956
  %4965 = vst [vmem:[#allocation2 + $0x218] sm:$0xff] %v4957
  %4966 = vst [vmem:[#allocation2 + $0x220] sm:$0xff] %v4958
  %4967 = vst [vmem:[#allocation2 + $0x228] sm:$0xff] %v4959
  %4968 = vst [vmem:[#allocation2 + $0x230] sm:$0xff] %v4960
  %4969 = vst [vmem:[#allocation2 + $0x238] sm:$0xff] %v4961
  %v4970 = vld [vmem:[#allocation2] sm:$0xff]
  %v4971 = vld [vmem:[#allocation2 + $0x8] sm:$0xff]
  %v4972 = vld [vmem:[#allocation2 + $0x10] sm:$0xff]
  %v4973 = vld [vmem:[#allocation2 + $0x18] sm:$0xff]
  %v4974 = vld [vmem:[#allocation2 + $0x20] sm:$0xff]
  %v4975 = vld [vmem:[#allocation2 + $0x28] sm:$0xff]
  %v4976 = vld [vmem:[#allocation2 + $0x30] sm:$0xff]
  %v4977 = vld [vmem:[#allocation2 + $0x38] sm:$0xff]
  %v4978 = vld [vmem:[#allocation2 + $0x40] sm:$0xff]
  %v4979 = vld [vmem:[#allocation2 + $0x48] sm:$0xff]
  %v4980 = vld [vmem:[#allocation2 + $0x50] sm:$0xff]
  %v4981 = vld [vmem:[#allocation2 + $0x58] sm:$0xff]
  %v4982 = vld [vmem:[#allocation2 + $0x60] sm:$0xff]
  %v4983 = vld [vmem:[#allocation2 + $0x68] sm:$0xff]
  %v4984 = vld [vmem:[#allocation2 + $0x70] sm:$0xff]
  %v4985 = vld [vmem:[#allocation2 + $0x78] sm:$0xff]
  %v4986 = vld [vmem:[#allocation2 + $0x80] sm:$0xff]
  %v4987 = vld [vmem:[#allocation2 + $0x88] sm:$0xff]
  %v4988 = vld [vmem:[#allocation2 + $0x90] sm:$0xff]
  %v4989 = vld [vmem:[#allocation2 + $0x98] sm:$0xff]
  %v4990 = vld [vmem:[#allocation2 + $0xa0] sm:$0xff]
  %v4991 = vld [vmem:[#allocation2 + $0xa8] sm:$0xff]
  %v4992 = vld [vmem:[#allocation2 + $0xb0] sm:$0xff]
  %v4993 = vld [vmem:[#allocation2 + $0xb8] sm:$0xff]
  %v4994 = vld [vmem:[#allocation2 + $0xc0] sm:$0xff]
  %v4995 = vld [vmem:[#allocation2 + $0xc8] sm:$0xff]
  %v4996 = vld [vmem:[#allocation2 + $0xd0] sm:$0xff]
  %v4997 = vld [vmem:[#allocation2 + $0xd8] sm:$0xff]
  %v4998 = vld [vmem:[#allocation2 + $0xe0] sm:$0xff]
  %v4999 = vld [vmem:[#allocation2 + $0xe8] sm:$0xff]
  %v5000 = vld [vmem:[#allocation2 + $0xf0] sm:$0xff]
  %v5001 = vld [vmem:[#allocation2 + $0xf8] sm:$0xff]
  %v5002 = vld [vmem:[#allocation2 + $0x100] sm:$0xff]
  %v5003 = vld [vmem:[#allocation2 + $0x108] sm:$0xff]
  %v5004 = vld [vmem:[#allocation2 + $0x110] sm:$0xff]
  %v5005 = vld [vmem:[#allocation2 + $0x118] sm:$0xff]
  %v5006 = vld [vmem:[#allocation2 + $0x120] sm:$0xff]
  %v5007 = vld [vmem:[#allocation2 + $0x128] sm:$0xff]
  %v5008 = vld [vmem:[#allocation2 + $0x130] sm:$0xff]
  %v5009 = vld [vmem:[#allocation2 + $0x138] sm:$0xff]
  %v5010 = vld [vmem:[#allocation2 + $0x140] sm:$0xff]
  %v5011 = vld [vmem:[#allocation2 + $0x148] sm:$0xff]
  %v5012 = vld [vmem:[#allocation2 + $0x150] sm:$0xff]
  %v5013 = vld [vmem:[#allocation2 + $0x158] sm:$0xff]
  %v5014 = vld [vmem:[#allocation2 + $0x160] sm:$0xff]
  %v5015 = vld [vmem:[#allocation2 + $0x168] sm:$0xff]
  %v5016 = vld [vmem:[#allocation2 + $0x170] sm:$0xff]
  %v5017 = vld [vmem:[#allocation2 + $0x178] sm:$0xff]
  %v5018 = vld [vmem:[#allocation2 + $0x180] sm:$0xff]
  %v5019 = vld [vmem:[#allocation2 + $0x188] sm:$0xff]
  %v5020 = vld [vmem:[#allocation2 + $0x190] sm:$0xff]
  %v5021 = vld [vmem:[#allocation2 + $0x198] sm:$0xff]
  %v5022 = vld [vmem:[#allocation2 + $0x1a0] sm:$0xff]
  %v5023 = vld [vmem:[#allocation2 + $0x1a8] sm:$0xff]
  %v5024 = vld [vmem:[#allocation2 + $0x1b0] sm:$0xff]
  %v5025 = vld [vmem:[#allocation2 + $0x1b8] sm:$0xff]
  %v5026 = vld [vmem:[#allocation2 + $0x1c0] sm:$0xff]
  %v5027 = vld [vmem:[#allocation2 + $0x1c8] sm:$0xff]
  %v5028 = vld [vmem:[#allocation2 + $0x1d0] sm:$0xff]
  %v5029 = vld [vmem:[#allocation2 + $0x1d8] sm:$0xff]
  %v5030 = vld [vmem:[#allocation2 + $0x1e0] sm:$0xff]
  %v5031 = vld [vmem:[#allocation2 + $0x1e8] sm:$0xff]
  %v5032 = vld [vmem:[#allocation2 + $0x1f0] sm:$0xff]
  %v5033 = vld [vmem:[#allocation2 + $0x1f8] sm:$0xff]
  %v5034 = vld [vmem:[#allocation2 + $0x200] sm:$0xff]
  %v5035 = vld [vmem:[#allocation2 + $0x208] sm:$0xff]
  %v5036 = vld [vmem:[#allocation2 + $0x210] sm:$0xff]
  %v5037 = vld [vmem:[#allocation2 + $0x218] sm:$0xff]
  %v5038 = vld [vmem:[#allocation2 + $0x220] sm:$0xff]
  %v5039 = vld [vmem:[#allocation2 + $0x228] sm:$0xff]
  %v5040 = vld [vmem:[#allocation2 + $0x230] sm:$0xff]
  %v5041 = vld [vmem:[#allocation2 + $0x238] sm:$0xff]
  %v5042 = vld [vmem:[%s1 + $0x1b0] sm:$0xff]
  %v5043 = vld [vmem:[%s1 + $0x1bc] sm:$0xff]
  %v5044 = vpack.c.bf16 %v4974, %v4970
  %v5045 = vpack.c.bf16 %v4975, %v4971
  %v5046 = vpack.c.bf16 %v4976, %v4972
  %v5047 = vpack.c.bf16 %v4977, %v4973
  %v5048 = vpack.c.bf16 %v4982, %v4978
  %v5049 = vpack.c.bf16 %v4983, %v4979
  %v5050 = vpack.c.bf16 %v4984, %v4980
  %v5051 = vpack.c.bf16 %v4985, %v4981
  %v5052 = vpack.c.bf16 %v4990, %v4986
  %v5053 = vpack.c.bf16 %v4991, %v4987
  %v5054 = vpack.c.bf16 %v4992, %v4988
  %v5055 = vpack.c.bf16 %v4993, %v4989
  %v5056 = vpack.c.bf16 %v4998, %v4994
  %v5057 = vpack.c.bf16 %v4999, %v4995
  %v5058 = vpack.c.bf16 %v5000, %v4996
  %v5059 = vpack.c.bf16 %v5001, %v4997
  %v5060 = vpack.c.bf16 %v5006, %v5002
  %v5061 = vpack.c.bf16 %v5007, %v5003
  %v5062 = vpack.c.bf16 %v5008, %v5004
  %v5063 = vpack.c.bf16 %v5009, %v5005
  %v5064 = vpack.c.bf16 %v5014, %v5010
  %v5065 = vpack.c.bf16 %v5015, %v5011
  %v5066 = vpack.c.bf16 %v5016, %v5012
  %v5067 = vpack.c.bf16 %v5017, %v5013
  %v5068 = vpack.c.bf16 %v5022, %v5018
  %v5069 = vpack.c.bf16 %v5023, %v5019
  %v5070 = vpack.c.bf16 %v5024, %v5020
  %v5071 = vpack.c.bf16 %v5025, %v5021
  %v5072 = vpack.c.bf16 %v5030, %v5026
  %v5073 = vpack.c.bf16 %v5031, %v5027
  %v5074 = vpack.c.bf16 %v5032, %v5028
  %v5075 = vpack.c.bf16 %v5033, %v5029
  %v5076 = vpack.c.bf16 %v5038, %v5034
  %v5077 = vpack.c.bf16 %v5039, %v5035
  %v5078 = vpack.c.bf16 %v5040, %v5036
  %v5079 = vpack.c.bf16 %v5041, %v5037
  %v5080 = vld [vmem:[%s2] sm:$0xff]
  %v5081 = vld [vmem:[%s2 + $0x8] sm:$0xff]
  %5083 = vset.pattern.permute.xlu0 9
  %5084 = vperm.xlu0 %5083, %v5080
  %v5085 = vpop.permute.xlu0 %5084
  %5088 = vset.pattern.permute.xlu0 9
  %5089 = vperm.xlu0 %5088, %v5081
  %v5090 = vpop.permute.xlu0 %5089
  %v5094 = vunpack.c.l.b16 %v5042
  %v5095 = vunpack.c.h.b16 %v5042
  %v5096 = vunpack.c.l.b16 %v5043
  %v5097 = vunpack.c.h.b16 %v5043
  %v5098 = vpack.c.b16 %v5096, %v5094
  %v5099 = vpack.c.b16 %v5097, %v5095
  %v5102 = vsel %vm2175, %v5099, 0
  %5104 = vmatprep.subr.bf16.mxu0 %v5045
  %5105 = vmatpush1.bf16.msra.mxu0 %v5044
  %5106 = vmatprep.subr.bf16.mxu0 %v5049
  %5107 = vmatpush1.bf16.msra.mxu0 %v5048
  %5108 = vmatprep.subr.bf16.mxu0 %v5053
  %5109 = vmatpush1.bf16.msra.mxu0 %v5052
  %5110 = vmatprep.subr.bf16.mxu0 %v5057
  %5111 = vmatpush1.bf16.msra.mxu0 %v5056
  %5112 = vmatprep.subr.bf16.mxu0 %v5061
  %5113 = vmatpush1.bf16.msra.mxu0 %v5060
  %5114 = vmatprep.subr.bf16.mxu0 %v5065
  %5115 = vmatpush1.bf16.msra.mxu0 %v5064
  %5116 = vmatprep.subr.bf16.mxu0 %v5069
  %5117 = vmatpush1.bf16.msra.mxu0 %v5068
  %5118 = vmatprep.subr.bf16.mxu0 %v5073
  %5119 = vmatpush1.bf16.msra.mxu0 %v5072
  %5120 = vmatprep.subr.bf16.mxu0 %v5077
  %5121 = vmatpush1.bf16.msra.mxu0 %v5076
  %5122 = vmatprep.subr.bf16.mxu0 0
  %5123 = vmatpush1.bf16.msra.mxu0 0
  %5124 = vmatprep.subr.bf16.mxu0 0
  %5125 = vmatpush1.bf16.msra.mxu0 0
  %5126 = vmatprep.subr.bf16.mxu0 0
  %5127 = vmatpush1.bf16.msra.mxu0 0
  %5128 = vmatprep.subr.bf16.mxu0 0
  %5129 = vmatpush1.bf16.msra.mxu0 0
  %5130 = vmatprep.subr.bf16.mxu0 0
  %5131 = vmatpush1.bf16.msra.mxu0 0
  %5132 = vmatprep.subr.bf16.mxu0 0
  %5133 = vmatpush1.bf16.msra.mxu0 0
  %5134 = vmatprep.subr.bf16.mxu0 0
  %5135 = vmatpush1.bf16.msra.mxu0 0
  %5136 = vmatprep.mubr.bf16.mxu0 %v5102
  %5137 = vmatmul.mubr.bf16.gmra.mrb[0].mxu0 %v5098
  %v5138 = vpop.f32.mrb[0].mxu0
  %v5139 = vadd.f32 %v5085, %v5138
  %v5140 = vpop.f32.mrb[0].mxu0
  %v5141 = vadd.f32 %v5085, %v5140
  %v5142 = vpop.f32.mrb[0].mxu0
  %v5143 = vadd.f32 %v5090, %v5142
  %v5144 = vpop.f32.mrb[0].mxu0
  %v5145 = vadd.f32 %v5090, %v5144
  %5146 = vdwg.mxu0
  %5147 = vmatprep.subr.bf16.mxu0 %v5047
  %5148 = vmatpush1.bf16.msra.mxu0 %v5046
  %5149 = vmatprep.subr.bf16.mxu0 %v5051
  %5150 = vmatpush1.bf16.msra.mxu0 %v5050
  %5151 = vmatprep.subr.bf16.mxu0 %v5055
  %5152 = vmatpush1.bf16.msra.mxu0 %v5054
  %5153 = vmatprep.subr.bf16.mxu0 %v5059
  %5154 = vmatpush1.bf16.msra.mxu0 %v5058
  %5155 = vmatprep.subr.bf16.mxu0 %v5063
  %5156 = vmatpush1.bf16.msra.mxu0 %v5062
  %5157 = vmatprep.subr.bf16.mxu0 %v5067
  %5158 = vmatpush1.bf16.msra.mxu0 %v5066
  %5159 = vmatprep.subr.bf16.mxu0 %v5071
  %5160 = vmatpush1.bf16.msra.mxu0 %v5070
  %5161 = vmatprep.subr.bf16.mxu0 %v5075
  %5162 = vmatpush1.bf16.msra.mxu0 %v5074
  %5163 = vmatprep.subr.bf16.mxu0 %v5079
  %5164 = vmatpush1.bf16.msra.mxu0 %v5078
  %5165 = vmatprep.subr.bf16.mxu0 0
  %5166 = vmatpush1.bf16.msra.mxu0 0
  %5167 = vmatprep.subr.bf16.mxu0 0
  %5168 = vmatpush1.bf16.msra.mxu0 0
  %5169 = vmatprep.subr.bf16.mxu0 0
  %5170 = vmatpush1.bf16.msra.mxu0 0
  %5171 = vmatprep.subr.bf16.mxu0 0
  %5172 = vmatpush1.bf16.msra.mxu0 0
  %5173 = vmatprep.subr.bf16.mxu0 0
  %5174 = vmatpush1.bf16.msra.mxu0 0
  %5175 = vmatprep.subr.bf16.mxu0 0
  %5176 = vmatpush1.bf16.msra.mxu0 0
  %5177 = vmatprep.subr.bf16.mxu0 0
  %5178 = vmatpush1.bf16.msra.mxu0 0
  %5179 = vmatprep.mubr.bf16.mxu0 %v5102
  %5180 = vmatmul.mubr.bf16.gmra.mrb[0].mxu0 %v5098
  %v5181 = vpop.f32.mrb[0].mxu0
  %v5182 = vadd.f32 %v5085, %v5181
  %v5183 = vpop.f32.mrb[0].mxu0
  %v5184 = vadd.f32 %v5085, %v5183
  %v5185 = vpop.f32.mrb[0].mxu0
  %v5186 = vadd.f32 %v5090, %v5185
  %v5187 = vpop.f32.mrb[0].mxu0
  %v5188 = vadd.f32 %v5090, %v5187
  %5189 = vdwg.mxu0
  %vm5190 = vcmp.ge.f32.partialorder %v5139, 0.0
  %vm5191 = vcmp.ge.f32.partialorder %v5141, 0.0
  %vm5192 = vcmp.ge.f32.partialorder %v5182, 0.0
  %vm5193 = vcmp.ge.f32.partialorder %v5184, 0.0
  %vm5194 = vcmp.ge.f32.partialorder %v5143, 0.0
  %vm5195 = vcmp.ge.f32.partialorder %v5145, 0.0
  %vm5196 = vcmp.ge.f32.partialorder %v5186, 0.0
  %vm5197 = vcmp.ge.f32.partialorder %v5188, 0.0
  %v5198 = vmul.f32 %v5139, 0.01
  %v5199 = vmul.f32 %v5141, 0.01
  %v5200 = vmul.f32 %v5182, 0.01
  %v5201 = vmul.f32 %v5184, 0.01
  %v5202 = vmul.f32 %v5143, 0.01
  %v5203 = vmul.f32 %v5145, 0.01
  %v5204 = vmul.f32 %v5186, 0.01
  %v5205 = vmul.f32 %v5188, 0.01
  %v5206 = vsel %vm5190, %v5139, %v5198
  %v5207 = vsel %vm5191, %v5141, %v5199
  %v5208 = vsel %vm5192, %v5182, %v5200
  %v5209 = vsel %vm5193, %v5184, %v5201
  %v5210 = vsel %vm5194, %v5143, %v5202
  %v5211 = vsel %vm5195, %v5145, %v5203
  %v5212 = vsel %vm5196, %v5186, %v5204
  %v5213 = vsel %vm5197, %v5188, %v5205
  %v5214 = vld [vmem:[%s1 + $0x1e0] sm:$0xf]
  %v5215 = vpack.c.bf16 %v5210, %v5206
  %v5216 = vpack.c.bf16 %v5211, %v5207
  %v5217 = vpack.c.bf16 %v5212, %v5208
  %v5218 = vpack.c.bf16 %v5213, %v5209
  %v5219 = vld [vmem:[%s2] sm:$0xff]
  %5221 = vset.pattern.permute.xlu0 10
  %5222 = vperm.xlu0 %5221, %v5219
  %v5223 = vpop.permute.xlu0 %5222
  %v5226 = vsel %vm2175, %v5214, 0
  %5228 = vmatprep.subr.bf16.mxu0 %v5216
  %5229 = vmatpush1.bf16.msra.mxu0 %v5215
  %5230 = vmatprep.subr.bf16.mxu0 0
  %5231 = vmatpush1.bf16.msra.mxu0 0
  %5232 = vmatprep.subr.bf16.mxu0 0
  %5233 = vmatpush1.bf16.msra.mxu0 0
  %5234 = vmatprep.subr.bf16.mxu0 0
  %5235 = vmatpush1.bf16.msra.mxu0 0
  %5236 = vmatprep.subr.bf16.mxu0 0
  %5237 = vmatpush1.bf16.msra.mxu0 0
  %5238 = vmatprep.subr.bf16.mxu0 0
  %5239 = vmatpush1.bf16.msra.mxu0 0
  %5240 = vmatprep.subr.bf16.mxu0 0
  %5241 = vmatpush1.bf16.msra.mxu0 0
  %5242 = vmatprep.subr.bf16.mxu0 0
  %5243 = vmatpush1.bf16.msra.mxu0 0
  %5244 = vmatprep.subr.bf16.mxu0 0
  %5245 = vmatpush1.bf16.msra.mxu0 0
  %5246 = vmatprep.subr.bf16.mxu0 0
  %5247 = vmatpush1.bf16.msra.mxu0 0
  %5248 = vmatprep.subr.bf16.mxu0 0
  %5249 = vmatpush1.bf16.msra.mxu0 0
  %5250 = vmatprep.subr.bf16.mxu0 0
  %5251 = vmatpush1.bf16.msra.mxu0 0
  %5252 = vmatprep.subr.bf16.mxu0 0
  %5253 = vmatpush1.bf16.msra.mxu0 0
  %5254 = vmatprep.subr.bf16.mxu0 0
  %5255 = vmatpush1.bf16.msra.mxu0 0
  %5256 = vmatprep.subr.bf16.mxu0 0
  %5257 = vmatpush1.bf16.msra.mxu0 0
  %5258 = vmatprep.subr.bf16.mxu0 0
  %5259 = vmatpush1.bf16.msra.mxu0 0
  %5260 = vmatprep.mubr.bf16.mxu0 0
  %5261 = vmatmul.mubr.bf16.gmra.mrb[0].mxu0 %v5226
  %v5262 = vpop.f32.mrb[0].mxu0
  %v5263 = vadd.f32 %v5223, %v5262
  %v5264 = vpop.f32.mrb[0].mxu0
  %v5265 = vadd.f32 %v5223, %v5264
  %v5266 = vpop.f32.mrb[0].mxu0
  %v5267 = vpop.f32.mrb[0].mxu0
  %5268 = vdwg.mxu0
  %5269 = vmatprep.subr.bf16.mxu0 %v5218
  %5270 = vmatpush1.bf16.msra.mxu0 %v5217
  %5271 = vmatprep.subr.bf16.mxu0 0
  %5272 = vmatpush1.bf16.msra.mxu0 0
  %5273 = vmatprep.subr.bf16.mxu0 0
  %5274 = vmatpush1.bf16.msra.mxu0 0
  %5275 = vmatprep.subr.bf16.mxu0 0
  %5276 = vmatpush1.bf16.msra.mxu0 0
  %5277 = vmatprep.subr.bf16.mxu0 0
  %5278 = vmatpush1.bf16.msra.mxu0 0
  %5279 = vmatprep.subr.bf16.mxu0 0
  %5280 = vmatpush1.bf16.msra.mxu0 0
  %5281 = vmatprep.subr.bf16.mxu0 0
  %5282 = vmatpush1.bf16.msra.mxu0 0
  %5283 = vmatprep.subr.bf16.mxu0 0
  %5284 = vmatpush1.bf16.msra.mxu0 0
  %5285 = vmatprep.subr.bf16.mxu0 0
  %5286 = vmatpush1.bf16.msra.mxu0 0
  %5287 = vmatprep.subr.bf16.mxu0 0
  %5288 = vmatpush1.bf16.msra.mxu0 0
  %5289 = vmatprep.subr.bf16.mxu0 0
  %5290 = vmatpush1.bf16.msra.mxu0 0
  %5291 = vmatprep.subr.bf16.mxu0 0
  %5292 = vmatpush1.bf16.msra.mxu0 0
  %5293 = vmatprep.subr.bf16.mxu0 0
  %5294 = vmatpush1.bf16.msra.mxu0 0
  %5295 = vmatprep.subr.bf16.mxu0 0
  %5296 = vmatpush1.bf16.msra.mxu0 0
  %5297 = vmatprep.subr.bf16.mxu0 0
  %5298 = vmatpush1.bf16.msra.mxu0 0
  %5299 = vmatprep.subr.bf16.mxu0 0
  %5300 = vmatpush1.bf16.msra.mxu0 0
  %5301 = vmatprep.mubr.bf16.mxu0 0
  %5302 = vmatmul.mubr.bf16.gmra.mrb[0].mxu0 %v5226
  %v5303 = vpop.f32.mrb[0].mxu0
  %v5304 = vadd.f32 %v5223, %v5303
  %v5305 = vpop.f32.mrb[0].mxu0
  %v5306 = vadd.f32 %v5223, %v5305
  %v5307 = vpop.f32.mrb[0].mxu0
  %v5308 = vpop.f32.mrb[0].mxu0
  %5309 = vdwg.mxu0
  %vm5310 = vcmp.ge.f32.partialorder %v5263, 0.0
  %vm5311 = vcmp.ge.f32.partialorder %v5265, 0.0
  %vm5312 = vcmp.ge.f32.partialorder %v5304, 0.0
  %vm5313 = vcmp.ge.f32.partialorder %v5306, 0.0
  %v5314 = vmul.f32 %v5263, 0.01
  %v5315 = vmul.f32 %v5265, 0.01
  %v5316 = vmul.f32 %v5304, 0.01
  %v5317 = vmul.f32 %v5306, 0.01
  %v5318 = vsel %vm5310, %v5263, %v5314
  %v5319 = vsel %vm5311, %v5265, %v5315
  %v5320 = vsel %vm5312, %v5304, %v5316
  %v5321 = vsel %vm5313, %v5306, %v5317
  %v5322 = vld [vmem:[%s1 + $0x210] sm:$0x3]
  %v5323 = vpack.c.bf16 %v5318, %v5318
  %v5324 = vpack.c.bf16 %v5319, %v5319
  %v5325 = vpack.c.bf16 %v5320, %v5320
  %v5326 = vpack.c.bf16 %v5321, %v5321
  %v5327 = vld [vmem:[%s2] sm:$0xf]
  %5329 = vset.pattern.permute.xlu0 11
  %5330 = vperm.xlu0 %5329, %v5327
  %v5331 = vpop.permute.xlu0 %5330
  %v5334 = vsel %vm3784, %v5322, 0
  %v5337 = vsel %vm480, %v5323, 0
  %v5340 = vsel %vm480, %v5324, 0
  %v5343 = vsel %vm480, %v5325, 0
  %v5346 = vsel %vm480, %v5326, 0
  %5348 = vmatprep.subr.bf16.mxu0 %v5340
  %5349 = vmatpush1.bf16.msra.mxu0 %v5337
  %5350 = vmatprep.subr.bf16.mxu0 0
  %5351 = vmatpush1.bf16.msra.mxu0 0
  %5352 = vmatprep.subr.bf16.mxu0 0
  %5353 = vmatpush1.bf16.msra.mxu0 0
  %5354 = vmatprep.subr.bf16.mxu0 0
  %5355 = vmatpush1.bf16.msra.mxu0 0
  %5356 = vmatprep.subr.bf16.mxu0 0
  %5357 = vmatpush1.bf16.msra.mxu0 0
  %5358 = vmatprep.subr.bf16.mxu0 0
  %5359 = vmatpush1.bf16.msra.mxu0 0
  %5360 = vmatprep.subr.bf16.mxu0 0
  %5361 = vmatpush1.bf16.msra.mxu0 0
  %5362 = vmatprep.subr.bf16.mxu0 0
  %5363 = vmatpush1.bf16.msra.mxu0 0
  %5364 = vmatprep.subr.bf16.mxu0 0
  %5365 = vmatpush1.bf16.msra.mxu0 0
  %5366 = vmatprep.subr.bf16.mxu0 0
  %5367 = vmatpush1.bf16.msra.mxu0 0
  %5368 = vmatprep.subr.bf16.mxu0 0
  %5369 = vmatpush1.bf16.msra.mxu0 0
  %5370 = vmatprep.subr.bf16.mxu0 0
  %5371 = vmatpush1.bf16.msra.mxu0 0
  %5372 = vmatprep.subr.bf16.mxu0 0
  %5373 = vmatpush1.bf16.msra.mxu0 0
  %5374 = vmatprep.subr.bf16.mxu0 0
  %5375 = vmatpush1.bf16.msra.mxu0 0
  %5376 = vmatprep.subr.bf16.mxu0 0
  %5377 = vmatpush1.bf16.msra.mxu0 0
  %5378 = vmatprep.subr.bf16.mxu0 0
  %5379 = vmatpush1.bf16.msra.mxu0 0
  %5380 = vmatprep.mubr.bf16.mxu0 0
  %5381 = vmatmul.mubr.bf16.gmra.mrb[0].mxu0 %v5334
  %v5382 = vpop.f32.mrb[0].mxu0
  %v5383 = vadd.f32 %v5331, %v5382
  %v5384 = vpop.f32.mrb[0].mxu0
  %v5385 = vadd.f32 %v5331, %v5384
  %v5386 = vpop.f32.mrb[0].mxu0
  %v5387 = vpop.f32.mrb[0].mxu0
  %5388 = vdwg.mxu0
  %5389 = vmatprep.subr.bf16.mxu0 %v5346
  %5390 = vmatpush1.bf16.msra.mxu0 %v5343
  %5391 = vmatprep.subr.bf16.mxu0 0
  %5392 = vmatpush1.bf16.msra.mxu0 0
  %5393 = vmatprep.subr.bf16.mxu0 0
  %5394 = vmatpush1.bf16.msra.mxu0 0
  %5395 = vmatprep.subr.bf16.mxu0 0
  %5396 = vmatpush1.bf16.msra.mxu0 0
  %5397 = vmatprep.subr.bf16.mxu0 0
  %5398 = vmatpush1.bf16.msra.mxu0 0
  %5399 = vmatprep.subr.bf16.mxu0 0
  %5400 = vmatpush1.bf16.msra.mxu0 0
  %5401 = vmatprep.subr.bf16.mxu0 0
  %5402 = vmatpush1.bf16.msra.mxu0 0
  %5403 = vmatprep.subr.bf16.mxu0 0
  %5404 = vmatpush1.bf16.msra.mxu0 0
  %5405 = vmatprep.subr.bf16.mxu0 0
  %5406 = vmatpush1.bf16.msra.mxu0 0
  %5407 = vmatprep.subr.bf16.mxu0 0
  %5408 = vmatpush1.bf16.msra.mxu0 0
  %5409 = vmatprep.subr.bf16.mxu0 0
  %5410 = vmatpush1.bf16.msra.mxu0 0
  %5411 = vmatprep.subr.bf16.mxu0 0
  %5412 = vmatpush1.bf16.msra.mxu0 0
  %5413 = vmatprep.subr.bf16.mxu0 0
  %5414 = vmatpush1.bf16.msra.mxu0 0
  %5415 = vmatprep.subr.bf16.mxu0 0
  %5416 = vmatpush1.bf16.msra.mxu0 0
  %5417 = vmatprep.subr.bf16.mxu0 0
  %5418 = vmatpush1.bf16.msra.mxu0 0
  %5419 = vmatprep.subr.bf16.mxu0 0
  %5420 = vmatpush1.bf16.msra.mxu0 0
  %5421 = vmatprep.mubr.bf16.mxu0 0
  %5422 = vmatmul.mubr.bf16.gmra.mrb[0].mxu0 %v5334
  %v5423 = vpop.f32.mrb[0].mxu0
  %v5424 = vadd.f32 %v5331, %v5423
  %v5425 = vpop.f32.mrb[0].mxu0
  %v5426 = vadd.f32 %v5331, %v5425
  %v5427 = vpop.f32.mrb[0].mxu0
  %v5428 = vpop.f32.mrb[0].mxu0
  %5429 = vdwg.mxu0
  %v5434 = vrot.slane %v5383, 4
  %v5435 = vrot.slane %v5385, 4
  %v5436 = vrot.slane %v5424, 4
  %v5437 = vrot.slane %v5426, 4
  %v5442 = vsel %vm480, %v3835, %v5434
  %v5443 = vsel %vm480, %v3837, %v5435
  %v5444 = vsel %vm480, %v3876, %v5436
  %v5445 = vsel %vm480, %v3878, %v5437
  %5446 = vst [vmem:[%s4 + $0x20] sm:$0xff] %v5442
  %5447 = vst [vmem:[%s4 + $0x28] sm:$0xff] %v5443
  %5448 = vst [vmem:[%s4 + $0x30] sm:$0xff] %v5444
  %5449 = vst [vmem:[%s4 + $0x38] sm:$0xff] %v5445
  // Predicated region
  $region18: #{forward.1} parent=0 // pred_check
    _
  $region19: #{forward.1} parent=0 // pred_check_branch
    %5451 = sbr.rel (0) target = $region21
  $region20: #{forward.1} parent=0 // pred_region
    _
  $region21: #{forward.1} parent=0 // pred_fallthru
    _
  // Predicated region
  $region22: #{forward.1} parent=0 // pred_check
    _
  $region23: #{forward.1} parent=0 // pred_check_branch
    %5453 = sbr.rel (0) target = $region25
  $region24: #{forward.1} parent=0 // pred_region
    _
  $region25: #{forward.1} parent=0 // pred_fallthru
    _

</llo_original>
